<compile_context>
chip_gen: v6e
topology: v6e:2x2x1
jax: 0.10.0
libtpu: 0.0.40
codegen_flags: <defaults>
</compile_context>

<pallas_src>
import jax
import jax.numpy as jnp
from jax.experimental import pallas as pl
from jax.experimental.pallas import tpu as pltpu

PRIMITIVES = (
    "none",            # 0
    "max_pool_3x3",    # 1
    "avg_pool_3x3",    # 2
    "skip_connect",    # 3
    "sep_conv_3x3",    # 4
    "sep_conv_5x5",    # 5
    "dil_conv_3x3",    # 6
    "dil_conv_5x5",    # 7
)

BN_EPS = 1e-5

# Leading "parallel" grid axis: op-groups -> the two v7x TensorCores.
_NUM_GROUPS = 2
# op index -> group (roughly cost-balanced: {avgpool, sep5} vs the rest)
_OP_GROUP = {1: 0, 2: 1, 3: 0, 4: 0, 5: 1, 6: 0, 7: 0}

# Parameter layout (all float32):
#   dw weights : (k*k, C)   dw[t, c] == torch_w[c, 0, t // k, t % k]   (depthwise)
#   pw weights : (C_in, C_out) == torch_w[:, :, 0, 0].T                 (1x1 conv)
_PARAM_ORDER = (
    "sep3_dw1", "sep3_pw1", "sep3_dw2", "sep3_pw2",
    "sep5_dw1", "sep5_pw1", "sep5_dw2", "sep5_pw2",
    "dil3_dw", "dil3_pw",
    "dil5_dw", "dil5_pw",
)


# --------------------------------------------------------------------------- #
# Pallas kernel: the whole MixedOp forward on a lane-packed (H, N*W*C) tensor. #
# --------------------------------------------------------------------------- #
def _make_kernel(N, C, H, W):
    L = N * W * C          # packed lane extent (128 at the test shape)
    inv_cnt = 1.0 / float(N * H * W)

    def kernel(alpha_ref, x_ref, hid_ref, wid_ref,
               s3_dw1, s3_pw1, s3_dw2, s3_pw2,
               s5_dw1, s5_pw1, s5_dw2, s5_pw2,
               d3_dw, d3_pw, d5_dw, d5_pw,
               out_ref):
        x = x_ref[...]                              # (H, L) f32
        rx = jnp.maximum(x, 0.0)                    # shared ReLU (hoisted once)
        h_idx = hid_ref[...]                        # (H, 1) int32: row -> h
        w_idx = wid_ref[...]                        # (1, L) int32: lane -> w

        def shifted(y, offy, offx, fill):
            # y[h, (n, w, c)] -> y[h+offy, (n, w+offx, c)], `fill` outside HxW.
            # Rolls land on the XLU; masks are cheap VPU selects.
            if offy != 0:
                y = pltpu.roll(y, (-offy) % H, axis=0)
                ok = jnp.logical_and(h_idx + offy >= 0, h_idx + offy < H)
                y = jnp.where(ok, y, fill)
            if offx != 0:
                y = pltpu.roll(y, (-offx * C) % L, axis=1)
                ok = jnp.logical_and(w_idx + offx >= 0, w_idx + offx < W)
                y = jnp.where(ok, y, fill)
            return y

        def channel_mean(y):
            # Per-channel mean over (N, H, W), broadcast back to every lane.
            # Lane roll-add doubling tree over the N*W pixel groups (multiples
            # of C keep channels aligned), then a sublane reduction over H.
            s = y
            step = C
            while step < L:                          # requires N*W power of 2
                s = s + pltpu.roll(s, step, axis=1)
                step *= 2
            return jnp.sum(s, axis=0, keepdims=True) * inv_cnt

        def batch_norm(y):
            # nn.BatchNorm2d(C, affine=False), training mode -> batch stats.
            mean = channel_mean(y)
            diff = y - mean
            var = channel_mean(diff * diff)
            return diff * jax.lax.rsqrt(var + BN_EPS)

        def depthwise(y, dwv, k, dil, p):
            # groups=C depthwise conv, stride 1, zero pad p, dilation dil.
            acc = jnp.zeros((H, L), jnp.float32)
            for i in range(k):
                yh = shifted(y, i * dil - p, 0, 0.0)
                for j in range(k):
                    acc = acc + shifted(yh, 0, j * dil - p, 0.0) * dwv[i * k + j, :]
            return acc

        def pointwise(y, pwv):
            # 1x1 conv over the packed channel groups:
            #   out[l = p*C+co] = sum_d y[l-d] * pw[co-d, co]
            # each relative offset d is one full-lane rotate + MAC; the
            # rotate-coefficient rows pwv[(2C-1, L)] are packed in the wrapper.
            acc = y * pwv[C - 1, :]                              # d = 0
            for d in range(1, C):
                acc = acc + pltpu.roll(y, d, axis=1) * pwv[C - 1 + d, :]
                acc = acc + pltpu.roll(y, L - d, axis=1) * pwv[C - 1 - d, :]
            return acc

        def sep_conv(k, p, dw1, pw1, dw2, pw2):
            h1 = batch_norm(pointwise(depthwise(rx, dw1, k, 1, p), pw1))
            return batch_norm(
                pointwise(depthwise(jnp.maximum(h1, 0.0), dw2, k, 1, p), pw2))

        def dil_conv(k, p, dw, pw):
            return batch_norm(pointwise(depthwise(rx, dw, k, 2, p), pw))

        def max_pool_bn():
            acc = jnp.full((H, L), -jnp.inf, jnp.float32)
            for offy in (-1, 0, 1):
                yh = shifted(x, offy, 0, -jnp.inf)
                for offx in (-1, 0, 1):
                    acc = jnp.maximum(acc, shifted(yh, 0, offx, -jnp.inf))
            return batch_norm(acc)

        def avg_pool_bn():
            acc = jnp.zeros((H, L), jnp.float32)
            for offy in (-1, 0, 1):
                yh = shifted(x, offy, 0, 0.0)
                for offx in (-1, 0, 1):
                    acc = acc + shifted(yh, 0, offx, 0.0)
            # count_include_pad=False divisor is a separable constant.
            rows = (3.0 - jnp.where(h_idx == 0, 1.0, 0.0)
                    - jnp.where(h_idx == H - 1, 1.0, 0.0))
            cols = (3.0 - jnp.where(w_idx == 0, 1.0, 0.0)
                    - jnp.where(w_idx == W - 1, 1.0, 0.0))
            return batch_norm(acc / (rows * cols))

        def skip():
            return x

        g = pl.program_id(0)
        out_ref[...] = jnp.zeros(out_ref.shape, out_ref.dtype)

        def accumulate(i, fn):
            # Mirrors the `if w != 0` skip in the PyTorch forward; _OP_GROUP
            # routes each candidate op to one of the two grid programs.
            @pl.when(jnp.logical_and(g == _OP_GROUP[i], alpha_ref[i] != 0.0))
            def _():
                out_ref[...] += alpha_ref[i] * fn()

        # op 0 ('none') contributes w * 0 == 0 for finite x -> skipped.
        # TODO(synk): NaN/Inf propagation through the 'none' op is not reproduced.
        accumulate(1, max_pool_bn)
        accumulate(2, avg_pool_bn)
        accumulate(3, skip)
        accumulate(4, lambda: sep_conv(3, 1, s3_dw1, s3_pw1, s3_dw2, s3_pw2))
        accumulate(5, lambda: sep_conv(5, 2, s5_dw1, s5_pw1, s5_dw2, s5_pw2))
        accumulate(6, lambda: dil_conv(3, 2, d3_dw, d3_pw))
        accumulate(7, lambda: dil_conv(5, 4, d5_dw, d5_pw))

    return kernel


# ------------------------------- wrapper (glue) ----------------------------- #
@jax.jit
def mixed_op_forward(x_nchw, weights, params):
    """MixedOp.forward (stride=1).  x_nchw: (N, C, H, W) f32, weights: (8,) f32."""
    N, C, H, W = x_nchw.shape
    NW, L = N * W, N * W * C
    # TODO(synk): generalize the in-kernel per-channel reduction to non-power-of-two N*W.
    assert NW & (NW - 1) == 0, "N*W must be a power of two"

    # NCHW -> lane-packed (H, N*W*C), channel fastest along lanes.
    xp = jnp.transpose(x_nchw.astype(jnp.float32), (2, 0, 3, 1)).reshape(H, L)

    h_idx = jnp.arange(H, dtype=jnp.int32).reshape(H, 1)
    w_idx = jnp.tile(jnp.repeat(jnp.arange(W, dtype=jnp.int32), C), N).reshape(1, L)

    def tile_dw(dw):                      # (k*k, C) -> (k*k, L) lane-tiled taps
        return jnp.tile(dw.astype(jnp.float32), (1, NW))

    def pack_pw(pw):                      # (C, C) -> (2C-1, L) rotate coefficients
        pw = pw.astype(jnp.float32)
        co = jnp.arange(C)
        rows = []
        for d in range(-(C - 1), C):
            ci = co - d
            ok = jnp.logical_and(ci >= 0, ci < C)
            vals = jnp.where(ok, pw[jnp.clip(ci, 0, C - 1), co], 0.0)
            rows.append(jnp.tile(vals, NW))
        return jnp.stack(rows)

    flat = [pack_pw(params[n]) if "_pw" in n else tile_dw(params[n])
            for n in _PARAM_ORDER]

    def full_spec(a):
        zeros = (0,) * a.ndim
        return pl.BlockSpec(a.shape, lambda g: zeros)

    kernel = _make_kernel(N, C, H, W)
    parts = pl.pallas_call(
        kernel,
        out_shape=jax.ShapeDtypeStruct((_NUM_GROUPS, H, L), jnp.float32),
        grid=(_NUM_GROUPS,),
        in_specs=[pl.BlockSpec(memory_space=pltpu.MemorySpace.SMEM),
                  full_spec(xp), full_spec(h_idx), full_spec(w_idx)]
                 + [full_spec(a) for a in flat],
        out_specs=pl.BlockSpec((None, H, L), lambda g: (g, 0, 0)),
        compiler_params=pltpu.CompilerParams(
            dimension_semantics=("parallel",)),
    )(weights.astype(jnp.float32), xp, h_idx, w_idx, *flat)

    out = jnp.sum(parts, axis=0)                          # combine the 2 op-groups
    return jnp.transpose(out.reshape(H, N, W, C), (1, 3, 0, 2))   # -> NCHW


# ------------------------- deterministic parameter init --------------------- #
def init_params(key, C):
    ks = jax.random.split(key, len(_PARAM_ORDER))
    shapes = {
        "sep3_dw1": (9, C), "sep3_pw1": (C, C), "sep3_dw2": (9, C), "sep3_pw2": (C, C),
        "sep5_dw1": (25, C), "sep5_pw1": (C, C), "sep5_dw2": (25, C), "sep5_pw2": (C, C),
        "dil3_dw": (9, C), "dil3_pw": (C, C),
        "dil5_dw": (25, C), "dil5_pw": (C, C),
    }
    return {name: 0.1 * jax.random.normal(k, shapes[name], jnp.float32)
            for name, k in zip(_PARAM_ORDER, ks)}


# -------------------- pure-JAX reference (for verification) ----------------- #
def _bn_ref(y):
    m = jnp.mean(y, axis=(0, 1, 2), keepdims=True)
    v = jnp.mean((y - m) ** 2, axis=(0, 1, 2), keepdims=True)
    return (y - m) / jnp.sqrt(v + BN_EPS)


def _dw_ref(y, dw_flat, k, dil, p):
    C = y.shape[-1]
    w = dw_flat.reshape(k, k, C)[:, :, None, :]                  # HWIO, I=1
    return jax.lax.conv_general_dilated(
        y, w, window_strides=(1, 1), padding=[(p, p), (p, p)],
        rhs_dilation=(dil, dil),
        dimension_numbers=("NHWC", "HWIO", "NHWC"),
        feature_group_count=C, precision=jax.lax.Precision.HIGHEST)


def _pw_ref(y, pw):
    return jnp.einsum("nhwi,io->nhwo", y, pw,
                      precision=jax.lax.Precision.HIGHEST)


def mixed_op_reference(x_nchw, weights, params):
    x = jnp.transpose(x_nchw, (0, 2, 3, 1)).astype(jnp.float32)
    relu = lambda y: jnp.maximum(y, 0.0)

    def sep(k, p, dw1, pw1, dw2, pw2):
        h = _bn_ref(_pw_ref(_dw_ref(relu(x), dw1, k, 1, p), pw1))
        return _bn_ref(_pw_ref(_dw_ref(relu(h), dw2, k, 1, p), pw2))

    def dil(k, p, dw, pw):
        return _bn_ref(_pw_ref(_dw_ref(relu(x), dw, k, 2, p), pw))

    win, strd = (1, 3, 3, 1), (1, 1, 1, 1)
    pad = [(0, 0), (1, 1), (1, 1), (0, 0)]
    mp = jax.lax.reduce_window(x, -jnp.inf, jax.lax.max, win, strd, pad)
    sm = jax.lax.reduce_window(x, 0.0, jax.lax.add, win, strd, pad)
    cnt = jax.lax.reduce_window(jnp.ones_like(x), 0.0, jax.lax.add, win, strd, pad)

    outs = [
        jnp.zeros_like(x),                                   # none
        _bn_ref(mp),                                         # max_pool_3x3 + BN
        _bn_ref(sm / cnt),                                   # avg_pool_3x3 + BN
        x,                                                   # skip_connect
        sep(3, 1, params["sep3_dw1"], params["sep3_pw1"],
            params["sep3_dw2"], params["sep3_pw2"]),
        sep(5, 2, params["sep5_dw1"], params["sep5_pw1"],
            params["sep5_dw2"], params["sep5_pw2"]),
        dil(3, 2, params["dil3_dw"], params["dil3_pw"]),
        dil(5, 4, params["dil5_dw"], params["dil5_pw"]),
    ]
    y = sum(w * o for w, o in zip(weights, outs))
    return jnp.transpose(y, (0, 3, 1, 2))


# ------------------------------------ main ---------------------------------- #
if __name__ == "__main__":
    key = jax.random.PRNGKey(0)
    kx, kw, kp = jax.random.split(key, 3)

    N, C, H, W = 2, 4, 16, 16
    x = jax.random.normal(kx, (N, C, H, W), jnp.float32)
    weights = jax.nn.softmax(jax.random.normal(kw, (len(PRIMITIVES),), jnp.float32))
    weights = weights.at[1].set(0.0)        # exercise the `w != 0` skip path
    params = init_params(kp, C)

    y = jax.block_until_ready(mixed_op_forward(x, weights, params))
    y_ref = jax.block_until_ready(mixed_op_reference(x, weights, params))

    assert y.shape == (N, C, H, W) and y.dtype == jnp.float32
    err = float(jnp.max(jnp.abs(y - y_ref)))
    assert err < 1e-3, f"mismatch vs reference: max abs err = {err}"
    print("KERNEL_OK")
</pallas_src>

<mosaic_0001>
module attributes {stable_mosaic.version = 11 : i64} {
  func.func @kernel(%arg0: i32, %arg1: memref<8xf32, #tpu.memory_space<smem>>, %arg2: memref<16x128xf32, #tpu.memory_space<vmem>>, %arg3: memref<16x1xi32, #tpu.memory_space<vmem>>, %arg4: memref<1x128xi32, #tpu.memory_space<vmem>>, %arg5: memref<9x128xf32, #tpu.memory_space<vmem>>, %arg6: memref<7x128xf32, #tpu.memory_space<vmem>>, %arg7: memref<9x128xf32, #tpu.memory_space<vmem>>, %arg8: memref<7x128xf32, #tpu.memory_space<vmem>>, %arg9: memref<25x128xf32, #tpu.memory_space<vmem>>, %arg10: memref<7x128xf32, #tpu.memory_space<vmem>>, %arg11: memref<25x128xf32, #tpu.memory_space<vmem>>, %arg12: memref<7x128xf32, #tpu.memory_space<vmem>>, %arg13: memref<9x128xf32, #tpu.memory_space<vmem>>, %arg14: memref<7x128xf32, #tpu.memory_space<vmem>>, %arg15: memref<25x128xf32, #tpu.memory_space<vmem>>, %arg16: memref<7x128xf32, #tpu.memory_space<vmem>>, %arg17: memref<1x16x128xf32, #tpu.memory_space<vmem>>) attributes {dimension_semantics = [#tpu.dimension_semantics<parallel>], iteration_bounds = array<i64: 2>, scalar_prefetch = 0 : i64, scratch_operands = 0 : i64, tpu.core_type = #tpu.core_type<tc>, window_params = [{transform_indices = @transform_0, window_bounds = array<i64: 8>}, {pipeline_mode = #tpu.pipeline_mode<synchronous>, transform_indices = @transform_1, window_bounds = array<i64: 16, 128>}, {pipeline_mode = #tpu.pipeline_mode<synchronous>, transform_indices = @transform_2, window_bounds = array<i64: 16, 1>}, {pipeline_mode = #tpu.pipeline_mode<synchronous>, transform_indices = @transform_3, window_bounds = array<i64: 1, 128>}, {pipeline_mode = #tpu.pipeline_mode<synchronous>, transform_indices = @transform_4, window_bounds = array<i64: 9, 128>}, {pipeline_mode = #tpu.pipeline_mode<synchronous>, transform_indices = @transform_5, window_bounds = array<i64: 7, 128>}, {pipeline_mode = #tpu.pipeline_mode<synchronous>, transform_indices = @transform_6, window_bounds = array<i64: 9, 128>}, {pipeline_mode = #tpu.pipeline_mode<synchronous>, transform_indices = @transform_7, window_bounds = array<i64: 7, 128>}, {pipeline_mode = #tpu.pipeline_mode<synchronous>, transform_indices = @transform_8, window_bounds = array<i64: 25, 128>}, {pipeline_mode = #tpu.pipeline_mode<synchronous>, transform_indices = @transform_9, window_bounds = array<i64: 7, 128>}, {pipeline_mode = #tpu.pipeline_mode<synchronous>, transform_indices = @transform_10, window_bounds = array<i64: 25, 128>}, {pipeline_mode = #tpu.pipeline_mode<synchronous>, transform_indices = @transform_11, window_bounds = array<i64: 7, 128>}, {pipeline_mode = #tpu.pipeline_mode<synchronous>, transform_indices = @transform_12, window_bounds = array<i64: 9, 128>}, {pipeline_mode = #tpu.pipeline_mode<synchronous>, transform_indices = @transform_13, window_bounds = array<i64: 7, 128>}, {pipeline_mode = #tpu.pipeline_mode<synchronous>, transform_indices = @transform_14, window_bounds = array<i64: 25, 128>}, {pipeline_mode = #tpu.pipeline_mode<synchronous>, transform_indices = @transform_15, window_bounds = array<i64: 7, 128>}, {transform_indices = @transform_16, window_bounds = array<i64: 1, 16, 128>}]} {
    %c0 = arith.constant 0 : index
    %c0_0 = arith.constant 0 : index
    %0 = vector.load %arg2[%c0, %c0_0] : memref<16x128xf32, #tpu.memory_space<vmem>>, vector<16x128xf32>
    %cst = arith.constant 0.000000e+00 : f32
    %1 = vector.broadcast %cst : f32 to vector<16x128xf32>
    %2 = arith.maximumf %0, %1 : vector<16x128xf32>
    %c0_1 = arith.constant 0 : index
    %c0_2 = arith.constant 0 : index
    %3 = vector.load %arg3[%c0_1, %c0_2] : memref<16x1xi32, #tpu.memory_space<vmem>>, vector<16x1xi32>
    %c0_3 = arith.constant 0 : index
    %c0_4 = arith.constant 0 : index
    %4 = vector.load %arg4[%c0_3, %c0_4] : memref<1x128xi32, #tpu.memory_space<vmem>>, vector<1x128xi32>
    %cst_5 = arith.constant 0.000000e+00 : f32
    %5 = vector.broadcast %cst_5 : f32 to vector<16x128xf32>
    %c0_6 = arith.constant 0 : index
    %c0_7 = arith.constant 0 : index
    %c0_8 = arith.constant 0 : index
    %6 = vector.load %arg17[%c0_6, %c0_7, %c0_8] : memref<1x16x128xf32, #tpu.memory_space<vmem>>, vector<1x16x128xf32>
    %7 = vector.shape_cast %6 : vector<1x16x128xf32> to vector<16x128xf32>
    %8 = vector.shape_cast %5 : vector<16x128xf32> to vector<1x16x128xf32>
    tpu.vector_store %arg17[%c0_6, %c0_7, %c0_8], %8 {strides = array<i32>} : memref<1x16x128xf32, #tpu.memory_space<vmem>>, vector<1x16x128xf32>,
    %c0_i32 = arith.constant 0 : i32
    %9 = arith.cmpi eq, %arg0, %c0_i32 : i32
    %c1 = arith.constant 1 : index
    %10 = memref.load %arg1[%c1] : memref<8xf32, #tpu.memory_space<smem>>
    %cst_9 = arith.constant 0.000000e+00 : f32
    %11 = arith.cmpf one, %10, %cst_9 : f32
    %12 = arith.andi %9, %11 : i1
    %13 = arith.extui %12 : i1 to i32
    %c0_i32_10 = arith.constant 0 : i32
    %14 = arith.cmpi ne, %13, %c0_i32_10 : i32
    scf.if %14 {
      %c0_28 = arith.constant 0 : index
      %c0_29 = arith.constant 0 : index
      %c0_30 = arith.constant 0 : index
      %51 = vector.load %arg17[%c0_28, %c0_29, %c0_30] : memref<1x16x128xf32, #tpu.memory_space<vmem>>, vector<1x16x128xf32>
      %52 = vector.shape_cast %51 : vector<1x16x128xf32> to vector<16x128xf32>
      %c1_31 = arith.constant 1 : index
      %53 = memref.load %arg1[%c1_31] : memref<8xf32, #tpu.memory_space<smem>>
      %cst_32 = arith.constant 0xFF800000 : f32
      %54 = vector.broadcast %cst_32 : f32 to vector<16x128xf32>
      %c1_i32_33 = arith.constant 1 : i32
      %55 = tpu.dynamic_rotate %0 by %c1_i32_33 dim 0 : vector<16x128xf32>, i32 -> vector<16x128xf32>
      %c-1_i32 = arith.constant -1 : i32
      %56 = vector.broadcast %c-1_i32 : i32 to vector<16x1xi32>
      %57 = arith.addi %3, %56 : vector<16x1xi32>
      %c0_i32_34 = arith.constant 0 : i32
      %58 = vector.broadcast %c0_i32_34 : i32 to vector<16x1xi32>
      %59 = arith.cmpi sge, %57, %58 : vector<16x1xi32>
      %c-1_i32_35 = arith.constant -1 : i32
      %60 = vector.broadcast %c-1_i32_35 : i32 to vector<16x1xi32>
      %61 = arith.addi %3, %60 : vector<16x1xi32>
      %c16_i32 = arith.constant 16 : i32
      %62 = vector.broadcast %c16_i32 : i32 to vector<16x1xi32>
      %63 = arith.cmpi slt, %61, %62 : vector<16x1xi32>
      %64 = arith.andi %59, %63 : vector<16x1xi1>
      %cst_36 = arith.constant 0xFF800000 : f32
      %65 = vector.shape_cast %64 : vector<16x1xi1> to vector<16x1xi1>
      %66 = vector.broadcast %65 : vector<16x1xi1> to vector<16x128xi1>
      %67 = vector.broadcast %cst_36 : f32 to vector<16x128xf32>
      %68 = arith.select %66, %55, %67 : vector<16x128xi1>, vector<16x128xf32>
      %c4_i32 = arith.constant 4 : i32
      %69 = tpu.dynamic_rotate %68 by %c4_i32 dim 1 : vector<16x128xf32>, i32 -> vector<16x128xf32>
      %c-1_i32_37 = arith.constant -1 : i32
      %70 = vector.broadcast %c-1_i32_37 : i32 to vector<1x128xi32>
      %71 = arith.addi %4, %70 : vector<1x128xi32>
      %c0_i32_38 = arith.constant 0 : i32
      %72 = vector.broadcast %c0_i32_38 : i32 to vector<1x128xi32>
      %73 = arith.cmpi sge, %71, %72 : vector<1x128xi32>
      %c-1_i32_39 = arith.constant -1 : i32
      %74 = vector.broadcast %c-1_i32_39 : i32 to vector<1x128xi32>
      %75 = arith.addi %4, %74 : vector<1x128xi32>
      %c16_i32_40 = arith.constant 16 : i32
      %76 = vector.broadcast %c16_i32_40 : i32 to vector<1x128xi32>
      %77 = arith.cmpi slt, %75, %76 : vector<1x128xi32>
      %78 = arith.andi %73, %77 : vector<1x128xi1>
      %cst_41 = arith.constant 0xFF800000 : f32
      %79 = vector.shape_cast %78 : vector<1x128xi1> to vector<1x128xi1>
      %80 = vector.broadcast %79 : vector<1x128xi1> to vector<16x128xi1>
      %81 = vector.broadcast %cst_41 : f32 to vector<16x128xf32>
      %82 = arith.select %80, %69, %81 : vector<16x128xi1>, vector<16x128xf32>
      %83 = arith.maximumf %54, %82 : vector<16x128xf32>
      %84 = arith.maximumf %83, %68 : vector<16x128xf32>
      %c124_i32 = arith.constant 124 : i32
      %85 = tpu.dynamic_rotate %68 by %c124_i32 dim 1 : vector<16x128xf32>, i32 -> vector<16x128xf32>
      %c1_i32_42 = arith.constant 1 : i32
      %86 = vector.broadcast %c1_i32_42 : i32 to vector<1x128xi32>
      %87 = arith.addi %4, %86 : vector<1x128xi32>
      %c0_i32_43 = arith.constant 0 : i32
      %88 = vector.broadcast %c0_i32_43 : i32 to vector<1x128xi32>
      %89 = arith.cmpi sge, %87, %88 : vector<1x128xi32>
      %c1_i32_44 = arith.constant 1 : i32
      %90 = vector.broadcast %c1_i32_44 : i32 to vector<1x128xi32>
      %91 = arith.addi %4, %90 : vector<1x128xi32>
      %c16_i32_45 = arith.constant 16 : i32
      %92 = vector.broadcast %c16_i32_45 : i32 to vector<1x128xi32>
      %93 = arith.cmpi slt, %91, %92 : vector<1x128xi32>
      %94 = arith.andi %89, %93 : vector<1x128xi1>
      %cst_46 = arith.constant 0xFF800000 : f32
      %95 = vector.shape_cast %94 : vector<1x128xi1> to vector<1x128xi1>
      %96 = vector.broadcast %95 : vector<1x128xi1> to vector<16x128xi1>
      %97 = vector.broadcast %cst_46 : f32 to vector<16x128xf32>
      %98 = arith.select %96, %85, %97 : vector<16x128xi1>, vector<16x128xf32>
      %99 = arith.maximumf %84, %98 : vector<16x128xf32>
      %c4_i32_47 = arith.constant 4 : i32
      %100 = tpu.dynamic_rotate %0 by %c4_i32_47 dim 1 : vector<16x128xf32>, i32 -> vector<16x128xf32>
      %c-1_i32_48 = arith.constant -1 : i32
      %101 = vector.broadcast %c-1_i32_48 : i32 to vector<1x128xi32>
      %102 = arith.addi %4, %101 : vector<1x128xi32>
      %c0_i32_49 = arith.constant 0 : i32
      %103 = vector.broadcast %c0_i32_49 : i32 to vector<1x128xi32>
      %104 = arith.cmpi sge, %102, %103 : vector<1x128xi32>
      %c-1_i32_50 = arith.constant -1 : i32
      %105 = vector.broadcast %c-1_i32_50 : i32 to vector<1x128xi32>
      %106 = arith.addi %4, %105 : vector<1x128xi32>
      %c16_i32_51 = arith.constant 16 : i32
      %107 = vector.broadcast %c16_i32_51 : i32 to vector<1x128xi32>
      %108 = arith.cmpi slt, %106, %107 : vector<1x128xi32>
      %109 = arith.andi %104, %108 : vector<1x128xi1>
      %cst_52 = arith.constant 0xFF800000 : f32
      %110 = vector.shape_cast %109 : vector<1x128xi1> to vector<1x128xi1>
      %111 = vector.broadcast %110 : vector<1x128xi1> to vector<16x128xi1>
      %112 = vector.broadcast %cst_52 : f32 to vector<16x128xf32>
      %113 = arith.select %111, %100, %112 : vector<16x128xi1>, vector<16x128xf32>
      %114 = arith.maximumf %99, %113 : vector<16x128xf32>
      %115 = arith.maximumf %114, %0 : vector<16x128xf32>
      %c124_i32_53 = arith.constant 124 : i32
      %116 = tpu.dynamic_rotate %0 by %c124_i32_53 dim 1 : vector<16x128xf32>, i32 -> vector<16x128xf32>
      %c1_i32_54 = arith.constant 1 : i32
      %117 = vector.broadcast %c1_i32_54 : i32 to vector<1x128xi32>
      %118 = arith.addi %4, %117 : vector<1x128xi32>
      %c0_i32_55 = arith.constant 0 : i32
      %119 = vector.broadcast %c0_i32_55 : i32 to vector<1x128xi32>
      %120 = arith.cmpi sge, %118, %119 : vector<1x128xi32>
      %c1_i32_56 = arith.constant 1 : i32
      %121 = vector.broadcast %c1_i32_56 : i32 to vector<1x128xi32>
      %122 = arith.addi %4, %121 : vector<1x128xi32>
      %c16_i32_57 = arith.constant 16 : i32
      %123 = vector.broadcast %c16_i32_57 : i32 to vector<1x128xi32>
      %124 = arith.cmpi slt, %122, %123 : vector<1x128xi32>
      %125 = arith.andi %120, %124 : vector<1x128xi1>
      %cst_58 = arith.constant 0xFF800000 : f32
      %126 = vector.shape_cast %125 : vector<1x128xi1> to vector<1x128xi1>
      %127 = vector.broadcast %126 : vector<1x128xi1> to vector<16x128xi1>
      %128 = vector.broadcast %cst_58 : f32 to vector<16x128xf32>
      %129 = arith.select %127, %116, %128 : vector<16x128xi1>, vector<16x128xf32>
      %130 = arith.maximumf %115, %129 : vector<16x128xf32>
      %c15_i32 = arith.constant 15 : i32
      %131 = tpu.dynamic_rotate %0 by %c15_i32 dim 0 : vector<16x128xf32>, i32 -> vector<16x128xf32>
      %c1_i32_59 = arith.constant 1 : i32
      %132 = vector.broadcast %c1_i32_59 : i32 to vector<16x1xi32>
      %133 = arith.addi %3, %132 : vector<16x1xi32>
      %c0_i32_60 = arith.constant 0 : i32
      %134 = vector.broadcast %c0_i32_60 : i32 to vector<16x1xi32>
      %135 = arith.cmpi sge, %133, %134 : vector<16x1xi32>
      %c1_i32_61 = arith.constant 1 : i32
      %136 = vector.broadcast %c1_i32_61 : i32 to vector<16x1xi32>
      %137 = arith.addi %3, %136 : vector<16x1xi32>
      %c16_i32_62 = arith.constant 16 : i32
      %138 = vector.broadcast %c16_i32_62 : i32 to vector<16x1xi32>
      %139 = arith.cmpi slt, %137, %138 : vector<16x1xi32>
      %140 = arith.andi %135, %139 : vector<16x1xi1>
      %cst_63 = arith.constant 0xFF800000 : f32
      %141 = vector.shape_cast %140 : vector<16x1xi1> to vector<16x1xi1>
      %142 = vector.broadcast %141 : vector<16x1xi1> to vector<16x128xi1>
      %143 = vector.broadcast %cst_63 : f32 to vector<16x128xf32>
      %144 = arith.select %142, %131, %143 : vector<16x128xi1>, vector<16x128xf32>
      %c4_i32_64 = arith.constant 4 : i32
      %145 = tpu.dynamic_rotate %144 by %c4_i32_64 dim 1 : vector<16x128xf32>, i32 -> vector<16x128xf32>
      %c-1_i32_65 = arith.constant -1 : i32
      %146 = vector.broadcast %c-1_i32_65 : i32 to vector<1x128xi32>
      %147 = arith.addi %4, %146 : vector<1x128xi32>
      %c0_i32_66 = arith.constant 0 : i32
      %148 = vector.broadcast %c0_i32_66 : i32 to vector<1x128xi32>
      %149 = arith.cmpi sge, %147, %148 : vector<1x128xi32>
      %c-1_i32_67 = arith.constant -1 : i32
      %150 = vector.broadcast %c-1_i32_67 : i32 to vector<1x128xi32>
      %151 = arith.addi %4, %150 : vector<1x128xi32>
      %c16_i32_68 = arith.constant 16 : i32
      %152 = vector.broadcast %c16_i32_68 : i32 to vector<1x128xi32>
      %153 = arith.cmpi slt, %151, %152 : vector<1x128xi32>
      %154 = arith.andi %149, %153 : vector<1x128xi1>
      %cst_69 = arith.constant 0xFF800000 : f32
      %155 = vector.shape_cast %154 : vector<1x128xi1> to vector<1x128xi1>
      %156 = vector.broadcast %155 : vector<1x128xi1> to vector<16x128xi1>
      %157 = vector.broadcast %cst_69 : f32 to vector<16x128xf32>
      %158 = arith.select %156, %145, %157 : vector<16x128xi1>, vector<16x128xf32>
      %159 = arith.maximumf %130, %158 : vector<16x128xf32>
      %160 = arith.maximumf %159, %144 : vector<16x128xf32>
      %c124_i32_70 = arith.constant 124 : i32
      %161 = tpu.dynamic_rotate %144 by %c124_i32_70 dim 1 : vector<16x128xf32>, i32 -> vector<16x128xf32>
      %c1_i32_71 = arith.constant 1 : i32
      %162 = vector.broadcast %c1_i32_71 : i32 to vector<1x128xi32>
      %163 = arith.addi %4, %162 : vector<1x128xi32>
      %c0_i32_72 = arith.constant 0 : i32
      %164 = vector.broadcast %c0_i32_72 : i32 to vector<1x128xi32>
      %165 = arith.cmpi sge, %163, %164 : vector<1x128xi32>
      %c1_i32_73 = arith.constant 1 : i32
      %166 = vector.broadcast %c1_i32_73 : i32 to vector<1x128xi32>
      %167 = arith.addi %4, %166 : vector<1x128xi32>
      %c16_i32_74 = arith.constant 16 : i32
      %168 = vector.broadcast %c16_i32_74 : i32 to vector<1x128xi32>
      %169 = arith.cmpi slt, %167, %168 : vector<1x128xi32>
      %170 = arith.andi %165, %169 : vector<1x128xi1>
      %cst_75 = arith.constant 0xFF800000 : f32
      %171 = vector.shape_cast %170 : vector<1x128xi1> to vector<1x128xi1>
      %172 = vector.broadcast %171 : vector<1x128xi1> to vector<16x128xi1>
      %173 = vector.broadcast %cst_75 : f32 to vector<16x128xf32>
      %174 = arith.select %172, %161, %173 : vector<16x128xi1>, vector<16x128xf32>
      %175 = arith.maximumf %160, %174 : vector<16x128xf32>
      %c4_i32_76 = arith.constant 4 : i32
      %176 = tpu.dynamic_rotate %175 by %c4_i32_76 dim 1 : vector<16x128xf32>, i32 -> vector<16x128xf32>
      %177 = arith.addf %175, %176 : vector<16x128xf32>
      %c8_i32 = arith.constant 8 : i32
      %178 = tpu.dynamic_rotate %177 by %c8_i32 dim 1 : vector<16x128xf32>, i32 -> vector<16x128xf32>
      %179 = arith.addf %177, %178 : vector<16x128xf32>
      %c16_i32_77 = arith.constant 16 : i32
      %180 = tpu.dynamic_rotate %179 by %c16_i32_77 dim 1 : vector<16x128xf32>, i32 -> vector<16x128xf32>
      %181 = arith.addf %179, %180 : vector<16x128xf32>
      %c32_i32 = arith.constant 32 : i32
      %182 = tpu.dynamic_rotate %181 by %c32_i32 dim 1 : vector<16x128xf32>, i32 -> vector<16x128xf32>
      %183 = arith.addf %181, %182 : vector<16x128xf32>
      %c64_i32 = arith.constant 64 : i32
      %184 = tpu.dynamic_rotate %183 by %c64_i32 dim 1 : vector<16x128xf32>, i32 -> vector<16x128xf32>
      %185 = arith.addf %183, %184 : vector<16x128xf32>
      %cst_78 = arith.constant dense<0.000000e+00> : vector<128xf32>
      %186 = vector.multi_reduction <add>, %185, %cst_78 [0] : vector<16x128xf32> to vector<128xf32>
      %187 = vector.shape_cast %186 : vector<128xf32> to vector<1x128xf32>
      %cst_79 = arith.constant 0.001953125 : f32
      %188 = vector.broadcast %cst_79 : f32 to vector<1x128xf32>
      %189 = arith.mulf %187, %188 : vector<1x128xf32>
      %190 = vector.broadcast %189 : vector<1x128xf32> to vector<16x128xf32>
      %191 = arith.subf %175, %190 : vector<16x128xf32>
      %192 = arith.mulf %191, %191 : vector<16x128xf32>
      %c4_i32_80 = arith.constant 4 : i32
      %193 = tpu.dynamic_rotate %192 by %c4_i32_80 dim 1 : vector<16x128xf32>, i32 -> vector<16x128xf32>
      %194 = arith.addf %192, %193 : vector<16x128xf32>
      %c8_i32_81 = arith.constant 8 : i32
      %195 = tpu.dynamic_rotate %194 by %c8_i32_81 dim 1 : vector<16x128xf32>, i32 -> vector<16x128xf32>
      %196 = arith.addf %194, %195 : vector<16x128xf32>
      %c16_i32_82 = arith.constant 16 : i32
      %197 = tpu.dynamic_rotate %196 by %c16_i32_82 dim 1 : vector<16x128xf32>, i32 -> vector<16x128xf32>
      %198 = arith.addf %196, %197 : vector<16x128xf32>
      %c32_i32_83 = arith.constant 32 : i32
      %199 = tpu.dynamic_rotate %198 by %c32_i32_83 dim 1 : vector<16x128xf32>, i32 -> vector<16x128xf32>
      %200 = arith.addf %198, %199 : vector<16x128xf32>
      %c64_i32_84 = arith.constant 64 : i32
      %201 = tpu.dynamic_rotate %200 by %c64_i32_84 dim 1 : vector<16x128xf32>, i32 -> vector<16x128xf32>
      %202 = arith.addf %200, %201 : vector<16x128xf32>
      %cst_85 = arith.constant dense<0.000000e+00> : vector<128xf32>
      %203 = vector.multi_reduction <add>, %202, %cst_85 [0] : vector<16x128xf32> to vector<128xf32>
      %204 = vector.shape_cast %203 : vector<128xf32> to vector<1x128xf32>
      %cst_86 = arith.constant 0.001953125 : f32
      %205 = vector.broadcast %cst_86 : f32 to vector<1x128xf32>
      %206 = arith.mulf %204, %205 : vector<1x128xf32>
      %cst_87 = arith.constant 9.99999974E-6 : f32
      %207 = vector.broadcast %cst_87 : f32 to vector<1x128xf32>
      %208 = arith.addf %206, %207 : vector<1x128xf32>
      %209 = math.rsqrt %208 : vector<1x128xf32>
      %210 = vector.broadcast %209 : vector<1x128xf32> to vector<16x128xf32>
      %211 = arith.mulf %191, %210 : vector<16x128xf32>
      %212 = vector.broadcast %53 : f32 to vector<16x128xf32>
      %213 = arith.mulf %212, %211 : vector<16x128xf32>
      %214 = arith.addf %52, %213 : vector<16x128xf32>
      %c0_88 = arith.constant 0 : index
      %c0_89 = arith.constant 0 : index
      %c0_90 = arith.constant 0 : index
      %215 = vector.load %arg17[%c0_88, %c0_89, %c0_90] : memref<1x16x128xf32, #tpu.memory_space<vmem>>, vector<1x16x128xf32>
      %216 = vector.shape_cast %215 : vector<1x16x128xf32> to vector<16x128xf32>
      %217 = vector.shape_cast %214 : vector<16x128xf32> to vector<1x16x128xf32>
      tpu.vector_store %arg17[%c0_88, %c0_89, %c0_90], %217 {strides = array<i32>} : memref<1x16x128xf32, #tpu.memory_space<vmem>>, vector<1x16x128xf32>,
    } else {
    }
    %c1_i32 = arith.constant 1 : i32
    %15 = arith.cmpi eq, %arg0, %c1_i32 : i32
    %c2 = arith.constant 2 : index
    %16 = memref.load %arg1[%c2] : memref<8xf32, #tpu.memory_space<smem>>
    %cst_11 = arith.constant 0.000000e+00 : f32
    %17 = arith.cmpf one, %16, %cst_11 : f32
    %18 = arith.andi %15, %17 : i1
    %19 = arith.extui %18 : i1 to i32
    %c0_i32_12 = arith.constant 0 : i32
    %20 = arith.cmpi ne, %19, %c0_i32_12 : i32
    scf.if %20 {
      %c0_28 = arith.constant 0 : index
      %c0_29 = arith.constant 0 : index
      %c0_30 = arith.constant 0 : index
      %51 = vector.load %arg17[%c0_28, %c0_29, %c0_30] : memref<1x16x128xf32, #tpu.memory_space<vmem>>, vector<1x16x128xf32>
      %52 = vector.shape_cast %51 : vector<1x16x128xf32> to vector<16x128xf32>
      %c2_31 = arith.constant 2 : index
      %53 = memref.load %arg1[%c2_31] : memref<8xf32, #tpu.memory_space<smem>>
      %cst_32 = arith.constant 0.000000e+00 : f32
      %54 = vector.broadcast %cst_32 : f32 to vector<16x128xf32>
      %c1_i32_33 = arith.constant 1 : i32
      %55 = tpu.dynamic_rotate %0 by %c1_i32_33 dim 0 : vector<16x128xf32>, i32 -> vector<16x128xf32>
      %c-1_i32 = arith.constant -1 : i32
      %56 = vector.broadcast %c-1_i32 : i32 to vector<16x1xi32>
      %57 = arith.addi %3, %56 : vector<16x1xi32>
      %c0_i32_34 = arith.constant 0 : i32
      %58 = vector.broadcast %c0_i32_34 : i32 to vector<16x1xi32>
      %59 = arith.cmpi sge, %57, %58 : vector<16x1xi32>
      %c-1_i32_35 = arith.constant -1 : i32
      %60 = vector.broadcast %c-1_i32_35 : i32 to vector<16x1xi32>
      %61 = arith.addi %3, %60 : vector<16x1xi32>
      %c16_i32 = arith.constant 16 : i32
      %62 = vector.broadcast %c16_i32 : i32 to vector<16x1xi32>
      %63 = arith.cmpi slt, %61, %62 : vector<16x1xi32>
      %64 = arith.andi %59, %63 : vector<16x1xi1>
      %cst_36 = arith.constant 0.000000e+00 : f32
      %65 = vector.shape_cast %64 : vector<16x1xi1> to vector<16x1xi1>
      %66 = vector.broadcast %65 : vector<16x1xi1> to vector<16x128xi1>
      %67 = vector.broadcast %cst_36 : f32 to vector<16x128xf32>
      %68 = arith.select %66, %55, %67 : vector<16x128xi1>, vector<16x128xf32>
      %c4_i32 = arith.constant 4 : i32
      %69 = tpu.dynamic_rotate %68 by %c4_i32 dim 1 : vector<16x128xf32>, i32 -> vector<16x128xf32>
      %c-1_i32_37 = arith.constant -1 : i32
      %70 = vector.broadcast %c-1_i32_37 : i32 to vector<1x128xi32>
      %71 = arith.addi %4, %70 : vector<1x128xi32>
      %c0_i32_38 = arith.constant 0 : i32
      %72 = vector.broadcast %c0_i32_38 : i32 to vector<1x128xi32>
      %73 = arith.cmpi sge, %71, %72 : vector<1x128xi32>
      %c-1_i32_39 = arith.constant -1 : i32
      %74 = vector.broadcast %c-1_i32_39 : i32 to vector<1x128xi32>
      %75 = arith.addi %4, %74 : vector<1x128xi32>
      %c16_i32_40 = arith.constant 16 : i32
      %76 = vector.broadcast %c16_i32_40 : i32 to vector<1x128xi32>
      %77 = arith.cmpi slt, %75, %76 : vector<1x128xi32>
      %78 = arith.andi %73, %77 : vector<1x128xi1>
      %cst_41 = arith.constant 0.000000e+00 : f32
      %79 = vector.shape_cast %78 : vector<1x128xi1> to vector<1x128xi1>
      %80 = vector.broadcast %79 : vector<1x128xi1> to vector<16x128xi1>
      %81 = vector.broadcast %cst_41 : f32 to vector<16x128xf32>
      %82 = arith.select %80, %69, %81 : vector<16x128xi1>, vector<16x128xf32>
      %83 = arith.addf %54, %82 : vector<16x128xf32>
      %84 = arith.addf %83, %68 : vector<16x128xf32>
      %c124_i32 = arith.constant 124 : i32
      %85 = tpu.dynamic_rotate %68 by %c124_i32 dim 1 : vector<16x128xf32>, i32 -> vector<16x128xf32>
      %c1_i32_42 = arith.constant 1 : i32
      %86 = vector.broadcast %c1_i32_42 : i32 to vector<1x128xi32>
      %87 = arith.addi %4, %86 : vector<1x128xi32>
      %c0_i32_43 = arith.constant 0 : i32
      %88 = vector.broadcast %c0_i32_43 : i32 to vector<1x128xi32>
      %89 = arith.cmpi sge, %87, %88 : vector<1x128xi32>
      %c1_i32_44 = arith.constant 1 : i32
      %90 = vector.broadcast %c1_i32_44 : i32 to vector<1x128xi32>
      %91 = arith.addi %4, %90 : vector<1x128xi32>
      %c16_i32_45 = arith.constant 16 : i32
      %92 = vector.broadcast %c16_i32_45 : i32 to vector<1x128xi32>
      %93 = arith.cmpi slt, %91, %92 : vector<1x128xi32>
      %94 = arith.andi %89, %93 : vector<1x128xi1>
      %cst_46 = arith.constant 0.000000e+00 : f32
      %95 = vector.shape_cast %94 : vector<1x128xi1> to vector<1x128xi1>
      %96 = vector.broadcast %95 : vector<1x128xi1> to vector<16x128xi1>
      %97 = vector.broadcast %cst_46 : f32 to vector<16x128xf32>
      %98 = arith.select %96, %85, %97 : vector<16x128xi1>, vector<16x128xf32>
      %99 = arith.addf %84, %98 : vector<16x128xf32>
      %c4_i32_47 = arith.constant 4 : i32
      %100 = tpu.dynamic_rotate %0 by %c4_i32_47 dim 1 : vector<16x128xf32>, i32 -> vector<16x128xf32>
      %c-1_i32_48 = arith.constant -1 : i32
      %101 = vector.broadcast %c-1_i32_48 : i32 to vector<1x128xi32>
      %102 = arith.addi %4, %101 : vector<1x128xi32>
      %c0_i32_49 = arith.constant 0 : i32
      %103 = vector.broadcast %c0_i32_49 : i32 to vector<1x128xi32>
      %104 = arith.cmpi sge, %102, %103 : vector<1x128xi32>
      %c-1_i32_50 = arith.constant -1 : i32
      %105 = vector.broadcast %c-1_i32_50 : i32 to vector<1x128xi32>
      %106 = arith.addi %4, %105 : vector<1x128xi32>
      %c16_i32_51 = arith.constant 16 : i32
      %107 = vector.broadcast %c16_i32_51 : i32 to vector<1x128xi32>
      %108 = arith.cmpi slt, %106, %107 : vector<1x128xi32>
      %109 = arith.andi %104, %108 : vector<1x128xi1>
      %cst_52 = arith.constant 0.000000e+00 : f32
      %110 = vector.shape_cast %109 : vector<1x128xi1> to vector<1x128xi1>
      %111 = vector.broadcast %110 : vector<1x128xi1> to vector<16x128xi1>
      %112 = vector.broadcast %cst_52 : f32 to vector<16x128xf32>
      %113 = arith.select %111, %100, %112 : vector<16x128xi1>, vector<16x128xf32>
      %114 = arith.addf %99, %113 : vector<16x128xf32>
      %115 = arith.addf %114, %0 : vector<16x128xf32>
      %c124_i32_53 = arith.constant 124 : i32
      %116 = tpu.dynamic_rotate %0 by %c124_i32_53 dim 1 : vector<16x128xf32>, i32 -> vector<16x128xf32>
      %c1_i32_54 = arith.constant 1 : i32
      %117 = vector.broadcast %c1_i32_54 : i32 to vector<1x128xi32>
      %118 = arith.addi %4, %117 : vector<1x128xi32>
      %c0_i32_55 = arith.constant 0 : i32
      %119 = vector.broadcast %c0_i32_55 : i32 to vector<1x128xi32>
      %120 = arith.cmpi sge, %118, %119 : vector<1x128xi32>
      %c1_i32_56 = arith.constant 1 : i32
      %121 = vector.broadcast %c1_i32_56 : i32 to vector<1x128xi32>
      %122 = arith.addi %4, %121 : vector<1x128xi32>
      %c16_i32_57 = arith.constant 16 : i32
      %123 = vector.broadcast %c16_i32_57 : i32 to vector<1x128xi32>
      %124 = arith.cmpi slt, %122, %123 : vector<1x128xi32>
      %125 = arith.andi %120, %124 : vector<1x128xi1>
      %cst_58 = arith.constant 0.000000e+00 : f32
      %126 = vector.shape_cast %125 : vector<1x128xi1> to vector<1x128xi1>
      %127 = vector.broadcast %126 : vector<1x128xi1> to vector<16x128xi1>
      %128 = vector.broadcast %cst_58 : f32 to vector<16x128xf32>
      %129 = arith.select %127, %116, %128 : vector<16x128xi1>, vector<16x128xf32>
      %130 = arith.addf %115, %129 : vector<16x128xf32>
      %c15_i32 = arith.constant 15 : i32
      %131 = tpu.dynamic_rotate %0 by %c15_i32 dim 0 : vector<16x128xf32>, i32 -> vector<16x128xf32>
      %c1_i32_59 = arith.constant 1 : i32
      %132 = vector.broadcast %c1_i32_59 : i32 to vector<16x1xi32>
      %133 = arith.addi %3, %132 : vector<16x1xi32>
      %c0_i32_60 = arith.constant 0 : i32
      %134 = vector.broadcast %c0_i32_60 : i32 to vector<16x1xi32>
      %135 = arith.cmpi sge, %133, %134 : vector<16x1xi32>
      %c1_i32_61 = arith.constant 1 : i32
      %136 = vector.broadcast %c1_i32_61 : i32 to vector<16x1xi32>
      %137 = arith.addi %3, %136 : vector<16x1xi32>
      %c16_i32_62 = arith.constant 16 : i32
      %138 = vector.broadcast %c16_i32_62 : i32 to vector<16x1xi32>
      %139 = arith.cmpi slt, %137, %138 : vector<16x1xi32>
      %140 = arith.andi %135, %139 : vector<16x1xi1>
      %cst_63 = arith.constant 0.000000e+00 : f32
      %141 = vector.shape_cast %140 : vector<16x1xi1> to vector<16x1xi1>
      %142 = vector.broadcast %141 : vector<16x1xi1> to vector<16x128xi1>
      %143 = vector.broadcast %cst_63 : f32 to vector<16x128xf32>
      %144 = arith.select %142, %131, %143 : vector<16x128xi1>, vector<16x128xf32>
      %c4_i32_64 = arith.constant 4 : i32
      %145 = tpu.dynamic_rotate %144 by %c4_i32_64 dim 1 : vector<16x128xf32>, i32 -> vector<16x128xf32>
      %c-1_i32_65 = arith.constant -1 : i32
      %146 = vector.broadcast %c-1_i32_65 : i32 to vector<1x128xi32>
      %147 = arith.addi %4, %146 : vector<1x128xi32>
      %c0_i32_66 = arith.constant 0 : i32
      %148 = vector.broadcast %c0_i32_66 : i32 to vector<1x128xi32>
      %149 = arith.cmpi sge, %147, %148 : vector<1x128xi32>
      %c-1_i32_67 = arith.constant -1 : i32
      %150 = vector.broadcast %c-1_i32_67 : i32 to vector<1x128xi32>
      %151 = arith.addi %4, %150 : vector<1x128xi32>
      %c16_i32_68 = arith.constant 16 : i32
      %152 = vector.broadcast %c16_i32_68 : i32 to vector<1x128xi32>
      %153 = arith.cmpi slt, %151, %152 : vector<1x128xi32>
      %154 = arith.andi %149, %153 : vector<1x128xi1>
      %cst_69 = arith.constant 0.000000e+00 : f32
      %155 = vector.shape_cast %154 : vector<1x128xi1> to vector<1x128xi1>
      %156 = vector.broadcast %155 : vector<1x128xi1> to vector<16x128xi1>
      %157 = vector.broadcast %cst_69 : f32 to vector<16x128xf32>
      %158 = arith.select %156, %145, %157 : vector<16x128xi1>, vector<16x128xf32>
      %159 = arith.addf %130, %158 : vector<16x128xf32>
      %160 = arith.addf %159, %144 : vector<16x128xf32>
      %c124_i32_70 = arith.constant 124 : i32
      %161 = tpu.dynamic_rotate %144 by %c124_i32_70 dim 1 : vector<16x128xf32>, i32 -> vector<16x128xf32>
      %c1_i32_71 = arith.constant 1 : i32
      %162 = vector.broadcast %c1_i32_71 : i32 to vector<1x128xi32>
      %163 = arith.addi %4, %162 : vector<1x128xi32>
      %c0_i32_72 = arith.constant 0 : i32
      %164 = vector.broadcast %c0_i32_72 : i32 to vector<1x128xi32>
      %165 = arith.cmpi sge, %163, %164 : vector<1x128xi32>
      %c1_i32_73 = arith.constant 1 : i32
      %166 = vector.broadcast %c1_i32_73 : i32 to vector<1x128xi32>
      %167 = arith.addi %4, %166 : vector<1x128xi32>
      %c16_i32_74 = arith.constant 16 : i32
      %168 = vector.broadcast %c16_i32_74 : i32 to vector<1x128xi32>
      %169 = arith.cmpi slt, %167, %168 : vector<1x128xi32>
      %170 = arith.andi %165, %169 : vector<1x128xi1>
      %cst_75 = arith.constant 0.000000e+00 : f32
      %171 = vector.shape_cast %170 : vector<1x128xi1> to vector<1x128xi1>
      %172 = vector.broadcast %171 : vector<1x128xi1> to vector<16x128xi1>
      %173 = vector.broadcast %cst_75 : f32 to vector<16x128xf32>
      %174 = arith.select %172, %161, %173 : vector<16x128xi1>, vector<16x128xf32>
      %175 = arith.addf %160, %174 : vector<16x128xf32>
      %c0_i32_76 = arith.constant 0 : i32
      %176 = vector.broadcast %c0_i32_76 : i32 to vector<16x1xi32>
      %177 = arith.cmpi eq, %3, %176 : vector<16x1xi32>
      %cst_77 = arith.constant 1.000000e+00 : f32
      %cst_78 = arith.constant 0.000000e+00 : f32
      %178 = vector.broadcast %cst_77 : f32 to vector<16x1xf32>
      %179 = vector.broadcast %cst_78 : f32 to vector<16x1xf32>
      %180 = arith.select %177, %178, %179 : vector<16x1xi1>, vector<16x1xf32>
      %cst_79 = arith.constant 3.000000e+00 : f32
      %181 = vector.broadcast %cst_79 : f32 to vector<16x1xf32>
      %182 = arith.subf %181, %180 : vector<16x1xf32>
      %c15_i32_80 = arith.constant 15 : i32
      %183 = vector.broadcast %c15_i32_80 : i32 to vector<16x1xi32>
      %184 = arith.cmpi eq, %3, %183 : vector<16x1xi32>
      %cst_81 = arith.constant 1.000000e+00 : f32
      %cst_82 = arith.constant 0.000000e+00 : f32
      %185 = vector.broadcast %cst_81 : f32 to vector<16x1xf32>
      %186 = vector.broadcast %cst_82 : f32 to vector<16x1xf32>
      %187 = arith.select %184, %185, %186 : vector<16x1xi1>, vector<16x1xf32>
      %188 = arith.subf %182, %187 : vector<16x1xf32>
      %c0_i32_83 = arith.constant 0 : i32
      %189 = vector.broadcast %c0_i32_83 : i32 to vector<1x128xi32>
      %190 = arith.cmpi eq, %4, %189 : vector<1x128xi32>
      %cst_84 = arith.constant 1.000000e+00 : f32
      %cst_85 = arith.constant 0.000000e+00 : f32
      %191 = vector.broadcast %cst_84 : f32 to vector<1x128xf32>
      %192 = vector.broadcast %cst_85 : f32 to vector<1x128xf32>
      %193 = arith.select %190, %191, %192 : vector<1x128xi1>, vector<1x128xf32>
      %cst_86 = arith.constant 3.000000e+00 : f32
      %194 = vector.broadcast %cst_86 : f32 to vector<1x128xf32>
      %195 = arith.subf %194, %193 : vector<1x128xf32>
      %c15_i32_87 = arith.constant 15 : i32
      %196 = vector.broadcast %c15_i32_87 : i32 to vector<1x128xi32>
      %197 = arith.cmpi eq, %4, %196 : vector<1x128xi32>
      %cst_88 = arith.constant 1.000000e+00 : f32
      %cst_89 = arith.constant 0.000000e+00 : f32
      %198 = vector.broadcast %cst_88 : f32 to vector<1x128xf32>
      %199 = vector.broadcast %cst_89 : f32 to vector<1x128xf32>
      %200 = arith.select %197, %198, %199 : vector<1x128xi1>, vector<1x128xf32>
      %201 = arith.subf %195, %200 : vector<1x128xf32>
      %202 = vector.broadcast %188 : vector<16x1xf32> to vector<16x128xf32>
      %203 = vector.broadcast %201 : vector<1x128xf32> to vector<16x128xf32>
      %204 = arith.mulf %202, %203 : vector<16x128xf32>
      %205 = arith.divf %175, %204 : vector<16x128xf32>
      %c4_i32_90 = arith.constant 4 : i32
      %206 = tpu.dynamic_rotate %205 by %c4_i32_90 dim 1 : vector<16x128xf32>, i32 -> vector<16x128xf32>
      %207 = arith.addf %205, %206 : vector<16x128xf32>
      %c8_i32 = arith.constant 8 : i32
      %208 = tpu.dynamic_rotate %207 by %c8_i32 dim 1 : vector<16x128xf32>, i32 -> vector<16x128xf32>
      %209 = arith.addf %207, %208 : vector<16x128xf32>
      %c16_i32_91 = arith.constant 16 : i32
      %210 = tpu.dynamic_rotate %209 by %c16_i32_91 dim 1 : vector<16x128xf32>, i32 -> vector<16x128xf32>
      %211 = arith.addf %209, %210 : vector<16x128xf32>
      %c32_i32 = arith.constant 32 : i32
      %212 = tpu.dynamic_rotate %211 by %c32_i32 dim 1 : vector<16x128xf32>, i32 -> vector<16x128xf32>
      %213 = arith.addf %211, %212 : vector<16x128xf32>
      %c64_i32 = arith.constant 64 : i32
      %214 = tpu.dynamic_rotate %213 by %c64_i32 dim 1 : vector<16x128xf32>, i32 -> vector<16x128xf32>
      %215 = arith.addf %213, %214 : vector<16x128xf32>
      %cst_92 = arith.constant dense<0.000000e+00> : vector<128xf32>
      %216 = vector.multi_reduction <add>, %215, %cst_92 [0] : vector<16x128xf32> to vector<128xf32>
      %217 = vector.shape_cast %216 : vector<128xf32> to vector<1x128xf32>
      %cst_93 = arith.constant 0.001953125 : f32
      %218 = vector.broadcast %cst_93 : f32 to vector<1x128xf32>
      %219 = arith.mulf %217, %218 : vector<1x128xf32>
      %220 = vector.broadcast %219 : vector<1x128xf32> to vector<16x128xf32>
      %221 = arith.subf %205, %220 : vector<16x128xf32>
      %222 = arith.mulf %221, %221 : vector<16x128xf32>
      %c4_i32_94 = arith.constant 4 : i32
      %223 = tpu.dynamic_rotate %222 by %c4_i32_94 dim 1 : vector<16x128xf32>, i32 -> vector<16x128xf32>
      %224 = arith.addf %222, %223 : vector<16x128xf32>
      %c8_i32_95 = arith.constant 8 : i32
      %225 = tpu.dynamic_rotate %224 by %c8_i32_95 dim 1 : vector<16x128xf32>, i32 -> vector<16x128xf32>
      %226 = arith.addf %224, %225 : vector<16x128xf32>
      %c16_i32_96 = arith.constant 16 : i32
      %227 = tpu.dynamic_rotate %226 by %c16_i32_96 dim 1 : vector<16x128xf32>, i32 -> vector<16x128xf32>
      %228 = arith.addf %226, %227 : vector<16x128xf32>
      %c32_i32_97 = arith.constant 32 : i32
      %229 = tpu.dynamic_rotate %228 by %c32_i32_97 dim 1 : vector<16x128xf32>, i32 -> vector<16x128xf32>
      %230 = arith.addf %228, %229 : vector<16x128xf32>
      %c64_i32_98 = arith.constant 64 : i32
      %231 = tpu.dynamic_rotate %230 by %c64_i32_98 dim 1 : vector<16x128xf32>, i32 -> vector<16x128xf32>
      %232 = arith.addf %230, %231 : vector<16x128xf32>
      %cst_99 = arith.constant dense<0.000000e+00> : vector<128xf32>
      %233 = vector.multi_reduction <add>, %232, %cst_99 [0] : vector<16x128xf32> to vector<128xf32>
      %234 = vector.shape_cast %233 : vector<128xf32> to vector<1x128xf32>
      %cst_100 = arith.constant 0.001953125 : f32
      %235 = vector.broadcast %cst_100 : f32 to vector<1x128xf32>
      %236 = arith.mulf %234, %235 : vector<1x128xf32>
      %cst_101 = arith.constant 9.99999974E-6 : f32
      %237 = vector.broadcast %cst_101 : f32 to vector<1x128xf32>
      %238 = arith.addf %236, %237 : vector<1x128xf32>
      %239 = math.rsqrt %238 : vector<1x128xf32>
      %240 = vector.broadcast %239 : vector<1x128xf32> to vector<16x128xf32>
      %241 = arith.mulf %221, %240 : vector<16x128xf32>
      %242 = vector.broadcast %53 : f32 to vector<16x128xf32>
      %243 = arith.mulf %242, %241 : vector<16x128xf32>
      %244 = arith.addf %52, %243 : vector<16x128xf32>
      %c0_102 = arith.constant 0 : index
      %c0_103 = arith.constant 0 : index
      %c0_104 = arith.constant 0 : index
      %245 = vector.load %arg17[%c0_102, %c0_103, %c0_104] : memref<1x16x128xf32, #tpu.memory_space<vmem>>, vector<1x16x128xf32>
      %246 = vector.shape_cast %245 : vector<1x16x128xf32> to vector<16x128xf32>
      %247 = vector.shape_cast %244 : vector<16x128xf32> to vector<1x16x128xf32>
      tpu.vector_store %arg17[%c0_102, %c0_103, %c0_104], %247 {strides = array<i32>} : memref<1x16x128xf32, #tpu.memory_space<vmem>>, vector<1x16x128xf32>,
    } else {
    }
    %c0_i32_13 = arith.constant 0 : i32
    %21 = arith.cmpi eq, %arg0, %c0_i32_13 : i32
    %c3 = arith.constant 3 : index
    %22 = memref.load %arg1[%c3] : memref<8xf32, #tpu.memory_space<smem>>
    %cst_14 = arith.constant 0.000000e+00 : f32
    %23 = arith.cmpf one, %22, %cst_14 : f32
    %24 = arith.andi %21, %23 : i1
    %25 = arith.extui %24 : i1 to i32
    %c0_i32_15 = arith.constant 0 : i32
    %26 = arith.cmpi ne, %25, %c0_i32_15 : i32
    scf.if %26 {
      %c0_28 = arith.constant 0 : index
      %c0_29 = arith.constant 0 : index
      %c0_30 = arith.constant 0 : index
      %51 = vector.load %arg17[%c0_28, %c0_29, %c0_30] : memref<1x16x128xf32, #tpu.memory_space<vmem>>, vector<1x16x128xf32>
      %52 = vector.shape_cast %51 : vector<1x16x128xf32> to vector<16x128xf32>
      %c3_31 = arith.constant 3 : index
      %53 = memref.load %arg1[%c3_31] : memref<8xf32, #tpu.memory_space<smem>>
      %54 = vector.broadcast %53 : f32 to vector<16x128xf32>
      %55 = arith.mulf %54, %0 : vector<16x128xf32>
      %56 = arith.addf %52, %55 : vector<16x128xf32>
      %c0_32 = arith.constant 0 : index
      %c0_33 = arith.constant 0 : index
      %c0_34 = arith.constant 0 : index
      %57 = vector.load %arg17[%c0_32, %c0_33, %c0_34] : memref<1x16x128xf32, #tpu.memory_space<vmem>>, vector<1x16x128xf32>
      %58 = vector.shape_cast %57 : vector<1x16x128xf32> to vector<16x128xf32>
      %59 = vector.shape_cast %56 : vector<16x128xf32> to vector<1x16x128xf32>
      tpu.vector_store %arg17[%c0_32, %c0_33, %c0_34], %59 {strides = array<i32>} : memref<1x16x128xf32, #tpu.memory_space<vmem>>, vector<1x16x128xf32>,
    } else {
    }
    %c0_i32_16 = arith.constant 0 : i32
    %27 = arith.cmpi eq, %arg0, %c0_i32_16 : i32
    %c4 = arith.constant 4 : index
    %28 = memref.load %arg1[%c4] : memref<8xf32, #tpu.memory_space<smem>>
    %cst_17 = arith.constant 0.000000e+00 : f32
    %29 = arith.cmpf one, %28, %cst_17 : f32
    %30 = arith.andi %27, %29 : i1
    %31 = arith.extui %30 : i1 to i32
    %c0_i32_18 = arith.constant 0 : i32
    %32 = arith.cmpi ne, %31, %c0_i32_18 : i32
    scf.if %32 {
      %c0_28 = arith.constant 0 : index
      %c0_29 = arith.constant 0 : index
      %c0_30 = arith.constant 0 : index
      %51 = vector.load %arg17[%c0_28, %c0_29, %c0_30] : memref<1x16x128xf32, #tpu.memory_space<vmem>>, vector<1x16x128xf32>
      %52 = vector.shape_cast %51 : vector<1x16x128xf32> to vector<16x128xf32>
      %c4_31 = arith.constant 4 : index
      %53 = memref.load %arg1[%c4_31] : memref<8xf32, #tpu.memory_space<smem>>
      %cst_32 = arith.constant 0.000000e+00 : f32
      %54 = vector.broadcast %cst_32 : f32 to vector<16x128xf32>
      %c1_i32_33 = arith.constant 1 : i32
      %55 = tpu.dynamic_rotate %2 by %c1_i32_33 dim 0 : vector<16x128xf32>, i32 -> vector<16x128xf32>
      %c-1_i32 = arith.constant -1 : i32
      %56 = vector.broadcast %c-1_i32 : i32 to vector<16x1xi32>
      %57 = arith.addi %3, %56 : vector<16x1xi32>
      %c0_i32_34 = arith.constant 0 : i32
      %58 = vector.broadcast %c0_i32_34 : i32 to vector<16x1xi32>
      %59 = arith.cmpi sge, %57, %58 : vector<16x1xi32>
      %c-1_i32_35 = arith.constant -1 : i32
      %60 = vector.broadcast %c-1_i32_35 : i32 to vector<16x1xi32>
      %61 = arith.addi %3, %60 : vector<16x1xi32>
      %c16_i32 = arith.constant 16 : i32
      %62 = vector.broadcast %c16_i32 : i32 to vector<16x1xi32>
      %63 = arith.cmpi slt, %61, %62 : vector<16x1xi32>
      %64 = arith.andi %59, %63 : vector<16x1xi1>
      %cst_36 = arith.constant 0.000000e+00 : f32
      %65 = vector.shape_cast %64 : vector<16x1xi1> to vector<16x1xi1>
      %66 = vector.broadcast %65 : vector<16x1xi1> to vector<16x128xi1>
      %67 = vector.broadcast %cst_36 : f32 to vector<16x128xf32>
      %68 = arith.select %66, %55, %67 : vector<16x128xi1>, vector<16x128xf32>
      %c4_i32 = arith.constant 4 : i32
      %69 = tpu.dynamic_rotate %68 by %c4_i32 dim 1 : vector<16x128xf32>, i32 -> vector<16x128xf32>
      %c-1_i32_37 = arith.constant -1 : i32
      %70 = vector.broadcast %c-1_i32_37 : i32 to vector<1x128xi32>
      %71 = arith.addi %4, %70 : vector<1x128xi32>
      %c0_i32_38 = arith.constant 0 : i32
      %72 = vector.broadcast %c0_i32_38 : i32 to vector<1x128xi32>
      %73 = arith.cmpi sge, %71, %72 : vector<1x128xi32>
      %c-1_i32_39 = arith.constant -1 : i32
      %74 = vector.broadcast %c-1_i32_39 : i32 to vector<1x128xi32>
      %75 = arith.addi %4, %74 : vector<1x128xi32>
      %c16_i32_40 = arith.constant 16 : i32
      %76 = vector.broadcast %c16_i32_40 : i32 to vector<1x128xi32>
      %77 = arith.cmpi slt, %75, %76 : vector<1x128xi32>
      %78 = arith.andi %73, %77 : vector<1x128xi1>
      %cst_41 = arith.constant 0.000000e+00 : f32
      %79 = vector.shape_cast %78 : vector<1x128xi1> to vector<1x128xi1>
      %80 = vector.broadcast %79 : vector<1x128xi1> to vector<16x128xi1>
      %81 = vector.broadcast %cst_41 : f32 to vector<16x128xf32>
      %82 = arith.select %80, %69, %81 : vector<16x128xi1>, vector<16x128xf32>
      %c0_42 = arith.constant 0 : index
      %c0_43 = arith.constant 0 : index
      %83 = vector.load %arg5[%c0_42, %c0_43] : memref<9x128xf32, #tpu.memory_space<vmem>>, vector<1x128xf32>
      %84 = vector.shape_cast %83 : vector<1x128xf32> to vector<128xf32>
      %85 = vector.shape_cast %84 : vector<128xf32> to vector<1x128xf32>
      %86 = vector.broadcast %85 : vector<1x128xf32> to vector<16x128xf32>
      %87 = arith.mulf %82, %86 : vector<16x128xf32>
      %88 = arith.addf %54, %87 : vector<16x128xf32>
      %c1_44 = arith.constant 1 : index
      %c0_45 = arith.constant 0 : index
      %89 = vector.load %arg5[%c1_44, %c0_45] : memref<9x128xf32, #tpu.memory_space<vmem>>, vector<1x128xf32>
      %90 = vector.shape_cast %89 : vector<1x128xf32> to vector<128xf32>
      %91 = vector.shape_cast %90 : vector<128xf32> to vector<1x128xf32>
      %92 = vector.broadcast %91 : vector<1x128xf32> to vector<16x128xf32>
      %93 = arith.mulf %68, %92 : vector<16x128xf32>
      %94 = arith.addf %88, %93 : vector<16x128xf32>
      %c124_i32 = arith.constant 124 : i32
      %95 = tpu.dynamic_rotate %68 by %c124_i32 dim 1 : vector<16x128xf32>, i32 -> vector<16x128xf32>
      %c1_i32_46 = arith.constant 1 : i32
      %96 = vector.broadcast %c1_i32_46 : i32 to vector<1x128xi32>
      %97 = arith.addi %4, %96 : vector<1x128xi32>
      %c0_i32_47 = arith.constant 0 : i32
      %98 = vector.broadcast %c0_i32_47 : i32 to vector<1x128xi32>
      %99 = arith.cmpi sge, %97, %98 : vector<1x128xi32>
      %c1_i32_48 = arith.constant 1 : i32
      %100 = vector.broadcast %c1_i32_48 : i32 to vector<1x128xi32>
      %101 = arith.addi %4, %100 : vector<1x128xi32>
      %c16_i32_49 = arith.constant 16 : i32
      %102 = vector.broadcast %c16_i32_49 : i32 to vector<1x128xi32>
      %103 = arith.cmpi slt, %101, %102 : vector<1x128xi32>
      %104 = arith.andi %99, %103 : vector<1x128xi1>
      %cst_50 = arith.constant 0.000000e+00 : f32
      %105 = vector.shape_cast %104 : vector<1x128xi1> to vector<1x128xi1>
      %106 = vector.broadcast %105 : vector<1x128xi1> to vector<16x128xi1>
      %107 = vector.broadcast %cst_50 : f32 to vector<16x128xf32>
      %108 = arith.select %106, %95, %107 : vector<16x128xi1>, vector<16x128xf32>
      %c2_51 = arith.constant 2 : index
      %c0_52 = arith.constant 0 : index
      %109 = vector.load %arg5[%c2_51, %c0_52] : memref<9x128xf32, #tpu.memory_space<vmem>>, vector<1x128xf32>
      %110 = vector.shape_cast %109 : vector<1x128xf32> to vector<128xf32>
      %111 = vector.shape_cast %110 : vector<128xf32> to vector<1x128xf32>
      %112 = vector.broadcast %111 : vector<1x128xf32> to vector<16x128xf32>
      %113 = arith.mulf %108, %112 : vector<16x128xf32>
      %114 = arith.addf %94, %113 : vector<16x128xf32>
      %c4_i32_53 = arith.constant 4 : i32
      %115 = tpu.dynamic_rotate %2 by %c4_i32_53 dim 1 : vector<16x128xf32>, i32 -> vector<16x128xf32>
      %c-1_i32_54 = arith.constant -1 : i32
      %116 = vector.broadcast %c-1_i32_54 : i32 to vector<1x128xi32>
      %117 = arith.addi %4, %116 : vector<1x128xi32>
      %c0_i32_55 = arith.constant 0 : i32
      %118 = vector.broadcast %c0_i32_55 : i32 to vector<1x128xi32>
      %119 = arith.cmpi sge, %117, %118 : vector<1x128xi32>
      %c-1_i32_56 = arith.constant -1 : i32
      %120 = vector.broadcast %c-1_i32_56 : i32 to vector<1x128xi32>
      %121 = arith.addi %4, %120 : vector<1x128xi32>
      %c16_i32_57 = arith.constant 16 : i32
      %122 = vector.broadcast %c16_i32_57 : i32 to vector<1x128xi32>
      %123 = arith.cmpi slt, %121, %122 : vector<1x128xi32>
      %124 = arith.andi %119, %123 : vector<1x128xi1>
      %cst_58 = arith.constant 0.000000e+00 : f32
      %125 = vector.shape_cast %124 : vector<1x128xi1> to vector<1x128xi1>
      %126 = vector.broadcast %125 : vector<1x128xi1> to vector<16x128xi1>
      %127 = vector.broadcast %cst_58 : f32 to vector<16x128xf32>
      %128 = arith.select %126, %115, %127 : vector<16x128xi1>, vector<16x128xf32>
      %c3_59 = arith.constant 3 : index
      %c0_60 = arith.constant 0 : index
      %129 = vector.load %arg5[%c3_59, %c0_60] : memref<9x128xf32, #tpu.memory_space<vmem>>, vector<1x128xf32>
      %130 = vector.shape_cast %129 : vector<1x128xf32> to vector<128xf32>
      %131 = vector.shape_cast %130 : vector<128xf32> to vector<1x128xf32>
      %132 = vector.broadcast %131 : vector<1x128xf32> to vector<16x128xf32>
      %133 = arith.mulf %128, %132 : vector<16x128xf32>
      %134 = arith.addf %114, %133 : vector<16x128xf32>
      %c4_61 = arith.constant 4 : index
      %c0_62 = arith.constant 0 : index
      %135 = vector.load %arg5[%c4_61, %c0_62] : memref<9x128xf32, #tpu.memory_space<vmem>>, vector<1x128xf32>
      %136 = vector.shape_cast %135 : vector<1x128xf32> to vector<128xf32>
      %137 = vector.shape_cast %136 : vector<128xf32> to vector<1x128xf32>
      %138 = vector.broadcast %137 : vector<1x128xf32> to vector<16x128xf32>
      %139 = arith.mulf %2, %138 : vector<16x128xf32>
      %140 = arith.addf %134, %139 : vector<16x128xf32>
      %c124_i32_63 = arith.constant 124 : i32
      %141 = tpu.dynamic_rotate %2 by %c124_i32_63 dim 1 : vector<16x128xf32>, i32 -> vector<16x128xf32>
      %c1_i32_64 = arith.constant 1 : i32
      %142 = vector.broadcast %c1_i32_64 : i32 to vector<1x128xi32>
      %143 = arith.addi %4, %142 : vector<1x128xi32>
      %c0_i32_65 = arith.constant 0 : i32
      %144 = vector.broadcast %c0_i32_65 : i32 to vector<1x128xi32>
      %145 = arith.cmpi sge, %143, %144 : vector<1x128xi32>
      %c1_i32_66 = arith.constant 1 : i32
      %146 = vector.broadcast %c1_i32_66 : i32 to vector<1x128xi32>
      %147 = arith.addi %4, %146 : vector<1x128xi32>
      %c16_i32_67 = arith.constant 16 : i32
      %148 = vector.broadcast %c16_i32_67 : i32 to vector<1x128xi32>
      %149 = arith.cmpi slt, %147, %148 : vector<1x128xi32>
      %150 = arith.andi %145, %149 : vector<1x128xi1>
      %cst_68 = arith.constant 0.000000e+00 : f32
      %151 = vector.shape_cast %150 : vector<1x128xi1> to vector<1x128xi1>
      %152 = vector.broadcast %151 : vector<1x128xi1> to vector<16x128xi1>
      %153 = vector.broadcast %cst_68 : f32 to vector<16x128xf32>
      %154 = arith.select %152, %141, %153 : vector<16x128xi1>, vector<16x128xf32>
      %c5_69 = arith.constant 5 : index
      %c0_70 = arith.constant 0 : index
      %155 = vector.load %arg5[%c5_69, %c0_70] : memref<9x128xf32, #tpu.memory_space<vmem>>, vector<1x128xf32>
      %156 = vector.shape_cast %155 : vector<1x128xf32> to vector<128xf32>
      %157 = vector.shape_cast %156 : vector<128xf32> to vector<1x128xf32>
      %158 = vector.broadcast %157 : vector<1x128xf32> to vector<16x128xf32>
      %159 = arith.mulf %154, %158 : vector<16x128xf32>
      %160 = arith.addf %140, %159 : vector<16x128xf32>
      %c15_i32 = arith.constant 15 : i32
      %161 = tpu.dynamic_rotate %2 by %c15_i32 dim 0 : vector<16x128xf32>, i32 -> vector<16x128xf32>
      %c1_i32_71 = arith.constant 1 : i32
      %162 = vector.broadcast %c1_i32_71 : i32 to vector<16x1xi32>
      %163 = arith.addi %3, %162 : vector<16x1xi32>
      %c0_i32_72 = arith.constant 0 : i32
      %164 = vector.broadcast %c0_i32_72 : i32 to vector<16x1xi32>
      %165 = arith.cmpi sge, %163, %164 : vector<16x1xi32>
      %c1_i32_73 = arith.constant 1 : i32
      %166 = vector.broadcast %c1_i32_73 : i32 to vector<16x1xi32>
      %167 = arith.addi %3, %166 : vector<16x1xi32>
      %c16_i32_74 = arith.constant 16 : i32
      %168 = vector.broadcast %c16_i32_74 : i32 to vector<16x1xi32>
      %169 = arith.cmpi slt, %167, %168 : vector<16x1xi32>
      %170 = arith.andi %165, %169 : vector<16x1xi1>
      %cst_75 = arith.constant 0.000000e+00 : f32
      %171 = vector.shape_cast %170 : vector<16x1xi1> to vector<16x1xi1>
      %172 = vector.broadcast %171 : vector<16x1xi1> to vector<16x128xi1>
      %173 = vector.broadcast %cst_75 : f32 to vector<16x128xf32>
      %174 = arith.select %172, %161, %173 : vector<16x128xi1>, vector<16x128xf32>
      %c4_i32_76 = arith.constant 4 : i32
      %175 = tpu.dynamic_rotate %174 by %c4_i32_76 dim 1 : vector<16x128xf32>, i32 -> vector<16x128xf32>
      %c-1_i32_77 = arith.constant -1 : i32
      %176 = vector.broadcast %c-1_i32_77 : i32 to vector<1x128xi32>
      %177 = arith.addi %4, %176 : vector<1x128xi32>
      %c0_i32_78 = arith.constant 0 : i32
      %178 = vector.broadcast %c0_i32_78 : i32 to vector<1x128xi32>
      %179 = arith.cmpi sge, %177, %178 : vector<1x128xi32>
      %c-1_i32_79 = arith.constant -1 : i32
      %180 = vector.broadcast %c-1_i32_79 : i32 to vector<1x128xi32>
      %181 = arith.addi %4, %180 : vector<1x128xi32>
      %c16_i32_80 = arith.constant 16 : i32
      %182 = vector.broadcast %c16_i32_80 : i32 to vector<1x128xi32>
      %183 = arith.cmpi slt, %181, %182 : vector<1x128xi32>
      %184 = arith.andi %179, %183 : vector<1x128xi1>
      %cst_81 = arith.constant 0.000000e+00 : f32
      %185 = vector.shape_cast %184 : vector<1x128xi1> to vector<1x128xi1>
      %186 = vector.broadcast %185 : vector<1x128xi1> to vector<16x128xi1>
      %187 = vector.broadcast %cst_81 : f32 to vector<16x128xf32>
      %188 = arith.select %186, %175, %187 : vector<16x128xi1>, vector<16x128xf32>
      %c6_82 = arith.constant 6 : index
      %c0_83 = arith.constant 0 : index
      %189 = vector.load %arg5[%c6_82, %c0_83] : memref<9x128xf32, #tpu.memory_space<vmem>>, vector<1x128xf32>
      %190 = vector.shape_cast %189 : vector<1x128xf32> to vector<128xf32>
      %191 = vector.shape_cast %190 : vector<128xf32> to vector<1x128xf32>
      %192 = vector.broadcast %191 : vector<1x128xf32> to vector<16x128xf32>
      %193 = arith.mulf %188, %192 : vector<16x128xf32>
      %194 = arith.addf %160, %193 : vector<16x128xf32>
      %c7_84 = arith.constant 7 : index
      %c0_85 = arith.constant 0 : index
      %195 = vector.load %arg5[%c7_84, %c0_85] : memref<9x128xf32, #tpu.memory_space<vmem>>, vector<1x128xf32>
      %196 = vector.shape_cast %195 : vector<1x128xf32> to vector<128xf32>
      %197 = vector.shape_cast %196 : vector<128xf32> to vector<1x128xf32>
      %198 = vector.broadcast %197 : vector<1x128xf32> to vector<16x128xf32>
      %199 = arith.mulf %174, %198 : vector<16x128xf32>
      %200 = arith.addf %194, %199 : vector<16x128xf32>
      %c124_i32_86 = arith.constant 124 : i32
      %201 = tpu.dynamic_rotate %174 by %c124_i32_86 dim 1 : vector<16x128xf32>, i32 -> vector<16x128xf32>
      %c1_i32_87 = arith.constant 1 : i32
      %202 = vector.broadcast %c1_i32_87 : i32 to vector<1x128xi32>
      %203 = arith.addi %4, %202 : vector<1x128xi32>
      %c0_i32_88 = arith.constant 0 : i32
      %204 = vector.broadcast %c0_i32_88 : i32 to vector<1x128xi32>
      %205 = arith.cmpi sge, %203, %204 : vector<1x128xi32>
      %c1_i32_89 = arith.constant 1 : i32
      %206 = vector.broadcast %c1_i32_89 : i32 to vector<1x128xi32>
      %207 = arith.addi %4, %206 : vector<1x128xi32>
      %c16_i32_90 = arith.constant 16 : i32
      %208 = vector.broadcast %c16_i32_90 : i32 to vector<1x128xi32>
      %209 = arith.cmpi slt, %207, %208 : vector<1x128xi32>
      %210 = arith.andi %205, %209 : vector<1x128xi1>
      %cst_91 = arith.constant 0.000000e+00 : f32
      %211 = vector.shape_cast %210 : vector<1x128xi1> to vector<1x128xi1>
      %212 = vector.broadcast %211 : vector<1x128xi1> to vector<16x128xi1>
      %213 = vector.broadcast %cst_91 : f32 to vector<16x128xf32>
      %214 = arith.select %212, %201, %213 : vector<16x128xi1>, vector<16x128xf32>
      %c8 = arith.constant 8 : index
      %c0_92 = arith.constant 0 : index
      %215 = vector.load %arg5[%c8, %c0_92] : memref<9x128xf32, #tpu.memory_space<vmem>>, vector<1x128xf32>
      %216 = vector.shape_cast %215 : vector<1x128xf32> to vector<128xf32>
      %217 = vector.shape_cast %216 : vector<128xf32> to vector<1x128xf32>
      %218 = vector.broadcast %217 : vector<1x128xf32> to vector<16x128xf32>
      %219 = arith.mulf %214, %218 : vector<16x128xf32>
      %220 = arith.addf %200, %219 : vector<16x128xf32>
      %c3_93 = arith.constant 3 : index
      %c0_94 = arith.constant 0 : index
      %221 = vector.load %arg6[%c3_93, %c0_94] : memref<7x128xf32, #tpu.memory_space<vmem>>, vector<1x128xf32>
      %222 = vector.shape_cast %221 : vector<1x128xf32> to vector<128xf32>
      %223 = vector.shape_cast %222 : vector<128xf32> to vector<1x128xf32>
      %224 = vector.broadcast %223 : vector<1x128xf32> to vector<16x128xf32>
      %225 = arith.mulf %220, %224 : vector<16x128xf32>
      %c1_i32_95 = arith.constant 1 : i32
      %226 = tpu.dynamic_rotate %220 by %c1_i32_95 dim 1 : vector<16x128xf32>, i32 -> vector<16x128xf32>
      %c4_96 = arith.constant 4 : index
      %c0_97 = arith.constant 0 : index
      %227 = vector.load %arg6[%c4_96, %c0_97] : memref<7x128xf32, #tpu.memory_space<vmem>>, vector<1x128xf32>
      %228 = vector.shape_cast %227 : vector<1x128xf32> to vector<128xf32>
      %229 = vector.shape_cast %228 : vector<128xf32> to vector<1x128xf32>
      %230 = vector.broadcast %229 : vector<1x128xf32> to vector<16x128xf32>
      %231 = arith.mulf %226, %230 : vector<16x128xf32>
      %232 = arith.addf %225, %231 : vector<16x128xf32>
      %c127_i32 = arith.constant 127 : i32
      %233 = tpu.dynamic_rotate %220 by %c127_i32 dim 1 : vector<16x128xf32>, i32 -> vector<16x128xf32>
      %c2_98 = arith.constant 2 : index
      %c0_99 = arith.constant 0 : index
      %234 = vector.load %arg6[%c2_98, %c0_99] : memref<7x128xf32, #tpu.memory_space<vmem>>, vector<1x128xf32>
      %235 = vector.shape_cast %234 : vector<1x128xf32> to vector<128xf32>
      %236 = vector.shape_cast %235 : vector<128xf32> to vector<1x128xf32>
      %237 = vector.broadcast %236 : vector<1x128xf32> to vector<16x128xf32>
      %238 = arith.mulf %233, %237 : vector<16x128xf32>
      %239 = arith.addf %232, %238 : vector<16x128xf32>
      %c2_i32 = arith.constant 2 : i32
      %240 = tpu.dynamic_rotate %220 by %c2_i32 dim 1 : vector<16x128xf32>, i32 -> vector<16x128xf32>
      %c5_100 = arith.constant 5 : index
      %c0_101 = arith.constant 0 : index
      %241 = vector.load %arg6[%c5_100, %c0_101] : memref<7x128xf32, #tpu.memory_space<vmem>>, vector<1x128xf32>
      %242 = vector.shape_cast %241 : vector<1x128xf32> to vector<128xf32>
      %243 = vector.shape_cast %242 : vector<128xf32> to vector<1x128xf32>
      %244 = vector.broadcast %243 : vector<1x128xf32> to vector<16x128xf32>
      %245 = arith.mulf %240, %244 : vector<16x128xf32>
      %246 = arith.addf %239, %245 : vector<16x128xf32>
      %c126_i32 = arith.constant 126 : i32
      %247 = tpu.dynamic_rotate %220 by %c126_i32 dim 1 : vector<16x128xf32>, i32 -> vector<16x128xf32>
      %c1_102 = arith.constant 1 : index
      %c0_103 = arith.constant 0 : index
      %248 = vector.load %arg6[%c1_102, %c0_103] : memref<7x128xf32, #tpu.memory_space<vmem>>, vector<1x128xf32>
      %249 = vector.shape_cast %248 : vector<1x128xf32> to vector<128xf32>
      %250 = vector.shape_cast %249 : vector<128xf32> to vector<1x128xf32>
      %251 = vector.broadcast %250 : vector<1x128xf32> to vector<16x128xf32>
      %252 = arith.mulf %247, %251 : vector<16x128xf32>
      %253 = arith.addf %246, %252 : vector<16x128xf32>
      %c3_i32 = arith.constant 3 : i32
      %254 = tpu.dynamic_rotate %220 by %c3_i32 dim 1 : vector<16x128xf32>, i32 -> vector<16x128xf32>
      %c6_104 = arith.constant 6 : index
      %c0_105 = arith.constant 0 : index
      %255 = vector.load %arg6[%c6_104, %c0_105] : memref<7x128xf32, #tpu.memory_space<vmem>>, vector<1x128xf32>
      %256 = vector.shape_cast %255 : vector<1x128xf32> to vector<128xf32>
      %257 = vector.shape_cast %256 : vector<128xf32> to vector<1x128xf32>
      %258 = vector.broadcast %257 : vector<1x128xf32> to vector<16x128xf32>
      %259 = arith.mulf %254, %258 : vector<16x128xf32>
      %260 = arith.addf %253, %259 : vector<16x128xf32>
      %c125_i32 = arith.constant 125 : i32
      %261 = tpu.dynamic_rotate %220 by %c125_i32 dim 1 : vector<16x128xf32>, i32 -> vector<16x128xf32>
      %c0_106 = arith.constant 0 : index
      %c0_107 = arith.constant 0 : index
      %262 = vector.load %arg6[%c0_106, %c0_107] : memref<7x128xf32, #tpu.memory_space<vmem>>, vector<1x128xf32>
      %263 = vector.shape_cast %262 : vector<1x128xf32> to vector<128xf32>
      %264 = vector.shape_cast %263 : vector<128xf32> to vector<1x128xf32>
      %265 = vector.broadcast %264 : vector<1x128xf32> to vector<16x128xf32>
      %266 = arith.mulf %261, %265 : vector<16x128xf32>
      %267 = arith.addf %260, %266 : vector<16x128xf32>
      %c4_i32_108 = arith.constant 4 : i32
      %268 = tpu.dynamic_rotate %267 by %c4_i32_108 dim 1 : vector<16x128xf32>, i32 -> vector<16x128xf32>
      %269 = arith.addf %267, %268 : vector<16x128xf32>
      %c8_i32 = arith.constant 8 : i32
      %270 = tpu.dynamic_rotate %269 by %c8_i32 dim 1 : vector<16x128xf32>, i32 -> vector<16x128xf32>
      %271 = arith.addf %269, %270 : vector<16x128xf32>
      %c16_i32_109 = arith.constant 16 : i32
      %272 = tpu.dynamic_rotate %271 by %c16_i32_109 dim 1 : vector<16x128xf32>, i32 -> vector<16x128xf32>
      %273 = arith.addf %271, %272 : vector<16x128xf32>
      %c32_i32 = arith.constant 32 : i32
      %274 = tpu.dynamic_rotate %273 by %c32_i32 dim 1 : vector<16x128xf32>, i32 -> vector<16x128xf32>
      %275 = arith.addf %273, %274 : vector<16x128xf32>
      %c64_i32 = arith.constant 64 : i32
      %276 = tpu.dynamic_rotate %275 by %c64_i32 dim 1 : vector<16x128xf32>, i32 -> vector<16x128xf32>
      %277 = arith.addf %275, %276 : vector<16x128xf32>
      %cst_110 = arith.constant dense<0.000000e+00> : vector<128xf32>
      %278 = vector.multi_reduction <add>, %277, %cst_110 [0] : vector<16x128xf32> to vector<128xf32>
      %279 = vector.shape_cast %278 : vector<128xf32> to vector<1x128xf32>
      %cst_111 = arith.constant 0.001953125 : f32
      %280 = vector.broadcast %cst_111 : f32 to vector<1x128xf32>
      %281 = arith.mulf %279, %280 : vector<1x128xf32>
      %282 = vector.broadcast %281 : vector<1x128xf32> to vector<16x128xf32>
      %283 = arith.subf %267, %282 : vector<16x128xf32>
      %284 = arith.mulf %283, %283 : vector<16x128xf32>
      %c4_i32_112 = arith.constant 4 : i32
      %285 = tpu.dynamic_rotate %284 by %c4_i32_112 dim 1 : vector<16x128xf32>, i32 -> vector<16x128xf32>
      %286 = arith.addf %284, %285 : vector<16x128xf32>
      %c8_i32_113 = arith.constant 8 : i32
      %287 = tpu.dynamic_rotate %286 by %c8_i32_113 dim 1 : vector<16x128xf32>, i32 -> vector<16x128xf32>
      %288 = arith.addf %286, %287 : vector<16x128xf32>
      %c16_i32_114 = arith.constant 16 : i32
      %289 = tpu.dynamic_rotate %288 by %c16_i32_114 dim 1 : vector<16x128xf32>, i32 -> vector<16x128xf32>
      %290 = arith.addf %288, %289 : vector<16x128xf32>
      %c32_i32_115 = arith.constant 32 : i32
      %291 = tpu.dynamic_rotate %290 by %c32_i32_115 dim 1 : vector<16x128xf32>, i32 -> vector<16x128xf32>
      %292 = arith.addf %290, %291 : vector<16x128xf32>
      %c64_i32_116 = arith.constant 64 : i32
      %293 = tpu.dynamic_rotate %292 by %c64_i32_116 dim 1 : vector<16x128xf32>, i32 -> vector<16x128xf32>
      %294 = arith.addf %292, %293 : vector<16x128xf32>
      %cst_117 = arith.constant dense<0.000000e+00> : vector<128xf32>
      %295 = vector.multi_reduction <add>, %294, %cst_117 [0] : vector<16x128xf32> to vector<128xf32>
      %296 = vector.shape_cast %295 : vector<128xf32> to vector<1x128xf32>
      %cst_118 = arith.constant 0.001953125 : f32
      %297 = vector.broadcast %cst_118 : f32 to vector<1x128xf32>
      %298 = arith.mulf %296, %297 : vector<1x128xf32>
      %cst_119 = arith.constant 9.99999974E-6 : f32
      %299 = vector.broadcast %cst_119 : f32 to vector<1x128xf32>
      %300 = arith.addf %298, %299 : vector<1x128xf32>
      %301 = math.rsqrt %300 : vector<1x128xf32>
      %302 = vector.broadcast %301 : vector<1x128xf32> to vector<16x128xf32>
      %303 = arith.mulf %283, %302 : vector<16x128xf32>
      %cst_120 = arith.constant 0.000000e+00 : f32
      %304 = vector.broadcast %cst_120 : f32 to vector<16x128xf32>
      %305 = arith.maximumf %303, %304 : vector<16x128xf32>
      %cst_121 = arith.constant 0.000000e+00 : f32
      %306 = vector.broadcast %cst_121 : f32 to vector<16x128xf32>
      %c1_i32_122 = arith.constant 1 : i32
      %307 = tpu.dynamic_rotate %305 by %c1_i32_122 dim 0 : vector<16x128xf32>, i32 -> vector<16x128xf32>
      %c-1_i32_123 = arith.constant -1 : i32
      %308 = vector.broadcast %c-1_i32_123 : i32 to vector<16x1xi32>
      %309 = arith.addi %3, %308 : vector<16x1xi32>
      %c0_i32_124 = arith.constant 0 : i32
      %310 = vector.broadcast %c0_i32_124 : i32 to vector<16x1xi32>
      %311 = arith.cmpi sge, %309, %310 : vector<16x1xi32>
      %c-1_i32_125 = arith.constant -1 : i32
      %312 = vector.broadcast %c-1_i32_125 : i32 to vector<16x1xi32>
      %313 = arith.addi %3, %312 : vector<16x1xi32>
      %c16_i32_126 = arith.constant 16 : i32
      %314 = vector.broadcast %c16_i32_126 : i32 to vector<16x1xi32>
      %315 = arith.cmpi slt, %313, %314 : vector<16x1xi32>
      %316 = arith.andi %311, %315 : vector<16x1xi1>
      %cst_127 = arith.constant 0.000000e+00 : f32
      %317 = vector.shape_cast %316 : vector<16x1xi1> to vector<16x1xi1>
      %318 = vector.broadcast %317 : vector<16x1xi1> to vector<16x128xi1>
      %319 = vector.broadcast %cst_127 : f32 to vector<16x128xf32>
      %320 = arith.select %318, %307, %319 : vector<16x128xi1>, vector<16x128xf32>
      %c4_i32_128 = arith.constant 4 : i32
      %321 = tpu.dynamic_rotate %320 by %c4_i32_128 dim 1 : vector<16x128xf32>, i32 -> vector<16x128xf32>
      %c-1_i32_129 = arith.constant -1 : i32
      %322 = vector.broadcast %c-1_i32_129 : i32 to vector<1x128xi32>
      %323 = arith.addi %4, %322 : vector<1x128xi32>
      %c0_i32_130 = arith.constant 0 : i32
      %324 = vector.broadcast %c0_i32_130 : i32 to vector<1x128xi32>
      %325 = arith.cmpi sge, %323, %324 : vector<1x128xi32>
      %c-1_i32_131 = arith.constant -1 : i32
      %326 = vector.broadcast %c-1_i32_131 : i32 to vector<1x128xi32>
      %327 = arith.addi %4, %326 : vector<1x128xi32>
      %c16_i32_132 = arith.constant 16 : i32
      %328 = vector.broadcast %c16_i32_132 : i32 to vector<1x128xi32>
      %329 = arith.cmpi slt, %327, %328 : vector<1x128xi32>
      %330 = arith.andi %325, %329 : vector<1x128xi1>
      %cst_133 = arith.constant 0.000000e+00 : f32
      %331 = vector.shape_cast %330 : vector<1x128xi1> to vector<1x128xi1>
      %332 = vector.broadcast %331 : vector<1x128xi1> to vector<16x128xi1>
      %333 = vector.broadcast %cst_133 : f32 to vector<16x128xf32>
      %334 = arith.select %332, %321, %333 : vector<16x128xi1>, vector<16x128xf32>
      %c0_134 = arith.constant 0 : index
      %c0_135 = arith.constant 0 : index
      %335 = vector.load %arg7[%c0_134, %c0_135] : memref<9x128xf32, #tpu.memory_space<vmem>>, vector<1x128xf32>
      %336 = vector.shape_cast %335 : vector<1x128xf32> to vector<128xf32>
      %337 = vector.shape_cast %336 : vector<128xf32> to vector<1x128xf32>
      %338 = vector.broadcast %337 : vector<1x128xf32> to vector<16x128xf32>
      %339 = arith.mulf %334, %338 : vector<16x128xf32>
      %340 = arith.addf %306, %339 : vector<16x128xf32>
      %c1_136 = arith.constant 1 : index
      %c0_137 = arith.constant 0 : index
      %341 = vector.load %arg7[%c1_136, %c0_137] : memref<9x128xf32, #tpu.memory_space<vmem>>, vector<1x128xf32>
      %342 = vector.shape_cast %341 : vector<1x128xf32> to vector<128xf32>
      %343 = vector.shape_cast %342 : vector<128xf32> to vector<1x128xf32>
      %344 = vector.broadcast %343 : vector<1x128xf32> to vector<16x128xf32>
      %345 = arith.mulf %320, %344 : vector<16x128xf32>
      %346 = arith.addf %340, %345 : vector<16x128xf32>
      %c124_i32_138 = arith.constant 124 : i32
      %347 = tpu.dynamic_rotate %320 by %c124_i32_138 dim 1 : vector<16x128xf32>, i32 -> vector<16x128xf32>
      %c1_i32_139 = arith.constant 1 : i32
      %348 = vector.broadcast %c1_i32_139 : i32 to vector<1x128xi32>
      %349 = arith.addi %4, %348 : vector<1x128xi32>
      %c0_i32_140 = arith.constant 0 : i32
      %350 = vector.broadcast %c0_i32_140 : i32 to vector<1x128xi32>
      %351 = arith.cmpi sge, %349, %350 : vector<1x128xi32>
      %c1_i32_141 = arith.constant 1 : i32
      %352 = vector.broadcast %c1_i32_141 : i32 to vector<1x128xi32>
      %353 = arith.addi %4, %352 : vector<1x128xi32>
      %c16_i32_142 = arith.constant 16 : i32
      %354 = vector.broadcast %c16_i32_142 : i32 to vector<1x128xi32>
      %355 = arith.cmpi slt, %353, %354 : vector<1x128xi32>
      %356 = arith.andi %351, %355 : vector<1x128xi1>
      %cst_143 = arith.constant 0.000000e+00 : f32
      %357 = vector.shape_cast %356 : vector<1x128xi1> to vector<1x128xi1>
      %358 = vector.broadcast %357 : vector<1x128xi1> to vector<16x128xi1>
      %359 = vector.broadcast %cst_143 : f32 to vector<16x128xf32>
      %360 = arith.select %358, %347, %359 : vector<16x128xi1>, vector<16x128xf32>
      %c2_144 = arith.constant 2 : index
      %c0_145 = arith.constant 0 : index
      %361 = vector.load %arg7[%c2_144, %c0_145] : memref<9x128xf32, #tpu.memory_space<vmem>>, vector<1x128xf32>
      %362 = vector.shape_cast %361 : vector<1x128xf32> to vector<128xf32>
      %363 = vector.shape_cast %362 : vector<128xf32> to vector<1x128xf32>
      %364 = vector.broadcast %363 : vector<1x128xf32> to vector<16x128xf32>
      %365 = arith.mulf %360, %364 : vector<16x128xf32>
      %366 = arith.addf %346, %365 : vector<16x128xf32>
      %c4_i32_146 = arith.constant 4 : i32
      %367 = tpu.dynamic_rotate %305 by %c4_i32_146 dim 1 : vector<16x128xf32>, i32 -> vector<16x128xf32>
      %c-1_i32_147 = arith.constant -1 : i32
      %368 = vector.broadcast %c-1_i32_147 : i32 to vector<1x128xi32>
      %369 = arith.addi %4, %368 : vector<1x128xi32>
      %c0_i32_148 = arith.constant 0 : i32
      %370 = vector.broadcast %c0_i32_148 : i32 to vector<1x128xi32>
      %371 = arith.cmpi sge, %369, %370 : vector<1x128xi32>
      %c-1_i32_149 = arith.constant -1 : i32
      %372 = vector.broadcast %c-1_i32_149 : i32 to vector<1x128xi32>
      %373 = arith.addi %4, %372 : vector<1x128xi32>
      %c16_i32_150 = arith.constant 16 : i32
      %374 = vector.broadcast %c16_i32_150 : i32 to vector<1x128xi32>
      %375 = arith.cmpi slt, %373, %374 : vector<1x128xi32>
      %376 = arith.andi %371, %375 : vector<1x128xi1>
      %cst_151 = arith.constant 0.000000e+00 : f32
      %377 = vector.shape_cast %376 : vector<1x128xi1> to vector<1x128xi1>
      %378 = vector.broadcast %377 : vector<1x128xi1> to vector<16x128xi1>
      %379 = vector.broadcast %cst_151 : f32 to vector<16x128xf32>
      %380 = arith.select %378, %367, %379 : vector<16x128xi1>, vector<16x128xf32>
      %c3_152 = arith.constant 3 : index
      %c0_153 = arith.constant 0 : index
      %381 = vector.load %arg7[%c3_152, %c0_153] : memref<9x128xf32, #tpu.memory_space<vmem>>, vector<1x128xf32>
      %382 = vector.shape_cast %381 : vector<1x128xf32> to vector<128xf32>
      %383 = vector.shape_cast %382 : vector<128xf32> to vector<1x128xf32>
      %384 = vector.broadcast %383 : vector<1x128xf32> to vector<16x128xf32>
      %385 = arith.mulf %380, %384 : vector<16x128xf32>
      %386 = arith.addf %366, %385 : vector<16x128xf32>
      %c4_154 = arith.constant 4 : index
      %c0_155 = arith.constant 0 : index
      %387 = vector.load %arg7[%c4_154, %c0_155] : memref<9x128xf32, #tpu.memory_space<vmem>>, vector<1x128xf32>
      %388 = vector.shape_cast %387 : vector<1x128xf32> to vector<128xf32>
      %389 = vector.shape_cast %388 : vector<128xf32> to vector<1x128xf32>
      %390 = vector.broadcast %389 : vector<1x128xf32> to vector<16x128xf32>
      %391 = arith.mulf %305, %390 : vector<16x128xf32>
      %392 = arith.addf %386, %391 : vector<16x128xf32>
      %c124_i32_156 = arith.constant 124 : i32
      %393 = tpu.dynamic_rotate %305 by %c124_i32_156 dim 1 : vector<16x128xf32>, i32 -> vector<16x128xf32>
      %c1_i32_157 = arith.constant 1 : i32
      %394 = vector.broadcast %c1_i32_157 : i32 to vector<1x128xi32>
      %395 = arith.addi %4, %394 : vector<1x128xi32>
      %c0_i32_158 = arith.constant 0 : i32
      %396 = vector.broadcast %c0_i32_158 : i32 to vector<1x128xi32>
      %397 = arith.cmpi sge, %395, %396 : vector<1x128xi32>
      %c1_i32_159 = arith.constant 1 : i32
      %398 = vector.broadcast %c1_i32_159 : i32 to vector<1x128xi32>
      %399 = arith.addi %4, %398 : vector<1x128xi32>
      %c16_i32_160 = arith.constant 16 : i32
      %400 = vector.broadcast %c16_i32_160 : i32 to vector<1x128xi32>
      %401 = arith.cmpi slt, %399, %400 : vector<1x128xi32>
      %402 = arith.andi %397, %401 : vector<1x128xi1>
      %cst_161 = arith.constant 0.000000e+00 : f32
      %403 = vector.shape_cast %402 : vector<1x128xi1> to vector<1x128xi1>
      %404 = vector.broadcast %403 : vector<1x128xi1> to vector<16x128xi1>
      %405 = vector.broadcast %cst_161 : f32 to vector<16x128xf32>
      %406 = arith.select %404, %393, %405 : vector<16x128xi1>, vector<16x128xf32>
      %c5_162 = arith.constant 5 : index
      %c0_163 = arith.constant 0 : index
      %407 = vector.load %arg7[%c5_162, %c0_163] : memref<9x128xf32, #tpu.memory_space<vmem>>, vector<1x128xf32>
      %408 = vector.shape_cast %407 : vector<1x128xf32> to vector<128xf32>
      %409 = vector.shape_cast %408 : vector<128xf32> to vector<1x128xf32>
      %410 = vector.broadcast %409 : vector<1x128xf32> to vector<16x128xf32>
      %411 = arith.mulf %406, %410 : vector<16x128xf32>
      %412 = arith.addf %392, %411 : vector<16x128xf32>
      %c15_i32_164 = arith.constant 15 : i32
      %413 = tpu.dynamic_rotate %305 by %c15_i32_164 dim 0 : vector<16x128xf32>, i32 -> vector<16x128xf32>
      %c1_i32_165 = arith.constant 1 : i32
      %414 = vector.broadcast %c1_i32_165 : i32 to vector<16x1xi32>
      %415 = arith.addi %3, %414 : vector<16x1xi32>
      %c0_i32_166 = arith.constant 0 : i32
      %416 = vector.broadcast %c0_i32_166 : i32 to vector<16x1xi32>
      %417 = arith.cmpi sge, %415, %416 : vector<16x1xi32>
      %c1_i32_167 = arith.constant 1 : i32
      %418 = vector.broadcast %c1_i32_167 : i32 to vector<16x1xi32>
      %419 = arith.addi %3, %418 : vector<16x1xi32>
      %c16_i32_168 = arith.constant 16 : i32
      %420 = vector.broadcast %c16_i32_168 : i32 to vector<16x1xi32>
      %421 = arith.cmpi slt, %419, %420 : vector<16x1xi32>
      %422 = arith.andi %417, %421 : vector<16x1xi1>
      %cst_169 = arith.constant 0.000000e+00 : f32
      %423 = vector.shape_cast %422 : vector<16x1xi1> to vector<16x1xi1>
      %424 = vector.broadcast %423 : vector<16x1xi1> to vector<16x128xi1>
      %425 = vector.broadcast %cst_169 : f32 to vector<16x128xf32>
      %426 = arith.select %424, %413, %425 : vector<16x128xi1>, vector<16x128xf32>
      %c4_i32_170 = arith.constant 4 : i32
      %427 = tpu.dynamic_rotate %426 by %c4_i32_170 dim 1 : vector<16x128xf32>, i32 -> vector<16x128xf32>
      %c-1_i32_171 = arith.constant -1 : i32
      %428 = vector.broadcast %c-1_i32_171 : i32 to vector<1x128xi32>
      %429 = arith.addi %4, %428 : vector<1x128xi32>
      %c0_i32_172 = arith.constant 0 : i32
      %430 = vector.broadcast %c0_i32_172 : i32 to vector<1x128xi32>
      %431 = arith.cmpi sge, %429, %430 : vector<1x128xi32>
      %c-1_i32_173 = arith.constant -1 : i32
      %432 = vector.broadcast %c-1_i32_173 : i32 to vector<1x128xi32>
      %433 = arith.addi %4, %432 : vector<1x128xi32>
      %c16_i32_174 = arith.constant 16 : i32
      %434 = vector.broadcast %c16_i32_174 : i32 to vector<1x128xi32>
      %435 = arith.cmpi slt, %433, %434 : vector<1x128xi32>
      %436 = arith.andi %431, %435 : vector<1x128xi1>
      %cst_175 = arith.constant 0.000000e+00 : f32
      %437 = vector.shape_cast %436 : vector<1x128xi1> to vector<1x128xi1>
      %438 = vector.broadcast %437 : vector<1x128xi1> to vector<16x128xi1>
      %439 = vector.broadcast %cst_175 : f32 to vector<16x128xf32>
      %440 = arith.select %438, %427, %439 : vector<16x128xi1>, vector<16x128xf32>
      %c6_176 = arith.constant 6 : index
      %c0_177 = arith.constant 0 : index
      %441 = vector.load %arg7[%c6_176, %c0_177] : memref<9x128xf32, #tpu.memory_space<vmem>>, vector<1x128xf32>
      %442 = vector.shape_cast %441 : vector<1x128xf32> to vector<128xf32>
      %443 = vector.shape_cast %442 : vector<128xf32> to vector<1x128xf32>
      %444 = vector.broadcast %443 : vector<1x128xf32> to vector<16x128xf32>
      %445 = arith.mulf %440, %444 : vector<16x128xf32>
      %446 = arith.addf %412, %445 : vector<16x128xf32>
      %c7_178 = arith.constant 7 : index
      %c0_179 = arith.constant 0 : index
      %447 = vector.load %arg7[%c7_178, %c0_179] : memref<9x128xf32, #tpu.memory_space<vmem>>, vector<1x128xf32>
      %448 = vector.shape_cast %447 : vector<1x128xf32> to vector<128xf32>
      %449 = vector.shape_cast %448 : vector<128xf32> to vector<1x128xf32>
      %450 = vector.broadcast %449 : vector<1x128xf32> to vector<16x128xf32>
      %451 = arith.mulf %426, %450 : vector<16x128xf32>
      %452 = arith.addf %446, %451 : vector<16x128xf32>
      %c124_i32_180 = arith.constant 124 : i32
      %453 = tpu.dynamic_rotate %426 by %c124_i32_180 dim 1 : vector<16x128xf32>, i32 -> vector<16x128xf32>
      %c1_i32_181 = arith.constant 1 : i32
      %454 = vector.broadcast %c1_i32_181 : i32 to vector<1x128xi32>
      %455 = arith.addi %4, %454 : vector<1x128xi32>
      %c0_i32_182 = arith.constant 0 : i32
      %456 = vector.broadcast %c0_i32_182 : i32 to vector<1x128xi32>
      %457 = arith.cmpi sge, %455, %456 : vector<1x128xi32>
      %c1_i32_183 = arith.constant 1 : i32
      %458 = vector.broadcast %c1_i32_183 : i32 to vector<1x128xi32>
      %459 = arith.addi %4, %458 : vector<1x128xi32>
      %c16_i32_184 = arith.constant 16 : i32
      %460 = vector.broadcast %c16_i32_184 : i32 to vector<1x128xi32>
      %461 = arith.cmpi slt, %459, %460 : vector<1x128xi32>
      %462 = arith.andi %457, %461 : vector<1x128xi1>
      %cst_185 = arith.constant 0.000000e+00 : f32
      %463 = vector.shape_cast %462 : vector<1x128xi1> to vector<1x128xi1>
      %464 = vector.broadcast %463 : vector<1x128xi1> to vector<16x128xi1>
      %465 = vector.broadcast %cst_185 : f32 to vector<16x128xf32>
      %466 = arith.select %464, %453, %465 : vector<16x128xi1>, vector<16x128xf32>
      %c8_186 = arith.constant 8 : index
      %c0_187 = arith.constant 0 : index
      %467 = vector.load %arg7[%c8_186, %c0_187] : memref<9x128xf32, #tpu.memory_space<vmem>>, vector<1x128xf32>
      %468 = vector.shape_cast %467 : vector<1x128xf32> to vector<128xf32>
      %469 = vector.shape_cast %468 : vector<128xf32> to vector<1x128xf32>
      %470 = vector.broadcast %469 : vector<1x128xf32> to vector<16x128xf32>
      %471 = arith.mulf %466, %470 : vector<16x128xf32>
      %472 = arith.addf %452, %471 : vector<16x128xf32>
      %c3_188 = arith.constant 3 : index
      %c0_189 = arith.constant 0 : index
      %473 = vector.load %arg8[%c3_188, %c0_189] : memref<7x128xf32, #tpu.memory_space<vmem>>, vector<1x128xf32>
      %474 = vector.shape_cast %473 : vector<1x128xf32> to vector<128xf32>
      %475 = vector.shape_cast %474 : vector<128xf32> to vector<1x128xf32>
      %476 = vector.broadcast %475 : vector<1x128xf32> to vector<16x128xf32>
      %477 = arith.mulf %472, %476 : vector<16x128xf32>
      %c1_i32_190 = arith.constant 1 : i32
      %478 = tpu.dynamic_rotate %472 by %c1_i32_190 dim 1 : vector<16x128xf32>, i32 -> vector<16x128xf32>
      %c4_191 = arith.constant 4 : index
      %c0_192 = arith.constant 0 : index
      %479 = vector.load %arg8[%c4_191, %c0_192] : memref<7x128xf32, #tpu.memory_space<vmem>>, vector<1x128xf32>
      %480 = vector.shape_cast %479 : vector<1x128xf32> to vector<128xf32>
      %481 = vector.shape_cast %480 : vector<128xf32> to vector<1x128xf32>
      %482 = vector.broadcast %481 : vector<1x128xf32> to vector<16x128xf32>
      %483 = arith.mulf %478, %482 : vector<16x128xf32>
      %484 = arith.addf %477, %483 : vector<16x128xf32>
      %c127_i32_193 = arith.constant 127 : i32
      %485 = tpu.dynamic_rotate %472 by %c127_i32_193 dim 1 : vector<16x128xf32>, i32 -> vector<16x128xf32>
      %c2_194 = arith.constant 2 : index
      %c0_195 = arith.constant 0 : index
      %486 = vector.load %arg8[%c2_194, %c0_195] : memref<7x128xf32, #tpu.memory_space<vmem>>, vector<1x128xf32>
      %487 = vector.shape_cast %486 : vector<1x128xf32> to vector<128xf32>
      %488 = vector.shape_cast %487 : vector<128xf32> to vector<1x128xf32>
      %489 = vector.broadcast %488 : vector<1x128xf32> to vector<16x128xf32>
      %490 = arith.mulf %485, %489 : vector<16x128xf32>
      %491 = arith.addf %484, %490 : vector<16x128xf32>
      %c2_i32_196 = arith.constant 2 : i32
      %492 = tpu.dynamic_rotate %472 by %c2_i32_196 dim 1 : vector<16x128xf32>, i32 -> vector<16x128xf32>
      %c5_197 = arith.constant 5 : index
      %c0_198 = arith.constant 0 : index
      %493 = vector.load %arg8[%c5_197, %c0_198] : memref<7x128xf32, #tpu.memory_space<vmem>>, vector<1x128xf32>
      %494 = vector.shape_cast %493 : vector<1x128xf32> to vector<128xf32>
      %495 = vector.shape_cast %494 : vector<128xf32> to vector<1x128xf32>
      %496 = vector.broadcast %495 : vector<1x128xf32> to vector<16x128xf32>
      %497 = arith.mulf %492, %496 : vector<16x128xf32>
      %498 = arith.addf %491, %497 : vector<16x128xf32>
      %c126_i32_199 = arith.constant 126 : i32
      %499 = tpu.dynamic_rotate %472 by %c126_i32_199 dim 1 : vector<16x128xf32>, i32 -> vector<16x128xf32>
      %c1_200 = arith.constant 1 : index
      %c0_201 = arith.constant 0 : index
      %500 = vector.load %arg8[%c1_200, %c0_201] : memref<7x128xf32, #tpu.memory_space<vmem>>, vector<1x128xf32>
      %501 = vector.shape_cast %500 : vector<1x128xf32> to vector<128xf32>
      %502 = vector.shape_cast %501 : vector<128xf32> to vector<1x128xf32>
      %503 = vector.broadcast %502 : vector<1x128xf32> to vector<16x128xf32>
      %504 = arith.mulf %499, %503 : vector<16x128xf32>
      %505 = arith.addf %498, %504 : vector<16x128xf32>
      %c3_i32_202 = arith.constant 3 : i32
      %506 = tpu.dynamic_rotate %472 by %c3_i32_202 dim 1 : vector<16x128xf32>, i32 -> vector<16x128xf32>
      %c6_203 = arith.constant 6 : index
      %c0_204 = arith.constant 0 : index
      %507 = vector.load %arg8[%c6_203, %c0_204] : memref<7x128xf32, #tpu.memory_space<vmem>>, vector<1x128xf32>
      %508 = vector.shape_cast %507 : vector<1x128xf32> to vector<128xf32>
      %509 = vector.shape_cast %508 : vector<128xf32> to vector<1x128xf32>
      %510 = vector.broadcast %509 : vector<1x128xf32> to vector<16x128xf32>
      %511 = arith.mulf %506, %510 : vector<16x128xf32>
      %512 = arith.addf %505, %511 : vector<16x128xf32>
      %c125_i32_205 = arith.constant 125 : i32
      %513 = tpu.dynamic_rotate %472 by %c125_i32_205 dim 1 : vector<16x128xf32>, i32 -> vector<16x128xf32>
      %c0_206 = arith.constant 0 : index
      %c0_207 = arith.constant 0 : index
      %514 = vector.load %arg8[%c0_206, %c0_207] : memref<7x128xf32, #tpu.memory_space<vmem>>, vector<1x128xf32>
      %515 = vector.shape_cast %514 : vector<1x128xf32> to vector<128xf32>
      %516 = vector.shape_cast %515 : vector<128xf32> to vector<1x128xf32>
      %517 = vector.broadcast %516 : vector<1x128xf32> to vector<16x128xf32>
      %518 = arith.mulf %513, %517 : vector<16x128xf32>
      %519 = arith.addf %512, %518 : vector<16x128xf32>
      %c4_i32_208 = arith.constant 4 : i32
      %520 = tpu.dynamic_rotate %519 by %c4_i32_208 dim 1 : vector<16x128xf32>, i32 -> vector<16x128xf32>
      %521 = arith.addf %519, %520 : vector<16x128xf32>
      %c8_i32_209 = arith.constant 8 : i32
      %522 = tpu.dynamic_rotate %521 by %c8_i32_209 dim 1 : vector<16x128xf32>, i32 -> vector<16x128xf32>
      %523 = arith.addf %521, %522 : vector<16x128xf32>
      %c16_i32_210 = arith.constant 16 : i32
      %524 = tpu.dynamic_rotate %523 by %c16_i32_210 dim 1 : vector<16x128xf32>, i32 -> vector<16x128xf32>
      %525 = arith.addf %523, %524 : vector<16x128xf32>
      %c32_i32_211 = arith.constant 32 : i32
      %526 = tpu.dynamic_rotate %525 by %c32_i32_211 dim 1 : vector<16x128xf32>, i32 -> vector<16x128xf32>
      %527 = arith.addf %525, %526 : vector<16x128xf32>
      %c64_i32_212 = arith.constant 64 : i32
      %528 = tpu.dynamic_rotate %527 by %c64_i32_212 dim 1 : vector<16x128xf32>, i32 -> vector<16x128xf32>
      %529 = arith.addf %527, %528 : vector<16x128xf32>
      %cst_213 = arith.constant dense<0.000000e+00> : vector<128xf32>
      %530 = vector.multi_reduction <add>, %529, %cst_213 [0] : vector<16x128xf32> to vector<128xf32>
      %531 = vector.shape_cast %530 : vector<128xf32> to vector<1x128xf32>
      %cst_214 = arith.constant 0.001953125 : f32
      %532 = vector.broadcast %cst_214 : f32 to vector<1x128xf32>
      %533 = arith.mulf %531, %532 : vector<1x128xf32>
      %534 = vector.broadcast %533 : vector<1x128xf32> to vector<16x128xf32>
      %535 = arith.subf %519, %534 : vector<16x128xf32>
      %536 = arith.mulf %535, %535 : vector<16x128xf32>
      %c4_i32_215 = arith.constant 4 : i32
      %537 = tpu.dynamic_rotate %536 by %c4_i32_215 dim 1 : vector<16x128xf32>, i32 -> vector<16x128xf32>
      %538 = arith.addf %536, %537 : vector<16x128xf32>
      %c8_i32_216 = arith.constant 8 : i32
      %539 = tpu.dynamic_rotate %538 by %c8_i32_216 dim 1 : vector<16x128xf32>, i32 -> vector<16x128xf32>
      %540 = arith.addf %538, %539 : vector<16x128xf32>
      %c16_i32_217 = arith.constant 16 : i32
      %541 = tpu.dynamic_rotate %540 by %c16_i32_217 dim 1 : vector<16x128xf32>, i32 -> vector<16x128xf32>
      %542 = arith.addf %540, %541 : vector<16x128xf32>
      %c32_i32_218 = arith.constant 32 : i32
      %543 = tpu.dynamic_rotate %542 by %c32_i32_218 dim 1 : vector<16x128xf32>, i32 -> vector<16x128xf32>
      %544 = arith.addf %542, %543 : vector<16x128xf32>
      %c64_i32_219 = arith.constant 64 : i32
      %545 = tpu.dynamic_rotate %544 by %c64_i32_219 dim 1 : vector<16x128xf32>, i32 -> vector<16x128xf32>
      %546 = arith.addf %544, %545 : vector<16x128xf32>
      %cst_220 = arith.constant dense<0.000000e+00> : vector<128xf32>
      %547 = vector.multi_reduction <add>, %546, %cst_220 [0] : vector<16x128xf32> to vector<128xf32>
      %548 = vector.shape_cast %547 : vector<128xf32> to vector<1x128xf32>
      %cst_221 = arith.constant 0.001953125 : f32
      %549 = vector.broadcast %cst_221 : f32 to vector<1x128xf32>
      %550 = arith.mulf %548, %549 : vector<1x128xf32>
      %cst_222 = arith.constant 9.99999974E-6 : f32
      %551 = vector.broadcast %cst_222 : f32 to vector<1x128xf32>
      %552 = arith.addf %550, %551 : vector<1x128xf32>
      %553 = math.rsqrt %552 : vector<1x128xf32>
      %554 = vector.broadcast %553 : vector<1x128xf32> to vector<16x128xf32>
      %555 = arith.mulf %535, %554 : vector<16x128xf32>
      %556 = vector.broadcast %53 : f32 to vector<16x128xf32>
      %557 = arith.mulf %556, %555 : vector<16x128xf32>
      %558 = arith.addf %52, %557 : vector<16x128xf32>
      %c0_223 = arith.constant 0 : index
      %c0_224 = arith.constant 0 : index
      %c0_225 = arith.constant 0 : index
      %559 = vector.load %arg17[%c0_223, %c0_224, %c0_225] : memref<1x16x128xf32, #tpu.memory_space<vmem>>, vector<1x16x128xf32>
      %560 = vector.shape_cast %559 : vector<1x16x128xf32> to vector<16x128xf32>
      %561 = vector.shape_cast %558 : vector<16x128xf32> to vector<1x16x128xf32>
      tpu.vector_store %arg17[%c0_223, %c0_224, %c0_225], %561 {strides = array<i32>} : memref<1x16x128xf32, #tpu.memory_space<vmem>>, vector<1x16x128xf32>,
    } else {
    }
    %c1_i32_19 = arith.constant 1 : i32
    %33 = arith.cmpi eq, %arg0, %c1_i32_19 : i32
    %c5 = arith.constant 5 : index
    %34 = memref.load %arg1[%c5] : memref<8xf32, #tpu.memory_space<smem>>
    %cst_20 = arith.constant 0.000000e+00 : f32
    %35 = arith.cmpf one, %34, %cst_20 : f32
    %36 = arith.andi %33, %35 : i1
    %37 = arith.extui %36 : i1 to i32
    %c0_i32_21 = arith.constant 0 : i32
    %38 = arith.cmpi ne, %37, %c0_i32_21 : i32
    scf.if %38 {
      %c0_28 = arith.constant 0 : index
      %c0_29 = arith.constant 0 : index
      %c0_30 = arith.constant 0 : index
      %51 = vector.load %arg17[%c0_28, %c0_29, %c0_30] : memref<1x16x128xf32, #tpu.memory_space<vmem>>, vector<1x16x128xf32>
      %52 = vector.shape_cast %51 : vector<1x16x128xf32> to vector<16x128xf32>
      %c5_31 = arith.constant 5 : index
      %53 = memref.load %arg1[%c5_31] : memref<8xf32, #tpu.memory_space<smem>>
      %cst_32 = arith.constant 0.000000e+00 : f32
      %54 = vector.broadcast %cst_32 : f32 to vector<16x128xf32>
      %c2_i32 = arith.constant 2 : i32
      %55 = tpu.dynamic_rotate %2 by %c2_i32 dim 0 : vector<16x128xf32>, i32 -> vector<16x128xf32>
      %c-2_i32 = arith.constant -2 : i32
      %56 = vector.broadcast %c-2_i32 : i32 to vector<16x1xi32>
      %57 = arith.addi %3, %56 : vector<16x1xi32>
      %c0_i32_33 = arith.constant 0 : i32
      %58 = vector.broadcast %c0_i32_33 : i32 to vector<16x1xi32>
      %59 = arith.cmpi sge, %57, %58 : vector<16x1xi32>
      %c-2_i32_34 = arith.constant -2 : i32
      %60 = vector.broadcast %c-2_i32_34 : i32 to vector<16x1xi32>
      %61 = arith.addi %3, %60 : vector<16x1xi32>
      %c16_i32 = arith.constant 16 : i32
      %62 = vector.broadcast %c16_i32 : i32 to vector<16x1xi32>
      %63 = arith.cmpi slt, %61, %62 : vector<16x1xi32>
      %64 = arith.andi %59, %63 : vector<16x1xi1>
      %cst_35 = arith.constant 0.000000e+00 : f32
      %65 = vector.shape_cast %64 : vector<16x1xi1> to vector<16x1xi1>
      %66 = vector.broadcast %65 : vector<16x1xi1> to vector<16x128xi1>
      %67 = vector.broadcast %cst_35 : f32 to vector<16x128xf32>
      %68 = arith.select %66, %55, %67 : vector<16x128xi1>, vector<16x128xf32>
      %c8_i32 = arith.constant 8 : i32
      %69 = tpu.dynamic_rotate %68 by %c8_i32 dim 1 : vector<16x128xf32>, i32 -> vector<16x128xf32>
      %c-2_i32_36 = arith.constant -2 : i32
      %70 = vector.broadcast %c-2_i32_36 : i32 to vector<1x128xi32>
      %71 = arith.addi %4, %70 : vector<1x128xi32>
      %c0_i32_37 = arith.constant 0 : i32
      %72 = vector.broadcast %c0_i32_37 : i32 to vector<1x128xi32>
      %73 = arith.cmpi sge, %71, %72 : vector<1x128xi32>
      %c-2_i32_38 = arith.constant -2 : i32
      %74 = vector.broadcast %c-2_i32_38 : i32 to vector<1x128xi32>
      %75 = arith.addi %4, %74 : vector<1x128xi32>
      %c16_i32_39 = arith.constant 16 : i32
      %76 = vector.broadcast %c16_i32_39 : i32 to vector<1x128xi32>
      %77 = arith.cmpi slt, %75, %76 : vector<1x128xi32>
      %78 = arith.andi %73, %77 : vector<1x128xi1>
      %cst_40 = arith.constant 0.000000e+00 : f32
      %79 = vector.shape_cast %78 : vector<1x128xi1> to vector<1x128xi1>
      %80 = vector.broadcast %79 : vector<1x128xi1> to vector<16x128xi1>
      %81 = vector.broadcast %cst_40 : f32 to vector<16x128xf32>
      %82 = arith.select %80, %69, %81 : vector<16x128xi1>, vector<16x128xf32>
      %c0_41 = arith.constant 0 : index
      %c0_42 = arith.constant 0 : index
      %83 = vector.load %arg9[%c0_41, %c0_42] : memref<25x128xf32, #tpu.memory_space<vmem>>, vector<1x128xf32>
      %84 = vector.shape_cast %83 : vector<1x128xf32> to vector<128xf32>
      %85 = vector.shape_cast %84 : vector<128xf32> to vector<1x128xf32>
      %86 = vector.broadcast %85 : vector<1x128xf32> to vector<16x128xf32>
      %87 = arith.mulf %82, %86 : vector<16x128xf32>
      %88 = arith.addf %54, %87 : vector<16x128xf32>
      %c4_i32 = arith.constant 4 : i32
      %89 = tpu.dynamic_rotate %68 by %c4_i32 dim 1 : vector<16x128xf32>, i32 -> vector<16x128xf32>
      %c-1_i32 = arith.constant -1 : i32
      %90 = vector.broadcast %c-1_i32 : i32 to vector<1x128xi32>
      %91 = arith.addi %4, %90 : vector<1x128xi32>
      %c0_i32_43 = arith.constant 0 : i32
      %92 = vector.broadcast %c0_i32_43 : i32 to vector<1x128xi32>
      %93 = arith.cmpi sge, %91, %92 : vector<1x128xi32>
      %c-1_i32_44 = arith.constant -1 : i32
      %94 = vector.broadcast %c-1_i32_44 : i32 to vector<1x128xi32>
      %95 = arith.addi %4, %94 : vector<1x128xi32>
      %c16_i32_45 = arith.constant 16 : i32
      %96 = vector.broadcast %c16_i32_45 : i32 to vector<1x128xi32>
      %97 = arith.cmpi slt, %95, %96 : vector<1x128xi32>
      %98 = arith.andi %93, %97 : vector<1x128xi1>
      %cst_46 = arith.constant 0.000000e+00 : f32
      %99 = vector.shape_cast %98 : vector<1x128xi1> to vector<1x128xi1>
      %100 = vector.broadcast %99 : vector<1x128xi1> to vector<16x128xi1>
      %101 = vector.broadcast %cst_46 : f32 to vector<16x128xf32>
      %102 = arith.select %100, %89, %101 : vector<16x128xi1>, vector<16x128xf32>
      %c1_47 = arith.constant 1 : index
      %c0_48 = arith.constant 0 : index
      %103 = vector.load %arg9[%c1_47, %c0_48] : memref<25x128xf32, #tpu.memory_space<vmem>>, vector<1x128xf32>
      %104 = vector.shape_cast %103 : vector<1x128xf32> to vector<128xf32>
      %105 = vector.shape_cast %104 : vector<128xf32> to vector<1x128xf32>
      %106 = vector.broadcast %105 : vector<1x128xf32> to vector<16x128xf32>
      %107 = arith.mulf %102, %106 : vector<16x128xf32>
      %108 = arith.addf %88, %107 : vector<16x128xf32>
      %c2_49 = arith.constant 2 : index
      %c0_50 = arith.constant 0 : index
      %109 = vector.load %arg9[%c2_49, %c0_50] : memref<25x128xf32, #tpu.memory_space<vmem>>, vector<1x128xf32>
      %110 = vector.shape_cast %109 : vector<1x128xf32> to vector<128xf32>
      %111 = vector.shape_cast %110 : vector<128xf32> to vector<1x128xf32>
      %112 = vector.broadcast %111 : vector<1x128xf32> to vector<16x128xf32>
      %113 = arith.mulf %68, %112 : vector<16x128xf32>
      %114 = arith.addf %108, %113 : vector<16x128xf32>
      %c124_i32 = arith.constant 124 : i32
      %115 = tpu.dynamic_rotate %68 by %c124_i32 dim 1 : vector<16x128xf32>, i32 -> vector<16x128xf32>
      %c1_i32_51 = arith.constant 1 : i32
      %116 = vector.broadcast %c1_i32_51 : i32 to vector<1x128xi32>
      %117 = arith.addi %4, %116 : vector<1x128xi32>
      %c0_i32_52 = arith.constant 0 : i32
      %118 = vector.broadcast %c0_i32_52 : i32 to vector<1x128xi32>
      %119 = arith.cmpi sge, %117, %118 : vector<1x128xi32>
      %c1_i32_53 = arith.constant 1 : i32
      %120 = vector.broadcast %c1_i32_53 : i32 to vector<1x128xi32>
      %121 = arith.addi %4, %120 : vector<1x128xi32>
      %c16_i32_54 = arith.constant 16 : i32
      %122 = vector.broadcast %c16_i32_54 : i32 to vector<1x128xi32>
      %123 = arith.cmpi slt, %121, %122 : vector<1x128xi32>
      %124 = arith.andi %119, %123 : vector<1x128xi1>
      %cst_55 = arith.constant 0.000000e+00 : f32
      %125 = vector.shape_cast %124 : vector<1x128xi1> to vector<1x128xi1>
      %126 = vector.broadcast %125 : vector<1x128xi1> to vector<16x128xi1>
      %127 = vector.broadcast %cst_55 : f32 to vector<16x128xf32>
      %128 = arith.select %126, %115, %127 : vector<16x128xi1>, vector<16x128xf32>
      %c3_56 = arith.constant 3 : index
      %c0_57 = arith.constant 0 : index
      %129 = vector.load %arg9[%c3_56, %c0_57] : memref<25x128xf32, #tpu.memory_space<vmem>>, vector<1x128xf32>
      %130 = vector.shape_cast %129 : vector<1x128xf32> to vector<128xf32>
      %131 = vector.shape_cast %130 : vector<128xf32> to vector<1x128xf32>
      %132 = vector.broadcast %131 : vector<1x128xf32> to vector<16x128xf32>
      %133 = arith.mulf %128, %132 : vector<16x128xf32>
      %134 = arith.addf %114, %133 : vector<16x128xf32>
      %c120_i32 = arith.constant 120 : i32
      %135 = tpu.dynamic_rotate %68 by %c120_i32 dim 1 : vector<16x128xf32>, i32 -> vector<16x128xf32>
      %c2_i32_58 = arith.constant 2 : i32
      %136 = vector.broadcast %c2_i32_58 : i32 to vector<1x128xi32>
      %137 = arith.addi %4, %136 : vector<1x128xi32>
      %c0_i32_59 = arith.constant 0 : i32
      %138 = vector.broadcast %c0_i32_59 : i32 to vector<1x128xi32>
      %139 = arith.cmpi sge, %137, %138 : vector<1x128xi32>
      %c2_i32_60 = arith.constant 2 : i32
      %140 = vector.broadcast %c2_i32_60 : i32 to vector<1x128xi32>
      %141 = arith.addi %4, %140 : vector<1x128xi32>
      %c16_i32_61 = arith.constant 16 : i32
      %142 = vector.broadcast %c16_i32_61 : i32 to vector<1x128xi32>
      %143 = arith.cmpi slt, %141, %142 : vector<1x128xi32>
      %144 = arith.andi %139, %143 : vector<1x128xi1>
      %cst_62 = arith.constant 0.000000e+00 : f32
      %145 = vector.shape_cast %144 : vector<1x128xi1> to vector<1x128xi1>
      %146 = vector.broadcast %145 : vector<1x128xi1> to vector<16x128xi1>
      %147 = vector.broadcast %cst_62 : f32 to vector<16x128xf32>
      %148 = arith.select %146, %135, %147 : vector<16x128xi1>, vector<16x128xf32>
      %c4_63 = arith.constant 4 : index
      %c0_64 = arith.constant 0 : index
      %149 = vector.load %arg9[%c4_63, %c0_64] : memref<25x128xf32, #tpu.memory_space<vmem>>, vector<1x128xf32>
      %150 = vector.shape_cast %149 : vector<1x128xf32> to vector<128xf32>
      %151 = vector.shape_cast %150 : vector<128xf32> to vector<1x128xf32>
      %152 = vector.broadcast %151 : vector<1x128xf32> to vector<16x128xf32>
      %153 = arith.mulf %148, %152 : vector<16x128xf32>
      %154 = arith.addf %134, %153 : vector<16x128xf32>
      %c1_i32_65 = arith.constant 1 : i32
      %155 = tpu.dynamic_rotate %2 by %c1_i32_65 dim 0 : vector<16x128xf32>, i32 -> vector<16x128xf32>
      %c-1_i32_66 = arith.constant -1 : i32
      %156 = vector.broadcast %c-1_i32_66 : i32 to vector<16x1xi32>
      %157 = arith.addi %3, %156 : vector<16x1xi32>
      %c0_i32_67 = arith.constant 0 : i32
      %158 = vector.broadcast %c0_i32_67 : i32 to vector<16x1xi32>
      %159 = arith.cmpi sge, %157, %158 : vector<16x1xi32>
      %c-1_i32_68 = arith.constant -1 : i32
      %160 = vector.broadcast %c-1_i32_68 : i32 to vector<16x1xi32>
      %161 = arith.addi %3, %160 : vector<16x1xi32>
      %c16_i32_69 = arith.constant 16 : i32
      %162 = vector.broadcast %c16_i32_69 : i32 to vector<16x1xi32>
      %163 = arith.cmpi slt, %161, %162 : vector<16x1xi32>
      %164 = arith.andi %159, %163 : vector<16x1xi1>
      %cst_70 = arith.constant 0.000000e+00 : f32
      %165 = vector.shape_cast %164 : vector<16x1xi1> to vector<16x1xi1>
      %166 = vector.broadcast %165 : vector<16x1xi1> to vector<16x128xi1>
      %167 = vector.broadcast %cst_70 : f32 to vector<16x128xf32>
      %168 = arith.select %166, %155, %167 : vector<16x128xi1>, vector<16x128xf32>
      %c8_i32_71 = arith.constant 8 : i32
      %169 = tpu.dynamic_rotate %168 by %c8_i32_71 dim 1 : vector<16x128xf32>, i32 -> vector<16x128xf32>
      %c-2_i32_72 = arith.constant -2 : i32
      %170 = vector.broadcast %c-2_i32_72 : i32 to vector<1x128xi32>
      %171 = arith.addi %4, %170 : vector<1x128xi32>
      %c0_i32_73 = arith.constant 0 : i32
      %172 = vector.broadcast %c0_i32_73 : i32 to vector<1x128xi32>
      %173 = arith.cmpi sge, %171, %172 : vector<1x128xi32>
      %c-2_i32_74 = arith.constant -2 : i32
      %174 = vector.broadcast %c-2_i32_74 : i32 to vector<1x128xi32>
      %175 = arith.addi %4, %174 : vector<1x128xi32>
      %c16_i32_75 = arith.constant 16 : i32
      %176 = vector.broadcast %c16_i32_75 : i32 to vector<1x128xi32>
      %177 = arith.cmpi slt, %175, %176 : vector<1x128xi32>
      %178 = arith.andi %173, %177 : vector<1x128xi1>
      %cst_76 = arith.constant 0.000000e+00 : f32
      %179 = vector.shape_cast %178 : vector<1x128xi1> to vector<1x128xi1>
      %180 = vector.broadcast %179 : vector<1x128xi1> to vector<16x128xi1>
      %181 = vector.broadcast %cst_76 : f32 to vector<16x128xf32>
      %182 = arith.select %180, %169, %181 : vector<16x128xi1>, vector<16x128xf32>
      %c5_77 = arith.constant 5 : index
      %c0_78 = arith.constant 0 : index
      %183 = vector.load %arg9[%c5_77, %c0_78] : memref<25x128xf32, #tpu.memory_space<vmem>>, vector<1x128xf32>
      %184 = vector.shape_cast %183 : vector<1x128xf32> to vector<128xf32>
      %185 = vector.shape_cast %184 : vector<128xf32> to vector<1x128xf32>
      %186 = vector.broadcast %185 : vector<1x128xf32> to vector<16x128xf32>
      %187 = arith.mulf %182, %186 : vector<16x128xf32>
      %188 = arith.addf %154, %187 : vector<16x128xf32>
      %c4_i32_79 = arith.constant 4 : i32
      %189 = tpu.dynamic_rotate %168 by %c4_i32_79 dim 1 : vector<16x128xf32>, i32 -> vector<16x128xf32>
      %c-1_i32_80 = arith.constant -1 : i32
      %190 = vector.broadcast %c-1_i32_80 : i32 to vector<1x128xi32>
      %191 = arith.addi %4, %190 : vector<1x128xi32>
      %c0_i32_81 = arith.constant 0 : i32
      %192 = vector.broadcast %c0_i32_81 : i32 to vector<1x128xi32>
      %193 = arith.cmpi sge, %191, %192 : vector<1x128xi32>
      %c-1_i32_82 = arith.constant -1 : i32
      %194 = vector.broadcast %c-1_i32_82 : i32 to vector<1x128xi32>
      %195 = arith.addi %4, %194 : vector<1x128xi32>
      %c16_i32_83 = arith.constant 16 : i32
      %196 = vector.broadcast %c16_i32_83 : i32 to vector<1x128xi32>
      %197 = arith.cmpi slt, %195, %196 : vector<1x128xi32>
      %198 = arith.andi %193, %197 : vector<1x128xi1>
      %cst_84 = arith.constant 0.000000e+00 : f32
      %199 = vector.shape_cast %198 : vector<1x128xi1> to vector<1x128xi1>
      %200 = vector.broadcast %199 : vector<1x128xi1> to vector<16x128xi1>
      %201 = vector.broadcast %cst_84 : f32 to vector<16x128xf32>
      %202 = arith.select %200, %189, %201 : vector<16x128xi1>, vector<16x128xf32>
      %c6_85 = arith.constant 6 : index
      %c0_86 = arith.constant 0 : index
      %203 = vector.load %arg9[%c6_85, %c0_86] : memref<25x128xf32, #tpu.memory_space<vmem>>, vector<1x128xf32>
      %204 = vector.shape_cast %203 : vector<1x128xf32> to vector<128xf32>
      %205 = vector.shape_cast %204 : vector<128xf32> to vector<1x128xf32>
      %206 = vector.broadcast %205 : vector<1x128xf32> to vector<16x128xf32>
      %207 = arith.mulf %202, %206 : vector<16x128xf32>
      %208 = arith.addf %188, %207 : vector<16x128xf32>
      %c7_87 = arith.constant 7 : index
      %c0_88 = arith.constant 0 : index
      %209 = vector.load %arg9[%c7_87, %c0_88] : memref<25x128xf32, #tpu.memory_space<vmem>>, vector<1x128xf32>
      %210 = vector.shape_cast %209 : vector<1x128xf32> to vector<128xf32>
      %211 = vector.shape_cast %210 : vector<128xf32> to vector<1x128xf32>
      %212 = vector.broadcast %211 : vector<1x128xf32> to vector<16x128xf32>
      %213 = arith.mulf %168, %212 : vector<16x128xf32>
      %214 = arith.addf %208, %213 : vector<16x128xf32>
      %c124_i32_89 = arith.constant 124 : i32
      %215 = tpu.dynamic_rotate %168 by %c124_i32_89 dim 1 : vector<16x128xf32>, i32 -> vector<16x128xf32>
      %c1_i32_90 = arith.constant 1 : i32
      %216 = vector.broadcast %c1_i32_90 : i32 to vector<1x128xi32>
      %217 = arith.addi %4, %216 : vector<1x128xi32>
      %c0_i32_91 = arith.constant 0 : i32
      %218 = vector.broadcast %c0_i32_91 : i32 to vector<1x128xi32>
      %219 = arith.cmpi sge, %217, %218 : vector<1x128xi32>
      %c1_i32_92 = arith.constant 1 : i32
      %220 = vector.broadcast %c1_i32_92 : i32 to vector<1x128xi32>
      %221 = arith.addi %4, %220 : vector<1x128xi32>
      %c16_i32_93 = arith.constant 16 : i32
      %222 = vector.broadcast %c16_i32_93 : i32 to vector<1x128xi32>
      %223 = arith.cmpi slt, %221, %222 : vector<1x128xi32>
      %224 = arith.andi %219, %223 : vector<1x128xi1>
      %cst_94 = arith.constant 0.000000e+00 : f32
      %225 = vector.shape_cast %224 : vector<1x128xi1> to vector<1x128xi1>
      %226 = vector.broadcast %225 : vector<1x128xi1> to vector<16x128xi1>
      %227 = vector.broadcast %cst_94 : f32 to vector<16x128xf32>
      %228 = arith.select %226, %215, %227 : vector<16x128xi1>, vector<16x128xf32>
      %c8 = arith.constant 8 : index
      %c0_95 = arith.constant 0 : index
      %229 = vector.load %arg9[%c8, %c0_95] : memref<25x128xf32, #tpu.memory_space<vmem>>, vector<1x128xf32>
      %230 = vector.shape_cast %229 : vector<1x128xf32> to vector<128xf32>
      %231 = vector.shape_cast %230 : vector<128xf32> to vector<1x128xf32>
      %232 = vector.broadcast %231 : vector<1x128xf32> to vector<16x128xf32>
      %233 = arith.mulf %228, %232 : vector<16x128xf32>
      %234 = arith.addf %214, %233 : vector<16x128xf32>
      %c120_i32_96 = arith.constant 120 : i32
      %235 = tpu.dynamic_rotate %168 by %c120_i32_96 dim 1 : vector<16x128xf32>, i32 -> vector<16x128xf32>
      %c2_i32_97 = arith.constant 2 : i32
      %236 = vector.broadcast %c2_i32_97 : i32 to vector<1x128xi32>
      %237 = arith.addi %4, %236 : vector<1x128xi32>
      %c0_i32_98 = arith.constant 0 : i32
      %238 = vector.broadcast %c0_i32_98 : i32 to vector<1x128xi32>
      %239 = arith.cmpi sge, %237, %238 : vector<1x128xi32>
      %c2_i32_99 = arith.constant 2 : i32
      %240 = vector.broadcast %c2_i32_99 : i32 to vector<1x128xi32>
      %241 = arith.addi %4, %240 : vector<1x128xi32>
      %c16_i32_100 = arith.constant 16 : i32
      %242 = vector.broadcast %c16_i32_100 : i32 to vector<1x128xi32>
      %243 = arith.cmpi slt, %241, %242 : vector<1x128xi32>
      %244 = arith.andi %239, %243 : vector<1x128xi1>
      %cst_101 = arith.constant 0.000000e+00 : f32
      %245 = vector.shape_cast %244 : vector<1x128xi1> to vector<1x128xi1>
      %246 = vector.broadcast %245 : vector<1x128xi1> to vector<16x128xi1>
      %247 = vector.broadcast %cst_101 : f32 to vector<16x128xf32>
      %248 = arith.select %246, %235, %247 : vector<16x128xi1>, vector<16x128xf32>
      %c9 = arith.constant 9 : index
      %c0_102 = arith.constant 0 : index
      %249 = vector.load %arg9[%c9, %c0_102] : memref<25x128xf32, #tpu.memory_space<vmem>>, vector<1x128xf32>
      %250 = vector.shape_cast %249 : vector<1x128xf32> to vector<128xf32>
      %251 = vector.shape_cast %250 : vector<128xf32> to vector<1x128xf32>
      %252 = vector.broadcast %251 : vector<1x128xf32> to vector<16x128xf32>
      %253 = arith.mulf %248, %252 : vector<16x128xf32>
      %254 = arith.addf %234, %253 : vector<16x128xf32>
      %c8_i32_103 = arith.constant 8 : i32
      %255 = tpu.dynamic_rotate %2 by %c8_i32_103 dim 1 : vector<16x128xf32>, i32 -> vector<16x128xf32>
      %c-2_i32_104 = arith.constant -2 : i32
      %256 = vector.broadcast %c-2_i32_104 : i32 to vector<1x128xi32>
      %257 = arith.addi %4, %256 : vector<1x128xi32>
      %c0_i32_105 = arith.constant 0 : i32
      %258 = vector.broadcast %c0_i32_105 : i32 to vector<1x128xi32>
      %259 = arith.cmpi sge, %257, %258 : vector<1x128xi32>
      %c-2_i32_106 = arith.constant -2 : i32
      %260 = vector.broadcast %c-2_i32_106 : i32 to vector<1x128xi32>
      %261 = arith.addi %4, %260 : vector<1x128xi32>
      %c16_i32_107 = arith.constant 16 : i32
      %262 = vector.broadcast %c16_i32_107 : i32 to vector<1x128xi32>
      %263 = arith.cmpi slt, %261, %262 : vector<1x128xi32>
      %264 = arith.andi %259, %263 : vector<1x128xi1>
      %cst_108 = arith.constant 0.000000e+00 : f32
      %265 = vector.shape_cast %264 : vector<1x128xi1> to vector<1x128xi1>
      %266 = vector.broadcast %265 : vector<1x128xi1> to vector<16x128xi1>
      %267 = vector.broadcast %cst_108 : f32 to vector<16x128xf32>
      %268 = arith.select %266, %255, %267 : vector<16x128xi1>, vector<16x128xf32>
      %c10 = arith.constant 10 : index
      %c0_109 = arith.constant 0 : index
      %269 = vector.load %arg9[%c10, %c0_109] : memref<25x128xf32, #tpu.memory_space<vmem>>, vector<1x128xf32>
      %270 = vector.shape_cast %269 : vector<1x128xf32> to vector<128xf32>
      %271 = vector.shape_cast %270 : vector<128xf32> to vector<1x128xf32>
      %272 = vector.broadcast %271 : vector<1x128xf32> to vector<16x128xf32>
      %273 = arith.mulf %268, %272 : vector<16x128xf32>
      %274 = arith.addf %254, %273 : vector<16x128xf32>
      %c4_i32_110 = arith.constant 4 : i32
      %275 = tpu.dynamic_rotate %2 by %c4_i32_110 dim 1 : vector<16x128xf32>, i32 -> vector<16x128xf32>
      %c-1_i32_111 = arith.constant -1 : i32
      %276 = vector.broadcast %c-1_i32_111 : i32 to vector<1x128xi32>
      %277 = arith.addi %4, %276 : vector<1x128xi32>
      %c0_i32_112 = arith.constant 0 : i32
      %278 = vector.broadcast %c0_i32_112 : i32 to vector<1x128xi32>
      %279 = arith.cmpi sge, %277, %278 : vector<1x128xi32>
      %c-1_i32_113 = arith.constant -1 : i32
      %280 = vector.broadcast %c-1_i32_113 : i32 to vector<1x128xi32>
      %281 = arith.addi %4, %280 : vector<1x128xi32>
      %c16_i32_114 = arith.constant 16 : i32
      %282 = vector.broadcast %c16_i32_114 : i32 to vector<1x128xi32>
      %283 = arith.cmpi slt, %281, %282 : vector<1x128xi32>
      %284 = arith.andi %279, %283 : vector<1x128xi1>
      %cst_115 = arith.constant 0.000000e+00 : f32
      %285 = vector.shape_cast %284 : vector<1x128xi1> to vector<1x128xi1>
      %286 = vector.broadcast %285 : vector<1x128xi1> to vector<16x128xi1>
      %287 = vector.broadcast %cst_115 : f32 to vector<16x128xf32>
      %288 = arith.select %286, %275, %287 : vector<16x128xi1>, vector<16x128xf32>
      %c11 = arith.constant 11 : index
      %c0_116 = arith.constant 0 : index
      %289 = vector.load %arg9[%c11, %c0_116] : memref<25x128xf32, #tpu.memory_space<vmem>>, vector<1x128xf32>
      %290 = vector.shape_cast %289 : vector<1x128xf32> to vector<128xf32>
      %291 = vector.shape_cast %290 : vector<128xf32> to vector<1x128xf32>
      %292 = vector.broadcast %291 : vector<1x128xf32> to vector<16x128xf32>
      %293 = arith.mulf %288, %292 : vector<16x128xf32>
      %294 = arith.addf %274, %293 : vector<16x128xf32>
      %c12 = arith.constant 12 : index
      %c0_117 = arith.constant 0 : index
      %295 = vector.load %arg9[%c12, %c0_117] : memref<25x128xf32, #tpu.memory_space<vmem>>, vector<1x128xf32>
      %296 = vector.shape_cast %295 : vector<1x128xf32> to vector<128xf32>
      %297 = vector.shape_cast %296 : vector<128xf32> to vector<1x128xf32>
      %298 = vector.broadcast %297 : vector<1x128xf32> to vector<16x128xf32>
      %299 = arith.mulf %2, %298 : vector<16x128xf32>
      %300 = arith.addf %294, %299 : vector<16x128xf32>
      %c124_i32_118 = arith.constant 124 : i32
      %301 = tpu.dynamic_rotate %2 by %c124_i32_118 dim 1 : vector<16x128xf32>, i32 -> vector<16x128xf32>
      %c1_i32_119 = arith.constant 1 : i32
      %302 = vector.broadcast %c1_i32_119 : i32 to vector<1x128xi32>
      %303 = arith.addi %4, %302 : vector<1x128xi32>
      %c0_i32_120 = arith.constant 0 : i32
      %304 = vector.broadcast %c0_i32_120 : i32 to vector<1x128xi32>
      %305 = arith.cmpi sge, %303, %304 : vector<1x128xi32>
      %c1_i32_121 = arith.constant 1 : i32
      %306 = vector.broadcast %c1_i32_121 : i32 to vector<1x128xi32>
      %307 = arith.addi %4, %306 : vector<1x128xi32>
      %c16_i32_122 = arith.constant 16 : i32
      %308 = vector.broadcast %c16_i32_122 : i32 to vector<1x128xi32>
      %309 = arith.cmpi slt, %307, %308 : vector<1x128xi32>
      %310 = arith.andi %305, %309 : vector<1x128xi1>
      %cst_123 = arith.constant 0.000000e+00 : f32
      %311 = vector.shape_cast %310 : vector<1x128xi1> to vector<1x128xi1>
      %312 = vector.broadcast %311 : vector<1x128xi1> to vector<16x128xi1>
      %313 = vector.broadcast %cst_123 : f32 to vector<16x128xf32>
      %314 = arith.select %312, %301, %313 : vector<16x128xi1>, vector<16x128xf32>
      %c13 = arith.constant 13 : index
      %c0_124 = arith.constant 0 : index
      %315 = vector.load %arg9[%c13, %c0_124] : memref<25x128xf32, #tpu.memory_space<vmem>>, vector<1x128xf32>
      %316 = vector.shape_cast %315 : vector<1x128xf32> to vector<128xf32>
      %317 = vector.shape_cast %316 : vector<128xf32> to vector<1x128xf32>
      %318 = vector.broadcast %317 : vector<1x128xf32> to vector<16x128xf32>
      %319 = arith.mulf %314, %318 : vector<16x128xf32>
      %320 = arith.addf %300, %319 : vector<16x128xf32>
      %c120_i32_125 = arith.constant 120 : i32
      %321 = tpu.dynamic_rotate %2 by %c120_i32_125 dim 1 : vector<16x128xf32>, i32 -> vector<16x128xf32>
      %c2_i32_126 = arith.constant 2 : i32
      %322 = vector.broadcast %c2_i32_126 : i32 to vector<1x128xi32>
      %323 = arith.addi %4, %322 : vector<1x128xi32>
      %c0_i32_127 = arith.constant 0 : i32
      %324 = vector.broadcast %c0_i32_127 : i32 to vector<1x128xi32>
      %325 = arith.cmpi sge, %323, %324 : vector<1x128xi32>
      %c2_i32_128 = arith.constant 2 : i32
      %326 = vector.broadcast %c2_i32_128 : i32 to vector<1x128xi32>
      %327 = arith.addi %4, %326 : vector<1x128xi32>
      %c16_i32_129 = arith.constant 16 : i32
      %328 = vector.broadcast %c16_i32_129 : i32 to vector<1x128xi32>
      %329 = arith.cmpi slt, %327, %328 : vector<1x128xi32>
      %330 = arith.andi %325, %329 : vector<1x128xi1>
      %cst_130 = arith.constant 0.000000e+00 : f32
      %331 = vector.shape_cast %330 : vector<1x128xi1> to vector<1x128xi1>
      %332 = vector.broadcast %331 : vector<1x128xi1> to vector<16x128xi1>
      %333 = vector.broadcast %cst_130 : f32 to vector<16x128xf32>
      %334 = arith.select %332, %321, %333 : vector<16x128xi1>, vector<16x128xf32>
      %c14 = arith.constant 14 : index
      %c0_131 = arith.constant 0 : index
      %335 = vector.load %arg9[%c14, %c0_131] : memref<25x128xf32, #tpu.memory_space<vmem>>, vector<1x128xf32>
      %336 = vector.shape_cast %335 : vector<1x128xf32> to vector<128xf32>
      %337 = vector.shape_cast %336 : vector<128xf32> to vector<1x128xf32>
      %338 = vector.broadcast %337 : vector<1x128xf32> to vector<16x128xf32>
      %339 = arith.mulf %334, %338 : vector<16x128xf32>
      %340 = arith.addf %320, %339 : vector<16x128xf32>
      %c15_i32 = arith.constant 15 : i32
      %341 = tpu.dynamic_rotate %2 by %c15_i32 dim 0 : vector<16x128xf32>, i32 -> vector<16x128xf32>
      %c1_i32_132 = arith.constant 1 : i32
      %342 = vector.broadcast %c1_i32_132 : i32 to vector<16x1xi32>
      %343 = arith.addi %3, %342 : vector<16x1xi32>
      %c0_i32_133 = arith.constant 0 : i32
      %344 = vector.broadcast %c0_i32_133 : i32 to vector<16x1xi32>
      %345 = arith.cmpi sge, %343, %344 : vector<16x1xi32>
      %c1_i32_134 = arith.constant 1 : i32
      %346 = vector.broadcast %c1_i32_134 : i32 to vector<16x1xi32>
      %347 = arith.addi %3, %346 : vector<16x1xi32>
      %c16_i32_135 = arith.constant 16 : i32
      %348 = vector.broadcast %c16_i32_135 : i32 to vector<16x1xi32>
      %349 = arith.cmpi slt, %347, %348 : vector<16x1xi32>
      %350 = arith.andi %345, %349 : vector<16x1xi1>
      %cst_136 = arith.constant 0.000000e+00 : f32
      %351 = vector.shape_cast %350 : vector<16x1xi1> to vector<16x1xi1>
      %352 = vector.broadcast %351 : vector<16x1xi1> to vector<16x128xi1>
      %353 = vector.broadcast %cst_136 : f32 to vector<16x128xf32>
      %354 = arith.select %352, %341, %353 : vector<16x128xi1>, vector<16x128xf32>
      %c8_i32_137 = arith.constant 8 : i32
      %355 = tpu.dynamic_rotate %354 by %c8_i32_137 dim 1 : vector<16x128xf32>, i32 -> vector<16x128xf32>
      %c-2_i32_138 = arith.constant -2 : i32
      %356 = vector.broadcast %c-2_i32_138 : i32 to vector<1x128xi32>
      %357 = arith.addi %4, %356 : vector<1x128xi32>
      %c0_i32_139 = arith.constant 0 : i32
      %358 = vector.broadcast %c0_i32_139 : i32 to vector<1x128xi32>
      %359 = arith.cmpi sge, %357, %358 : vector<1x128xi32>
      %c-2_i32_140 = arith.constant -2 : i32
      %360 = vector.broadcast %c-2_i32_140 : i32 to vector<1x128xi32>
      %361 = arith.addi %4, %360 : vector<1x128xi32>
      %c16_i32_141 = arith.constant 16 : i32
      %362 = vector.broadcast %c16_i32_141 : i32 to vector<1x128xi32>
      %363 = arith.cmpi slt, %361, %362 : vector<1x128xi32>
      %364 = arith.andi %359, %363 : vector<1x128xi1>
      %cst_142 = arith.constant 0.000000e+00 : f32
      %365 = vector.shape_cast %364 : vector<1x128xi1> to vector<1x128xi1>
      %366 = vector.broadcast %365 : vector<1x128xi1> to vector<16x128xi1>
      %367 = vector.broadcast %cst_142 : f32 to vector<16x128xf32>
      %368 = arith.select %366, %355, %367 : vector<16x128xi1>, vector<16x128xf32>
      %c15 = arith.constant 15 : index
      %c0_143 = arith.constant 0 : index
      %369 = vector.load %arg9[%c15, %c0_143] : memref<25x128xf32, #tpu.memory_space<vmem>>, vector<1x128xf32>
      %370 = vector.shape_cast %369 : vector<1x128xf32> to vector<128xf32>
      %371 = vector.shape_cast %370 : vector<128xf32> to vector<1x128xf32>
      %372 = vector.broadcast %371 : vector<1x128xf32> to vector<16x128xf32>
      %373 = arith.mulf %368, %372 : vector<16x128xf32>
      %374 = arith.addf %340, %373 : vector<16x128xf32>
      %c4_i32_144 = arith.constant 4 : i32
      %375 = tpu.dynamic_rotate %354 by %c4_i32_144 dim 1 : vector<16x128xf32>, i32 -> vector<16x128xf32>
      %c-1_i32_145 = arith.constant -1 : i32
      %376 = vector.broadcast %c-1_i32_145 : i32 to vector<1x128xi32>
      %377 = arith.addi %4, %376 : vector<1x128xi32>
      %c0_i32_146 = arith.constant 0 : i32
      %378 = vector.broadcast %c0_i32_146 : i32 to vector<1x128xi32>
      %379 = arith.cmpi sge, %377, %378 : vector<1x128xi32>
      %c-1_i32_147 = arith.constant -1 : i32
      %380 = vector.broadcast %c-1_i32_147 : i32 to vector<1x128xi32>
      %381 = arith.addi %4, %380 : vector<1x128xi32>
      %c16_i32_148 = arith.constant 16 : i32
      %382 = vector.broadcast %c16_i32_148 : i32 to vector<1x128xi32>
      %383 = arith.cmpi slt, %381, %382 : vector<1x128xi32>
      %384 = arith.andi %379, %383 : vector<1x128xi1>
      %cst_149 = arith.constant 0.000000e+00 : f32
      %385 = vector.shape_cast %384 : vector<1x128xi1> to vector<1x128xi1>
      %386 = vector.broadcast %385 : vector<1x128xi1> to vector<16x128xi1>
      %387 = vector.broadcast %cst_149 : f32 to vector<16x128xf32>
      %388 = arith.select %386, %375, %387 : vector<16x128xi1>, vector<16x128xf32>
      %c16 = arith.constant 16 : index
      %c0_150 = arith.constant 0 : index
      %389 = vector.load %arg9[%c16, %c0_150] : memref<25x128xf32, #tpu.memory_space<vmem>>, vector<1x128xf32>
      %390 = vector.shape_cast %389 : vector<1x128xf32> to vector<128xf32>
      %391 = vector.shape_cast %390 : vector<128xf32> to vector<1x128xf32>
      %392 = vector.broadcast %391 : vector<1x128xf32> to vector<16x128xf32>
      %393 = arith.mulf %388, %392 : vector<16x128xf32>
      %394 = arith.addf %374, %393 : vector<16x128xf32>
      %c17 = arith.constant 17 : index
      %c0_151 = arith.constant 0 : index
      %395 = vector.load %arg9[%c17, %c0_151] : memref<25x128xf32, #tpu.memory_space<vmem>>, vector<1x128xf32>
      %396 = vector.shape_cast %395 : vector<1x128xf32> to vector<128xf32>
      %397 = vector.shape_cast %396 : vector<128xf32> to vector<1x128xf32>
      %398 = vector.broadcast %397 : vector<1x128xf32> to vector<16x128xf32>
      %399 = arith.mulf %354, %398 : vector<16x128xf32>
      %400 = arith.addf %394, %399 : vector<16x128xf32>
      %c124_i32_152 = arith.constant 124 : i32
      %401 = tpu.dynamic_rotate %354 by %c124_i32_152 dim 1 : vector<16x128xf32>, i32 -> vector<16x128xf32>
      %c1_i32_153 = arith.constant 1 : i32
      %402 = vector.broadcast %c1_i32_153 : i32 to vector<1x128xi32>
      %403 = arith.addi %4, %402 : vector<1x128xi32>
      %c0_i32_154 = arith.constant 0 : i32
      %404 = vector.broadcast %c0_i32_154 : i32 to vector<1x128xi32>
      %405 = arith.cmpi sge, %403, %404 : vector<1x128xi32>
      %c1_i32_155 = arith.constant 1 : i32
      %406 = vector.broadcast %c1_i32_155 : i32 to vector<1x128xi32>
      %407 = arith.addi %4, %406 : vector<1x128xi32>
      %c16_i32_156 = arith.constant 16 : i32
      %408 = vector.broadcast %c16_i32_156 : i32 to vector<1x128xi32>
      %409 = arith.cmpi slt, %407, %408 : vector<1x128xi32>
      %410 = arith.andi %405, %409 : vector<1x128xi1>
      %cst_157 = arith.constant 0.000000e+00 : f32
      %411 = vector.shape_cast %410 : vector<1x128xi1> to vector<1x128xi1>
      %412 = vector.broadcast %411 : vector<1x128xi1> to vector<16x128xi1>
      %413 = vector.broadcast %cst_157 : f32 to vector<16x128xf32>
      %414 = arith.select %412, %401, %413 : vector<16x128xi1>, vector<16x128xf32>
      %c18 = arith.constant 18 : index
      %c0_158 = arith.constant 0 : index
      %415 = vector.load %arg9[%c18, %c0_158] : memref<25x128xf32, #tpu.memory_space<vmem>>, vector<1x128xf32>
      %416 = vector.shape_cast %415 : vector<1x128xf32> to vector<128xf32>
      %417 = vector.shape_cast %416 : vector<128xf32> to vector<1x128xf32>
      %418 = vector.broadcast %417 : vector<1x128xf32> to vector<16x128xf32>
      %419 = arith.mulf %414, %418 : vector<16x128xf32>
      %420 = arith.addf %400, %419 : vector<16x128xf32>
      %c120_i32_159 = arith.constant 120 : i32
      %421 = tpu.dynamic_rotate %354 by %c120_i32_159 dim 1 : vector<16x128xf32>, i32 -> vector<16x128xf32>
      %c2_i32_160 = arith.constant 2 : i32
      %422 = vector.broadcast %c2_i32_160 : i32 to vector<1x128xi32>
      %423 = arith.addi %4, %422 : vector<1x128xi32>
      %c0_i32_161 = arith.constant 0 : i32
      %424 = vector.broadcast %c0_i32_161 : i32 to vector<1x128xi32>
      %425 = arith.cmpi sge, %423, %424 : vector<1x128xi32>
      %c2_i32_162 = arith.constant 2 : i32
      %426 = vector.broadcast %c2_i32_162 : i32 to vector<1x128xi32>
      %427 = arith.addi %4, %426 : vector<1x128xi32>
      %c16_i32_163 = arith.constant 16 : i32
      %428 = vector.broadcast %c16_i32_163 : i32 to vector<1x128xi32>
      %429 = arith.cmpi slt, %427, %428 : vector<1x128xi32>
      %430 = arith.andi %425, %429 : vector<1x128xi1>
      %cst_164 = arith.constant 0.000000e+00 : f32
      %431 = vector.shape_cast %430 : vector<1x128xi1> to vector<1x128xi1>
      %432 = vector.broadcast %431 : vector<1x128xi1> to vector<16x128xi1>
      %433 = vector.broadcast %cst_164 : f32 to vector<16x128xf32>
      %434 = arith.select %432, %421, %433 : vector<16x128xi1>, vector<16x128xf32>
      %c19 = arith.constant 19 : index
      %c0_165 = arith.constant 0 : index
      %435 = vector.load %arg9[%c19, %c0_165] : memref<25x128xf32, #tpu.memory_space<vmem>>, vector<1x128xf32>
      %436 = vector.shape_cast %435 : vector<1x128xf32> to vector<128xf32>
      %437 = vector.shape_cast %436 : vector<128xf32> to vector<1x128xf32>
      %438 = vector.broadcast %437 : vector<1x128xf32> to vector<16x128xf32>
      %439 = arith.mulf %434, %438 : vector<16x128xf32>
      %440 = arith.addf %420, %439 : vector<16x128xf32>
      %c14_i32 = arith.constant 14 : i32
      %441 = tpu.dynamic_rotate %2 by %c14_i32 dim 0 : vector<16x128xf32>, i32 -> vector<16x128xf32>
      %c2_i32_166 = arith.constant 2 : i32
      %442 = vector.broadcast %c2_i32_166 : i32 to vector<16x1xi32>
      %443 = arith.addi %3, %442 : vector<16x1xi32>
      %c0_i32_167 = arith.constant 0 : i32
      %444 = vector.broadcast %c0_i32_167 : i32 to vector<16x1xi32>
      %445 = arith.cmpi sge, %443, %444 : vector<16x1xi32>
      %c2_i32_168 = arith.constant 2 : i32
      %446 = vector.broadcast %c2_i32_168 : i32 to vector<16x1xi32>
      %447 = arith.addi %3, %446 : vector<16x1xi32>
      %c16_i32_169 = arith.constant 16 : i32
      %448 = vector.broadcast %c16_i32_169 : i32 to vector<16x1xi32>
      %449 = arith.cmpi slt, %447, %448 : vector<16x1xi32>
      %450 = arith.andi %445, %449 : vector<16x1xi1>
      %cst_170 = arith.constant 0.000000e+00 : f32
      %451 = vector.shape_cast %450 : vector<16x1xi1> to vector<16x1xi1>
      %452 = vector.broadcast %451 : vector<16x1xi1> to vector<16x128xi1>
      %453 = vector.broadcast %cst_170 : f32 to vector<16x128xf32>
      %454 = arith.select %452, %441, %453 : vector<16x128xi1>, vector<16x128xf32>
      %c8_i32_171 = arith.constant 8 : i32
      %455 = tpu.dynamic_rotate %454 by %c8_i32_171 dim 1 : vector<16x128xf32>, i32 -> vector<16x128xf32>
      %c-2_i32_172 = arith.constant -2 : i32
      %456 = vector.broadcast %c-2_i32_172 : i32 to vector<1x128xi32>
      %457 = arith.addi %4, %456 : vector<1x128xi32>
      %c0_i32_173 = arith.constant 0 : i32
      %458 = vector.broadcast %c0_i32_173 : i32 to vector<1x128xi32>
      %459 = arith.cmpi sge, %457, %458 : vector<1x128xi32>
      %c-2_i32_174 = arith.constant -2 : i32
      %460 = vector.broadcast %c-2_i32_174 : i32 to vector<1x128xi32>
      %461 = arith.addi %4, %460 : vector<1x128xi32>
      %c16_i32_175 = arith.constant 16 : i32
      %462 = vector.broadcast %c16_i32_175 : i32 to vector<1x128xi32>
      %463 = arith.cmpi slt, %461, %462 : vector<1x128xi32>
      %464 = arith.andi %459, %463 : vector<1x128xi1>
      %cst_176 = arith.constant 0.000000e+00 : f32
      %465 = vector.shape_cast %464 : vector<1x128xi1> to vector<1x128xi1>
      %466 = vector.broadcast %465 : vector<1x128xi1> to vector<16x128xi1>
      %467 = vector.broadcast %cst_176 : f32 to vector<16x128xf32>
      %468 = arith.select %466, %455, %467 : vector<16x128xi1>, vector<16x128xf32>
      %c20 = arith.constant 20 : index
      %c0_177 = arith.constant 0 : index
      %469 = vector.load %arg9[%c20, %c0_177] : memref<25x128xf32, #tpu.memory_space<vmem>>, vector<1x128xf32>
      %470 = vector.shape_cast %469 : vector<1x128xf32> to vector<128xf32>
      %471 = vector.shape_cast %470 : vector<128xf32> to vector<1x128xf32>
      %472 = vector.broadcast %471 : vector<1x128xf32> to vector<16x128xf32>
      %473 = arith.mulf %468, %472 : vector<16x128xf32>
      %474 = arith.addf %440, %473 : vector<16x128xf32>
      %c4_i32_178 = arith.constant 4 : i32
      %475 = tpu.dynamic_rotate %454 by %c4_i32_178 dim 1 : vector<16x128xf32>, i32 -> vector<16x128xf32>
      %c-1_i32_179 = arith.constant -1 : i32
      %476 = vector.broadcast %c-1_i32_179 : i32 to vector<1x128xi32>
      %477 = arith.addi %4, %476 : vector<1x128xi32>
      %c0_i32_180 = arith.constant 0 : i32
      %478 = vector.broadcast %c0_i32_180 : i32 to vector<1x128xi32>
      %479 = arith.cmpi sge, %477, %478 : vector<1x128xi32>
      %c-1_i32_181 = arith.constant -1 : i32
      %480 = vector.broadcast %c-1_i32_181 : i32 to vector<1x128xi32>
      %481 = arith.addi %4, %480 : vector<1x128xi32>
      %c16_i32_182 = arith.constant 16 : i32
      %482 = vector.broadcast %c16_i32_182 : i32 to vector<1x128xi32>
      %483 = arith.cmpi slt, %481, %482 : vector<1x128xi32>
      %484 = arith.andi %479, %483 : vector<1x128xi1>
      %cst_183 = arith.constant 0.000000e+00 : f32
      %485 = vector.shape_cast %484 : vector<1x128xi1> to vector<1x128xi1>
      %486 = vector.broadcast %485 : vector<1x128xi1> to vector<16x128xi1>
      %487 = vector.broadcast %cst_183 : f32 to vector<16x128xf32>
      %488 = arith.select %486, %475, %487 : vector<16x128xi1>, vector<16x128xf32>
      %c21 = arith.constant 21 : index
      %c0_184 = arith.constant 0 : index
      %489 = vector.load %arg9[%c21, %c0_184] : memref<25x128xf32, #tpu.memory_space<vmem>>, vector<1x128xf32>
      %490 = vector.shape_cast %489 : vector<1x128xf32> to vector<128xf32>
      %491 = vector.shape_cast %490 : vector<128xf32> to vector<1x128xf32>
      %492 = vector.broadcast %491 : vector<1x128xf32> to vector<16x128xf32>
      %493 = arith.mulf %488, %492 : vector<16x128xf32>
      %494 = arith.addf %474, %493 : vector<16x128xf32>
      %c22 = arith.constant 22 : index
      %c0_185 = arith.constant 0 : index
      %495 = vector.load %arg9[%c22, %c0_185] : memref<25x128xf32, #tpu.memory_space<vmem>>, vector<1x128xf32>
      %496 = vector.shape_cast %495 : vector<1x128xf32> to vector<128xf32>
      %497 = vector.shape_cast %496 : vector<128xf32> to vector<1x128xf32>
      %498 = vector.broadcast %497 : vector<1x128xf32> to vector<16x128xf32>
      %499 = arith.mulf %454, %498 : vector<16x128xf32>
      %500 = arith.addf %494, %499 : vector<16x128xf32>
      %c124_i32_186 = arith.constant 124 : i32
      %501 = tpu.dynamic_rotate %454 by %c124_i32_186 dim 1 : vector<16x128xf32>, i32 -> vector<16x128xf32>
      %c1_i32_187 = arith.constant 1 : i32
      %502 = vector.broadcast %c1_i32_187 : i32 to vector<1x128xi32>
      %503 = arith.addi %4, %502 : vector<1x128xi32>
      %c0_i32_188 = arith.constant 0 : i32
      %504 = vector.broadcast %c0_i32_188 : i32 to vector<1x128xi32>
      %505 = arith.cmpi sge, %503, %504 : vector<1x128xi32>
      %c1_i32_189 = arith.constant 1 : i32
      %506 = vector.broadcast %c1_i32_189 : i32 to vector<1x128xi32>
      %507 = arith.addi %4, %506 : vector<1x128xi32>
      %c16_i32_190 = arith.constant 16 : i32
      %508 = vector.broadcast %c16_i32_190 : i32 to vector<1x128xi32>
      %509 = arith.cmpi slt, %507, %508 : vector<1x128xi32>
      %510 = arith.andi %505, %509 : vector<1x128xi1>
      %cst_191 = arith.constant 0.000000e+00 : f32
      %511 = vector.shape_cast %510 : vector<1x128xi1> to vector<1x128xi1>
      %512 = vector.broadcast %511 : vector<1x128xi1> to vector<16x128xi1>
      %513 = vector.broadcast %cst_191 : f32 to vector<16x128xf32>
      %514 = arith.select %512, %501, %513 : vector<16x128xi1>, vector<16x128xf32>
      %c23 = arith.constant 23 : index
      %c0_192 = arith.constant 0 : index
      %515 = vector.load %arg9[%c23, %c0_192] : memref<25x128xf32, #tpu.memory_space<vmem>>, vector<1x128xf32>
      %516 = vector.shape_cast %515 : vector<1x128xf32> to vector<128xf32>
      %517 = vector.shape_cast %516 : vector<128xf32> to vector<1x128xf32>
      %518 = vector.broadcast %517 : vector<1x128xf32> to vector<16x128xf32>
      %519 = arith.mulf %514, %518 : vector<16x128xf32>
      %520 = arith.addf %500, %519 : vector<16x128xf32>
      %c120_i32_193 = arith.constant 120 : i32
      %521 = tpu.dynamic_rotate %454 by %c120_i32_193 dim 1 : vector<16x128xf32>, i32 -> vector<16x128xf32>
      %c2_i32_194 = arith.constant 2 : i32
      %522 = vector.broadcast %c2_i32_194 : i32 to vector<1x128xi32>
      %523 = arith.addi %4, %522 : vector<1x128xi32>
      %c0_i32_195 = arith.constant 0 : i32
      %524 = vector.broadcast %c0_i32_195 : i32 to vector<1x128xi32>
      %525 = arith.cmpi sge, %523, %524 : vector<1x128xi32>
      %c2_i32_196 = arith.constant 2 : i32
      %526 = vector.broadcast %c2_i32_196 : i32 to vector<1x128xi32>
      %527 = arith.addi %4, %526 : vector<1x128xi32>
      %c16_i32_197 = arith.constant 16 : i32
      %528 = vector.broadcast %c16_i32_197 : i32 to vector<1x128xi32>
      %529 = arith.cmpi slt, %527, %528 : vector<1x128xi32>
      %530 = arith.andi %525, %529 : vector<1x128xi1>
      %cst_198 = arith.constant 0.000000e+00 : f32
      %531 = vector.shape_cast %530 : vector<1x128xi1> to vector<1x128xi1>
      %532 = vector.broadcast %531 : vector<1x128xi1> to vector<16x128xi1>
      %533 = vector.broadcast %cst_198 : f32 to vector<16x128xf32>
      %534 = arith.select %532, %521, %533 : vector<16x128xi1>, vector<16x128xf32>
      %c24 = arith.constant 24 : index
      %c0_199 = arith.constant 0 : index
      %535 = vector.load %arg9[%c24, %c0_199] : memref<25x128xf32, #tpu.memory_space<vmem>>, vector<1x128xf32>
      %536 = vector.shape_cast %535 : vector<1x128xf32> to vector<128xf32>
      %537 = vector.shape_cast %536 : vector<128xf32> to vector<1x128xf32>
      %538 = vector.broadcast %537 : vector<1x128xf32> to vector<16x128xf32>
      %539 = arith.mulf %534, %538 : vector<16x128xf32>
      %540 = arith.addf %520, %539 : vector<16x128xf32>
      %c3_200 = arith.constant 3 : index
      %c0_201 = arith.constant 0 : index
      %541 = vector.load %arg10[%c3_200, %c0_201] : memref<7x128xf32, #tpu.memory_space<vmem>>, vector<1x128xf32>
      %542 = vector.shape_cast %541 : vector<1x128xf32> to vector<128xf32>
      %543 = vector.shape_cast %542 : vector<128xf32> to vector<1x128xf32>
      %544 = vector.broadcast %543 : vector<1x128xf32> to vector<16x128xf32>
      %545 = arith.mulf %540, %544 : vector<16x128xf32>
      %c1_i32_202 = arith.constant 1 : i32
      %546 = tpu.dynamic_rotate %540 by %c1_i32_202 dim 1 : vector<16x128xf32>, i32 -> vector<16x128xf32>
      %c4_203 = arith.constant 4 : index
      %c0_204 = arith.constant 0 : index
      %547 = vector.load %arg10[%c4_203, %c0_204] : memref<7x128xf32, #tpu.memory_space<vmem>>, vector<1x128xf32>
      %548 = vector.shape_cast %547 : vector<1x128xf32> to vector<128xf32>
      %549 = vector.shape_cast %548 : vector<128xf32> to vector<1x128xf32>
      %550 = vector.broadcast %549 : vector<1x128xf32> to vector<16x128xf32>
      %551 = arith.mulf %546, %550 : vector<16x128xf32>
      %552 = arith.addf %545, %551 : vector<16x128xf32>
      %c127_i32 = arith.constant 127 : i32
      %553 = tpu.dynamic_rotate %540 by %c127_i32 dim 1 : vector<16x128xf32>, i32 -> vector<16x128xf32>
      %c2_205 = arith.constant 2 : index
      %c0_206 = arith.constant 0 : index
      %554 = vector.load %arg10[%c2_205, %c0_206] : memref<7x128xf32, #tpu.memory_space<vmem>>, vector<1x128xf32>
      %555 = vector.shape_cast %554 : vector<1x128xf32> to vector<128xf32>
      %556 = vector.shape_cast %555 : vector<128xf32> to vector<1x128xf32>
      %557 = vector.broadcast %556 : vector<1x128xf32> to vector<16x128xf32>
      %558 = arith.mulf %553, %557 : vector<16x128xf32>
      %559 = arith.addf %552, %558 : vector<16x128xf32>
      %c2_i32_207 = arith.constant 2 : i32
      %560 = tpu.dynamic_rotate %540 by %c2_i32_207 dim 1 : vector<16x128xf32>, i32 -> vector<16x128xf32>
      %c5_208 = arith.constant 5 : index
      %c0_209 = arith.constant 0 : index
      %561 = vector.load %arg10[%c5_208, %c0_209] : memref<7x128xf32, #tpu.memory_space<vmem>>, vector<1x128xf32>
      %562 = vector.shape_cast %561 : vector<1x128xf32> to vector<128xf32>
      %563 = vector.shape_cast %562 : vector<128xf32> to vector<1x128xf32>
      %564 = vector.broadcast %563 : vector<1x128xf32> to vector<16x128xf32>
      %565 = arith.mulf %560, %564 : vector<16x128xf32>
      %566 = arith.addf %559, %565 : vector<16x128xf32>
      %c126_i32 = arith.constant 126 : i32
      %567 = tpu.dynamic_rotate %540 by %c126_i32 dim 1 : vector<16x128xf32>, i32 -> vector<16x128xf32>
      %c1_210 = arith.constant 1 : index
      %c0_211 = arith.constant 0 : index
      %568 = vector.load %arg10[%c1_210, %c0_211] : memref<7x128xf32, #tpu.memory_space<vmem>>, vector<1x128xf32>
      %569 = vector.shape_cast %568 : vector<1x128xf32> to vector<128xf32>
      %570 = vector.shape_cast %569 : vector<128xf32> to vector<1x128xf32>
      %571 = vector.broadcast %570 : vector<1x128xf32> to vector<16x128xf32>
      %572 = arith.mulf %567, %571 : vector<16x128xf32>
      %573 = arith.addf %566, %572 : vector<16x128xf32>
      %c3_i32 = arith.constant 3 : i32
      %574 = tpu.dynamic_rotate %540 by %c3_i32 dim 1 : vector<16x128xf32>, i32 -> vector<16x128xf32>
      %c6_212 = arith.constant 6 : index
      %c0_213 = arith.constant 0 : index
      %575 = vector.load %arg10[%c6_212, %c0_213] : memref<7x128xf32, #tpu.memory_space<vmem>>, vector<1x128xf32>
      %576 = vector.shape_cast %575 : vector<1x128xf32> to vector<128xf32>
      %577 = vector.shape_cast %576 : vector<128xf32> to vector<1x128xf32>
      %578 = vector.broadcast %577 : vector<1x128xf32> to vector<16x128xf32>
      %579 = arith.mulf %574, %578 : vector<16x128xf32>
      %580 = arith.addf %573, %579 : vector<16x128xf32>
      %c125_i32 = arith.constant 125 : i32
      %581 = tpu.dynamic_rotate %540 by %c125_i32 dim 1 : vector<16x128xf32>, i32 -> vector<16x128xf32>
      %c0_214 = arith.constant 0 : index
      %c0_215 = arith.constant 0 : index
      %582 = vector.load %arg10[%c0_214, %c0_215] : memref<7x128xf32, #tpu.memory_space<vmem>>, vector<1x128xf32>
      %583 = vector.shape_cast %582 : vector<1x128xf32> to vector<128xf32>
      %584 = vector.shape_cast %583 : vector<128xf32> to vector<1x128xf32>
      %585 = vector.broadcast %584 : vector<1x128xf32> to vector<16x128xf32>
      %586 = arith.mulf %581, %585 : vector<16x128xf32>
      %587 = arith.addf %580, %586 : vector<16x128xf32>
      %c4_i32_216 = arith.constant 4 : i32
      %588 = tpu.dynamic_rotate %587 by %c4_i32_216 dim 1 : vector<16x128xf32>, i32 -> vector<16x128xf32>
      %589 = arith.addf %587, %588 : vector<16x128xf32>
      %c8_i32_217 = arith.constant 8 : i32
      %590 = tpu.dynamic_rotate %589 by %c8_i32_217 dim 1 : vector<16x128xf32>, i32 -> vector<16x128xf32>
      %591 = arith.addf %589, %590 : vector<16x128xf32>
      %c16_i32_218 = arith.constant 16 : i32
      %592 = tpu.dynamic_rotate %591 by %c16_i32_218 dim 1 : vector<16x128xf32>, i32 -> vector<16x128xf32>
      %593 = arith.addf %591, %592 : vector<16x128xf32>
      %c32_i32 = arith.constant 32 : i32
      %594 = tpu.dynamic_rotate %593 by %c32_i32 dim 1 : vector<16x128xf32>, i32 -> vector<16x128xf32>
      %595 = arith.addf %593, %594 : vector<16x128xf32>
      %c64_i32 = arith.constant 64 : i32
      %596 = tpu.dynamic_rotate %595 by %c64_i32 dim 1 : vector<16x128xf32>, i32 -> vector<16x128xf32>
      %597 = arith.addf %595, %596 : vector<16x128xf32>
      %cst_219 = arith.constant dense<0.000000e+00> : vector<128xf32>
      %598 = vector.multi_reduction <add>, %597, %cst_219 [0] : vector<16x128xf32> to vector<128xf32>
      %599 = vector.shape_cast %598 : vector<128xf32> to vector<1x128xf32>
      %cst_220 = arith.constant 0.001953125 : f32
      %600 = vector.broadcast %cst_220 : f32 to vector<1x128xf32>
      %601 = arith.mulf %599, %600 : vector<1x128xf32>
      %602 = vector.broadcast %601 : vector<1x128xf32> to vector<16x128xf32>
      %603 = arith.subf %587, %602 : vector<16x128xf32>
      %604 = arith.mulf %603, %603 : vector<16x128xf32>
      %c4_i32_221 = arith.constant 4 : i32
      %605 = tpu.dynamic_rotate %604 by %c4_i32_221 dim 1 : vector<16x128xf32>, i32 -> vector<16x128xf32>
      %606 = arith.addf %604, %605 : vector<16x128xf32>
      %c8_i32_222 = arith.constant 8 : i32
      %607 = tpu.dynamic_rotate %606 by %c8_i32_222 dim 1 : vector<16x128xf32>, i32 -> vector<16x128xf32>
      %608 = arith.addf %606, %607 : vector<16x128xf32>
      %c16_i32_223 = arith.constant 16 : i32
      %609 = tpu.dynamic_rotate %608 by %c16_i32_223 dim 1 : vector<16x128xf32>, i32 -> vector<16x128xf32>
      %610 = arith.addf %608, %609 : vector<16x128xf32>
      %c32_i32_224 = arith.constant 32 : i32
      %611 = tpu.dynamic_rotate %610 by %c32_i32_224 dim 1 : vector<16x128xf32>, i32 -> vector<16x128xf32>
      %612 = arith.addf %610, %611 : vector<16x128xf32>
      %c64_i32_225 = arith.constant 64 : i32
      %613 = tpu.dynamic_rotate %612 by %c64_i32_225 dim 1 : vector<16x128xf32>, i32 -> vector<16x128xf32>
      %614 = arith.addf %612, %613 : vector<16x128xf32>
      %cst_226 = arith.constant dense<0.000000e+00> : vector<128xf32>
      %615 = vector.multi_reduction <add>, %614, %cst_226 [0] : vector<16x128xf32> to vector<128xf32>
      %616 = vector.shape_cast %615 : vector<128xf32> to vector<1x128xf32>
      %cst_227 = arith.constant 0.001953125 : f32
      %617 = vector.broadcast %cst_227 : f32 to vector<1x128xf32>
      %618 = arith.mulf %616, %617 : vector<1x128xf32>
      %cst_228 = arith.constant 9.99999974E-6 : f32
      %619 = vector.broadcast %cst_228 : f32 to vector<1x128xf32>
      %620 = arith.addf %618, %619 : vector<1x128xf32>
      %621 = math.rsqrt %620 : vector<1x128xf32>
      %622 = vector.broadcast %621 : vector<1x128xf32> to vector<16x128xf32>
      %623 = arith.mulf %603, %622 : vector<16x128xf32>
      %cst_229 = arith.constant 0.000000e+00 : f32
      %624 = vector.broadcast %cst_229 : f32 to vector<16x128xf32>
      %625 = arith.maximumf %623, %624 : vector<16x128xf32>
      %cst_230 = arith.constant 0.000000e+00 : f32
      %626 = vector.broadcast %cst_230 : f32 to vector<16x128xf32>
      %c2_i32_231 = arith.constant 2 : i32
      %627 = tpu.dynamic_rotate %625 by %c2_i32_231 dim 0 : vector<16x128xf32>, i32 -> vector<16x128xf32>
      %c-2_i32_232 = arith.constant -2 : i32
      %628 = vector.broadcast %c-2_i32_232 : i32 to vector<16x1xi32>
      %629 = arith.addi %3, %628 : vector<16x1xi32>
      %c0_i32_233 = arith.constant 0 : i32
      %630 = vector.broadcast %c0_i32_233 : i32 to vector<16x1xi32>
      %631 = arith.cmpi sge, %629, %630 : vector<16x1xi32>
      %c-2_i32_234 = arith.constant -2 : i32
      %632 = vector.broadcast %c-2_i32_234 : i32 to vector<16x1xi32>
      %633 = arith.addi %3, %632 : vector<16x1xi32>
      %c16_i32_235 = arith.constant 16 : i32
      %634 = vector.broadcast %c16_i32_235 : i32 to vector<16x1xi32>
      %635 = arith.cmpi slt, %633, %634 : vector<16x1xi32>
      %636 = arith.andi %631, %635 : vector<16x1xi1>
      %cst_236 = arith.constant 0.000000e+00 : f32
      %637 = vector.shape_cast %636 : vector<16x1xi1> to vector<16x1xi1>
      %638 = vector.broadcast %637 : vector<16x1xi1> to vector<16x128xi1>
      %639 = vector.broadcast %cst_236 : f32 to vector<16x128xf32>
      %640 = arith.select %638, %627, %639 : vector<16x128xi1>, vector<16x128xf32>
      %c8_i32_237 = arith.constant 8 : i32
      %641 = tpu.dynamic_rotate %640 by %c8_i32_237 dim 1 : vector<16x128xf32>, i32 -> vector<16x128xf32>
      %c-2_i32_238 = arith.constant -2 : i32
      %642 = vector.broadcast %c-2_i32_238 : i32 to vector<1x128xi32>
      %643 = arith.addi %4, %642 : vector<1x128xi32>
      %c0_i32_239 = arith.constant 0 : i32
      %644 = vector.broadcast %c0_i32_239 : i32 to vector<1x128xi32>
      %645 = arith.cmpi sge, %643, %644 : vector<1x128xi32>
      %c-2_i32_240 = arith.constant -2 : i32
      %646 = vector.broadcast %c-2_i32_240 : i32 to vector<1x128xi32>
      %647 = arith.addi %4, %646 : vector<1x128xi32>
      %c16_i32_241 = arith.constant 16 : i32
      %648 = vector.broadcast %c16_i32_241 : i32 to vector<1x128xi32>
      %649 = arith.cmpi slt, %647, %648 : vector<1x128xi32>
      %650 = arith.andi %645, %649 : vector<1x128xi1>
      %cst_242 = arith.constant 0.000000e+00 : f32
      %651 = vector.shape_cast %650 : vector<1x128xi1> to vector<1x128xi1>
      %652 = vector.broadcast %651 : vector<1x128xi1> to vector<16x128xi1>
      %653 = vector.broadcast %cst_242 : f32 to vector<16x128xf32>
      %654 = arith.select %652, %641, %653 : vector<16x128xi1>, vector<16x128xf32>
      %c0_243 = arith.constant 0 : index
      %c0_244 = arith.constant 0 : index
      %655 = vector.load %arg11[%c0_243, %c0_244] : memref<25x128xf32, #tpu.memory_space<vmem>>, vector<1x128xf32>
      %656 = vector.shape_cast %655 : vector<1x128xf32> to vector<128xf32>
      %657 = vector.shape_cast %656 : vector<128xf32> to vector<1x128xf32>
      %658 = vector.broadcast %657 : vector<1x128xf32> to vector<16x128xf32>
      %659 = arith.mulf %654, %658 : vector<16x128xf32>
      %660 = arith.addf %626, %659 : vector<16x128xf32>
      %c4_i32_245 = arith.constant 4 : i32
      %661 = tpu.dynamic_rotate %640 by %c4_i32_245 dim 1 : vector<16x128xf32>, i32 -> vector<16x128xf32>
      %c-1_i32_246 = arith.constant -1 : i32
      %662 = vector.broadcast %c-1_i32_246 : i32 to vector<1x128xi32>
      %663 = arith.addi %4, %662 : vector<1x128xi32>
      %c0_i32_247 = arith.constant 0 : i32
      %664 = vector.broadcast %c0_i32_247 : i32 to vector<1x128xi32>
      %665 = arith.cmpi sge, %663, %664 : vector<1x128xi32>
      %c-1_i32_248 = arith.constant -1 : i32
      %666 = vector.broadcast %c-1_i32_248 : i32 to vector<1x128xi32>
      %667 = arith.addi %4, %666 : vector<1x128xi32>
      %c16_i32_249 = arith.constant 16 : i32
      %668 = vector.broadcast %c16_i32_249 : i32 to vector<1x128xi32>
      %669 = arith.cmpi slt, %667, %668 : vector<1x128xi32>
      %670 = arith.andi %665, %669 : vector<1x128xi1>
      %cst_250 = arith.constant 0.000000e+00 : f32
      %671 = vector.shape_cast %670 : vector<1x128xi1> to vector<1x128xi1>
      %672 = vector.broadcast %671 : vector<1x128xi1> to vector<16x128xi1>
      %673 = vector.broadcast %cst_250 : f32 to vector<16x128xf32>
      %674 = arith.select %672, %661, %673 : vector<16x128xi1>, vector<16x128xf32>
      %c1_251 = arith.constant 1 : index
      %c0_252 = arith.constant 0 : index
      %675 = vector.load %arg11[%c1_251, %c0_252] : memref<25x128xf32, #tpu.memory_space<vmem>>, vector<1x128xf32>
      %676 = vector.shape_cast %675 : vector<1x128xf32> to vector<128xf32>
      %677 = vector.shape_cast %676 : vector<128xf32> to vector<1x128xf32>
      %678 = vector.broadcast %677 : vector<1x128xf32> to vector<16x128xf32>
      %679 = arith.mulf %674, %678 : vector<16x128xf32>
      %680 = arith.addf %660, %679 : vector<16x128xf32>
      %c2_253 = arith.constant 2 : index
      %c0_254 = arith.constant 0 : index
      %681 = vector.load %arg11[%c2_253, %c0_254] : memref<25x128xf32, #tpu.memory_space<vmem>>, vector<1x128xf32>
      %682 = vector.shape_cast %681 : vector<1x128xf32> to vector<128xf32>
      %683 = vector.shape_cast %682 : vector<128xf32> to vector<1x128xf32>
      %684 = vector.broadcast %683 : vector<1x128xf32> to vector<16x128xf32>
      %685 = arith.mulf %640, %684 : vector<16x128xf32>
      %686 = arith.addf %680, %685 : vector<16x128xf32>
      %c124_i32_255 = arith.constant 124 : i32
      %687 = tpu.dynamic_rotate %640 by %c124_i32_255 dim 1 : vector<16x128xf32>, i32 -> vector<16x128xf32>
      %c1_i32_256 = arith.constant 1 : i32
      %688 = vector.broadcast %c1_i32_256 : i32 to vector<1x128xi32>
      %689 = arith.addi %4, %688 : vector<1x128xi32>
      %c0_i32_257 = arith.constant 0 : i32
      %690 = vector.broadcast %c0_i32_257 : i32 to vector<1x128xi32>
      %691 = arith.cmpi sge, %689, %690 : vector<1x128xi32>
      %c1_i32_258 = arith.constant 1 : i32
      %692 = vector.broadcast %c1_i32_258 : i32 to vector<1x128xi32>
      %693 = arith.addi %4, %692 : vector<1x128xi32>
      %c16_i32_259 = arith.constant 16 : i32
      %694 = vector.broadcast %c16_i32_259 : i32 to vector<1x128xi32>
      %695 = arith.cmpi slt, %693, %694 : vector<1x128xi32>
      %696 = arith.andi %691, %695 : vector<1x128xi1>
      %cst_260 = arith.constant 0.000000e+00 : f32
      %697 = vector.shape_cast %696 : vector<1x128xi1> to vector<1x128xi1>
      %698 = vector.broadcast %697 : vector<1x128xi1> to vector<16x128xi1>
      %699 = vector.broadcast %cst_260 : f32 to vector<16x128xf32>
      %700 = arith.select %698, %687, %699 : vector<16x128xi1>, vector<16x128xf32>
      %c3_261 = arith.constant 3 : index
      %c0_262 = arith.constant 0 : index
      %701 = vector.load %arg11[%c3_261, %c0_262] : memref<25x128xf32, #tpu.memory_space<vmem>>, vector<1x128xf32>
      %702 = vector.shape_cast %701 : vector<1x128xf32> to vector<128xf32>
      %703 = vector.shape_cast %702 : vector<128xf32> to vector<1x128xf32>
      %704 = vector.broadcast %703 : vector<1x128xf32> to vector<16x128xf32>
      %705 = arith.mulf %700, %704 : vector<16x128xf32>
      %706 = arith.addf %686, %705 : vector<16x128xf32>
      %c120_i32_263 = arith.constant 120 : i32
      %707 = tpu.dynamic_rotate %640 by %c120_i32_263 dim 1 : vector<16x128xf32>, i32 -> vector<16x128xf32>
      %c2_i32_264 = arith.constant 2 : i32
      %708 = vector.broadcast %c2_i32_264 : i32 to vector<1x128xi32>
      %709 = arith.addi %4, %708 : vector<1x128xi32>
      %c0_i32_265 = arith.constant 0 : i32
      %710 = vector.broadcast %c0_i32_265 : i32 to vector<1x128xi32>
      %711 = arith.cmpi sge, %709, %710 : vector<1x128xi32>
      %c2_i32_266 = arith.constant 2 : i32
      %712 = vector.broadcast %c2_i32_266 : i32 to vector<1x128xi32>
      %713 = arith.addi %4, %712 : vector<1x128xi32>
      %c16_i32_267 = arith.constant 16 : i32
      %714 = vector.broadcast %c16_i32_267 : i32 to vector<1x128xi32>
      %715 = arith.cmpi slt, %713, %714 : vector<1x128xi32>
      %716 = arith.andi %711, %715 : vector<1x128xi1>
      %cst_268 = arith.constant 0.000000e+00 : f32
      %717 = vector.shape_cast %716 : vector<1x128xi1> to vector<1x128xi1>
      %718 = vector.broadcast %717 : vector<1x128xi1> to vector<16x128xi1>
      %719 = vector.broadcast %cst_268 : f32 to vector<16x128xf32>
      %720 = arith.select %718, %707, %719 : vector<16x128xi1>, vector<16x128xf32>
      %c4_269 = arith.constant 4 : index
      %c0_270 = arith.constant 0 : index
      %721 = vector.load %arg11[%c4_269, %c0_270] : memref<25x128xf32, #tpu.memory_space<vmem>>, vector<1x128xf32>
      %722 = vector.shape_cast %721 : vector<1x128xf32> to vector<128xf32>
      %723 = vector.shape_cast %722 : vector<128xf32> to vector<1x128xf32>
      %724 = vector.broadcast %723 : vector<1x128xf32> to vector<16x128xf32>
      %725 = arith.mulf %720, %724 : vector<16x128xf32>
      %726 = arith.addf %706, %725 : vector<16x128xf32>
      %c1_i32_271 = arith.constant 1 : i32
      %727 = tpu.dynamic_rotate %625 by %c1_i32_271 dim 0 : vector<16x128xf32>, i32 -> vector<16x128xf32>
      %c-1_i32_272 = arith.constant -1 : i32
      %728 = vector.broadcast %c-1_i32_272 : i32 to vector<16x1xi32>
      %729 = arith.addi %3, %728 : vector<16x1xi32>
      %c0_i32_273 = arith.constant 0 : i32
      %730 = vector.broadcast %c0_i32_273 : i32 to vector<16x1xi32>
      %731 = arith.cmpi sge, %729, %730 : vector<16x1xi32>
      %c-1_i32_274 = arith.constant -1 : i32
      %732 = vector.broadcast %c-1_i32_274 : i32 to vector<16x1xi32>
      %733 = arith.addi %3, %732 : vector<16x1xi32>
      %c16_i32_275 = arith.constant 16 : i32
      %734 = vector.broadcast %c16_i32_275 : i32 to vector<16x1xi32>
      %735 = arith.cmpi slt, %733, %734 : vector<16x1xi32>
      %736 = arith.andi %731, %735 : vector<16x1xi1>
      %cst_276 = arith.constant 0.000000e+00 : f32
      %737 = vector.shape_cast %736 : vector<16x1xi1> to vector<16x1xi1>
      %738 = vector.broadcast %737 : vector<16x1xi1> to vector<16x128xi1>
      %739 = vector.broadcast %cst_276 : f32 to vector<16x128xf32>
      %740 = arith.select %738, %727, %739 : vector<16x128xi1>, vector<16x128xf32>
      %c8_i32_277 = arith.constant 8 : i32
      %741 = tpu.dynamic_rotate %740 by %c8_i32_277 dim 1 : vector<16x128xf32>, i32 -> vector<16x128xf32>
      %c-2_i32_278 = arith.constant -2 : i32
      %742 = vector.broadcast %c-2_i32_278 : i32 to vector<1x128xi32>
      %743 = arith.addi %4, %742 : vector<1x128xi32>
      %c0_i32_279 = arith.constant 0 : i32
      %744 = vector.broadcast %c0_i32_279 : i32 to vector<1x128xi32>
      %745 = arith.cmpi sge, %743, %744 : vector<1x128xi32>
      %c-2_i32_280 = arith.constant -2 : i32
      %746 = vector.broadcast %c-2_i32_280 : i32 to vector<1x128xi32>
      %747 = arith.addi %4, %746 : vector<1x128xi32>
      %c16_i32_281 = arith.constant 16 : i32
      %748 = vector.broadcast %c16_i32_281 : i32 to vector<1x128xi32>
      %749 = arith.cmpi slt, %747, %748 : vector<1x128xi32>
      %750 = arith.andi %745, %749 : vector<1x128xi1>
      %cst_282 = arith.constant 0.000000e+00 : f32
      %751 = vector.shape_cast %750 : vector<1x128xi1> to vector<1x128xi1>
      %752 = vector.broadcast %751 : vector<1x128xi1> to vector<16x128xi1>
      %753 = vector.broadcast %cst_282 : f32 to vector<16x128xf32>
      %754 = arith.select %752, %741, %753 : vector<16x128xi1>, vector<16x128xf32>
      %c5_283 = arith.constant 5 : index
      %c0_284 = arith.constant 0 : index
      %755 = vector.load %arg11[%c5_283, %c0_284] : memref<25x128xf32, #tpu.memory_space<vmem>>, vector<1x128xf32>
      %756 = vector.shape_cast %755 : vector<1x128xf32> to vector<128xf32>
      %757 = vector.shape_cast %756 : vector<128xf32> to vector<1x128xf32>
      %758 = vector.broadcast %757 : vector<1x128xf32> to vector<16x128xf32>
      %759 = arith.mulf %754, %758 : vector<16x128xf32>
      %760 = arith.addf %726, %759 : vector<16x128xf32>
      %c4_i32_285 = arith.constant 4 : i32
      %761 = tpu.dynamic_rotate %740 by %c4_i32_285 dim 1 : vector<16x128xf32>, i32 -> vector<16x128xf32>
      %c-1_i32_286 = arith.constant -1 : i32
      %762 = vector.broadcast %c-1_i32_286 : i32 to vector<1x128xi32>
      %763 = arith.addi %4, %762 : vector<1x128xi32>
      %c0_i32_287 = arith.constant 0 : i32
      %764 = vector.broadcast %c0_i32_287 : i32 to vector<1x128xi32>
      %765 = arith.cmpi sge, %763, %764 : vector<1x128xi32>
      %c-1_i32_288 = arith.constant -1 : i32
      %766 = vector.broadcast %c-1_i32_288 : i32 to vector<1x128xi32>
      %767 = arith.addi %4, %766 : vector<1x128xi32>
      %c16_i32_289 = arith.constant 16 : i32
      %768 = vector.broadcast %c16_i32_289 : i32 to vector<1x128xi32>
      %769 = arith.cmpi slt, %767, %768 : vector<1x128xi32>
      %770 = arith.andi %765, %769 : vector<1x128xi1>
      %cst_290 = arith.constant 0.000000e+00 : f32
      %771 = vector.shape_cast %770 : vector<1x128xi1> to vector<1x128xi1>
      %772 = vector.broadcast %771 : vector<1x128xi1> to vector<16x128xi1>
      %773 = vector.broadcast %cst_290 : f32 to vector<16x128xf32>
      %774 = arith.select %772, %761, %773 : vector<16x128xi1>, vector<16x128xf32>
      %c6_291 = arith.constant 6 : index
      %c0_292 = arith.constant 0 : index
      %775 = vector.load %arg11[%c6_291, %c0_292] : memref<25x128xf32, #tpu.memory_space<vmem>>, vector<1x128xf32>
      %776 = vector.shape_cast %775 : vector<1x128xf32> to vector<128xf32>
      %777 = vector.shape_cast %776 : vector<128xf32> to vector<1x128xf32>
      %778 = vector.broadcast %777 : vector<1x128xf32> to vector<16x128xf32>
      %779 = arith.mulf %774, %778 : vector<16x128xf32>
      %780 = arith.addf %760, %779 : vector<16x128xf32>
      %c7_293 = arith.constant 7 : index
      %c0_294 = arith.constant 0 : index
      %781 = vector.load %arg11[%c7_293, %c0_294] : memref<25x128xf32, #tpu.memory_space<vmem>>, vector<1x128xf32>
      %782 = vector.shape_cast %781 : vector<1x128xf32> to vector<128xf32>
      %783 = vector.shape_cast %782 : vector<128xf32> to vector<1x128xf32>
      %784 = vector.broadcast %783 : vector<1x128xf32> to vector<16x128xf32>
      %785 = arith.mulf %740, %784 : vector<16x128xf32>
      %786 = arith.addf %780, %785 : vector<16x128xf32>
      %c124_i32_295 = arith.constant 124 : i32
      %787 = tpu.dynamic_rotate %740 by %c124_i32_295 dim 1 : vector<16x128xf32>, i32 -> vector<16x128xf32>
      %c1_i32_296 = arith.constant 1 : i32
      %788 = vector.broadcast %c1_i32_296 : i32 to vector<1x128xi32>
      %789 = arith.addi %4, %788 : vector<1x128xi32>
      %c0_i32_297 = arith.constant 0 : i32
      %790 = vector.broadcast %c0_i32_297 : i32 to vector<1x128xi32>
      %791 = arith.cmpi sge, %789, %790 : vector<1x128xi32>
      %c1_i32_298 = arith.constant 1 : i32
      %792 = vector.broadcast %c1_i32_298 : i32 to vector<1x128xi32>
      %793 = arith.addi %4, %792 : vector<1x128xi32>
      %c16_i32_299 = arith.constant 16 : i32
      %794 = vector.broadcast %c16_i32_299 : i32 to vector<1x128xi32>
      %795 = arith.cmpi slt, %793, %794 : vector<1x128xi32>
      %796 = arith.andi %791, %795 : vector<1x128xi1>
      %cst_300 = arith.constant 0.000000e+00 : f32
      %797 = vector.shape_cast %796 : vector<1x128xi1> to vector<1x128xi1>
      %798 = vector.broadcast %797 : vector<1x128xi1> to vector<16x128xi1>
      %799 = vector.broadcast %cst_300 : f32 to vector<16x128xf32>
      %800 = arith.select %798, %787, %799 : vector<16x128xi1>, vector<16x128xf32>
      %c8_301 = arith.constant 8 : index
      %c0_302 = arith.constant 0 : index
      %801 = vector.load %arg11[%c8_301, %c0_302] : memref<25x128xf32, #tpu.memory_space<vmem>>, vector<1x128xf32>
      %802 = vector.shape_cast %801 : vector<1x128xf32> to vector<128xf32>
      %803 = vector.shape_cast %802 : vector<128xf32> to vector<1x128xf32>
      %804 = vector.broadcast %803 : vector<1x128xf32> to vector<16x128xf32>
      %805 = arith.mulf %800, %804 : vector<16x128xf32>
      %806 = arith.addf %786, %805 : vector<16x128xf32>
      %c120_i32_303 = arith.constant 120 : i32
      %807 = tpu.dynamic_rotate %740 by %c120_i32_303 dim 1 : vector<16x128xf32>, i32 -> vector<16x128xf32>
      %c2_i32_304 = arith.constant 2 : i32
      %808 = vector.broadcast %c2_i32_304 : i32 to vector<1x128xi32>
      %809 = arith.addi %4, %808 : vector<1x128xi32>
      %c0_i32_305 = arith.constant 0 : i32
      %810 = vector.broadcast %c0_i32_305 : i32 to vector<1x128xi32>
      %811 = arith.cmpi sge, %809, %810 : vector<1x128xi32>
      %c2_i32_306 = arith.constant 2 : i32
      %812 = vector.broadcast %c2_i32_306 : i32 to vector<1x128xi32>
      %813 = arith.addi %4, %812 : vector<1x128xi32>
      %c16_i32_307 = arith.constant 16 : i32
      %814 = vector.broadcast %c16_i32_307 : i32 to vector<1x128xi32>
      %815 = arith.cmpi slt, %813, %814 : vector<1x128xi32>
      %816 = arith.andi %811, %815 : vector<1x128xi1>
      %cst_308 = arith.constant 0.000000e+00 : f32
      %817 = vector.shape_cast %816 : vector<1x128xi1> to vector<1x128xi1>
      %818 = vector.broadcast %817 : vector<1x128xi1> to vector<16x128xi1>
      %819 = vector.broadcast %cst_308 : f32 to vector<16x128xf32>
      %820 = arith.select %818, %807, %819 : vector<16x128xi1>, vector<16x128xf32>
      %c9_309 = arith.constant 9 : index
      %c0_310 = arith.constant 0 : index
      %821 = vector.load %arg11[%c9_309, %c0_310] : memref<25x128xf32, #tpu.memory_space<vmem>>, vector<1x128xf32>
      %822 = vector.shape_cast %821 : vector<1x128xf32> to vector<128xf32>
      %823 = vector.shape_cast %822 : vector<128xf32> to vector<1x128xf32>
      %824 = vector.broadcast %823 : vector<1x128xf32> to vector<16x128xf32>
      %825 = arith.mulf %820, %824 : vector<16x128xf32>
      %826 = arith.addf %806, %825 : vector<16x128xf32>
      %c8_i32_311 = arith.constant 8 : i32
      %827 = tpu.dynamic_rotate %625 by %c8_i32_311 dim 1 : vector<16x128xf32>, i32 -> vector<16x128xf32>
      %c-2_i32_312 = arith.constant -2 : i32
      %828 = vector.broadcast %c-2_i32_312 : i32 to vector<1x128xi32>
      %829 = arith.addi %4, %828 : vector<1x128xi32>
      %c0_i32_313 = arith.constant 0 : i32
      %830 = vector.broadcast %c0_i32_313 : i32 to vector<1x128xi32>
      %831 = arith.cmpi sge, %829, %830 : vector<1x128xi32>
      %c-2_i32_314 = arith.constant -2 : i32
      %832 = vector.broadcast %c-2_i32_314 : i32 to vector<1x128xi32>
      %833 = arith.addi %4, %832 : vector<1x128xi32>
      %c16_i32_315 = arith.constant 16 : i32
      %834 = vector.broadcast %c16_i32_315 : i32 to vector<1x128xi32>
      %835 = arith.cmpi slt, %833, %834 : vector<1x128xi32>
      %836 = arith.andi %831, %835 : vector<1x128xi1>
      %cst_316 = arith.constant 0.000000e+00 : f32
      %837 = vector.shape_cast %836 : vector<1x128xi1> to vector<1x128xi1>
      %838 = vector.broadcast %837 : vector<1x128xi1> to vector<16x128xi1>
      %839 = vector.broadcast %cst_316 : f32 to vector<16x128xf32>
      %840 = arith.select %838, %827, %839 : vector<16x128xi1>, vector<16x128xf32>
      %c10_317 = arith.constant 10 : index
      %c0_318 = arith.constant 0 : index
      %841 = vector.load %arg11[%c10_317, %c0_318] : memref<25x128xf32, #tpu.memory_space<vmem>>, vector<1x128xf32>
      %842 = vector.shape_cast %841 : vector<1x128xf32> to vector<128xf32>
      %843 = vector.shape_cast %842 : vector<128xf32> to vector<1x128xf32>
      %844 = vector.broadcast %843 : vector<1x128xf32> to vector<16x128xf32>
      %845 = arith.mulf %840, %844 : vector<16x128xf32>
      %846 = arith.addf %826, %845 : vector<16x128xf32>
      %c4_i32_319 = arith.constant 4 : i32
      %847 = tpu.dynamic_rotate %625 by %c4_i32_319 dim 1 : vector<16x128xf32>, i32 -> vector<16x128xf32>
      %c-1_i32_320 = arith.constant -1 : i32
      %848 = vector.broadcast %c-1_i32_320 : i32 to vector<1x128xi32>
      %849 = arith.addi %4, %848 : vector<1x128xi32>
      %c0_i32_321 = arith.constant 0 : i32
      %850 = vector.broadcast %c0_i32_321 : i32 to vector<1x128xi32>
      %851 = arith.cmpi sge, %849, %850 : vector<1x128xi32>
      %c-1_i32_322 = arith.constant -1 : i32
      %852 = vector.broadcast %c-1_i32_322 : i32 to vector<1x128xi32>
      %853 = arith.addi %4, %852 : vector<1x128xi32>
      %c16_i32_323 = arith.constant 16 : i32
      %854 = vector.broadcast %c16_i32_323 : i32 to vector<1x128xi32>
      %855 = arith.cmpi slt, %853, %854 : vector<1x128xi32>
      %856 = arith.andi %851, %855 : vector<1x128xi1>
      %cst_324 = arith.constant 0.000000e+00 : f32
      %857 = vector.shape_cast %856 : vector<1x128xi1> to vector<1x128xi1>
      %858 = vector.broadcast %857 : vector<1x128xi1> to vector<16x128xi1>
      %859 = vector.broadcast %cst_324 : f32 to vector<16x128xf32>
      %860 = arith.select %858, %847, %859 : vector<16x128xi1>, vector<16x128xf32>
      %c11_325 = arith.constant 11 : index
      %c0_326 = arith.constant 0 : index
      %861 = vector.load %arg11[%c11_325, %c0_326] : memref<25x128xf32, #tpu.memory_space<vmem>>, vector<1x128xf32>
      %862 = vector.shape_cast %861 : vector<1x128xf32> to vector<128xf32>
      %863 = vector.shape_cast %862 : vector<128xf32> to vector<1x128xf32>
      %864 = vector.broadcast %863 : vector<1x128xf32> to vector<16x128xf32>
      %865 = arith.mulf %860, %864 : vector<16x128xf32>
      %866 = arith.addf %846, %865 : vector<16x128xf32>
      %c12_327 = arith.constant 12 : index
      %c0_328 = arith.constant 0 : index
      %867 = vector.load %arg11[%c12_327, %c0_328] : memref<25x128xf32, #tpu.memory_space<vmem>>, vector<1x128xf32>
      %868 = vector.shape_cast %867 : vector<1x128xf32> to vector<128xf32>
      %869 = vector.shape_cast %868 : vector<128xf32> to vector<1x128xf32>
      %870 = vector.broadcast %869 : vector<1x128xf32> to vector<16x128xf32>
      %871 = arith.mulf %625, %870 : vector<16x128xf32>
      %872 = arith.addf %866, %871 : vector<16x128xf32>
      %c124_i32_329 = arith.constant 124 : i32
      %873 = tpu.dynamic_rotate %625 by %c124_i32_329 dim 1 : vector<16x128xf32>, i32 -> vector<16x128xf32>
      %c1_i32_330 = arith.constant 1 : i32
      %874 = vector.broadcast %c1_i32_330 : i32 to vector<1x128xi32>
      %875 = arith.addi %4, %874 : vector<1x128xi32>
      %c0_i32_331 = arith.constant 0 : i32
      %876 = vector.broadcast %c0_i32_331 : i32 to vector<1x128xi32>
      %877 = arith.cmpi sge, %875, %876 : vector<1x128xi32>
      %c1_i32_332 = arith.constant 1 : i32
      %878 = vector.broadcast %c1_i32_332 : i32 to vector<1x128xi32>
      %879 = arith.addi %4, %878 : vector<1x128xi32>
      %c16_i32_333 = arith.constant 16 : i32
      %880 = vector.broadcast %c16_i32_333 : i32 to vector<1x128xi32>
      %881 = arith.cmpi slt, %879, %880 : vector<1x128xi32>
      %882 = arith.andi %877, %881 : vector<1x128xi1>
      %cst_334 = arith.constant 0.000000e+00 : f32
      %883 = vector.shape_cast %882 : vector<1x128xi1> to vector<1x128xi1>
      %884 = vector.broadcast %883 : vector<1x128xi1> to vector<16x128xi1>
      %885 = vector.broadcast %cst_334 : f32 to vector<16x128xf32>
      %886 = arith.select %884, %873, %885 : vector<16x128xi1>, vector<16x128xf32>
      %c13_335 = arith.constant 13 : index
      %c0_336 = arith.constant 0 : index
      %887 = vector.load %arg11[%c13_335, %c0_336] : memref<25x128xf32, #tpu.memory_space<vmem>>, vector<1x128xf32>
      %888 = vector.shape_cast %887 : vector<1x128xf32> to vector<128xf32>
      %889 = vector.shape_cast %888 : vector<128xf32> to vector<1x128xf32>
      %890 = vector.broadcast %889 : vector<1x128xf32> to vector<16x128xf32>
      %891 = arith.mulf %886, %890 : vector<16x128xf32>
      %892 = arith.addf %872, %891 : vector<16x128xf32>
      %c120_i32_337 = arith.constant 120 : i32
      %893 = tpu.dynamic_rotate %625 by %c120_i32_337 dim 1 : vector<16x128xf32>, i32 -> vector<16x128xf32>
      %c2_i32_338 = arith.constant 2 : i32
      %894 = vector.broadcast %c2_i32_338 : i32 to vector<1x128xi32>
      %895 = arith.addi %4, %894 : vector<1x128xi32>
      %c0_i32_339 = arith.constant 0 : i32
      %896 = vector.broadcast %c0_i32_339 : i32 to vector<1x128xi32>
      %897 = arith.cmpi sge, %895, %896 : vector<1x128xi32>
      %c2_i32_340 = arith.constant 2 : i32
      %898 = vector.broadcast %c2_i32_340 : i32 to vector<1x128xi32>
      %899 = arith.addi %4, %898 : vector<1x128xi32>
      %c16_i32_341 = arith.constant 16 : i32
      %900 = vector.broadcast %c16_i32_341 : i32 to vector<1x128xi32>
      %901 = arith.cmpi slt, %899, %900 : vector<1x128xi32>
      %902 = arith.andi %897, %901 : vector<1x128xi1>
      %cst_342 = arith.constant 0.000000e+00 : f32
      %903 = vector.shape_cast %902 : vector<1x128xi1> to vector<1x128xi1>
      %904 = vector.broadcast %903 : vector<1x128xi1> to vector<16x128xi1>
      %905 = vector.broadcast %cst_342 : f32 to vector<16x128xf32>
      %906 = arith.select %904, %893, %905 : vector<16x128xi1>, vector<16x128xf32>
      %c14_343 = arith.constant 14 : index
      %c0_344 = arith.constant 0 : index
      %907 = vector.load %arg11[%c14_343, %c0_344] : memref<25x128xf32, #tpu.memory_space<vmem>>, vector<1x128xf32>
      %908 = vector.shape_cast %907 : vector<1x128xf32> to vector<128xf32>
      %909 = vector.shape_cast %908 : vector<128xf32> to vector<1x128xf32>
      %910 = vector.broadcast %909 : vector<1x128xf32> to vector<16x128xf32>
      %911 = arith.mulf %906, %910 : vector<16x128xf32>
      %912 = arith.addf %892, %911 : vector<16x128xf32>
      %c15_i32_345 = arith.constant 15 : i32
      %913 = tpu.dynamic_rotate %625 by %c15_i32_345 dim 0 : vector<16x128xf32>, i32 -> vector<16x128xf32>
      %c1_i32_346 = arith.constant 1 : i32
      %914 = vector.broadcast %c1_i32_346 : i32 to vector<16x1xi32>
      %915 = arith.addi %3, %914 : vector<16x1xi32>
      %c0_i32_347 = arith.constant 0 : i32
      %916 = vector.broadcast %c0_i32_347 : i32 to vector<16x1xi32>
      %917 = arith.cmpi sge, %915, %916 : vector<16x1xi32>
      %c1_i32_348 = arith.constant 1 : i32
      %918 = vector.broadcast %c1_i32_348 : i32 to vector<16x1xi32>
      %919 = arith.addi %3, %918 : vector<16x1xi32>
      %c16_i32_349 = arith.constant 16 : i32
      %920 = vector.broadcast %c16_i32_349 : i32 to vector<16x1xi32>
      %921 = arith.cmpi slt, %919, %920 : vector<16x1xi32>
      %922 = arith.andi %917, %921 : vector<16x1xi1>
      %cst_350 = arith.constant 0.000000e+00 : f32
      %923 = vector.shape_cast %922 : vector<16x1xi1> to vector<16x1xi1>
      %924 = vector.broadcast %923 : vector<16x1xi1> to vector<16x128xi1>
      %925 = vector.broadcast %cst_350 : f32 to vector<16x128xf32>
      %926 = arith.select %924, %913, %925 : vector<16x128xi1>, vector<16x128xf32>
      %c8_i32_351 = arith.constant 8 : i32
      %927 = tpu.dynamic_rotate %926 by %c8_i32_351 dim 1 : vector<16x128xf32>, i32 -> vector<16x128xf32>
      %c-2_i32_352 = arith.constant -2 : i32
      %928 = vector.broadcast %c-2_i32_352 : i32 to vector<1x128xi32>
      %929 = arith.addi %4, %928 : vector<1x128xi32>
      %c0_i32_353 = arith.constant 0 : i32
      %930 = vector.broadcast %c0_i32_353 : i32 to vector<1x128xi32>
      %931 = arith.cmpi sge, %929, %930 : vector<1x128xi32>
      %c-2_i32_354 = arith.constant -2 : i32
      %932 = vector.broadcast %c-2_i32_354 : i32 to vector<1x128xi32>
      %933 = arith.addi %4, %932 : vector<1x128xi32>
      %c16_i32_355 = arith.constant 16 : i32
      %934 = vector.broadcast %c16_i32_355 : i32 to vector<1x128xi32>
      %935 = arith.cmpi slt, %933, %934 : vector<1x128xi32>
      %936 = arith.andi %931, %935 : vector<1x128xi1>
      %cst_356 = arith.constant 0.000000e+00 : f32
      %937 = vector.shape_cast %936 : vector<1x128xi1> to vector<1x128xi1>
      %938 = vector.broadcast %937 : vector<1x128xi1> to vector<16x128xi1>
      %939 = vector.broadcast %cst_356 : f32 to vector<16x128xf32>
      %940 = arith.select %938, %927, %939 : vector<16x128xi1>, vector<16x128xf32>
      %c15_357 = arith.constant 15 : index
      %c0_358 = arith.constant 0 : index
      %941 = vector.load %arg11[%c15_357, %c0_358] : memref<25x128xf32, #tpu.memory_space<vmem>>, vector<1x128xf32>
      %942 = vector.shape_cast %941 : vector<1x128xf32> to vector<128xf32>
      %943 = vector.shape_cast %942 : vector<128xf32> to vector<1x128xf32>
      %944 = vector.broadcast %943 : vector<1x128xf32> to vector<16x128xf32>
      %945 = arith.mulf %940, %944 : vector<16x128xf32>
      %946 = arith.addf %912, %945 : vector<16x128xf32>
      %c4_i32_359 = arith.constant 4 : i32
      %947 = tpu.dynamic_rotate %926 by %c4_i32_359 dim 1 : vector<16x128xf32>, i32 -> vector<16x128xf32>
      %c-1_i32_360 = arith.constant -1 : i32
      %948 = vector.broadcast %c-1_i32_360 : i32 to vector<1x128xi32>
      %949 = arith.addi %4, %948 : vector<1x128xi32>
      %c0_i32_361 = arith.constant 0 : i32
      %950 = vector.broadcast %c0_i32_361 : i32 to vector<1x128xi32>
      %951 = arith.cmpi sge, %949, %950 : vector<1x128xi32>
      %c-1_i32_362 = arith.constant -1 : i32
      %952 = vector.broadcast %c-1_i32_362 : i32 to vector<1x128xi32>
      %953 = arith.addi %4, %952 : vector<1x128xi32>
      %c16_i32_363 = arith.constant 16 : i32
      %954 = vector.broadcast %c16_i32_363 : i32 to vector<1x128xi32>
      %955 = arith.cmpi slt, %953, %954 : vector<1x128xi32>
      %956 = arith.andi %951, %955 : vector<1x128xi1>
      %cst_364 = arith.constant 0.000000e+00 : f32
      %957 = vector.shape_cast %956 : vector<1x128xi1> to vector<1x128xi1>
      %958 = vector.broadcast %957 : vector<1x128xi1> to vector<16x128xi1>
      %959 = vector.broadcast %cst_364 : f32 to vector<16x128xf32>
      %960 = arith.select %958, %947, %959 : vector<16x128xi1>, vector<16x128xf32>
      %c16_365 = arith.constant 16 : index
      %c0_366 = arith.constant 0 : index
      %961 = vector.load %arg11[%c16_365, %c0_366] : memref<25x128xf32, #tpu.memory_space<vmem>>, vector<1x128xf32>
      %962 = vector.shape_cast %961 : vector<1x128xf32> to vector<128xf32>
      %963 = vector.shape_cast %962 : vector<128xf32> to vector<1x128xf32>
      %964 = vector.broadcast %963 : vector<1x128xf32> to vector<16x128xf32>
      %965 = arith.mulf %960, %964 : vector<16x128xf32>
      %966 = arith.addf %946, %965 : vector<16x128xf32>
      %c17_367 = arith.constant 17 : index
      %c0_368 = arith.constant 0 : index
      %967 = vector.load %arg11[%c17_367, %c0_368] : memref<25x128xf32, #tpu.memory_space<vmem>>, vector<1x128xf32>
      %968 = vector.shape_cast %967 : vector<1x128xf32> to vector<128xf32>
      %969 = vector.shape_cast %968 : vector<128xf32> to vector<1x128xf32>
      %970 = vector.broadcast %969 : vector<1x128xf32> to vector<16x128xf32>
      %971 = arith.mulf %926, %970 : vector<16x128xf32>
      %972 = arith.addf %966, %971 : vector<16x128xf32>
      %c124_i32_369 = arith.constant 124 : i32
      %973 = tpu.dynamic_rotate %926 by %c124_i32_369 dim 1 : vector<16x128xf32>, i32 -> vector<16x128xf32>
      %c1_i32_370 = arith.constant 1 : i32
      %974 = vector.broadcast %c1_i32_370 : i32 to vector<1x128xi32>
      %975 = arith.addi %4, %974 : vector<1x128xi32>
      %c0_i32_371 = arith.constant 0 : i32
      %976 = vector.broadcast %c0_i32_371 : i32 to vector<1x128xi32>
      %977 = arith.cmpi sge, %975, %976 : vector<1x128xi32>
      %c1_i32_372 = arith.constant 1 : i32
      %978 = vector.broadcast %c1_i32_372 : i32 to vector<1x128xi32>
      %979 = arith.addi %4, %978 : vector<1x128xi32>
      %c16_i32_373 = arith.constant 16 : i32
      %980 = vector.broadcast %c16_i32_373 : i32 to vector<1x128xi32>
      %981 = arith.cmpi slt, %979, %980 : vector<1x128xi32>
      %982 = arith.andi %977, %981 : vector<1x128xi1>
      %cst_374 = arith.constant 0.000000e+00 : f32
      %983 = vector.shape_cast %982 : vector<1x128xi1> to vector<1x128xi1>
      %984 = vector.broadcast %983 : vector<1x128xi1> to vector<16x128xi1>
      %985 = vector.broadcast %cst_374 : f32 to vector<16x128xf32>
      %986 = arith.select %984, %973, %985 : vector<16x128xi1>, vector<16x128xf32>
      %c18_375 = arith.constant 18 : index
      %c0_376 = arith.constant 0 : index
      %987 = vector.load %arg11[%c18_375, %c0_376] : memref<25x128xf32, #tpu.memory_space<vmem>>, vector<1x128xf32>
      %988 = vector.shape_cast %987 : vector<1x128xf32> to vector<128xf32>
      %989 = vector.shape_cast %988 : vector<128xf32> to vector<1x128xf32>
      %990 = vector.broadcast %989 : vector<1x128xf32> to vector<16x128xf32>
      %991 = arith.mulf %986, %990 : vector<16x128xf32>
      %992 = arith.addf %972, %991 : vector<16x128xf32>
      %c120_i32_377 = arith.constant 120 : i32
      %993 = tpu.dynamic_rotate %926 by %c120_i32_377 dim 1 : vector<16x128xf32>, i32 -> vector<16x128xf32>
      %c2_i32_378 = arith.constant 2 : i32
      %994 = vector.broadcast %c2_i32_378 : i32 to vector<1x128xi32>
      %995 = arith.addi %4, %994 : vector<1x128xi32>
      %c0_i32_379 = arith.constant 0 : i32
      %996 = vector.broadcast %c0_i32_379 : i32 to vector<1x128xi32>
      %997 = arith.cmpi sge, %995, %996 : vector<1x128xi32>
      %c2_i32_380 = arith.constant 2 : i32
      %998 = vector.broadcast %c2_i32_380 : i32 to vector<1x128xi32>
      %999 = arith.addi %4, %998 : vector<1x128xi32>
      %c16_i32_381 = arith.constant 16 : i32
      %1000 = vector.broadcast %c16_i32_381 : i32 to vector<1x128xi32>
      %1001 = arith.cmpi slt, %999, %1000 : vector<1x128xi32>
      %1002 = arith.andi %997, %1001 : vector<1x128xi1>
      %cst_382 = arith.constant 0.000000e+00 : f32
      %1003 = vector.shape_cast %1002 : vector<1x128xi1> to vector<1x128xi1>
      %1004 = vector.broadcast %1003 : vector<1x128xi1> to vector<16x128xi1>
      %1005 = vector.broadcast %cst_382 : f32 to vector<16x128xf32>
      %1006 = arith.select %1004, %993, %1005 : vector<16x128xi1>, vector<16x128xf32>
      %c19_383 = arith.constant 19 : index
      %c0_384 = arith.constant 0 : index
      %1007 = vector.load %arg11[%c19_383, %c0_384] : memref<25x128xf32, #tpu.memory_space<vmem>>, vector<1x128xf32>
      %1008 = vector.shape_cast %1007 : vector<1x128xf32> to vector<128xf32>
      %1009 = vector.shape_cast %1008 : vector<128xf32> to vector<1x128xf32>
      %1010 = vector.broadcast %1009 : vector<1x128xf32> to vector<16x128xf32>
      %1011 = arith.mulf %1006, %1010 : vector<16x128xf32>
      %1012 = arith.addf %992, %1011 : vector<16x128xf32>
      %c14_i32_385 = arith.constant 14 : i32
      %1013 = tpu.dynamic_rotate %625 by %c14_i32_385 dim 0 : vector<16x128xf32>, i32 -> vector<16x128xf32>
      %c2_i32_386 = arith.constant 2 : i32
      %1014 = vector.broadcast %c2_i32_386 : i32 to vector<16x1xi32>
      %1015 = arith.addi %3, %1014 : vector<16x1xi32>
      %c0_i32_387 = arith.constant 0 : i32
      %1016 = vector.broadcast %c0_i32_387 : i32 to vector<16x1xi32>
      %1017 = arith.cmpi sge, %1015, %1016 : vector<16x1xi32>
      %c2_i32_388 = arith.constant 2 : i32
      %1018 = vector.broadcast %c2_i32_388 : i32 to vector<16x1xi32>
      %1019 = arith.addi %3, %1018 : vector<16x1xi32>
      %c16_i32_389 = arith.constant 16 : i32
      %1020 = vector.broadcast %c16_i32_389 : i32 to vector<16x1xi32>
      %1021 = arith.cmpi slt, %1019, %1020 : vector<16x1xi32>
      %1022 = arith.andi %1017, %1021 : vector<16x1xi1>
      %cst_390 = arith.constant 0.000000e+00 : f32
      %1023 = vector.shape_cast %1022 : vector<16x1xi1> to vector<16x1xi1>
      %1024 = vector.broadcast %1023 : vector<16x1xi1> to vector<16x128xi1>
      %1025 = vector.broadcast %cst_390 : f32 to vector<16x128xf32>
      %1026 = arith.select %1024, %1013, %1025 : vector<16x128xi1>, vector<16x128xf32>
      %c8_i32_391 = arith.constant 8 : i32
      %1027 = tpu.dynamic_rotate %1026 by %c8_i32_391 dim 1 : vector<16x128xf32>, i32 -> vector<16x128xf32>
      %c-2_i32_392 = arith.constant -2 : i32
      %1028 = vector.broadcast %c-2_i32_392 : i32 to vector<1x128xi32>
      %1029 = arith.addi %4, %1028 : vector<1x128xi32>
      %c0_i32_393 = arith.constant 0 : i32
      %1030 = vector.broadcast %c0_i32_393 : i32 to vector<1x128xi32>
      %1031 = arith.cmpi sge, %1029, %1030 : vector<1x128xi32>
      %c-2_i32_394 = arith.constant -2 : i32
      %1032 = vector.broadcast %c-2_i32_394 : i32 to vector<1x128xi32>
      %1033 = arith.addi %4, %1032 : vector<1x128xi32>
      %c16_i32_395 = arith.constant 16 : i32
      %1034 = vector.broadcast %c16_i32_395 : i32 to vector<1x128xi32>
      %1035 = arith.cmpi slt, %1033, %1034 : vector<1x128xi32>
      %1036 = arith.andi %1031, %1035 : vector<1x128xi1>
      %cst_396 = arith.constant 0.000000e+00 : f32
      %1037 = vector.shape_cast %1036 : vector<1x128xi1> to vector<1x128xi1>
      %1038 = vector.broadcast %1037 : vector<1x128xi1> to vector<16x128xi1>
      %1039 = vector.broadcast %cst_396 : f32 to vector<16x128xf32>
      %1040 = arith.select %1038, %1027, %1039 : vector<16x128xi1>, vector<16x128xf32>
      %c20_397 = arith.constant 20 : index
      %c0_398 = arith.constant 0 : index
      %1041 = vector.load %arg11[%c20_397, %c0_398] : memref<25x128xf32, #tpu.memory_space<vmem>>, vector<1x128xf32>
      %1042 = vector.shape_cast %1041 : vector<1x128xf32> to vector<128xf32>
      %1043 = vector.shape_cast %1042 : vector<128xf32> to vector<1x128xf32>
      %1044 = vector.broadcast %1043 : vector<1x128xf32> to vector<16x128xf32>
      %1045 = arith.mulf %1040, %1044 : vector<16x128xf32>
      %1046 = arith.addf %1012, %1045 : vector<16x128xf32>
      %c4_i32_399 = arith.constant 4 : i32
      %1047 = tpu.dynamic_rotate %1026 by %c4_i32_399 dim 1 : vector<16x128xf32>, i32 -> vector<16x128xf32>
      %c-1_i32_400 = arith.constant -1 : i32
      %1048 = vector.broadcast %c-1_i32_400 : i32 to vector<1x128xi32>
      %1049 = arith.addi %4, %1048 : vector<1x128xi32>
      %c0_i32_401 = arith.constant 0 : i32
      %1050 = vector.broadcast %c0_i32_401 : i32 to vector<1x128xi32>
      %1051 = arith.cmpi sge, %1049, %1050 : vector<1x128xi32>
      %c-1_i32_402 = arith.constant -1 : i32
      %1052 = vector.broadcast %c-1_i32_402 : i32 to vector<1x128xi32>
      %1053 = arith.addi %4, %1052 : vector<1x128xi32>
      %c16_i32_403 = arith.constant 16 : i32
      %1054 = vector.broadcast %c16_i32_403 : i32 to vector<1x128xi32>
      %1055 = arith.cmpi slt, %1053, %1054 : vector<1x128xi32>
      %1056 = arith.andi %1051, %1055 : vector<1x128xi1>
      %cst_404 = arith.constant 0.000000e+00 : f32
      %1057 = vector.shape_cast %1056 : vector<1x128xi1> to vector<1x128xi1>
      %1058 = vector.broadcast %1057 : vector<1x128xi1> to vector<16x128xi1>
      %1059 = vector.broadcast %cst_404 : f32 to vector<16x128xf32>
      %1060 = arith.select %1058, %1047, %1059 : vector<16x128xi1>, vector<16x128xf32>
      %c21_405 = arith.constant 21 : index
      %c0_406 = arith.constant 0 : index
      %1061 = vector.load %arg11[%c21_405, %c0_406] : memref<25x128xf32, #tpu.memory_space<vmem>>, vector<1x128xf32>
      %1062 = vector.shape_cast %1061 : vector<1x128xf32> to vector<128xf32>
      %1063 = vector.shape_cast %1062 : vector<128xf32> to vector<1x128xf32>
      %1064 = vector.broadcast %1063 : vector<1x128xf32> to vector<16x128xf32>
      %1065 = arith.mulf %1060, %1064 : vector<16x128xf32>
      %1066 = arith.addf %1046, %1065 : vector<16x128xf32>
      %c22_407 = arith.constant 22 : index
      %c0_408 = arith.constant 0 : index
      %1067 = vector.load %arg11[%c22_407, %c0_408] : memref<25x128xf32, #tpu.memory_space<vmem>>, vector<1x128xf32>
      %1068 = vector.shape_cast %1067 : vector<1x128xf32> to vector<128xf32>
      %1069 = vector.shape_cast %1068 : vector<128xf32> to vector<1x128xf32>
      %1070 = vector.broadcast %1069 : vector<1x128xf32> to vector<16x128xf32>
      %1071 = arith.mulf %1026, %1070 : vector<16x128xf32>
      %1072 = arith.addf %1066, %1071 : vector<16x128xf32>
      %c124_i32_409 = arith.constant 124 : i32
      %1073 = tpu.dynamic_rotate %1026 by %c124_i32_409 dim 1 : vector<16x128xf32>, i32 -> vector<16x128xf32>
      %c1_i32_410 = arith.constant 1 : i32
      %1074 = vector.broadcast %c1_i32_410 : i32 to vector<1x128xi32>
      %1075 = arith.addi %4, %1074 : vector<1x128xi32>
      %c0_i32_411 = arith.constant 0 : i32
      %1076 = vector.broadcast %c0_i32_411 : i32 to vector<1x128xi32>
      %1077 = arith.cmpi sge, %1075, %1076 : vector<1x128xi32>
      %c1_i32_412 = arith.constant 1 : i32
      %1078 = vector.broadcast %c1_i32_412 : i32 to vector<1x128xi32>
      %1079 = arith.addi %4, %1078 : vector<1x128xi32>
      %c16_i32_413 = arith.constant 16 : i32
      %1080 = vector.broadcast %c16_i32_413 : i32 to vector<1x128xi32>
      %1081 = arith.cmpi slt, %1079, %1080 : vector<1x128xi32>
      %1082 = arith.andi %1077, %1081 : vector<1x128xi1>
      %cst_414 = arith.constant 0.000000e+00 : f32
      %1083 = vector.shape_cast %1082 : vector<1x128xi1> to vector<1x128xi1>
      %1084 = vector.broadcast %1083 : vector<1x128xi1> to vector<16x128xi1>
      %1085 = vector.broadcast %cst_414 : f32 to vector<16x128xf32>
      %1086 = arith.select %1084, %1073, %1085 : vector<16x128xi1>, vector<16x128xf32>
      %c23_415 = arith.constant 23 : index
      %c0_416 = arith.constant 0 : index
      %1087 = vector.load %arg11[%c23_415, %c0_416] : memref<25x128xf32, #tpu.memory_space<vmem>>, vector<1x128xf32>
      %1088 = vector.shape_cast %1087 : vector<1x128xf32> to vector<128xf32>
      %1089 = vector.shape_cast %1088 : vector<128xf32> to vector<1x128xf32>
      %1090 = vector.broadcast %1089 : vector<1x128xf32> to vector<16x128xf32>
      %1091 = arith.mulf %1086, %1090 : vector<16x128xf32>
      %1092 = arith.addf %1072, %1091 : vector<16x128xf32>
      %c120_i32_417 = arith.constant 120 : i32
      %1093 = tpu.dynamic_rotate %1026 by %c120_i32_417 dim 1 : vector<16x128xf32>, i32 -> vector<16x128xf32>
      %c2_i32_418 = arith.constant 2 : i32
      %1094 = vector.broadcast %c2_i32_418 : i32 to vector<1x128xi32>
      %1095 = arith.addi %4, %1094 : vector<1x128xi32>
      %c0_i32_419 = arith.constant 0 : i32
      %1096 = vector.broadcast %c0_i32_419 : i32 to vector<1x128xi32>
      %1097 = arith.cmpi sge, %1095, %1096 : vector<1x128xi32>
      %c2_i32_420 = arith.constant 2 : i32
      %1098 = vector.broadcast %c2_i32_420 : i32 to vector<1x128xi32>
      %1099 = arith.addi %4, %1098 : vector<1x128xi32>
      %c16_i32_421 = arith.constant 16 : i32
      %1100 = vector.broadcast %c16_i32_421 : i32 to vector<1x128xi32>
      %1101 = arith.cmpi slt, %1099, %1100 : vector<1x128xi32>
      %1102 = arith.andi %1097, %1101 : vector<1x128xi1>
      %cst_422 = arith.constant 0.000000e+00 : f32
      %1103 = vector.shape_cast %1102 : vector<1x128xi1> to vector<1x128xi1>
      %1104 = vector.broadcast %1103 : vector<1x128xi1> to vector<16x128xi1>
      %1105 = vector.broadcast %cst_422 : f32 to vector<16x128xf32>
      %1106 = arith.select %1104, %1093, %1105 : vector<16x128xi1>, vector<16x128xf32>
      %c24_423 = arith.constant 24 : index
      %c0_424 = arith.constant 0 : index
      %1107 = vector.load %arg11[%c24_423, %c0_424] : memref<25x128xf32, #tpu.memory_space<vmem>>, vector<1x128xf32>
      %1108 = vector.shape_cast %1107 : vector<1x128xf32> to vector<128xf32>
      %1109 = vector.shape_cast %1108 : vector<128xf32> to vector<1x128xf32>
      %1110 = vector.broadcast %1109 : vector<1x128xf32> to vector<16x128xf32>
      %1111 = arith.mulf %1106, %1110 : vector<16x128xf32>
      %1112 = arith.addf %1092, %1111 : vector<16x128xf32>
      %c3_425 = arith.constant 3 : index
      %c0_426 = arith.constant 0 : index
      %1113 = vector.load %arg12[%c3_425, %c0_426] : memref<7x128xf32, #tpu.memory_space<vmem>>, vector<1x128xf32>
      %1114 = vector.shape_cast %1113 : vector<1x128xf32> to vector<128xf32>
      %1115 = vector.shape_cast %1114 : vector<128xf32> to vector<1x128xf32>
      %1116 = vector.broadcast %1115 : vector<1x128xf32> to vector<16x128xf32>
      %1117 = arith.mulf %1112, %1116 : vector<16x128xf32>
      %c1_i32_427 = arith.constant 1 : i32
      %1118 = tpu.dynamic_rotate %1112 by %c1_i32_427 dim 1 : vector<16x128xf32>, i32 -> vector<16x128xf32>
      %c4_428 = arith.constant 4 : index
      %c0_429 = arith.constant 0 : index
      %1119 = vector.load %arg12[%c4_428, %c0_429] : memref<7x128xf32, #tpu.memory_space<vmem>>, vector<1x128xf32>
      %1120 = vector.shape_cast %1119 : vector<1x128xf32> to vector<128xf32>
      %1121 = vector.shape_cast %1120 : vector<128xf32> to vector<1x128xf32>
      %1122 = vector.broadcast %1121 : vector<1x128xf32> to vector<16x128xf32>
      %1123 = arith.mulf %1118, %1122 : vector<16x128xf32>
      %1124 = arith.addf %1117, %1123 : vector<16x128xf32>
      %c127_i32_430 = arith.constant 127 : i32
      %1125 = tpu.dynamic_rotate %1112 by %c127_i32_430 dim 1 : vector<16x128xf32>, i32 -> vector<16x128xf32>
      %c2_431 = arith.constant 2 : index
      %c0_432 = arith.constant 0 : index
      %1126 = vector.load %arg12[%c2_431, %c0_432] : memref<7x128xf32, #tpu.memory_space<vmem>>, vector<1x128xf32>
      %1127 = vector.shape_cast %1126 : vector<1x128xf32> to vector<128xf32>
      %1128 = vector.shape_cast %1127 : vector<128xf32> to vector<1x128xf32>
      %1129 = vector.broadcast %1128 : vector<1x128xf32> to vector<16x128xf32>
      %1130 = arith.mulf %1125, %1129 : vector<16x128xf32>
      %1131 = arith.addf %1124, %1130 : vector<16x128xf32>
      %c2_i32_433 = arith.constant 2 : i32
      %1132 = tpu.dynamic_rotate %1112 by %c2_i32_433 dim 1 : vector<16x128xf32>, i32 -> vector<16x128xf32>
      %c5_434 = arith.constant 5 : index
      %c0_435 = arith.constant 0 : index
      %1133 = vector.load %arg12[%c5_434, %c0_435] : memref<7x128xf32, #tpu.memory_space<vmem>>, vector<1x128xf32>
      %1134 = vector.shape_cast %1133 : vector<1x128xf32> to vector<128xf32>
      %1135 = vector.shape_cast %1134 : vector<128xf32> to vector<1x128xf32>
      %1136 = vector.broadcast %1135 : vector<1x128xf32> to vector<16x128xf32>
      %1137 = arith.mulf %1132, %1136 : vector<16x128xf32>
      %1138 = arith.addf %1131, %1137 : vector<16x128xf32>
      %c126_i32_436 = arith.constant 126 : i32
      %1139 = tpu.dynamic_rotate %1112 by %c126_i32_436 dim 1 : vector<16x128xf32>, i32 -> vector<16x128xf32>
      %c1_437 = arith.constant 1 : index
      %c0_438 = arith.constant 0 : index
      %1140 = vector.load %arg12[%c1_437, %c0_438] : memref<7x128xf32, #tpu.memory_space<vmem>>, vector<1x128xf32>
      %1141 = vector.shape_cast %1140 : vector<1x128xf32> to vector<128xf32>
      %1142 = vector.shape_cast %1141 : vector<128xf32> to vector<1x128xf32>
      %1143 = vector.broadcast %1142 : vector<1x128xf32> to vector<16x128xf32>
      %1144 = arith.mulf %1139, %1143 : vector<16x128xf32>
      %1145 = arith.addf %1138, %1144 : vector<16x128xf32>
      %c3_i32_439 = arith.constant 3 : i32
      %1146 = tpu.dynamic_rotate %1112 by %c3_i32_439 dim 1 : vector<16x128xf32>, i32 -> vector<16x128xf32>
      %c6_440 = arith.constant 6 : index
      %c0_441 = arith.constant 0 : index
      %1147 = vector.load %arg12[%c6_440, %c0_441] : memref<7x128xf32, #tpu.memory_space<vmem>>, vector<1x128xf32>
      %1148 = vector.shape_cast %1147 : vector<1x128xf32> to vector<128xf32>
      %1149 = vector.shape_cast %1148 : vector<128xf32> to vector<1x128xf32>
      %1150 = vector.broadcast %1149 : vector<1x128xf32> to vector<16x128xf32>
      %1151 = arith.mulf %1146, %1150 : vector<16x128xf32>
      %1152 = arith.addf %1145, %1151 : vector<16x128xf32>
      %c125_i32_442 = arith.constant 125 : i32
      %1153 = tpu.dynamic_rotate %1112 by %c125_i32_442 dim 1 : vector<16x128xf32>, i32 -> vector<16x128xf32>
      %c0_443 = arith.constant 0 : index
      %c0_444 = arith.constant 0 : index
      %1154 = vector.load %arg12[%c0_443, %c0_444] : memref<7x128xf32, #tpu.memory_space<vmem>>, vector<1x128xf32>
      %1155 = vector.shape_cast %1154 : vector<1x128xf32> to vector<128xf32>
      %1156 = vector.shape_cast %1155 : vector<128xf32> to vector<1x128xf32>
      %1157 = vector.broadcast %1156 : vector<1x128xf32> to vector<16x128xf32>
      %1158 = arith.mulf %1153, %1157 : vector<16x128xf32>
      %1159 = arith.addf %1152, %1158 : vector<16x128xf32>
      %c4_i32_445 = arith.constant 4 : i32
      %1160 = tpu.dynamic_rotate %1159 by %c4_i32_445 dim 1 : vector<16x128xf32>, i32 -> vector<16x128xf32>
      %1161 = arith.addf %1159, %1160 : vector<16x128xf32>
      %c8_i32_446 = arith.constant 8 : i32
      %1162 = tpu.dynamic_rotate %1161 by %c8_i32_446 dim 1 : vector<16x128xf32>, i32 -> vector<16x128xf32>
      %1163 = arith.addf %1161, %1162 : vector<16x128xf32>
      %c16_i32_447 = arith.constant 16 : i32
      %1164 = tpu.dynamic_rotate %1163 by %c16_i32_447 dim 1 : vector<16x128xf32>, i32 -> vector<16x128xf32>
      %1165 = arith.addf %1163, %1164 : vector<16x128xf32>
      %c32_i32_448 = arith.constant 32 : i32
      %1166 = tpu.dynamic_rotate %1165 by %c32_i32_448 dim 1 : vector<16x128xf32>, i32 -> vector<16x128xf32>
      %1167 = arith.addf %1165, %1166 : vector<16x128xf32>
      %c64_i32_449 = arith.constant 64 : i32
      %1168 = tpu.dynamic_rotate %1167 by %c64_i32_449 dim 1 : vector<16x128xf32>, i32 -> vector<16x128xf32>
      %1169 = arith.addf %1167, %1168 : vector<16x128xf32>
      %cst_450 = arith.constant dense<0.000000e+00> : vector<128xf32>
      %1170 = vector.multi_reduction <add>, %1169, %cst_450 [0] : vector<16x128xf32> to vector<128xf32>
      %1171 = vector.shape_cast %1170 : vector<128xf32> to vector<1x128xf32>
      %cst_451 = arith.constant 0.001953125 : f32
      %1172 = vector.broadcast %cst_451 : f32 to vector<1x128xf32>
      %1173 = arith.mulf %1171, %1172 : vector<1x128xf32>
      %1174 = vector.broadcast %1173 : vector<1x128xf32> to vector<16x128xf32>
      %1175 = arith.subf %1159, %1174 : vector<16x128xf32>
      %1176 = arith.mulf %1175, %1175 : vector<16x128xf32>
      %c4_i32_452 = arith.constant 4 : i32
      %1177 = tpu.dynamic_rotate %1176 by %c4_i32_452 dim 1 : vector<16x128xf32>, i32 -> vector<16x128xf32>
      %1178 = arith.addf %1176, %1177 : vector<16x128xf32>
      %c8_i32_453 = arith.constant 8 : i32
      %1179 = tpu.dynamic_rotate %1178 by %c8_i32_453 dim 1 : vector<16x128xf32>, i32 -> vector<16x128xf32>
      %1180 = arith.addf %1178, %1179 : vector<16x128xf32>
      %c16_i32_454 = arith.constant 16 : i32
      %1181 = tpu.dynamic_rotate %1180 by %c16_i32_454 dim 1 : vector<16x128xf32>, i32 -> vector<16x128xf32>
      %1182 = arith.addf %1180, %1181 : vector<16x128xf32>
      %c32_i32_455 = arith.constant 32 : i32
      %1183 = tpu.dynamic_rotate %1182 by %c32_i32_455 dim 1 : vector<16x128xf32>, i32 -> vector<16x128xf32>
      %1184 = arith.addf %1182, %1183 : vector<16x128xf32>
      %c64_i32_456 = arith.constant 64 : i32
      %1185 = tpu.dynamic_rotate %1184 by %c64_i32_456 dim 1 : vector<16x128xf32>, i32 -> vector<16x128xf32>
      %1186 = arith.addf %1184, %1185 : vector<16x128xf32>
      %cst_457 = arith.constant dense<0.000000e+00> : vector<128xf32>
      %1187 = vector.multi_reduction <add>, %1186, %cst_457 [0] : vector<16x128xf32> to vector<128xf32>
      %1188 = vector.shape_cast %1187 : vector<128xf32> to vector<1x128xf32>
      %cst_458 = arith.constant 0.001953125 : f32
      %1189 = vector.broadcast %cst_458 : f32 to vector<1x128xf32>
      %1190 = arith.mulf %1188, %1189 : vector<1x128xf32>
      %cst_459 = arith.constant 9.99999974E-6 : f32
      %1191 = vector.broadcast %cst_459 : f32 to vector<1x128xf32>
      %1192 = arith.addf %1190, %1191 : vector<1x128xf32>
      %1193 = math.rsqrt %1192 : vector<1x128xf32>
      %1194 = vector.broadcast %1193 : vector<1x128xf32> to vector<16x128xf32>
      %1195 = arith.mulf %1175, %1194 : vector<16x128xf32>
      %1196 = vector.broadcast %53 : f32 to vector<16x128xf32>
      %1197 = arith.mulf %1196, %1195 : vector<16x128xf32>
      %1198 = arith.addf %52, %1197 : vector<16x128xf32>
      %c0_460 = arith.constant 0 : index
      %c0_461 = arith.constant 0 : index
      %c0_462 = arith.constant 0 : index
      %1199 = vector.load %arg17[%c0_460, %c0_461, %c0_462] : memref<1x16x128xf32, #tpu.memory_space<vmem>>, vector<1x16x128xf32>
      %1200 = vector.shape_cast %1199 : vector<1x16x128xf32> to vector<16x128xf32>
      %1201 = vector.shape_cast %1198 : vector<16x128xf32> to vector<1x16x128xf32>
      tpu.vector_store %arg17[%c0_460, %c0_461, %c0_462], %1201 {strides = array<i32>} : memref<1x16x128xf32, #tpu.memory_space<vmem>>, vector<1x16x128xf32>,
    } else {
    }
    %c0_i32_22 = arith.constant 0 : i32
    %39 = arith.cmpi eq, %arg0, %c0_i32_22 : i32
    %c6 = arith.constant 6 : index
    %40 = memref.load %arg1[%c6] : memref<8xf32, #tpu.memory_space<smem>>
    %cst_23 = arith.constant 0.000000e+00 : f32
    %41 = arith.cmpf one, %40, %cst_23 : f32
    %42 = arith.andi %39, %41 : i1
    %43 = arith.extui %42 : i1 to i32
    %c0_i32_24 = arith.constant 0 : i32
    %44 = arith.cmpi ne, %43, %c0_i32_24 : i32
    scf.if %44 {
      %c0_28 = arith.constant 0 : index
      %c0_29 = arith.constant 0 : index
      %c0_30 = arith.constant 0 : index
      %51 = vector.load %arg17[%c0_28, %c0_29, %c0_30] : memref<1x16x128xf32, #tpu.memory_space<vmem>>, vector<1x16x128xf32>
      %52 = vector.shape_cast %51 : vector<1x16x128xf32> to vector<16x128xf32>
      %c6_31 = arith.constant 6 : index
      %53 = memref.load %arg1[%c6_31] : memref<8xf32, #tpu.memory_space<smem>>
      %cst_32 = arith.constant 0.000000e+00 : f32
      %54 = vector.broadcast %cst_32 : f32 to vector<16x128xf32>
      %c2_i32 = arith.constant 2 : i32
      %55 = tpu.dynamic_rotate %2 by %c2_i32 dim 0 : vector<16x128xf32>, i32 -> vector<16x128xf32>
      %c-2_i32 = arith.constant -2 : i32
      %56 = vector.broadcast %c-2_i32 : i32 to vector<16x1xi32>
      %57 = arith.addi %3, %56 : vector<16x1xi32>
      %c0_i32_33 = arith.constant 0 : i32
      %58 = vector.broadcast %c0_i32_33 : i32 to vector<16x1xi32>
      %59 = arith.cmpi sge, %57, %58 : vector<16x1xi32>
      %c-2_i32_34 = arith.constant -2 : i32
      %60 = vector.broadcast %c-2_i32_34 : i32 to vector<16x1xi32>
      %61 = arith.addi %3, %60 : vector<16x1xi32>
      %c16_i32 = arith.constant 16 : i32
      %62 = vector.broadcast %c16_i32 : i32 to vector<16x1xi32>
      %63 = arith.cmpi slt, %61, %62 : vector<16x1xi32>
      %64 = arith.andi %59, %63 : vector<16x1xi1>
      %cst_35 = arith.constant 0.000000e+00 : f32
      %65 = vector.shape_cast %64 : vector<16x1xi1> to vector<16x1xi1>
      %66 = vector.broadcast %65 : vector<16x1xi1> to vector<16x128xi1>
      %67 = vector.broadcast %cst_35 : f32 to vector<16x128xf32>
      %68 = arith.select %66, %55, %67 : vector<16x128xi1>, vector<16x128xf32>
      %c8_i32 = arith.constant 8 : i32
      %69 = tpu.dynamic_rotate %68 by %c8_i32 dim 1 : vector<16x128xf32>, i32 -> vector<16x128xf32>
      %c-2_i32_36 = arith.constant -2 : i32
      %70 = vector.broadcast %c-2_i32_36 : i32 to vector<1x128xi32>
      %71 = arith.addi %4, %70 : vector<1x128xi32>
      %c0_i32_37 = arith.constant 0 : i32
      %72 = vector.broadcast %c0_i32_37 : i32 to vector<1x128xi32>
      %73 = arith.cmpi sge, %71, %72 : vector<1x128xi32>
      %c-2_i32_38 = arith.constant -2 : i32
      %74 = vector.broadcast %c-2_i32_38 : i32 to vector<1x128xi32>
      %75 = arith.addi %4, %74 : vector<1x128xi32>
      %c16_i32_39 = arith.constant 16 : i32
      %76 = vector.broadcast %c16_i32_39 : i32 to vector<1x128xi32>
      %77 = arith.cmpi slt, %75, %76 : vector<1x128xi32>
      %78 = arith.andi %73, %77 : vector<1x128xi1>
      %cst_40 = arith.constant 0.000000e+00 : f32
      %79 = vector.shape_cast %78 : vector<1x128xi1> to vector<1x128xi1>
      %80 = vector.broadcast %79 : vector<1x128xi1> to vector<16x128xi1>
      %81 = vector.broadcast %cst_40 : f32 to vector<16x128xf32>
      %82 = arith.select %80, %69, %81 : vector<16x128xi1>, vector<16x128xf32>
      %c0_41 = arith.constant 0 : index
      %c0_42 = arith.constant 0 : index
      %83 = vector.load %arg13[%c0_41, %c0_42] : memref<9x128xf32, #tpu.memory_space<vmem>>, vector<1x128xf32>
      %84 = vector.shape_cast %83 : vector<1x128xf32> to vector<128xf32>
      %85 = vector.shape_cast %84 : vector<128xf32> to vector<1x128xf32>
      %86 = vector.broadcast %85 : vector<1x128xf32> to vector<16x128xf32>
      %87 = arith.mulf %82, %86 : vector<16x128xf32>
      %88 = arith.addf %54, %87 : vector<16x128xf32>
      %c1_43 = arith.constant 1 : index
      %c0_44 = arith.constant 0 : index
      %89 = vector.load %arg13[%c1_43, %c0_44] : memref<9x128xf32, #tpu.memory_space<vmem>>, vector<1x128xf32>
      %90 = vector.shape_cast %89 : vector<1x128xf32> to vector<128xf32>
      %91 = vector.shape_cast %90 : vector<128xf32> to vector<1x128xf32>
      %92 = vector.broadcast %91 : vector<1x128xf32> to vector<16x128xf32>
      %93 = arith.mulf %68, %92 : vector<16x128xf32>
      %94 = arith.addf %88, %93 : vector<16x128xf32>
      %c120_i32 = arith.constant 120 : i32
      %95 = tpu.dynamic_rotate %68 by %c120_i32 dim 1 : vector<16x128xf32>, i32 -> vector<16x128xf32>
      %c2_i32_45 = arith.constant 2 : i32
      %96 = vector.broadcast %c2_i32_45 : i32 to vector<1x128xi32>
      %97 = arith.addi %4, %96 : vector<1x128xi32>
      %c0_i32_46 = arith.constant 0 : i32
      %98 = vector.broadcast %c0_i32_46 : i32 to vector<1x128xi32>
      %99 = arith.cmpi sge, %97, %98 : vector<1x128xi32>
      %c2_i32_47 = arith.constant 2 : i32
      %100 = vector.broadcast %c2_i32_47 : i32 to vector<1x128xi32>
      %101 = arith.addi %4, %100 : vector<1x128xi32>
      %c16_i32_48 = arith.constant 16 : i32
      %102 = vector.broadcast %c16_i32_48 : i32 to vector<1x128xi32>
      %103 = arith.cmpi slt, %101, %102 : vector<1x128xi32>
      %104 = arith.andi %99, %103 : vector<1x128xi1>
      %cst_49 = arith.constant 0.000000e+00 : f32
      %105 = vector.shape_cast %104 : vector<1x128xi1> to vector<1x128xi1>
      %106 = vector.broadcast %105 : vector<1x128xi1> to vector<16x128xi1>
      %107 = vector.broadcast %cst_49 : f32 to vector<16x128xf32>
      %108 = arith.select %106, %95, %107 : vector<16x128xi1>, vector<16x128xf32>
      %c2_50 = arith.constant 2 : index
      %c0_51 = arith.constant 0 : index
      %109 = vector.load %arg13[%c2_50, %c0_51] : memref<9x128xf32, #tpu.memory_space<vmem>>, vector<1x128xf32>
      %110 = vector.shape_cast %109 : vector<1x128xf32> to vector<128xf32>
      %111 = vector.shape_cast %110 : vector<128xf32> to vector<1x128xf32>
      %112 = vector.broadcast %111 : vector<1x128xf32> to vector<16x128xf32>
      %113 = arith.mulf %108, %112 : vector<16x128xf32>
      %114 = arith.addf %94, %113 : vector<16x128xf32>
      %c8_i32_52 = arith.constant 8 : i32
      %115 = tpu.dynamic_rotate %2 by %c8_i32_52 dim 1 : vector<16x128xf32>, i32 -> vector<16x128xf32>
      %c-2_i32_53 = arith.constant -2 : i32
      %116 = vector.broadcast %c-2_i32_53 : i32 to vector<1x128xi32>
      %117 = arith.addi %4, %116 : vector<1x128xi32>
      %c0_i32_54 = arith.constant 0 : i32
      %118 = vector.broadcast %c0_i32_54 : i32 to vector<1x128xi32>
      %119 = arith.cmpi sge, %117, %118 : vector<1x128xi32>
      %c-2_i32_55 = arith.constant -2 : i32
      %120 = vector.broadcast %c-2_i32_55 : i32 to vector<1x128xi32>
      %121 = arith.addi %4, %120 : vector<1x128xi32>
      %c16_i32_56 = arith.constant 16 : i32
      %122 = vector.broadcast %c16_i32_56 : i32 to vector<1x128xi32>
      %123 = arith.cmpi slt, %121, %122 : vector<1x128xi32>
      %124 = arith.andi %119, %123 : vector<1x128xi1>
      %cst_57 = arith.constant 0.000000e+00 : f32
      %125 = vector.shape_cast %124 : vector<1x128xi1> to vector<1x128xi1>
      %126 = vector.broadcast %125 : vector<1x128xi1> to vector<16x128xi1>
      %127 = vector.broadcast %cst_57 : f32 to vector<16x128xf32>
      %128 = arith.select %126, %115, %127 : vector<16x128xi1>, vector<16x128xf32>
      %c3_58 = arith.constant 3 : index
      %c0_59 = arith.constant 0 : index
      %129 = vector.load %arg13[%c3_58, %c0_59] : memref<9x128xf32, #tpu.memory_space<vmem>>, vector<1x128xf32>
      %130 = vector.shape_cast %129 : vector<1x128xf32> to vector<128xf32>
      %131 = vector.shape_cast %130 : vector<128xf32> to vector<1x128xf32>
      %132 = vector.broadcast %131 : vector<1x128xf32> to vector<16x128xf32>
      %133 = arith.mulf %128, %132 : vector<16x128xf32>
      %134 = arith.addf %114, %133 : vector<16x128xf32>
      %c4_60 = arith.constant 4 : index
      %c0_61 = arith.constant 0 : index
      %135 = vector.load %arg13[%c4_60, %c0_61] : memref<9x128xf32, #tpu.memory_space<vmem>>, vector<1x128xf32>
      %136 = vector.shape_cast %135 : vector<1x128xf32> to vector<128xf32>
      %137 = vector.shape_cast %136 : vector<128xf32> to vector<1x128xf32>
      %138 = vector.broadcast %137 : vector<1x128xf32> to vector<16x128xf32>
      %139 = arith.mulf %2, %138 : vector<16x128xf32>
      %140 = arith.addf %134, %139 : vector<16x128xf32>
      %c120_i32_62 = arith.constant 120 : i32
      %141 = tpu.dynamic_rotate %2 by %c120_i32_62 dim 1 : vector<16x128xf32>, i32 -> vector<16x128xf32>
      %c2_i32_63 = arith.constant 2 : i32
      %142 = vector.broadcast %c2_i32_63 : i32 to vector<1x128xi32>
      %143 = arith.addi %4, %142 : vector<1x128xi32>
      %c0_i32_64 = arith.constant 0 : i32
      %144 = vector.broadcast %c0_i32_64 : i32 to vector<1x128xi32>
      %145 = arith.cmpi sge, %143, %144 : vector<1x128xi32>
      %c2_i32_65 = arith.constant 2 : i32
      %146 = vector.broadcast %c2_i32_65 : i32 to vector<1x128xi32>
      %147 = arith.addi %4, %146 : vector<1x128xi32>
      %c16_i32_66 = arith.constant 16 : i32
      %148 = vector.broadcast %c16_i32_66 : i32 to vector<1x128xi32>
      %149 = arith.cmpi slt, %147, %148 : vector<1x128xi32>
      %150 = arith.andi %145, %149 : vector<1x128xi1>
      %cst_67 = arith.constant 0.000000e+00 : f32
      %151 = vector.shape_cast %150 : vector<1x128xi1> to vector<1x128xi1>
      %152 = vector.broadcast %151 : vector<1x128xi1> to vector<16x128xi1>
      %153 = vector.broadcast %cst_67 : f32 to vector<16x128xf32>
      %154 = arith.select %152, %141, %153 : vector<16x128xi1>, vector<16x128xf32>
      %c5_68 = arith.constant 5 : index
      %c0_69 = arith.constant 0 : index
      %155 = vector.load %arg13[%c5_68, %c0_69] : memref<9x128xf32, #tpu.memory_space<vmem>>, vector<1x128xf32>
      %156 = vector.shape_cast %155 : vector<1x128xf32> to vector<128xf32>
      %157 = vector.shape_cast %156 : vector<128xf32> to vector<1x128xf32>
      %158 = vector.broadcast %157 : vector<1x128xf32> to vector<16x128xf32>
      %159 = arith.mulf %154, %158 : vector<16x128xf32>
      %160 = arith.addf %140, %159 : vector<16x128xf32>
      %c14_i32 = arith.constant 14 : i32
      %161 = tpu.dynamic_rotate %2 by %c14_i32 dim 0 : vector<16x128xf32>, i32 -> vector<16x128xf32>
      %c2_i32_70 = arith.constant 2 : i32
      %162 = vector.broadcast %c2_i32_70 : i32 to vector<16x1xi32>
      %163 = arith.addi %3, %162 : vector<16x1xi32>
      %c0_i32_71 = arith.constant 0 : i32
      %164 = vector.broadcast %c0_i32_71 : i32 to vector<16x1xi32>
      %165 = arith.cmpi sge, %163, %164 : vector<16x1xi32>
      %c2_i32_72 = arith.constant 2 : i32
      %166 = vector.broadcast %c2_i32_72 : i32 to vector<16x1xi32>
      %167 = arith.addi %3, %166 : vector<16x1xi32>
      %c16_i32_73 = arith.constant 16 : i32
      %168 = vector.broadcast %c16_i32_73 : i32 to vector<16x1xi32>
      %169 = arith.cmpi slt, %167, %168 : vector<16x1xi32>
      %170 = arith.andi %165, %169 : vector<16x1xi1>
      %cst_74 = arith.constant 0.000000e+00 : f32
      %171 = vector.shape_cast %170 : vector<16x1xi1> to vector<16x1xi1>
      %172 = vector.broadcast %171 : vector<16x1xi1> to vector<16x128xi1>
      %173 = vector.broadcast %cst_74 : f32 to vector<16x128xf32>
      %174 = arith.select %172, %161, %173 : vector<16x128xi1>, vector<16x128xf32>
      %c8_i32_75 = arith.constant 8 : i32
      %175 = tpu.dynamic_rotate %174 by %c8_i32_75 dim 1 : vector<16x128xf32>, i32 -> vector<16x128xf32>
      %c-2_i32_76 = arith.constant -2 : i32
      %176 = vector.broadcast %c-2_i32_76 : i32 to vector<1x128xi32>
      %177 = arith.addi %4, %176 : vector<1x128xi32>
      %c0_i32_77 = arith.constant 0 : i32
      %178 = vector.broadcast %c0_i32_77 : i32 to vector<1x128xi32>
      %179 = arith.cmpi sge, %177, %178 : vector<1x128xi32>
      %c-2_i32_78 = arith.constant -2 : i32
      %180 = vector.broadcast %c-2_i32_78 : i32 to vector<1x128xi32>
      %181 = arith.addi %4, %180 : vector<1x128xi32>
      %c16_i32_79 = arith.constant 16 : i32
      %182 = vector.broadcast %c16_i32_79 : i32 to vector<1x128xi32>
      %183 = arith.cmpi slt, %181, %182 : vector<1x128xi32>
      %184 = arith.andi %179, %183 : vector<1x128xi1>
      %cst_80 = arith.constant 0.000000e+00 : f32
      %185 = vector.shape_cast %184 : vector<1x128xi1> to vector<1x128xi1>
      %186 = vector.broadcast %185 : vector<1x128xi1> to vector<16x128xi1>
      %187 = vector.broadcast %cst_80 : f32 to vector<16x128xf32>
      %188 = arith.select %186, %175, %187 : vector<16x128xi1>, vector<16x128xf32>
      %c6_81 = arith.constant 6 : index
      %c0_82 = arith.constant 0 : index
      %189 = vector.load %arg13[%c6_81, %c0_82] : memref<9x128xf32, #tpu.memory_space<vmem>>, vector<1x128xf32>
      %190 = vector.shape_cast %189 : vector<1x128xf32> to vector<128xf32>
      %191 = vector.shape_cast %190 : vector<128xf32> to vector<1x128xf32>
      %192 = vector.broadcast %191 : vector<1x128xf32> to vector<16x128xf32>
      %193 = arith.mulf %188, %192 : vector<16x128xf32>
      %194 = arith.addf %160, %193 : vector<16x128xf32>
      %c7_83 = arith.constant 7 : index
      %c0_84 = arith.constant 0 : index
      %195 = vector.load %arg13[%c7_83, %c0_84] : memref<9x128xf32, #tpu.memory_space<vmem>>, vector<1x128xf32>
      %196 = vector.shape_cast %195 : vector<1x128xf32> to vector<128xf32>
      %197 = vector.shape_cast %196 : vector<128xf32> to vector<1x128xf32>
      %198 = vector.broadcast %197 : vector<1x128xf32> to vector<16x128xf32>
      %199 = arith.mulf %174, %198 : vector<16x128xf32>
      %200 = arith.addf %194, %199 : vector<16x128xf32>
      %c120_i32_85 = arith.constant 120 : i32
      %201 = tpu.dynamic_rotate %174 by %c120_i32_85 dim 1 : vector<16x128xf32>, i32 -> vector<16x128xf32>
      %c2_i32_86 = arith.constant 2 : i32
      %202 = vector.broadcast %c2_i32_86 : i32 to vector<1x128xi32>
      %203 = arith.addi %4, %202 : vector<1x128xi32>
      %c0_i32_87 = arith.constant 0 : i32
      %204 = vector.broadcast %c0_i32_87 : i32 to vector<1x128xi32>
      %205 = arith.cmpi sge, %203, %204 : vector<1x128xi32>
      %c2_i32_88 = arith.constant 2 : i32
      %206 = vector.broadcast %c2_i32_88 : i32 to vector<1x128xi32>
      %207 = arith.addi %4, %206 : vector<1x128xi32>
      %c16_i32_89 = arith.constant 16 : i32
      %208 = vector.broadcast %c16_i32_89 : i32 to vector<1x128xi32>
      %209 = arith.cmpi slt, %207, %208 : vector<1x128xi32>
      %210 = arith.andi %205, %209 : vector<1x128xi1>
      %cst_90 = arith.constant 0.000000e+00 : f32
      %211 = vector.shape_cast %210 : vector<1x128xi1> to vector<1x128xi1>
      %212 = vector.broadcast %211 : vector<1x128xi1> to vector<16x128xi1>
      %213 = vector.broadcast %cst_90 : f32 to vector<16x128xf32>
      %214 = arith.select %212, %201, %213 : vector<16x128xi1>, vector<16x128xf32>
      %c8 = arith.constant 8 : index
      %c0_91 = arith.constant 0 : index
      %215 = vector.load %arg13[%c8, %c0_91] : memref<9x128xf32, #tpu.memory_space<vmem>>, vector<1x128xf32>
      %216 = vector.shape_cast %215 : vector<1x128xf32> to vector<128xf32>
      %217 = vector.shape_cast %216 : vector<128xf32> to vector<1x128xf32>
      %218 = vector.broadcast %217 : vector<1x128xf32> to vector<16x128xf32>
      %219 = arith.mulf %214, %218 : vector<16x128xf32>
      %220 = arith.addf %200, %219 : vector<16x128xf32>
      %c3_92 = arith.constant 3 : index
      %c0_93 = arith.constant 0 : index
      %221 = vector.load %arg14[%c3_92, %c0_93] : memref<7x128xf32, #tpu.memory_space<vmem>>, vector<1x128xf32>
      %222 = vector.shape_cast %221 : vector<1x128xf32> to vector<128xf32>
      %223 = vector.shape_cast %222 : vector<128xf32> to vector<1x128xf32>
      %224 = vector.broadcast %223 : vector<1x128xf32> to vector<16x128xf32>
      %225 = arith.mulf %220, %224 : vector<16x128xf32>
      %c1_i32_94 = arith.constant 1 : i32
      %226 = tpu.dynamic_rotate %220 by %c1_i32_94 dim 1 : vector<16x128xf32>, i32 -> vector<16x128xf32>
      %c4_95 = arith.constant 4 : index
      %c0_96 = arith.constant 0 : index
      %227 = vector.load %arg14[%c4_95, %c0_96] : memref<7x128xf32, #tpu.memory_space<vmem>>, vector<1x128xf32>
      %228 = vector.shape_cast %227 : vector<1x128xf32> to vector<128xf32>
      %229 = vector.shape_cast %228 : vector<128xf32> to vector<1x128xf32>
      %230 = vector.broadcast %229 : vector<1x128xf32> to vector<16x128xf32>
      %231 = arith.mulf %226, %230 : vector<16x128xf32>
      %232 = arith.addf %225, %231 : vector<16x128xf32>
      %c127_i32 = arith.constant 127 : i32
      %233 = tpu.dynamic_rotate %220 by %c127_i32 dim 1 : vector<16x128xf32>, i32 -> vector<16x128xf32>
      %c2_97 = arith.constant 2 : index
      %c0_98 = arith.constant 0 : index
      %234 = vector.load %arg14[%c2_97, %c0_98] : memref<7x128xf32, #tpu.memory_space<vmem>>, vector<1x128xf32>
      %235 = vector.shape_cast %234 : vector<1x128xf32> to vector<128xf32>
      %236 = vector.shape_cast %235 : vector<128xf32> to vector<1x128xf32>
      %237 = vector.broadcast %236 : vector<1x128xf32> to vector<16x128xf32>
      %238 = arith.mulf %233, %237 : vector<16x128xf32>
      %239 = arith.addf %232, %238 : vector<16x128xf32>
      %c2_i32_99 = arith.constant 2 : i32
      %240 = tpu.dynamic_rotate %220 by %c2_i32_99 dim 1 : vector<16x128xf32>, i32 -> vector<16x128xf32>
      %c5_100 = arith.constant 5 : index
      %c0_101 = arith.constant 0 : index
      %241 = vector.load %arg14[%c5_100, %c0_101] : memref<7x128xf32, #tpu.memory_space<vmem>>, vector<1x128xf32>
      %242 = vector.shape_cast %241 : vector<1x128xf32> to vector<128xf32>
      %243 = vector.shape_cast %242 : vector<128xf32> to vector<1x128xf32>
      %244 = vector.broadcast %243 : vector<1x128xf32> to vector<16x128xf32>
      %245 = arith.mulf %240, %244 : vector<16x128xf32>
      %246 = arith.addf %239, %245 : vector<16x128xf32>
      %c126_i32 = arith.constant 126 : i32
      %247 = tpu.dynamic_rotate %220 by %c126_i32 dim 1 : vector<16x128xf32>, i32 -> vector<16x128xf32>
      %c1_102 = arith.constant 1 : index
      %c0_103 = arith.constant 0 : index
      %248 = vector.load %arg14[%c1_102, %c0_103] : memref<7x128xf32, #tpu.memory_space<vmem>>, vector<1x128xf32>
      %249 = vector.shape_cast %248 : vector<1x128xf32> to vector<128xf32>
      %250 = vector.shape_cast %249 : vector<128xf32> to vector<1x128xf32>
      %251 = vector.broadcast %250 : vector<1x128xf32> to vector<16x128xf32>
      %252 = arith.mulf %247, %251 : vector<16x128xf32>
      %253 = arith.addf %246, %252 : vector<16x128xf32>
      %c3_i32 = arith.constant 3 : i32
      %254 = tpu.dynamic_rotate %220 by %c3_i32 dim 1 : vector<16x128xf32>, i32 -> vector<16x128xf32>
      %c6_104 = arith.constant 6 : index
      %c0_105 = arith.constant 0 : index
      %255 = vector.load %arg14[%c6_104, %c0_105] : memref<7x128xf32, #tpu.memory_space<vmem>>, vector<1x128xf32>
      %256 = vector.shape_cast %255 : vector<1x128xf32> to vector<128xf32>
      %257 = vector.shape_cast %256 : vector<128xf32> to vector<1x128xf32>
      %258 = vector.broadcast %257 : vector<1x128xf32> to vector<16x128xf32>
      %259 = arith.mulf %254, %258 : vector<16x128xf32>
      %260 = arith.addf %253, %259 : vector<16x128xf32>
      %c125_i32 = arith.constant 125 : i32
      %261 = tpu.dynamic_rotate %220 by %c125_i32 dim 1 : vector<16x128xf32>, i32 -> vector<16x128xf32>
      %c0_106 = arith.constant 0 : index
      %c0_107 = arith.constant 0 : index
      %262 = vector.load %arg14[%c0_106, %c0_107] : memref<7x128xf32, #tpu.memory_space<vmem>>, vector<1x128xf32>
      %263 = vector.shape_cast %262 : vector<1x128xf32> to vector<128xf32>
      %264 = vector.shape_cast %263 : vector<128xf32> to vector<1x128xf32>
      %265 = vector.broadcast %264 : vector<1x128xf32> to vector<16x128xf32>
      %266 = arith.mulf %261, %265 : vector<16x128xf32>
      %267 = arith.addf %260, %266 : vector<16x128xf32>
      %c4_i32 = arith.constant 4 : i32
      %268 = tpu.dynamic_rotate %267 by %c4_i32 dim 1 : vector<16x128xf32>, i32 -> vector<16x128xf32>
      %269 = arith.addf %267, %268 : vector<16x128xf32>
      %c8_i32_108 = arith.constant 8 : i32
      %270 = tpu.dynamic_rotate %269 by %c8_i32_108 dim 1 : vector<16x128xf32>, i32 -> vector<16x128xf32>
      %271 = arith.addf %269, %270 : vector<16x128xf32>
      %c16_i32_109 = arith.constant 16 : i32
      %272 = tpu.dynamic_rotate %271 by %c16_i32_109 dim 1 : vector<16x128xf32>, i32 -> vector<16x128xf32>
      %273 = arith.addf %271, %272 : vector<16x128xf32>
      %c32_i32 = arith.constant 32 : i32
      %274 = tpu.dynamic_rotate %273 by %c32_i32 dim 1 : vector<16x128xf32>, i32 -> vector<16x128xf32>
      %275 = arith.addf %273, %274 : vector<16x128xf32>
      %c64_i32 = arith.constant 64 : i32
      %276 = tpu.dynamic_rotate %275 by %c64_i32 dim 1 : vector<16x128xf32>, i32 -> vector<16x128xf32>
      %277 = arith.addf %275, %276 : vector<16x128xf32>
      %cst_110 = arith.constant dense<0.000000e+00> : vector<128xf32>
      %278 = vector.multi_reduction <add>, %277, %cst_110 [0] : vector<16x128xf32> to vector<128xf32>
      %279 = vector.shape_cast %278 : vector<128xf32> to vector<1x128xf32>
      %cst_111 = arith.constant 0.001953125 : f32
      %280 = vector.broadcast %cst_111 : f32 to vector<1x128xf32>
      %281 = arith.mulf %279, %280 : vector<1x128xf32>
      %282 = vector.broadcast %281 : vector<1x128xf32> to vector<16x128xf32>
      %283 = arith.subf %267, %282 : vector<16x128xf32>
      %284 = arith.mulf %283, %283 : vector<16x128xf32>
      %c4_i32_112 = arith.constant 4 : i32
      %285 = tpu.dynamic_rotate %284 by %c4_i32_112 dim 1 : vector<16x128xf32>, i32 -> vector<16x128xf32>
      %286 = arith.addf %284, %285 : vector<16x128xf32>
      %c8_i32_113 = arith.constant 8 : i32
      %287 = tpu.dynamic_rotate %286 by %c8_i32_113 dim 1 : vector<16x128xf32>, i32 -> vector<16x128xf32>
      %288 = arith.addf %286, %287 : vector<16x128xf32>
      %c16_i32_114 = arith.constant 16 : i32
      %289 = tpu.dynamic_rotate %288 by %c16_i32_114 dim 1 : vector<16x128xf32>, i32 -> vector<16x128xf32>
      %290 = arith.addf %288, %289 : vector<16x128xf32>
      %c32_i32_115 = arith.constant 32 : i32
      %291 = tpu.dynamic_rotate %290 by %c32_i32_115 dim 1 : vector<16x128xf32>, i32 -> vector<16x128xf32>
      %292 = arith.addf %290, %291 : vector<16x128xf32>
      %c64_i32_116 = arith.constant 64 : i32
      %293 = tpu.dynamic_rotate %292 by %c64_i32_116 dim 1 : vector<16x128xf32>, i32 -> vector<16x128xf32>
      %294 = arith.addf %292, %293 : vector<16x128xf32>
      %cst_117 = arith.constant dense<0.000000e+00> : vector<128xf32>
      %295 = vector.multi_reduction <add>, %294, %cst_117 [0] : vector<16x128xf32> to vector<128xf32>
      %296 = vector.shape_cast %295 : vector<128xf32> to vector<1x128xf32>
      %cst_118 = arith.constant 0.001953125 : f32
      %297 = vector.broadcast %cst_118 : f32 to vector<1x128xf32>
      %298 = arith.mulf %296, %297 : vector<1x128xf32>
      %cst_119 = arith.constant 9.99999974E-6 : f32
      %299 = vector.broadcast %cst_119 : f32 to vector<1x128xf32>
      %300 = arith.addf %298, %299 : vector<1x128xf32>
      %301 = math.rsqrt %300 : vector<1x128xf32>
      %302 = vector.broadcast %301 : vector<1x128xf32> to vector<16x128xf32>
      %303 = arith.mulf %283, %302 : vector<16x128xf32>
      %304 = vector.broadcast %53 : f32 to vector<16x128xf32>
      %305 = arith.mulf %304, %303 : vector<16x128xf32>
      %306 = arith.addf %52, %305 : vector<16x128xf32>
      %c0_120 = arith.constant 0 : index
      %c0_121 = arith.constant 0 : index
      %c0_122 = arith.constant 0 : index
      %307 = vector.load %arg17[%c0_120, %c0_121, %c0_122] : memref<1x16x128xf32, #tpu.memory_space<vmem>>, vector<1x16x128xf32>
      %308 = vector.shape_cast %307 : vector<1x16x128xf32> to vector<16x128xf32>
      %309 = vector.shape_cast %306 : vector<16x128xf32> to vector<1x16x128xf32>
      tpu.vector_store %arg17[%c0_120, %c0_121, %c0_122], %309 {strides = array<i32>} : memref<1x16x128xf32, #tpu.memory_space<vmem>>, vector<1x16x128xf32>,
    } else {
    }
    %c0_i32_25 = arith.constant 0 : i32
    %45 = arith.cmpi eq, %arg0, %c0_i32_25 : i32
    %c7 = arith.constant 7 : index
    %46 = memref.load %arg1[%c7] : memref<8xf32, #tpu.memory_space<smem>>
    %cst_26 = arith.constant 0.000000e+00 : f32
    %47 = arith.cmpf one, %46, %cst_26 : f32
    %48 = arith.andi %45, %47 : i1
    %49 = arith.extui %48 : i1 to i32
    %c0_i32_27 = arith.constant 0 : i32
    %50 = arith.cmpi ne, %49, %c0_i32_27 : i32
    scf.if %50 {
      %c0_28 = arith.constant 0 : index
      %c0_29 = arith.constant 0 : index
      %c0_30 = arith.constant 0 : index
      %51 = vector.load %arg17[%c0_28, %c0_29, %c0_30] : memref<1x16x128xf32, #tpu.memory_space<vmem>>, vector<1x16x128xf32>
      %52 = vector.shape_cast %51 : vector<1x16x128xf32> to vector<16x128xf32>
      %c7_31 = arith.constant 7 : index
      %53 = memref.load %arg1[%c7_31] : memref<8xf32, #tpu.memory_space<smem>>
      %cst_32 = arith.constant 0.000000e+00 : f32
      %54 = vector.broadcast %cst_32 : f32 to vector<16x128xf32>
      %c4_i32 = arith.constant 4 : i32
      %55 = tpu.dynamic_rotate %2 by %c4_i32 dim 0 : vector<16x128xf32>, i32 -> vector<16x128xf32>
      %c-4_i32 = arith.constant -4 : i32
      %56 = vector.broadcast %c-4_i32 : i32 to vector<16x1xi32>
      %57 = arith.addi %3, %56 : vector<16x1xi32>
      %c0_i32_33 = arith.constant 0 : i32
      %58 = vector.broadcast %c0_i32_33 : i32 to vector<16x1xi32>
      %59 = arith.cmpi sge, %57, %58 : vector<16x1xi32>
      %c-4_i32_34 = arith.constant -4 : i32
      %60 = vector.broadcast %c-4_i32_34 : i32 to vector<16x1xi32>
      %61 = arith.addi %3, %60 : vector<16x1xi32>
      %c16_i32 = arith.constant 16 : i32
      %62 = vector.broadcast %c16_i32 : i32 to vector<16x1xi32>
      %63 = arith.cmpi slt, %61, %62 : vector<16x1xi32>
      %64 = arith.andi %59, %63 : vector<16x1xi1>
      %cst_35 = arith.constant 0.000000e+00 : f32
      %65 = vector.shape_cast %64 : vector<16x1xi1> to vector<16x1xi1>
      %66 = vector.broadcast %65 : vector<16x1xi1> to vector<16x128xi1>
      %67 = vector.broadcast %cst_35 : f32 to vector<16x128xf32>
      %68 = arith.select %66, %55, %67 : vector<16x128xi1>, vector<16x128xf32>
      %c16_i32_36 = arith.constant 16 : i32
      %69 = tpu.dynamic_rotate %68 by %c16_i32_36 dim 1 : vector<16x128xf32>, i32 -> vector<16x128xf32>
      %c-4_i32_37 = arith.constant -4 : i32
      %70 = vector.broadcast %c-4_i32_37 : i32 to vector<1x128xi32>
      %71 = arith.addi %4, %70 : vector<1x128xi32>
      %c0_i32_38 = arith.constant 0 : i32
      %72 = vector.broadcast %c0_i32_38 : i32 to vector<1x128xi32>
      %73 = arith.cmpi sge, %71, %72 : vector<1x128xi32>
      %c-4_i32_39 = arith.constant -4 : i32
      %74 = vector.broadcast %c-4_i32_39 : i32 to vector<1x128xi32>
      %75 = arith.addi %4, %74 : vector<1x128xi32>
      %c16_i32_40 = arith.constant 16 : i32
      %76 = vector.broadcast %c16_i32_40 : i32 to vector<1x128xi32>
      %77 = arith.cmpi slt, %75, %76 : vector<1x128xi32>
      %78 = arith.andi %73, %77 : vector<1x128xi1>
      %cst_41 = arith.constant 0.000000e+00 : f32
      %79 = vector.shape_cast %78 : vector<1x128xi1> to vector<1x128xi1>
      %80 = vector.broadcast %79 : vector<1x128xi1> to vector<16x128xi1>
      %81 = vector.broadcast %cst_41 : f32 to vector<16x128xf32>
      %82 = arith.select %80, %69, %81 : vector<16x128xi1>, vector<16x128xf32>
      %c0_42 = arith.constant 0 : index
      %c0_43 = arith.constant 0 : index
      %83 = vector.load %arg15[%c0_42, %c0_43] : memref<25x128xf32, #tpu.memory_space<vmem>>, vector<1x128xf32>
      %84 = vector.shape_cast %83 : vector<1x128xf32> to vector<128xf32>
      %85 = vector.shape_cast %84 : vector<128xf32> to vector<1x128xf32>
      %86 = vector.broadcast %85 : vector<1x128xf32> to vector<16x128xf32>
      %87 = arith.mulf %82, %86 : vector<16x128xf32>
      %88 = arith.addf %54, %87 : vector<16x128xf32>
      %c8_i32 = arith.constant 8 : i32
      %89 = tpu.dynamic_rotate %68 by %c8_i32 dim 1 : vector<16x128xf32>, i32 -> vector<16x128xf32>
      %c-2_i32 = arith.constant -2 : i32
      %90 = vector.broadcast %c-2_i32 : i32 to vector<1x128xi32>
      %91 = arith.addi %4, %90 : vector<1x128xi32>
      %c0_i32_44 = arith.constant 0 : i32
      %92 = vector.broadcast %c0_i32_44 : i32 to vector<1x128xi32>
      %93 = arith.cmpi sge, %91, %92 : vector<1x128xi32>
      %c-2_i32_45 = arith.constant -2 : i32
      %94 = vector.broadcast %c-2_i32_45 : i32 to vector<1x128xi32>
      %95 = arith.addi %4, %94 : vector<1x128xi32>
      %c16_i32_46 = arith.constant 16 : i32
      %96 = vector.broadcast %c16_i32_46 : i32 to vector<1x128xi32>
      %97 = arith.cmpi slt, %95, %96 : vector<1x128xi32>
      %98 = arith.andi %93, %97 : vector<1x128xi1>
      %cst_47 = arith.constant 0.000000e+00 : f32
      %99 = vector.shape_cast %98 : vector<1x128xi1> to vector<1x128xi1>
      %100 = vector.broadcast %99 : vector<1x128xi1> to vector<16x128xi1>
      %101 = vector.broadcast %cst_47 : f32 to vector<16x128xf32>
      %102 = arith.select %100, %89, %101 : vector<16x128xi1>, vector<16x128xf32>
      %c1_48 = arith.constant 1 : index
      %c0_49 = arith.constant 0 : index
      %103 = vector.load %arg15[%c1_48, %c0_49] : memref<25x128xf32, #tpu.memory_space<vmem>>, vector<1x128xf32>
      %104 = vector.shape_cast %103 : vector<1x128xf32> to vector<128xf32>
      %105 = vector.shape_cast %104 : vector<128xf32> to vector<1x128xf32>
      %106 = vector.broadcast %105 : vector<1x128xf32> to vector<16x128xf32>
      %107 = arith.mulf %102, %106 : vector<16x128xf32>
      %108 = arith.addf %88, %107 : vector<16x128xf32>
      %c2_50 = arith.constant 2 : index
      %c0_51 = arith.constant 0 : index
      %109 = vector.load %arg15[%c2_50, %c0_51] : memref<25x128xf32, #tpu.memory_space<vmem>>, vector<1x128xf32>
      %110 = vector.shape_cast %109 : vector<1x128xf32> to vector<128xf32>
      %111 = vector.shape_cast %110 : vector<128xf32> to vector<1x128xf32>
      %112 = vector.broadcast %111 : vector<1x128xf32> to vector<16x128xf32>
      %113 = arith.mulf %68, %112 : vector<16x128xf32>
      %114 = arith.addf %108, %113 : vector<16x128xf32>
      %c120_i32 = arith.constant 120 : i32
      %115 = tpu.dynamic_rotate %68 by %c120_i32 dim 1 : vector<16x128xf32>, i32 -> vector<16x128xf32>
      %c2_i32 = arith.constant 2 : i32
      %116 = vector.broadcast %c2_i32 : i32 to vector<1x128xi32>
      %117 = arith.addi %4, %116 : vector<1x128xi32>
      %c0_i32_52 = arith.constant 0 : i32
      %118 = vector.broadcast %c0_i32_52 : i32 to vector<1x128xi32>
      %119 = arith.cmpi sge, %117, %118 : vector<1x128xi32>
      %c2_i32_53 = arith.constant 2 : i32
      %120 = vector.broadcast %c2_i32_53 : i32 to vector<1x128xi32>
      %121 = arith.addi %4, %120 : vector<1x128xi32>
      %c16_i32_54 = arith.constant 16 : i32
      %122 = vector.broadcast %c16_i32_54 : i32 to vector<1x128xi32>
      %123 = arith.cmpi slt, %121, %122 : vector<1x128xi32>
      %124 = arith.andi %119, %123 : vector<1x128xi1>
      %cst_55 = arith.constant 0.000000e+00 : f32
      %125 = vector.shape_cast %124 : vector<1x128xi1> to vector<1x128xi1>
      %126 = vector.broadcast %125 : vector<1x128xi1> to vector<16x128xi1>
      %127 = vector.broadcast %cst_55 : f32 to vector<16x128xf32>
      %128 = arith.select %126, %115, %127 : vector<16x128xi1>, vector<16x128xf32>
      %c3_56 = arith.constant 3 : index
      %c0_57 = arith.constant 0 : index
      %129 = vector.load %arg15[%c3_56, %c0_57] : memref<25x128xf32, #tpu.memory_space<vmem>>, vector<1x128xf32>
      %130 = vector.shape_cast %129 : vector<1x128xf32> to vector<128xf32>
      %131 = vector.shape_cast %130 : vector<128xf32> to vector<1x128xf32>
      %132 = vector.broadcast %131 : vector<1x128xf32> to vector<16x128xf32>
      %133 = arith.mulf %128, %132 : vector<16x128xf32>
      %134 = arith.addf %114, %133 : vector<16x128xf32>
      %c112_i32 = arith.constant 112 : i32
      %135 = tpu.dynamic_rotate %68 by %c112_i32 dim 1 : vector<16x128xf32>, i32 -> vector<16x128xf32>
      %c4_i32_58 = arith.constant 4 : i32
      %136 = vector.broadcast %c4_i32_58 : i32 to vector<1x128xi32>
      %137 = arith.addi %4, %136 : vector<1x128xi32>
      %c0_i32_59 = arith.constant 0 : i32
      %138 = vector.broadcast %c0_i32_59 : i32 to vector<1x128xi32>
      %139 = arith.cmpi sge, %137, %138 : vector<1x128xi32>
      %c4_i32_60 = arith.constant 4 : i32
      %140 = vector.broadcast %c4_i32_60 : i32 to vector<1x128xi32>
      %141 = arith.addi %4, %140 : vector<1x128xi32>
      %c16_i32_61 = arith.constant 16 : i32
      %142 = vector.broadcast %c16_i32_61 : i32 to vector<1x128xi32>
      %143 = arith.cmpi slt, %141, %142 : vector<1x128xi32>
      %144 = arith.andi %139, %143 : vector<1x128xi1>
      %cst_62 = arith.constant 0.000000e+00 : f32
      %145 = vector.shape_cast %144 : vector<1x128xi1> to vector<1x128xi1>
      %146 = vector.broadcast %145 : vector<1x128xi1> to vector<16x128xi1>
      %147 = vector.broadcast %cst_62 : f32 to vector<16x128xf32>
      %148 = arith.select %146, %135, %147 : vector<16x128xi1>, vector<16x128xf32>
      %c4_63 = arith.constant 4 : index
      %c0_64 = arith.constant 0 : index
      %149 = vector.load %arg15[%c4_63, %c0_64] : memref<25x128xf32, #tpu.memory_space<vmem>>, vector<1x128xf32>
      %150 = vector.shape_cast %149 : vector<1x128xf32> to vector<128xf32>
      %151 = vector.shape_cast %150 : vector<128xf32> to vector<1x128xf32>
      %152 = vector.broadcast %151 : vector<1x128xf32> to vector<16x128xf32>
      %153 = arith.mulf %148, %152 : vector<16x128xf32>
      %154 = arith.addf %134, %153 : vector<16x128xf32>
      %c2_i32_65 = arith.constant 2 : i32
      %155 = tpu.dynamic_rotate %2 by %c2_i32_65 dim 0 : vector<16x128xf32>, i32 -> vector<16x128xf32>
      %c-2_i32_66 = arith.constant -2 : i32
      %156 = vector.broadcast %c-2_i32_66 : i32 to vector<16x1xi32>
      %157 = arith.addi %3, %156 : vector<16x1xi32>
      %c0_i32_67 = arith.constant 0 : i32
      %158 = vector.broadcast %c0_i32_67 : i32 to vector<16x1xi32>
      %159 = arith.cmpi sge, %157, %158 : vector<16x1xi32>
      %c-2_i32_68 = arith.constant -2 : i32
      %160 = vector.broadcast %c-2_i32_68 : i32 to vector<16x1xi32>
      %161 = arith.addi %3, %160 : vector<16x1xi32>
      %c16_i32_69 = arith.constant 16 : i32
      %162 = vector.broadcast %c16_i32_69 : i32 to vector<16x1xi32>
      %163 = arith.cmpi slt, %161, %162 : vector<16x1xi32>
      %164 = arith.andi %159, %163 : vector<16x1xi1>
      %cst_70 = arith.constant 0.000000e+00 : f32
      %165 = vector.shape_cast %164 : vector<16x1xi1> to vector<16x1xi1>
      %166 = vector.broadcast %165 : vector<16x1xi1> to vector<16x128xi1>
      %167 = vector.broadcast %cst_70 : f32 to vector<16x128xf32>
      %168 = arith.select %166, %155, %167 : vector<16x128xi1>, vector<16x128xf32>
      %c16_i32_71 = arith.constant 16 : i32
      %169 = tpu.dynamic_rotate %168 by %c16_i32_71 dim 1 : vector<16x128xf32>, i32 -> vector<16x128xf32>
      %c-4_i32_72 = arith.constant -4 : i32
      %170 = vector.broadcast %c-4_i32_72 : i32 to vector<1x128xi32>
      %171 = arith.addi %4, %170 : vector<1x128xi32>
      %c0_i32_73 = arith.constant 0 : i32
      %172 = vector.broadcast %c0_i32_73 : i32 to vector<1x128xi32>
      %173 = arith.cmpi sge, %171, %172 : vector<1x128xi32>
      %c-4_i32_74 = arith.constant -4 : i32
      %174 = vector.broadcast %c-4_i32_74 : i32 to vector<1x128xi32>
      %175 = arith.addi %4, %174 : vector<1x128xi32>
      %c16_i32_75 = arith.constant 16 : i32
      %176 = vector.broadcast %c16_i32_75 : i32 to vector<1x128xi32>
      %177 = arith.cmpi slt, %175, %176 : vector<1x128xi32>
      %178 = arith.andi %173, %177 : vector<1x128xi1>
      %cst_76 = arith.constant 0.000000e+00 : f32
      %179 = vector.shape_cast %178 : vector<1x128xi1> to vector<1x128xi1>
      %180 = vector.broadcast %179 : vector<1x128xi1> to vector<16x128xi1>
      %181 = vector.broadcast %cst_76 : f32 to vector<16x128xf32>
      %182 = arith.select %180, %169, %181 : vector<16x128xi1>, vector<16x128xf32>
      %c5_77 = arith.constant 5 : index
      %c0_78 = arith.constant 0 : index
      %183 = vector.load %arg15[%c5_77, %c0_78] : memref<25x128xf32, #tpu.memory_space<vmem>>, vector<1x128xf32>
      %184 = vector.shape_cast %183 : vector<1x128xf32> to vector<128xf32>
      %185 = vector.shape_cast %184 : vector<128xf32> to vector<1x128xf32>
      %186 = vector.broadcast %185 : vector<1x128xf32> to vector<16x128xf32>
      %187 = arith.mulf %182, %186 : vector<16x128xf32>
      %188 = arith.addf %154, %187 : vector<16x128xf32>
      %c8_i32_79 = arith.constant 8 : i32
      %189 = tpu.dynamic_rotate %168 by %c8_i32_79 dim 1 : vector<16x128xf32>, i32 -> vector<16x128xf32>
      %c-2_i32_80 = arith.constant -2 : i32
      %190 = vector.broadcast %c-2_i32_80 : i32 to vector<1x128xi32>
      %191 = arith.addi %4, %190 : vector<1x128xi32>
      %c0_i32_81 = arith.constant 0 : i32
      %192 = vector.broadcast %c0_i32_81 : i32 to vector<1x128xi32>
      %193 = arith.cmpi sge, %191, %192 : vector<1x128xi32>
      %c-2_i32_82 = arith.constant -2 : i32
      %194 = vector.broadcast %c-2_i32_82 : i32 to vector<1x128xi32>
      %195 = arith.addi %4, %194 : vector<1x128xi32>
      %c16_i32_83 = arith.constant 16 : i32
      %196 = vector.broadcast %c16_i32_83 : i32 to vector<1x128xi32>
      %197 = arith.cmpi slt, %195, %196 : vector<1x128xi32>
      %198 = arith.andi %193, %197 : vector<1x128xi1>
      %cst_84 = arith.constant 0.000000e+00 : f32
      %199 = vector.shape_cast %198 : vector<1x128xi1> to vector<1x128xi1>
      %200 = vector.broadcast %199 : vector<1x128xi1> to vector<16x128xi1>
      %201 = vector.broadcast %cst_84 : f32 to vector<16x128xf32>
      %202 = arith.select %200, %189, %201 : vector<16x128xi1>, vector<16x128xf32>
      %c6_85 = arith.constant 6 : index
      %c0_86 = arith.constant 0 : index
      %203 = vector.load %arg15[%c6_85, %c0_86] : memref<25x128xf32, #tpu.memory_space<vmem>>, vector<1x128xf32>
      %204 = vector.shape_cast %203 : vector<1x128xf32> to vector<128xf32>
      %205 = vector.shape_cast %204 : vector<128xf32> to vector<1x128xf32>
      %206 = vector.broadcast %205 : vector<1x128xf32> to vector<16x128xf32>
      %207 = arith.mulf %202, %206 : vector<16x128xf32>
      %208 = arith.addf %188, %207 : vector<16x128xf32>
      %c7_87 = arith.constant 7 : index
      %c0_88 = arith.constant 0 : index
      %209 = vector.load %arg15[%c7_87, %c0_88] : memref<25x128xf32, #tpu.memory_space<vmem>>, vector<1x128xf32>
      %210 = vector.shape_cast %209 : vector<1x128xf32> to vector<128xf32>
      %211 = vector.shape_cast %210 : vector<128xf32> to vector<1x128xf32>
      %212 = vector.broadcast %211 : vector<1x128xf32> to vector<16x128xf32>
      %213 = arith.mulf %168, %212 : vector<16x128xf32>
      %214 = arith.addf %208, %213 : vector<16x128xf32>
      %c120_i32_89 = arith.constant 120 : i32
      %215 = tpu.dynamic_rotate %168 by %c120_i32_89 dim 1 : vector<16x128xf32>, i32 -> vector<16x128xf32>
      %c2_i32_90 = arith.constant 2 : i32
      %216 = vector.broadcast %c2_i32_90 : i32 to vector<1x128xi32>
      %217 = arith.addi %4, %216 : vector<1x128xi32>
      %c0_i32_91 = arith.constant 0 : i32
      %218 = vector.broadcast %c0_i32_91 : i32 to vector<1x128xi32>
      %219 = arith.cmpi sge, %217, %218 : vector<1x128xi32>
      %c2_i32_92 = arith.constant 2 : i32
      %220 = vector.broadcast %c2_i32_92 : i32 to vector<1x128xi32>
      %221 = arith.addi %4, %220 : vector<1x128xi32>
      %c16_i32_93 = arith.constant 16 : i32
      %222 = vector.broadcast %c16_i32_93 : i32 to vector<1x128xi32>
      %223 = arith.cmpi slt, %221, %222 : vector<1x128xi32>
      %224 = arith.andi %219, %223 : vector<1x128xi1>
      %cst_94 = arith.constant 0.000000e+00 : f32
      %225 = vector.shape_cast %224 : vector<1x128xi1> to vector<1x128xi1>
      %226 = vector.broadcast %225 : vector<1x128xi1> to vector<16x128xi1>
      %227 = vector.broadcast %cst_94 : f32 to vector<16x128xf32>
      %228 = arith.select %226, %215, %227 : vector<16x128xi1>, vector<16x128xf32>
      %c8 = arith.constant 8 : index
      %c0_95 = arith.constant 0 : index
      %229 = vector.load %arg15[%c8, %c0_95] : memref<25x128xf32, #tpu.memory_space<vmem>>, vector<1x128xf32>
      %230 = vector.shape_cast %229 : vector<1x128xf32> to vector<128xf32>
      %231 = vector.shape_cast %230 : vector<128xf32> to vector<1x128xf32>
      %232 = vector.broadcast %231 : vector<1x128xf32> to vector<16x128xf32>
      %233 = arith.mulf %228, %232 : vector<16x128xf32>
      %234 = arith.addf %214, %233 : vector<16x128xf32>
      %c112_i32_96 = arith.constant 112 : i32
      %235 = tpu.dynamic_rotate %168 by %c112_i32_96 dim 1 : vector<16x128xf32>, i32 -> vector<16x128xf32>
      %c4_i32_97 = arith.constant 4 : i32
      %236 = vector.broadcast %c4_i32_97 : i32 to vector<1x128xi32>
      %237 = arith.addi %4, %236 : vector<1x128xi32>
      %c0_i32_98 = arith.constant 0 : i32
      %238 = vector.broadcast %c0_i32_98 : i32 to vector<1x128xi32>
      %239 = arith.cmpi sge, %237, %238 : vector<1x128xi32>
      %c4_i32_99 = arith.constant 4 : i32
      %240 = vector.broadcast %c4_i32_99 : i32 to vector<1x128xi32>
      %241 = arith.addi %4, %240 : vector<1x128xi32>
      %c16_i32_100 = arith.constant 16 : i32
      %242 = vector.broadcast %c16_i32_100 : i32 to vector<1x128xi32>
      %243 = arith.cmpi slt, %241, %242 : vector<1x128xi32>
      %244 = arith.andi %239, %243 : vector<1x128xi1>
      %cst_101 = arith.constant 0.000000e+00 : f32
      %245 = vector.shape_cast %244 : vector<1x128xi1> to vector<1x128xi1>
      %246 = vector.broadcast %245 : vector<1x128xi1> to vector<16x128xi1>
      %247 = vector.broadcast %cst_101 : f32 to vector<16x128xf32>
      %248 = arith.select %246, %235, %247 : vector<16x128xi1>, vector<16x128xf32>
      %c9 = arith.constant 9 : index
      %c0_102 = arith.constant 0 : index
      %249 = vector.load %arg15[%c9, %c0_102] : memref<25x128xf32, #tpu.memory_space<vmem>>, vector<1x128xf32>
      %250 = vector.shape_cast %249 : vector<1x128xf32> to vector<128xf32>
      %251 = vector.shape_cast %250 : vector<128xf32> to vector<1x128xf32>
      %252 = vector.broadcast %251 : vector<1x128xf32> to vector<16x128xf32>
      %253 = arith.mulf %248, %252 : vector<16x128xf32>
      %254 = arith.addf %234, %253 : vector<16x128xf32>
      %c16_i32_103 = arith.constant 16 : i32
      %255 = tpu.dynamic_rotate %2 by %c16_i32_103 dim 1 : vector<16x128xf32>, i32 -> vector<16x128xf32>
      %c-4_i32_104 = arith.constant -4 : i32
      %256 = vector.broadcast %c-4_i32_104 : i32 to vector<1x128xi32>
      %257 = arith.addi %4, %256 : vector<1x128xi32>
      %c0_i32_105 = arith.constant 0 : i32
      %258 = vector.broadcast %c0_i32_105 : i32 to vector<1x128xi32>
      %259 = arith.cmpi sge, %257, %258 : vector<1x128xi32>
      %c-4_i32_106 = arith.constant -4 : i32
      %260 = vector.broadcast %c-4_i32_106 : i32 to vector<1x128xi32>
      %261 = arith.addi %4, %260 : vector<1x128xi32>
      %c16_i32_107 = arith.constant 16 : i32
      %262 = vector.broadcast %c16_i32_107 : i32 to vector<1x128xi32>
      %263 = arith.cmpi slt, %261, %262 : vector<1x128xi32>
      %264 = arith.andi %259, %263 : vector<1x128xi1>
      %cst_108 = arith.constant 0.000000e+00 : f32
      %265 = vector.shape_cast %264 : vector<1x128xi1> to vector<1x128xi1>
      %266 = vector.broadcast %265 : vector<1x128xi1> to vector<16x128xi1>
      %267 = vector.broadcast %cst_108 : f32 to vector<16x128xf32>
      %268 = arith.select %266, %255, %267 : vector<16x128xi1>, vector<16x128xf32>
      %c10 = arith.constant 10 : index
      %c0_109 = arith.constant 0 : index
      %269 = vector.load %arg15[%c10, %c0_109] : memref<25x128xf32, #tpu.memory_space<vmem>>, vector<1x128xf32>
      %270 = vector.shape_cast %269 : vector<1x128xf32> to vector<128xf32>
      %271 = vector.shape_cast %270 : vector<128xf32> to vector<1x128xf32>
      %272 = vector.broadcast %271 : vector<1x128xf32> to vector<16x128xf32>
      %273 = arith.mulf %268, %272 : vector<16x128xf32>
      %274 = arith.addf %254, %273 : vector<16x128xf32>
      %c8_i32_110 = arith.constant 8 : i32
      %275 = tpu.dynamic_rotate %2 by %c8_i32_110 dim 1 : vector<16x128xf32>, i32 -> vector<16x128xf32>
      %c-2_i32_111 = arith.constant -2 : i32
      %276 = vector.broadcast %c-2_i32_111 : i32 to vector<1x128xi32>
      %277 = arith.addi %4, %276 : vector<1x128xi32>
      %c0_i32_112 = arith.constant 0 : i32
      %278 = vector.broadcast %c0_i32_112 : i32 to vector<1x128xi32>
      %279 = arith.cmpi sge, %277, %278 : vector<1x128xi32>
      %c-2_i32_113 = arith.constant -2 : i32
      %280 = vector.broadcast %c-2_i32_113 : i32 to vector<1x128xi32>
      %281 = arith.addi %4, %280 : vector<1x128xi32>
      %c16_i32_114 = arith.constant 16 : i32
      %282 = vector.broadcast %c16_i32_114 : i32 to vector<1x128xi32>
      %283 = arith.cmpi slt, %281, %282 : vector<1x128xi32>
      %284 = arith.andi %279, %283 : vector<1x128xi1>
      %cst_115 = arith.constant 0.000000e+00 : f32
      %285 = vector.shape_cast %284 : vector<1x128xi1> to vector<1x128xi1>
      %286 = vector.broadcast %285 : vector<1x128xi1> to vector<16x128xi1>
      %287 = vector.broadcast %cst_115 : f32 to vector<16x128xf32>
      %288 = arith.select %286, %275, %287 : vector<16x128xi1>, vector<16x128xf32>
      %c11 = arith.constant 11 : index
      %c0_116 = arith.constant 0 : index
      %289 = vector.load %arg15[%c11, %c0_116] : memref<25x128xf32, #tpu.memory_space<vmem>>, vector<1x128xf32>
      %290 = vector.shape_cast %289 : vector<1x128xf32> to vector<128xf32>
      %291 = vector.shape_cast %290 : vector<128xf32> to vector<1x128xf32>
      %292 = vector.broadcast %291 : vector<1x128xf32> to vector<16x128xf32>
      %293 = arith.mulf %288, %292 : vector<16x128xf32>
      %294 = arith.addf %274, %293 : vector<16x128xf32>
      %c12 = arith.constant 12 : index
      %c0_117 = arith.constant 0 : index
      %295 = vector.load %arg15[%c12, %c0_117] : memref<25x128xf32, #tpu.memory_space<vmem>>, vector<1x128xf32>
      %296 = vector.shape_cast %295 : vector<1x128xf32> to vector<128xf32>
      %297 = vector.shape_cast %296 : vector<128xf32> to vector<1x128xf32>
      %298 = vector.broadcast %297 : vector<1x128xf32> to vector<16x128xf32>
      %299 = arith.mulf %2, %298 : vector<16x128xf32>
      %300 = arith.addf %294, %299 : vector<16x128xf32>
      %c120_i32_118 = arith.constant 120 : i32
      %301 = tpu.dynamic_rotate %2 by %c120_i32_118 dim 1 : vector<16x128xf32>, i32 -> vector<16x128xf32>
      %c2_i32_119 = arith.constant 2 : i32
      %302 = vector.broadcast %c2_i32_119 : i32 to vector<1x128xi32>
      %303 = arith.addi %4, %302 : vector<1x128xi32>
      %c0_i32_120 = arith.constant 0 : i32
      %304 = vector.broadcast %c0_i32_120 : i32 to vector<1x128xi32>
      %305 = arith.cmpi sge, %303, %304 : vector<1x128xi32>
      %c2_i32_121 = arith.constant 2 : i32
      %306 = vector.broadcast %c2_i32_121 : i32 to vector<1x128xi32>
      %307 = arith.addi %4, %306 : vector<1x128xi32>
      %c16_i32_122 = arith.constant 16 : i32
      %308 = vector.broadcast %c16_i32_122 : i32 to vector<1x128xi32>
      %309 = arith.cmpi slt, %307, %308 : vector<1x128xi32>
      %310 = arith.andi %305, %309 : vector<1x128xi1>
      %cst_123 = arith.constant 0.000000e+00 : f32
      %311 = vector.shape_cast %310 : vector<1x128xi1> to vector<1x128xi1>
      %312 = vector.broadcast %311 : vector<1x128xi1> to vector<16x128xi1>
      %313 = vector.broadcast %cst_123 : f32 to vector<16x128xf32>
      %314 = arith.select %312, %301, %313 : vector<16x128xi1>, vector<16x128xf32>
      %c13 = arith.constant 13 : index
      %c0_124 = arith.constant 0 : index
      %315 = vector.load %arg15[%c13, %c0_124] : memref<25x128xf32, #tpu.memory_space<vmem>>, vector<1x128xf32>
      %316 = vector.shape_cast %315 : vector<1x128xf32> to vector<128xf32>
      %317 = vector.shape_cast %316 : vector<128xf32> to vector<1x128xf32>
      %318 = vector.broadcast %317 : vector<1x128xf32> to vector<16x128xf32>
      %319 = arith.mulf %314, %318 : vector<16x128xf32>
      %320 = arith.addf %300, %319 : vector<16x128xf32>
      %c112_i32_125 = arith.constant 112 : i32
      %321 = tpu.dynamic_rotate %2 by %c112_i32_125 dim 1 : vector<16x128xf32>, i32 -> vector<16x128xf32>
      %c4_i32_126 = arith.constant 4 : i32
      %322 = vector.broadcast %c4_i32_126 : i32 to vector<1x128xi32>
      %323 = arith.addi %4, %322 : vector<1x128xi32>
      %c0_i32_127 = arith.constant 0 : i32
      %324 = vector.broadcast %c0_i32_127 : i32 to vector<1x128xi32>
      %325 = arith.cmpi sge, %323, %324 : vector<1x128xi32>
      %c4_i32_128 = arith.constant 4 : i32
      %326 = vector.broadcast %c4_i32_128 : i32 to vector<1x128xi32>
      %327 = arith.addi %4, %326 : vector<1x128xi32>
      %c16_i32_129 = arith.constant 16 : i32
      %328 = vector.broadcast %c16_i32_129 : i32 to vector<1x128xi32>
      %329 = arith.cmpi slt, %327, %328 : vector<1x128xi32>
      %330 = arith.andi %325, %329 : vector<1x128xi1>
      %cst_130 = arith.constant 0.000000e+00 : f32
      %331 = vector.shape_cast %330 : vector<1x128xi1> to vector<1x128xi1>
      %332 = vector.broadcast %331 : vector<1x128xi1> to vector<16x128xi1>
      %333 = vector.broadcast %cst_130 : f32 to vector<16x128xf32>
      %334 = arith.select %332, %321, %333 : vector<16x128xi1>, vector<16x128xf32>
      %c14 = arith.constant 14 : index
      %c0_131 = arith.constant 0 : index
      %335 = vector.load %arg15[%c14, %c0_131] : memref<25x128xf32, #tpu.memory_space<vmem>>, vector<1x128xf32>
      %336 = vector.shape_cast %335 : vector<1x128xf32> to vector<128xf32>
      %337 = vector.shape_cast %336 : vector<128xf32> to vector<1x128xf32>
      %338 = vector.broadcast %337 : vector<1x128xf32> to vector<16x128xf32>
      %339 = arith.mulf %334, %338 : vector<16x128xf32>
      %340 = arith.addf %320, %339 : vector<16x128xf32>
      %c14_i32 = arith.constant 14 : i32
      %341 = tpu.dynamic_rotate %2 by %c14_i32 dim 0 : vector<16x128xf32>, i32 -> vector<16x128xf32>
      %c2_i32_132 = arith.constant 2 : i32
      %342 = vector.broadcast %c2_i32_132 : i32 to vector<16x1xi32>
      %343 = arith.addi %3, %342 : vector<16x1xi32>
      %c0_i32_133 = arith.constant 0 : i32
      %344 = vector.broadcast %c0_i32_133 : i32 to vector<16x1xi32>
      %345 = arith.cmpi sge, %343, %344 : vector<16x1xi32>
      %c2_i32_134 = arith.constant 2 : i32
      %346 = vector.broadcast %c2_i32_134 : i32 to vector<16x1xi32>
      %347 = arith.addi %3, %346 : vector<16x1xi32>
      %c16_i32_135 = arith.constant 16 : i32
      %348 = vector.broadcast %c16_i32_135 : i32 to vector<16x1xi32>
      %349 = arith.cmpi slt, %347, %348 : vector<16x1xi32>
      %350 = arith.andi %345, %349 : vector<16x1xi1>
      %cst_136 = arith.constant 0.000000e+00 : f32
      %351 = vector.shape_cast %350 : vector<16x1xi1> to vector<16x1xi1>
      %352 = vector.broadcast %351 : vector<16x1xi1> to vector<16x128xi1>
      %353 = vector.broadcast %cst_136 : f32 to vector<16x128xf32>
      %354 = arith.select %352, %341, %353 : vector<16x128xi1>, vector<16x128xf32>
      %c16_i32_137 = arith.constant 16 : i32
      %355 = tpu.dynamic_rotate %354 by %c16_i32_137 dim 1 : vector<16x128xf32>, i32 -> vector<16x128xf32>
      %c-4_i32_138 = arith.constant -4 : i32
      %356 = vector.broadcast %c-4_i32_138 : i32 to vector<1x128xi32>
      %357 = arith.addi %4, %356 : vector<1x128xi32>
      %c0_i32_139 = arith.constant 0 : i32
      %358 = vector.broadcast %c0_i32_139 : i32 to vector<1x128xi32>
      %359 = arith.cmpi sge, %357, %358 : vector<1x128xi32>
      %c-4_i32_140 = arith.constant -4 : i32
      %360 = vector.broadcast %c-4_i32_140 : i32 to vector<1x128xi32>
      %361 = arith.addi %4, %360 : vector<1x128xi32>
      %c16_i32_141 = arith.constant 16 : i32
      %362 = vector.broadcast %c16_i32_141 : i32 to vector<1x128xi32>
      %363 = arith.cmpi slt, %361, %362 : vector<1x128xi32>
      %364 = arith.andi %359, %363 : vector<1x128xi1>
      %cst_142 = arith.constant 0.000000e+00 : f32
      %365 = vector.shape_cast %364 : vector<1x128xi1> to vector<1x128xi1>
      %366 = vector.broadcast %365 : vector<1x128xi1> to vector<16x128xi1>
      %367 = vector.broadcast %cst_142 : f32 to vector<16x128xf32>
      %368 = arith.select %366, %355, %367 : vector<16x128xi1>, vector<16x128xf32>
      %c15 = arith.constant 15 : index
      %c0_143 = arith.constant 0 : index
      %369 = vector.load %arg15[%c15, %c0_143] : memref<25x128xf32, #tpu.memory_space<vmem>>, vector<1x128xf32>
      %370 = vector.shape_cast %369 : vector<1x128xf32> to vector<128xf32>
      %371 = vector.shape_cast %370 : vector<128xf32> to vector<1x128xf32>
      %372 = vector.broadcast %371 : vector<1x128xf32> to vector<16x128xf32>
      %373 = arith.mulf %368, %372 : vector<16x128xf32>
      %374 = arith.addf %340, %373 : vector<16x128xf32>
      %c8_i32_144 = arith.constant 8 : i32
      %375 = tpu.dynamic_rotate %354 by %c8_i32_144 dim 1 : vector<16x128xf32>, i32 -> vector<16x128xf32>
      %c-2_i32_145 = arith.constant -2 : i32
      %376 = vector.broadcast %c-2_i32_145 : i32 to vector<1x128xi32>
      %377 = arith.addi %4, %376 : vector<1x128xi32>
      %c0_i32_146 = arith.constant 0 : i32
      %378 = vector.broadcast %c0_i32_146 : i32 to vector<1x128xi32>
      %379 = arith.cmpi sge, %377, %378 : vector<1x128xi32>
      %c-2_i32_147 = arith.constant -2 : i32
      %380 = vector.broadcast %c-2_i32_147 : i32 to vector<1x128xi32>
      %381 = arith.addi %4, %380 : vector<1x128xi32>
      %c16_i32_148 = arith.constant 16 : i32
      %382 = vector.broadcast %c16_i32_148 : i32 to vector<1x128xi32>
      %383 = arith.cmpi slt, %381, %382 : vector<1x128xi32>
      %384 = arith.andi %379, %383 : vector<1x128xi1>
      %cst_149 = arith.constant 0.000000e+00 : f32
      %385 = vector.shape_cast %384 : vector<1x128xi1> to vector<1x128xi1>
      %386 = vector.broadcast %385 : vector<1x128xi1> to vector<16x128xi1>
      %387 = vector.broadcast %cst_149 : f32 to vector<16x128xf32>
      %388 = arith.select %386, %375, %387 : vector<16x128xi1>, vector<16x128xf32>
      %c16 = arith.constant 16 : index
      %c0_150 = arith.constant 0 : index
      %389 = vector.load %arg15[%c16, %c0_150] : memref<25x128xf32, #tpu.memory_space<vmem>>, vector<1x128xf32>
      %390 = vector.shape_cast %389 : vector<1x128xf32> to vector<128xf32>
      %391 = vector.shape_cast %390 : vector<128xf32> to vector<1x128xf32>
      %392 = vector.broadcast %391 : vector<1x128xf32> to vector<16x128xf32>
      %393 = arith.mulf %388, %392 : vector<16x128xf32>
      %394 = arith.addf %374, %393 : vector<16x128xf32>
      %c17 = arith.constant 17 : index
      %c0_151 = arith.constant 0 : index
      %395 = vector.load %arg15[%c17, %c0_151] : memref<25x128xf32, #tpu.memory_space<vmem>>, vector<1x128xf32>
      %396 = vector.shape_cast %395 : vector<1x128xf32> to vector<128xf32>
      %397 = vector.shape_cast %396 : vector<128xf32> to vector<1x128xf32>
      %398 = vector.broadcast %397 : vector<1x128xf32> to vector<16x128xf32>
      %399 = arith.mulf %354, %398 : vector<16x128xf32>
      %400 = arith.addf %394, %399 : vector<16x128xf32>
      %c120_i32_152 = arith.constant 120 : i32
      %401 = tpu.dynamic_rotate %354 by %c120_i32_152 dim 1 : vector<16x128xf32>, i32 -> vector<16x128xf32>
      %c2_i32_153 = arith.constant 2 : i32
      %402 = vector.broadcast %c2_i32_153 : i32 to vector<1x128xi32>
      %403 = arith.addi %4, %402 : vector<1x128xi32>
      %c0_i32_154 = arith.constant 0 : i32
      %404 = vector.broadcast %c0_i32_154 : i32 to vector<1x128xi32>
      %405 = arith.cmpi sge, %403, %404 : vector<1x128xi32>
      %c2_i32_155 = arith.constant 2 : i32
      %406 = vector.broadcast %c2_i32_155 : i32 to vector<1x128xi32>
      %407 = arith.addi %4, %406 : vector<1x128xi32>
      %c16_i32_156 = arith.constant 16 : i32
      %408 = vector.broadcast %c16_i32_156 : i32 to vector<1x128xi32>
      %409 = arith.cmpi slt, %407, %408 : vector<1x128xi32>
      %410 = arith.andi %405, %409 : vector<1x128xi1>
      %cst_157 = arith.constant 0.000000e+00 : f32
      %411 = vector.shape_cast %410 : vector<1x128xi1> to vector<1x128xi1>
      %412 = vector.broadcast %411 : vector<1x128xi1> to vector<16x128xi1>
      %413 = vector.broadcast %cst_157 : f32 to vector<16x128xf32>
      %414 = arith.select %412, %401, %413 : vector<16x128xi1>, vector<16x128xf32>
      %c18 = arith.constant 18 : index
      %c0_158 = arith.constant 0 : index
      %415 = vector.load %arg15[%c18, %c0_158] : memref<25x128xf32, #tpu.memory_space<vmem>>, vector<1x128xf32>
      %416 = vector.shape_cast %415 : vector<1x128xf32> to vector<128xf32>
      %417 = vector.shape_cast %416 : vector<128xf32> to vector<1x128xf32>
      %418 = vector.broadcast %417 : vector<1x128xf32> to vector<16x128xf32>
      %419 = arith.mulf %414, %418 : vector<16x128xf32>
      %420 = arith.addf %400, %419 : vector<16x128xf32>
      %c112_i32_159 = arith.constant 112 : i32
      %421 = tpu.dynamic_rotate %354 by %c112_i32_159 dim 1 : vector<16x128xf32>, i32 -> vector<16x128xf32>
      %c4_i32_160 = arith.constant 4 : i32
      %422 = vector.broadcast %c4_i32_160 : i32 to vector<1x128xi32>
      %423 = arith.addi %4, %422 : vector<1x128xi32>
      %c0_i32_161 = arith.constant 0 : i32
      %424 = vector.broadcast %c0_i32_161 : i32 to vector<1x128xi32>
      %425 = arith.cmpi sge, %423, %424 : vector<1x128xi32>
      %c4_i32_162 = arith.constant 4 : i32
      %426 = vector.broadcast %c4_i32_162 : i32 to vector<1x128xi32>
      %427 = arith.addi %4, %426 : vector<1x128xi32>
      %c16_i32_163 = arith.constant 16 : i32
      %428 = vector.broadcast %c16_i32_163 : i32 to vector<1x128xi32>
      %429 = arith.cmpi slt, %427, %428 : vector<1x128xi32>
      %430 = arith.andi %425, %429 : vector<1x128xi1>
      %cst_164 = arith.constant 0.000000e+00 : f32
      %431 = vector.shape_cast %430 : vector<1x128xi1> to vector<1x128xi1>
      %432 = vector.broadcast %431 : vector<1x128xi1> to vector<16x128xi1>
      %433 = vector.broadcast %cst_164 : f32 to vector<16x128xf32>
      %434 = arith.select %432, %421, %433 : vector<16x128xi1>, vector<16x128xf32>
      %c19 = arith.constant 19 : index
      %c0_165 = arith.constant 0 : index
      %435 = vector.load %arg15[%c19, %c0_165] : memref<25x128xf32, #tpu.memory_space<vmem>>, vector<1x128xf32>
      %436 = vector.shape_cast %435 : vector<1x128xf32> to vector<128xf32>
      %437 = vector.shape_cast %436 : vector<128xf32> to vector<1x128xf32>
      %438 = vector.broadcast %437 : vector<1x128xf32> to vector<16x128xf32>
      %439 = arith.mulf %434, %438 : vector<16x128xf32>
      %440 = arith.addf %420, %439 : vector<16x128xf32>
      %c12_i32 = arith.constant 12 : i32
      %441 = tpu.dynamic_rotate %2 by %c12_i32 dim 0 : vector<16x128xf32>, i32 -> vector<16x128xf32>
      %c4_i32_166 = arith.constant 4 : i32
      %442 = vector.broadcast %c4_i32_166 : i32 to vector<16x1xi32>
      %443 = arith.addi %3, %442 : vector<16x1xi32>
      %c0_i32_167 = arith.constant 0 : i32
      %444 = vector.broadcast %c0_i32_167 : i32 to vector<16x1xi32>
      %445 = arith.cmpi sge, %443, %444 : vector<16x1xi32>
      %c4_i32_168 = arith.constant 4 : i32
      %446 = vector.broadcast %c4_i32_168 : i32 to vector<16x1xi32>
      %447 = arith.addi %3, %446 : vector<16x1xi32>
      %c16_i32_169 = arith.constant 16 : i32
      %448 = vector.broadcast %c16_i32_169 : i32 to vector<16x1xi32>
      %449 = arith.cmpi slt, %447, %448 : vector<16x1xi32>
      %450 = arith.andi %445, %449 : vector<16x1xi1>
      %cst_170 = arith.constant 0.000000e+00 : f32
      %451 = vector.shape_cast %450 : vector<16x1xi1> to vector<16x1xi1>
      %452 = vector.broadcast %451 : vector<16x1xi1> to vector<16x128xi1>
      %453 = vector.broadcast %cst_170 : f32 to vector<16x128xf32>
      %454 = arith.select %452, %441, %453 : vector<16x128xi1>, vector<16x128xf32>
      %c16_i32_171 = arith.constant 16 : i32
      %455 = tpu.dynamic_rotate %454 by %c16_i32_171 dim 1 : vector<16x128xf32>, i32 -> vector<16x128xf32>
      %c-4_i32_172 = arith.constant -4 : i32
      %456 = vector.broadcast %c-4_i32_172 : i32 to vector<1x128xi32>
      %457 = arith.addi %4, %456 : vector<1x128xi32>
      %c0_i32_173 = arith.constant 0 : i32
      %458 = vector.broadcast %c0_i32_173 : i32 to vector<1x128xi32>
      %459 = arith.cmpi sge, %457, %458 : vector<1x128xi32>
      %c-4_i32_174 = arith.constant -4 : i32
      %460 = vector.broadcast %c-4_i32_174 : i32 to vector<1x128xi32>
      %461 = arith.addi %4, %460 : vector<1x128xi32>
      %c16_i32_175 = arith.constant 16 : i32
      %462 = vector.broadcast %c16_i32_175 : i32 to vector<1x128xi32>
      %463 = arith.cmpi slt, %461, %462 : vector<1x128xi32>
      %464 = arith.andi %459, %463 : vector<1x128xi1>
      %cst_176 = arith.constant 0.000000e+00 : f32
      %465 = vector.shape_cast %464 : vector<1x128xi1> to vector<1x128xi1>
      %466 = vector.broadcast %465 : vector<1x128xi1> to vector<16x128xi1>
      %467 = vector.broadcast %cst_176 : f32 to vector<16x128xf32>
      %468 = arith.select %466, %455, %467 : vector<16x128xi1>, vector<16x128xf32>
      %c20 = arith.constant 20 : index
      %c0_177 = arith.constant 0 : index
      %469 = vector.load %arg15[%c20, %c0_177] : memref<25x128xf32, #tpu.memory_space<vmem>>, vector<1x128xf32>
      %470 = vector.shape_cast %469 : vector<1x128xf32> to vector<128xf32>
      %471 = vector.shape_cast %470 : vector<128xf32> to vector<1x128xf32>
      %472 = vector.broadcast %471 : vector<1x128xf32> to vector<16x128xf32>
      %473 = arith.mulf %468, %472 : vector<16x128xf32>
      %474 = arith.addf %440, %473 : vector<16x128xf32>
      %c8_i32_178 = arith.constant 8 : i32
      %475 = tpu.dynamic_rotate %454 by %c8_i32_178 dim 1 : vector<16x128xf32>, i32 -> vector<16x128xf32>
      %c-2_i32_179 = arith.constant -2 : i32
      %476 = vector.broadcast %c-2_i32_179 : i32 to vector<1x128xi32>
      %477 = arith.addi %4, %476 : vector<1x128xi32>
      %c0_i32_180 = arith.constant 0 : i32
      %478 = vector.broadcast %c0_i32_180 : i32 to vector<1x128xi32>
      %479 = arith.cmpi sge, %477, %478 : vector<1x128xi32>
      %c-2_i32_181 = arith.constant -2 : i32
      %480 = vector.broadcast %c-2_i32_181 : i32 to vector<1x128xi32>
      %481 = arith.addi %4, %480 : vector<1x128xi32>
      %c16_i32_182 = arith.constant 16 : i32
      %482 = vector.broadcast %c16_i32_182 : i32 to vector<1x128xi32>
      %483 = arith.cmpi slt, %481, %482 : vector<1x128xi32>
      %484 = arith.andi %479, %483 : vector<1x128xi1>
      %cst_183 = arith.constant 0.000000e+00 : f32
      %485 = vector.shape_cast %484 : vector<1x128xi1> to vector<1x128xi1>
      %486 = vector.broadcast %485 : vector<1x128xi1> to vector<16x128xi1>
      %487 = vector.broadcast %cst_183 : f32 to vector<16x128xf32>
      %488 = arith.select %486, %475, %487 : vector<16x128xi1>, vector<16x128xf32>
      %c21 = arith.constant 21 : index
      %c0_184 = arith.constant 0 : index
      %489 = vector.load %arg15[%c21, %c0_184] : memref<25x128xf32, #tpu.memory_space<vmem>>, vector<1x128xf32>
      %490 = vector.shape_cast %489 : vector<1x128xf32> to vector<128xf32>
      %491 = vector.shape_cast %490 : vector<128xf32> to vector<1x128xf32>
      %492 = vector.broadcast %491 : vector<1x128xf32> to vector<16x128xf32>
      %493 = arith.mulf %488, %492 : vector<16x128xf32>
      %494 = arith.addf %474, %493 : vector<16x128xf32>
      %c22 = arith.constant 22 : index
      %c0_185 = arith.constant 0 : index
      %495 = vector.load %arg15[%c22, %c0_185] : memref<25x128xf32, #tpu.memory_space<vmem>>, vector<1x128xf32>
      %496 = vector.shape_cast %495 : vector<1x128xf32> to vector<128xf32>
      %497 = vector.shape_cast %496 : vector<128xf32> to vector<1x128xf32>
      %498 = vector.broadcast %497 : vector<1x128xf32> to vector<16x128xf32>
      %499 = arith.mulf %454, %498 : vector<16x128xf32>
      %500 = arith.addf %494, %499 : vector<16x128xf32>
      %c120_i32_186 = arith.constant 120 : i32
      %501 = tpu.dynamic_rotate %454 by %c120_i32_186 dim 1 : vector<16x128xf32>, i32 -> vector<16x128xf32>
      %c2_i32_187 = arith.constant 2 : i32
      %502 = vector.broadcast %c2_i32_187 : i32 to vector<1x128xi32>
      %503 = arith.addi %4, %502 : vector<1x128xi32>
      %c0_i32_188 = arith.constant 0 : i32
      %504 = vector.broadcast %c0_i32_188 : i32 to vector<1x128xi32>
      %505 = arith.cmpi sge, %503, %504 : vector<1x128xi32>
      %c2_i32_189 = arith.constant 2 : i32
      %506 = vector.broadcast %c2_i32_189 : i32 to vector<1x128xi32>
      %507 = arith.addi %4, %506 : vector<1x128xi32>
      %c16_i32_190 = arith.constant 16 : i32
      %508 = vector.broadcast %c16_i32_190 : i32 to vector<1x128xi32>
      %509 = arith.cmpi slt, %507, %508 : vector<1x128xi32>
      %510 = arith.andi %505, %509 : vector<1x128xi1>
      %cst_191 = arith.constant 0.000000e+00 : f32
      %511 = vector.shape_cast %510 : vector<1x128xi1> to vector<1x128xi1>
      %512 = vector.broadcast %511 : vector<1x128xi1> to vector<16x128xi1>
      %513 = vector.broadcast %cst_191 : f32 to vector<16x128xf32>
      %514 = arith.select %512, %501, %513 : vector<16x128xi1>, vector<16x128xf32>
      %c23 = arith.constant 23 : index
      %c0_192 = arith.constant 0 : index
      %515 = vector.load %arg15[%c23, %c0_192] : memref<25x128xf32, #tpu.memory_space<vmem>>, vector<1x128xf32>
      %516 = vector.shape_cast %515 : vector<1x128xf32> to vector<128xf32>
      %517 = vector.shape_cast %516 : vector<128xf32> to vector<1x128xf32>
      %518 = vector.broadcast %517 : vector<1x128xf32> to vector<16x128xf32>
      %519 = arith.mulf %514, %518 : vector<16x128xf32>
      %520 = arith.addf %500, %519 : vector<16x128xf32>
      %c112_i32_193 = arith.constant 112 : i32
      %521 = tpu.dynamic_rotate %454 by %c112_i32_193 dim 1 : vector<16x128xf32>, i32 -> vector<16x128xf32>
      %c4_i32_194 = arith.constant 4 : i32
      %522 = vector.broadcast %c4_i32_194 : i32 to vector<1x128xi32>
      %523 = arith.addi %4, %522 : vector<1x128xi32>
      %c0_i32_195 = arith.constant 0 : i32
      %524 = vector.broadcast %c0_i32_195 : i32 to vector<1x128xi32>
      %525 = arith.cmpi sge, %523, %524 : vector<1x128xi32>
      %c4_i32_196 = arith.constant 4 : i32
      %526 = vector.broadcast %c4_i32_196 : i32 to vector<1x128xi32>
      %527 = arith.addi %4, %526 : vector<1x128xi32>
      %c16_i32_197 = arith.constant 16 : i32
      %528 = vector.broadcast %c16_i32_197 : i32 to vector<1x128xi32>
      %529 = arith.cmpi slt, %527, %528 : vector<1x128xi32>
      %530 = arith.andi %525, %529 : vector<1x128xi1>
      %cst_198 = arith.constant 0.000000e+00 : f32
      %531 = vector.shape_cast %530 : vector<1x128xi1> to vector<1x128xi1>
      %532 = vector.broadcast %531 : vector<1x128xi1> to vector<16x128xi1>
      %533 = vector.broadcast %cst_198 : f32 to vector<16x128xf32>
      %534 = arith.select %532, %521, %533 : vector<16x128xi1>, vector<16x128xf32>
      %c24 = arith.constant 24 : index
      %c0_199 = arith.constant 0 : index
      %535 = vector.load %arg15[%c24, %c0_199] : memref<25x128xf32, #tpu.memory_space<vmem>>, vector<1x128xf32>
      %536 = vector.shape_cast %535 : vector<1x128xf32> to vector<128xf32>
      %537 = vector.shape_cast %536 : vector<128xf32> to vector<1x128xf32>
      %538 = vector.broadcast %537 : vector<1x128xf32> to vector<16x128xf32>
      %539 = arith.mulf %534, %538 : vector<16x128xf32>
      %540 = arith.addf %520, %539 : vector<16x128xf32>
      %c3_200 = arith.constant 3 : index
      %c0_201 = arith.constant 0 : index
      %541 = vector.load %arg16[%c3_200, %c0_201] : memref<7x128xf32, #tpu.memory_space<vmem>>, vector<1x128xf32>
      %542 = vector.shape_cast %541 : vector<1x128xf32> to vector<128xf32>
      %543 = vector.shape_cast %542 : vector<128xf32> to vector<1x128xf32>
      %544 = vector.broadcast %543 : vector<1x128xf32> to vector<16x128xf32>
      %545 = arith.mulf %540, %544 : vector<16x128xf32>
      %c1_i32_202 = arith.constant 1 : i32
      %546 = tpu.dynamic_rotate %540 by %c1_i32_202 dim 1 : vector<16x128xf32>, i32 -> vector<16x128xf32>
      %c4_203 = arith.constant 4 : index
      %c0_204 = arith.constant 0 : index
      %547 = vector.load %arg16[%c4_203, %c0_204] : memref<7x128xf32, #tpu.memory_space<vmem>>, vector<1x128xf32>
      %548 = vector.shape_cast %547 : vector<1x128xf32> to vector<128xf32>
      %549 = vector.shape_cast %548 : vector<128xf32> to vector<1x128xf32>
      %550 = vector.broadcast %549 : vector<1x128xf32> to vector<16x128xf32>
      %551 = arith.mulf %546, %550 : vector<16x128xf32>
      %552 = arith.addf %545, %551 : vector<16x128xf32>
      %c127_i32 = arith.constant 127 : i32
      %553 = tpu.dynamic_rotate %540 by %c127_i32 dim 1 : vector<16x128xf32>, i32 -> vector<16x128xf32>
      %c2_205 = arith.constant 2 : index
      %c0_206 = arith.constant 0 : index
      %554 = vector.load %arg16[%c2_205, %c0_206] : memref<7x128xf32, #tpu.memory_space<vmem>>, vector<1x128xf32>
      %555 = vector.shape_cast %554 : vector<1x128xf32> to vector<128xf32>
      %556 = vector.shape_cast %555 : vector<128xf32> to vector<1x128xf32>
      %557 = vector.broadcast %556 : vector<1x128xf32> to vector<16x128xf32>
      %558 = arith.mulf %553, %557 : vector<16x128xf32>
      %559 = arith.addf %552, %558 : vector<16x128xf32>
      %c2_i32_207 = arith.constant 2 : i32
      %560 = tpu.dynamic_rotate %540 by %c2_i32_207 dim 1 : vector<16x128xf32>, i32 -> vector<16x128xf32>
      %c5_208 = arith.constant 5 : index
      %c0_209 = arith.constant 0 : index
      %561 = vector.load %arg16[%c5_208, %c0_209] : memref<7x128xf32, #tpu.memory_space<vmem>>, vector<1x128xf32>
      %562 = vector.shape_cast %561 : vector<1x128xf32> to vector<128xf32>
      %563 = vector.shape_cast %562 : vector<128xf32> to vector<1x128xf32>
      %564 = vector.broadcast %563 : vector<1x128xf32> to vector<16x128xf32>
      %565 = arith.mulf %560, %564 : vector<16x128xf32>
      %566 = arith.addf %559, %565 : vector<16x128xf32>
      %c126_i32 = arith.constant 126 : i32
      %567 = tpu.dynamic_rotate %540 by %c126_i32 dim 1 : vector<16x128xf32>, i32 -> vector<16x128xf32>
      %c1_210 = arith.constant 1 : index
      %c0_211 = arith.constant 0 : index
      %568 = vector.load %arg16[%c1_210, %c0_211] : memref<7x128xf32, #tpu.memory_space<vmem>>, vector<1x128xf32>
      %569 = vector.shape_cast %568 : vector<1x128xf32> to vector<128xf32>
      %570 = vector.shape_cast %569 : vector<128xf32> to vector<1x128xf32>
      %571 = vector.broadcast %570 : vector<1x128xf32> to vector<16x128xf32>
      %572 = arith.mulf %567, %571 : vector<16x128xf32>
      %573 = arith.addf %566, %572 : vector<16x128xf32>
      %c3_i32 = arith.constant 3 : i32
      %574 = tpu.dynamic_rotate %540 by %c3_i32 dim 1 : vector<16x128xf32>, i32 -> vector<16x128xf32>
      %c6_212 = arith.constant 6 : index
      %c0_213 = arith.constant 0 : index
      %575 = vector.load %arg16[%c6_212, %c0_213] : memref<7x128xf32, #tpu.memory_space<vmem>>, vector<1x128xf32>
      %576 = vector.shape_cast %575 : vector<1x128xf32> to vector<128xf32>
      %577 = vector.shape_cast %576 : vector<128xf32> to vector<1x128xf32>
      %578 = vector.broadcast %577 : vector<1x128xf32> to vector<16x128xf32>
      %579 = arith.mulf %574, %578 : vector<16x128xf32>
      %580 = arith.addf %573, %579 : vector<16x128xf32>
      %c125_i32 = arith.constant 125 : i32
      %581 = tpu.dynamic_rotate %540 by %c125_i32 dim 1 : vector<16x128xf32>, i32 -> vector<16x128xf32>
      %c0_214 = arith.constant 0 : index
      %c0_215 = arith.constant 0 : index
      %582 = vector.load %arg16[%c0_214, %c0_215] : memref<7x128xf32, #tpu.memory_space<vmem>>, vector<1x128xf32>
      %583 = vector.shape_cast %582 : vector<1x128xf32> to vector<128xf32>
      %584 = vector.shape_cast %583 : vector<128xf32> to vector<1x128xf32>
      %585 = vector.broadcast %584 : vector<1x128xf32> to vector<16x128xf32>
      %586 = arith.mulf %581, %585 : vector<16x128xf32>
      %587 = arith.addf %580, %586 : vector<16x128xf32>
      %c4_i32_216 = arith.constant 4 : i32
      %588 = tpu.dynamic_rotate %587 by %c4_i32_216 dim 1 : vector<16x128xf32>, i32 -> vector<16x128xf32>
      %589 = arith.addf %587, %588 : vector<16x128xf32>
      %c8_i32_217 = arith.constant 8 : i32
      %590 = tpu.dynamic_rotate %589 by %c8_i32_217 dim 1 : vector<16x128xf32>, i32 -> vector<16x128xf32>
      %591 = arith.addf %589, %590 : vector<16x128xf32>
      %c16_i32_218 = arith.constant 16 : i32
      %592 = tpu.dynamic_rotate %591 by %c16_i32_218 dim 1 : vector<16x128xf32>, i32 -> vector<16x128xf32>
      %593 = arith.addf %591, %592 : vector<16x128xf32>
      %c32_i32 = arith.constant 32 : i32
      %594 = tpu.dynamic_rotate %593 by %c32_i32 dim 1 : vector<16x128xf32>, i32 -> vector<16x128xf32>
      %595 = arith.addf %593, %594 : vector<16x128xf32>
      %c64_i32 = arith.constant 64 : i32
      %596 = tpu.dynamic_rotate %595 by %c64_i32 dim 1 : vector<16x128xf32>, i32 -> vector<16x128xf32>
      %597 = arith.addf %595, %596 : vector<16x128xf32>
      %cst_219 = arith.constant dense<0.000000e+00> : vector<128xf32>
      %598 = vector.multi_reduction <add>, %597, %cst_219 [0] : vector<16x128xf32> to vector<128xf32>
      %599 = vector.shape_cast %598 : vector<128xf32> to vector<1x128xf32>
      %cst_220 = arith.constant 0.001953125 : f32
      %600 = vector.broadcast %cst_220 : f32 to vector<1x128xf32>
      %601 = arith.mulf %599, %600 : vector<1x128xf32>
      %602 = vector.broadcast %601 : vector<1x128xf32> to vector<16x128xf32>
      %603 = arith.subf %587, %602 : vector<16x128xf32>
      %604 = arith.mulf %603, %603 : vector<16x128xf32>
      %c4_i32_221 = arith.constant 4 : i32
      %605 = tpu.dynamic_rotate %604 by %c4_i32_221 dim 1 : vector<16x128xf32>, i32 -> vector<16x128xf32>
      %606 = arith.addf %604, %605 : vector<16x128xf32>
      %c8_i32_222 = arith.constant 8 : i32
      %607 = tpu.dynamic_rotate %606 by %c8_i32_222 dim 1 : vector<16x128xf32>, i32 -> vector<16x128xf32>
      %608 = arith.addf %606, %607 : vector<16x128xf32>
      %c16_i32_223 = arith.constant 16 : i32
      %609 = tpu.dynamic_rotate %608 by %c16_i32_223 dim 1 : vector<16x128xf32>, i32 -> vector<16x128xf32>
      %610 = arith.addf %608, %609 : vector<16x128xf32>
      %c32_i32_224 = arith.constant 32 : i32
      %611 = tpu.dynamic_rotate %610 by %c32_i32_224 dim 1 : vector<16x128xf32>, i32 -> vector<16x128xf32>
      %612 = arith.addf %610, %611 : vector<16x128xf32>
      %c64_i32_225 = arith.constant 64 : i32
      %613 = tpu.dynamic_rotate %612 by %c64_i32_225 dim 1 : vector<16x128xf32>, i32 -> vector<16x128xf32>
      %614 = arith.addf %612, %613 : vector<16x128xf32>
      %cst_226 = arith.constant dense<0.000000e+00> : vector<128xf32>
      %615 = vector.multi_reduction <add>, %614, %cst_226 [0] : vector<16x128xf32> to vector<128xf32>
      %616 = vector.shape_cast %615 : vector<128xf32> to vector<1x128xf32>
      %cst_227 = arith.constant 0.001953125 : f32
      %617 = vector.broadcast %cst_227 : f32 to vector<1x128xf32>
      %618 = arith.mulf %616, %617 : vector<1x128xf32>
      %cst_228 = arith.constant 9.99999974E-6 : f32
      %619 = vector.broadcast %cst_228 : f32 to vector<1x128xf32>
      %620 = arith.addf %618, %619 : vector<1x128xf32>
      %621 = math.rsqrt %620 : vector<1x128xf32>
      %622 = vector.broadcast %621 : vector<1x128xf32> to vector<16x128xf32>
      %623 = arith.mulf %603, %622 : vector<16x128xf32>
      %624 = vector.broadcast %53 : f32 to vector<16x128xf32>
      %625 = arith.mulf %624, %623 : vector<16x128xf32>
      %626 = arith.addf %52, %625 : vector<16x128xf32>
      %c0_229 = arith.constant 0 : index
      %c0_230 = arith.constant 0 : index
      %c0_231 = arith.constant 0 : index
      %627 = vector.load %arg17[%c0_229, %c0_230, %c0_231] : memref<1x16x128xf32, #tpu.memory_space<vmem>>, vector<1x16x128xf32>
      %628 = vector.shape_cast %627 : vector<1x16x128xf32> to vector<16x128xf32>
      %629 = vector.shape_cast %626 : vector<16x128xf32> to vector<1x16x128xf32>
      tpu.vector_store %arg17[%c0_229, %c0_230, %c0_231], %629 {strides = array<i32>} : memref<1x16x128xf32, #tpu.memory_space<vmem>>, vector<1x16x128xf32>,
    } else {
    }
    return
  }
  func.func @transform_0(%arg0: i32) -> i32 {
    %c0_i32 = arith.constant 0 : i32
    %c0_i32_0 = arith.constant 0 : i32
    return %c0_i32 : i32
  }
  func.func @transform_1(%arg0: i32) -> (i32, i32) {
    %c0_i32 = arith.constant 0 : i32
    %c0_i32_0 = arith.constant 0 : i32
    %c0_i32_1 = arith.constant 0 : i32
    return %c0_i32, %c0_i32_0 : i32, i32
  }
  func.func @transform_2(%arg0: i32) -> (i32, i32) {
    %c0_i32 = arith.constant 0 : i32
    %c0_i32_0 = arith.constant 0 : i32
    %c0_i32_1 = arith.constant 0 : i32
    return %c0_i32, %c0_i32_0 : i32, i32
  }
  func.func @transform_3(%arg0: i32) -> (i32, i32) {
    %c0_i32 = arith.constant 0 : i32
    %c0_i32_0 = arith.constant 0 : i32
    %c0_i32_1 = arith.constant 0 : i32
    return %c0_i32, %c0_i32_0 : i32, i32
  }
  func.func @transform_4(%arg0: i32) -> (i32, i32) {
    %c0_i32 = arith.constant 0 : i32
    %c0_i32_0 = arith.constant 0 : i32
    %c0_i32_1 = arith.constant 0 : i32
    return %c0_i32, %c0_i32_0 : i32, i32
  }
  func.func @transform_5(%arg0: i32) -> (i32, i32) {
    %c0_i32 = arith.constant 0 : i32
    %c0_i32_0 = arith.constant 0 : i32
    %c0_i32_1 = arith.constant 0 : i32
    return %c0_i32, %c0_i32_0 : i32, i32
  }
  func.func @transform_6(%arg0: i32) -> (i32, i32) {
    %c0_i32 = arith.constant 0 : i32
    %c0_i32_0 = arith.constant 0 : i32
    %c0_i32_1 = arith.constant 0 : i32
    return %c0_i32, %c0_i32_0 : i32, i32
  }
  func.func @transform_7(%arg0: i32) -> (i32, i32) {
    %c0_i32 = arith.constant 0 : i32
    %c0_i32_0 = arith.constant 0 : i32
    %c0_i32_1 = arith.constant 0 : i32
    return %c0_i32, %c0_i32_0 : i32, i32
  }
  func.func @transform_8(%arg0: i32) -> (i32, i32) {
    %c0_i32 = arith.constant 0 : i32
    %c0_i32_0 = arith.constant 0 : i32
    %c0_i32_1 = arith.constant 0 : i32
    return %c0_i32, %c0_i32_0 : i32, i32
  }
  func.func @transform_9(%arg0: i32) -> (i32, i32) {
    %c0_i32 = arith.constant 0 : i32
    %c0_i32_0 = arith.constant 0 : i32
    %c0_i32_1 = arith.constant 0 : i32
    return %c0_i32, %c0_i32_0 : i32, i32
  }
  func.func @transform_10(%arg0: i32) -> (i32, i32) {
    %c0_i32 = arith.constant 0 : i32
    %c0_i32_0 = arith.constant 0 : i32
    %c0_i32_1 = arith.constant 0 : i32
    return %c0_i32, %c0_i32_0 : i32, i32
  }
  func.func @transform_11(%arg0: i32) -> (i32, i32) {
    %c0_i32 = arith.constant 0 : i32
    %c0_i32_0 = arith.constant 0 : i32
    %c0_i32_1 = arith.constant 0 : i32
    return %c0_i32, %c0_i32_0 : i32, i32
  }
  func.func @transform_12(%arg0: i32) -> (i32, i32) {
    %c0_i32 = arith.constant 0 : i32
    %c0_i32_0 = arith.constant 0 : i32
    %c0_i32_1 = arith.constant 0 : i32
    return %c0_i32, %c0_i32_0 : i32, i32
  }
  func.func @transform_13(%arg0: i32) -> (i32, i32) {
    %c0_i32 = arith.constant 0 : i32
    %c0_i32_0 = arith.constant 0 : i32
    %c0_i32_1 = arith.constant 0 : i32
    return %c0_i32, %c0_i32_0 : i32, i32
  }
  func.func @transform_14(%arg0: i32) -> (i32, i32) {
    %c0_i32 = arith.constant 0 : i32
    %c0_i32_0 = arith.constant 0 : i32
    %c0_i32_1 = arith.constant 0 : i32
    return %c0_i32, %c0_i32_0 : i32, i32
  }
  func.func @transform_15(%arg0: i32) -> (i32, i32) {
    %c0_i32 = arith.constant 0 : i32
    %c0_i32_0 = arith.constant 0 : i32
    %c0_i32_1 = arith.constant 0 : i32
    return %c0_i32, %c0_i32_0 : i32, i32
  }
  func.func @transform_16(%arg0: i32) -> (i32, i32, i32) {
    %c0_i32 = arith.constant 0 : i32
    %c0_i32_0 = arith.constant 0 : i32
    %c0_i32_1 = arith.constant 0 : i32
    return %arg0, %c0_i32, %c0_i32_0 : i32, i32, i32
  }
}

</mosaic_0001>

<llo_original>
// kernel: tile.256
$region0: #{tile.256}
  #allocation0 [shape = 's32[1]{0}', space=sflag, size = 0x4, scoped, tag = 'scoped memory for tile.256']
  %s0 = inlined_call_operand.vmem [shape: f32[4], index: 0, kind: input, shape index: {}]
  %s1 = inlined_call_operand.vmem [shape: f32[32,4], index: 1, kind: output, shape index: {}]
  // Predicated region
  $region2: #{tile.256} parent=0 // pred_check
    _
  $region3: #{tile.256} parent=0 // pred_check_branch
    %3 = sbr.rel (0) target = $region5
  $region4: #{tile.256} parent=0 // pred_region
    _
  $region5: #{tile.256} parent=0 // pred_fallthru
    _
  %v4 = vld [vmem:[%s0] ss:$0 sm:$0xff]
  %5 = vst [vmem:[%s1] sm:$0xff] %v4
  %s6 = scalar_lea.vmem %s1, 8
  %7 = vst [vmem:[%s6] sm:$0xff] %v4
  %s8 = scalar_lea.vmem %s1, 16
  %9 = vst [vmem:[%s8] sm:$0xff] %v4
  %s10 = scalar_lea.vmem %s1, 24
  %11 = vst [vmem:[%s10] sm:$0xff] %v4

// kernel: tile.281
$region0: #{tile.281}
  %s0 = inlined_call_operand.vmem [shape: f32[32,4], index: 0, kind: input, shape index: {}]
  %s1 = inlined_call_operand.vmem [shape: f32[1,128], index: 1, kind: output, shape index: {}]
  $region1: #{tile.281} parent=0
    #allocation0 [shape = 'u8[4096]{0}', space=vmem, size = 0x1000, scoped, tag = 'scoped mem for output reshape']
    %v2 = vld [vmem:[%s0] sm:$0x1]
    %vm3 = vcmask 31744
    %4 = vst.msk [vmem:[#allocation0] sm:$0x1] %vm3, %v2
    %s5 = scalar_lea.vmem %s0, 31
    %v6 = vld [vmem:[%s5] sm:$0x1]
    %7 = vrot.lane.b32.xlu0 %v6, 124
    %v8 = vpop.permute.xlu0 %7
    %vm9 = vcmask 1048544
    %10 = vst.msk [vmem:[#allocation0] sm:$0x1] %vm9, %v8
    %s11 = scalar_lea.vmem %s0, 30
    %v12 = vld [vmem:[%s11] sm:$0x1]
    %13 = vrot.lane.b32.xlu0 %v12, 120
    %v14 = vpop.permute.xlu0 %13
    %vm15 = vcmask 1015744
    %16 = vst.msk [vmem:[#allocation0] sm:$0x1] %vm15, %v14
    %s17 = scalar_lea.vmem %s0, 29
    %v18 = vld [vmem:[%s17] sm:$0x1]
    %19 = vrot.lane.b32.xlu0 %v18, 116
    %v20 = vpop.permute.xlu0 %19
    %vm21 = vcmask 982944
    %22 = vst.msk [vmem:[#allocation0] sm:$0x1] %vm21, %v20
    %s23 = scalar_lea.vmem %s0, 28
    %v24 = vld [vmem:[%s23] sm:$0x1]
    %25 = vrot.lane.b32.xlu0 %v24, 112
    %v26 = vpop.permute.xlu0 %25
    %vm27 = vcmask 950144
    %28 = vst.msk [vmem:[#allocation0] sm:$0x1] %vm27, %v26
    %s29 = scalar_lea.vmem %s0, 27
    %v30 = vld [vmem:[%s29] sm:$0x1]
    %31 = vrot.lane.b32.xlu0 %v30, 108
    %v32 = vpop.permute.xlu0 %31
    %vm33 = vcmask 917344
    %34 = vst.msk [vmem:[#allocation0] sm:$0x1] %vm33, %v32
    %s35 = scalar_lea.vmem %s0, 26
    %v36 = vld [vmem:[%s35] sm:$0x1]
    %37 = vrot.lane.b32.xlu0 %v36, 104
    %v38 = vpop.permute.xlu0 %37
    %vm39 = vcmask 884544
    %40 = vst.msk [vmem:[#allocation0] sm:$0x1] %vm39, %v38
    %s41 = scalar_lea.vmem %s0, 25
    %v42 = vld [vmem:[%s41] sm:$0x1]
    %43 = vrot.lane.b32.xlu0 %v42, 100
    %v44 = vpop.permute.xlu0 %43
    %vm45 = vcmask 851744
    %46 = vst.msk [vmem:[#allocation0] sm:$0x1] %vm45, %v44
    %s47 = scalar_lea.vmem %s0, 24
    %v48 = vld [vmem:[%s47] sm:$0x1]
    %49 = vrot.lane.b32.xlu0 %v48, 96
    %v50 = vpop.permute.xlu0 %49
    %vm51 = vcmask 818944
    %52 = vst.msk [vmem:[#allocation0] sm:$0x1] %vm51, %v50
    %s53 = scalar_lea.vmem %s0, 23
    %v54 = vld [vmem:[%s53] sm:$0x1]
    %55 = vrot.lane.b32.xlu0 %v54, 92
    %v56 = vpop.permute.xlu0 %55
    %vm57 = vcmask 786144
    %58 = vst.msk [vmem:[#allocation0] sm:$0x1] %vm57, %v56
    %s59 = scalar_lea.vmem %s0, 22
    %v60 = vld [vmem:[%s59] sm:$0x1]
    %61 = vrot.lane.b32.xlu0 %v60, 88
    %v62 = vpop.permute.xlu0 %61
    %vm63 = vcmask 753344
    %64 = vst.msk [vmem:[#allocation0] sm:$0x1] %vm63, %v62
    %s65 = scalar_lea.vmem %s0, 21
    %v66 = vld [vmem:[%s65] sm:$0x1]
    %67 = vrot.lane.b32.xlu0 %v66, 84
    %v68 = vpop.permute.xlu0 %67
    %vm69 = vcmask 720544
    %70 = vst.msk [vmem:[#allocation0] sm:$0x1] %vm69, %v68
    %s71 = scalar_lea.vmem %s0, 20
    %v72 = vld [vmem:[%s71] sm:$0x1]
    %73 = vrot.lane.b32.xlu0 %v72, 80
    %v74 = vpop.permute.xlu0 %73
    %vm75 = vcmask 687744
    %76 = vst.msk [vmem:[#allocation0] sm:$0x1] %vm75, %v74
    %s77 = scalar_lea.vmem %s0, 19
    %v78 = vld [vmem:[%s77] sm:$0x1]
    %79 = vrot.lane.b32.xlu0 %v78, 76
    %v80 = vpop.permute.xlu0 %79
    %vm81 = vcmask 654944
    %82 = vst.msk [vmem:[#allocation0] sm:$0x1] %vm81, %v80
    %s83 = scalar_lea.vmem %s0, 18
    %v84 = vld [vmem:[%s83] sm:$0x1]
    %85 = vrot.lane.b32.xlu0 %v84, 72
    %v86 = vpop.permute.xlu0 %85
    %vm87 = vcmask 622144
    %88 = vst.msk [vmem:[#allocation0] sm:$0x1] %vm87, %v86
    %s89 = scalar_lea.vmem %s0, 17
    %v90 = vld [vmem:[%s89] sm:$0x1]
    %91 = vrot.lane.b32.xlu0 %v90, 68
    %v92 = vpop.permute.xlu0 %91
    %vm93 = vcmask 589344
    %94 = vst.msk [vmem:[#allocation0] sm:$0x1] %vm93, %v92
    %s95 = scalar_lea.vmem %s0, 16
    %v96 = vld [vmem:[%s95] sm:$0x1]
    %97 = vrot.lane.b32.xlu0 %v96, 64
    %v98 = vpop.permute.xlu0 %97
    %vm99 = vcmask 556544
    %100 = vst.msk [vmem:[#allocation0] sm:$0x1] %vm99, %v98
    %s101 = scalar_lea.vmem %s0, 15
    %v102 = vld [vmem:[%s101] sm:$0x1]
    %103 = vrot.lane.b32.xlu0 %v102, 60
    %v104 = vpop.permute.xlu0 %103
    %vm105 = vcmask 523744
    %106 = vst.msk [vmem:[#allocation0] sm:$0x1] %vm105, %v104
    %s107 = scalar_lea.vmem %s0, 14
    %v108 = vld [vmem:[%s107] sm:$0x1]
    %109 = vrot.lane.b32.xlu0 %v108, 56
    %v110 = vpop.permute.xlu0 %109
    %vm111 = vcmask 490944
    %112 = vst.msk [vmem:[#allocation0] sm:$0x1] %vm111, %v110
    %s113 = scalar_lea.vmem %s0, 13
    %v114 = vld [vmem:[%s113] sm:$0x1]
    %115 = vrot.lane.b32.xlu0 %v114, 52
    %v116 = vpop.permute.xlu0 %115
    %vm117 = vcmask 458144
    %118 = vst.msk [vmem:[#allocation0] sm:$0x1] %vm117, %v116
    %s119 = scalar_lea.vmem %s0, 12
    %v120 = vld [vmem:[%s119] sm:$0x1]
    %121 = vrot.lane.b32.xlu0 %v120, 48
    %v122 = vpop.permute.xlu0 %121
    %vm123 = vcmask 425344
    %124 = vst.msk [vmem:[#allocation0] sm:$0x1] %vm123, %v122
    %s125 = scalar_lea.vmem %s0, 11
    %v126 = vld [vmem:[%s125] sm:$0x1]
    %127 = vrot.lane.b32.xlu0 %v126, 44
    %v128 = vpop.permute.xlu0 %127
    %vm129 = vcmask 392544
    %130 = vst.msk [vmem:[#allocation0] sm:$0x1] %vm129, %v128
    %s131 = scalar_lea.vmem %s0, 10
    %v132 = vld [vmem:[%s131] sm:$0x1]
    %133 = vrot.lane.b32.xlu0 %v132, 40
    %v134 = vpop.permute.xlu0 %133
    %vm135 = vcmask 359744
    %136 = vst.msk [vmem:[#allocation0] sm:$0x1] %vm135, %v134
    %s137 = scalar_lea.vmem %s0, 9
    %v138 = vld [vmem:[%s137] sm:$0x1]
    %139 = vrot.lane.b32.xlu0 %v138, 36
    %v140 = vpop.permute.xlu0 %139
    %vm141 = vcmask 326944
    %142 = vst.msk [vmem:[#allocation0] sm:$0x1] %vm141, %v140
    %s143 = scalar_lea.vmem %s0, 8
    %v144 = vld [vmem:[%s143] sm:$0x1]
    %145 = vrot.lane.b32.xlu0 %v144, 32
    %v146 = vpop.permute.xlu0 %145
    %vm147 = vcmask 294144
    %148 = vst.msk [vmem:[#allocation0] sm:$0x1] %vm147, %v146
    %s149 = scalar_lea.vmem %s0, 7
    %v150 = vld [vmem:[%s149] sm:$0x1]
    %151 = vrot.lane.b32.xlu0 %v150, 28
    %v152 = vpop.permute.xlu0 %151
    %vm153 = vcmask 261344
    %154 = vst.msk [vmem:[#allocation0] sm:$0x1] %vm153, %v152
    %s155 = scalar_lea.vmem %s0, 6
    %v156 = vld [vmem:[%s155] sm:$0x1]
    %157 = vrot.lane.b32.xlu0 %v156, 24
    %v158 = vpop.permute.xlu0 %157
    %vm159 = vcmask 228544
    %160 = vst.msk [vmem:[#allocation0] sm:$0x1] %vm159, %v158
    %s161 = scalar_lea.vmem %s0, 5
    %v162 = vld [vmem:[%s161] sm:$0x1]
    %163 = vrot.lane.b32.xlu0 %v162, 20
    %v164 = vpop.permute.xlu0 %163
    %vm165 = vcmask 195744
    %166 = vst.msk [vmem:[#allocation0] sm:$0x1] %vm165, %v164
    %s167 = scalar_lea.vmem %s0, 4
    %v168 = vld [vmem:[%s167] sm:$0x1]
    %169 = vrot.lane.b32.xlu0 %v168, 16
    %v170 = vpop.permute.xlu0 %169
    %vm171 = vcmask 162944
    %172 = vst.msk [vmem:[#allocation0] sm:$0x1] %vm171, %v170
    %s173 = scalar_lea.vmem %s0, 3
    %v174 = vld [vmem:[%s173] sm:$0x1]
    %175 = vrot.lane.b32.xlu0 %v174, 12
    %v176 = vpop.permute.xlu0 %175
    %vm177 = vcmask 130144
    %178 = vst.msk [vmem:[#allocation0] sm:$0x1] %vm177, %v176
    %s179 = scalar_lea.vmem %s0, 2
    %v180 = vld [vmem:[%s179] sm:$0x1]
    %181 = vrot.lane.b32.xlu0 %v180, 8
    %v182 = vpop.permute.xlu0 %181
    %vm183 = vcmask 97344
    %184 = vst.msk [vmem:[#allocation0] sm:$0x1] %vm183, %v182
    %s185 = scalar_lea.vmem %s0, 1
    %v186 = vld [vmem:[%s185] sm:$0x1]
    %187 = vrot.lane.b32.xlu0 %v186, 4
    %v188 = vpop.permute.xlu0 %187
    %vm189 = vcmask 64544
    %190 = vst.msk [vmem:[#allocation0] sm:$0x1] %vm189, %v188
    %s192 = sshll.u32 1, 1
    %s193 = ssub.s32 %s192, 1
    %v195 = vld [vmem:[#allocation0] sm:%s193]
    %s196 = sshll.u32 1, 1
    %s197 = ssub.s32 %s196, 1
    %198 = vst [vmem:[%s1] sm:%s197] %v195

// kernel: tile.245
$region0: #{tile.245}
  %s0 = inlined_call_operand.vmem [shape: s32[16,4], index: 0, kind: input, shape index: {}]
  %s1 = inlined_call_operand.vmem [shape: s32[64], index: 1, kind: output, shape index: {}]
  $region1: #{tile.245} parent=0
    #allocation0 [shape = 'u8[4096]{0}', space=vmem, size = 0x1000, scoped, tag = 'scoped mem for output reshape']
    %v2 = vld [vmem:[%s0] sm:$0x1]
    %vm3 = vcmask 31744
    %4 = vst.msk [vmem:[#allocation0] sm:$0x1] %vm3, %v2
    %s5 = scalar_lea.vmem %s0, 15
    %v6 = vld [vmem:[%s5] sm:$0x1]
    %7 = vrot.lane.b32.xlu0 %v6, 60
    %v8 = vpop.permute.xlu0 %7
    %vm9 = vcmask 523744
    %10 = vst.msk [vmem:[#allocation0] sm:$0x1] %vm9, %v8
    %s11 = scalar_lea.vmem %s0, 14
    %v12 = vld [vmem:[%s11] sm:$0x1]
    %13 = vrot.lane.b32.xlu0 %v12, 56
    %v14 = vpop.permute.xlu0 %13
    %vm15 = vcmask 490944
    %16 = vst.msk [vmem:[#allocation0] sm:$0x1] %vm15, %v14
    %s17 = scalar_lea.vmem %s0, 13
    %v18 = vld [vmem:[%s17] sm:$0x1]
    %19 = vrot.lane.b32.xlu0 %v18, 52
    %v20 = vpop.permute.xlu0 %19
    %vm21 = vcmask 458144
    %22 = vst.msk [vmem:[#allocation0] sm:$0x1] %vm21, %v20
    %s23 = scalar_lea.vmem %s0, 12
    %v24 = vld [vmem:[%s23] sm:$0x1]
    %25 = vrot.lane.b32.xlu0 %v24, 48
    %v26 = vpop.permute.xlu0 %25
    %vm27 = vcmask 425344
    %28 = vst.msk [vmem:[#allocation0] sm:$0x1] %vm27, %v26
    %s29 = scalar_lea.vmem %s0, 11
    %v30 = vld [vmem:[%s29] sm:$0x1]
    %31 = vrot.lane.b32.xlu0 %v30, 44
    %v32 = vpop.permute.xlu0 %31
    %vm33 = vcmask 392544
    %34 = vst.msk [vmem:[#allocation0] sm:$0x1] %vm33, %v32
    %s35 = scalar_lea.vmem %s0, 10
    %v36 = vld [vmem:[%s35] sm:$0x1]
    %37 = vrot.lane.b32.xlu0 %v36, 40
    %v38 = vpop.permute.xlu0 %37
    %vm39 = vcmask 359744
    %40 = vst.msk [vmem:[#allocation0] sm:$0x1] %vm39, %v38
    %s41 = scalar_lea.vmem %s0, 9
    %v42 = vld [vmem:[%s41] sm:$0x1]
    %43 = vrot.lane.b32.xlu0 %v42, 36
    %v44 = vpop.permute.xlu0 %43
    %vm45 = vcmask 326944
    %46 = vst.msk [vmem:[#allocation0] sm:$0x1] %vm45, %v44
    %s47 = scalar_lea.vmem %s0, 8
    %v48 = vld [vmem:[%s47] sm:$0x1]
    %49 = vrot.lane.b32.xlu0 %v48, 32
    %v50 = vpop.permute.xlu0 %49
    %vm51 = vcmask 294144
    %52 = vst.msk [vmem:[#allocation0] sm:$0x1] %vm51, %v50
    %s53 = scalar_lea.vmem %s0, 7
    %v54 = vld [vmem:[%s53] sm:$0x1]
    %55 = vrot.lane.b32.xlu0 %v54, 28
    %v56 = vpop.permute.xlu0 %55
    %vm57 = vcmask 261344
    %58 = vst.msk [vmem:[#allocation0] sm:$0x1] %vm57, %v56
    %s59 = scalar_lea.vmem %s0, 6
    %v60 = vld [vmem:[%s59] sm:$0x1]
    %61 = vrot.lane.b32.xlu0 %v60, 24
    %v62 = vpop.permute.xlu0 %61
    %vm63 = vcmask 228544
    %64 = vst.msk [vmem:[#allocation0] sm:$0x1] %vm63, %v62
    %s65 = scalar_lea.vmem %s0, 5
    %v66 = vld [vmem:[%s65] sm:$0x1]
    %67 = vrot.lane.b32.xlu0 %v66, 20
    %v68 = vpop.permute.xlu0 %67
    %vm69 = vcmask 195744
    %70 = vst.msk [vmem:[#allocation0] sm:$0x1] %vm69, %v68
    %s71 = scalar_lea.vmem %s0, 4
    %v72 = vld [vmem:[%s71] sm:$0x1]
    %73 = vrot.lane.b32.xlu0 %v72, 16
    %v74 = vpop.permute.xlu0 %73
    %vm75 = vcmask 162944
    %76 = vst.msk [vmem:[#allocation0] sm:$0x1] %vm75, %v74
    %s77 = scalar_lea.vmem %s0, 3
    %v78 = vld [vmem:[%s77] sm:$0x1]
    %79 = vrot.lane.b32.xlu0 %v78, 12
    %v80 = vpop.permute.xlu0 %79
    %vm81 = vcmask 130144
    %82 = vst.msk [vmem:[#allocation0] sm:$0x1] %vm81, %v80
    %s83 = scalar_lea.vmem %s0, 2
    %v84 = vld [vmem:[%s83] sm:$0x1]
    %85 = vrot.lane.b32.xlu0 %v84, 8
    %v86 = vpop.permute.xlu0 %85
    %vm87 = vcmask 97344
    %88 = vst.msk [vmem:[#allocation0] sm:$0x1] %vm87, %v86
    %s89 = scalar_lea.vmem %s0, 1
    %v90 = vld [vmem:[%s89] sm:$0x1]
    %91 = vrot.lane.b32.xlu0 %v90, 4
    %v92 = vpop.permute.xlu0 %91
    %vm93 = vcmask 64544
    %94 = vst.msk [vmem:[#allocation0] sm:$0x1] %vm93, %v92
    %s96 = sshll.u32 1, 1
    %s97 = ssub.s32 %s96, 1
    %v99 = vld [vmem:[#allocation0] sm:%s97]
    %s100 = sshll.u32 1, 1
    %s101 = ssub.s32 %s100, 1
    %102 = vst [vmem:[%s1] sm:%s101] %v99

// kernel: tile.246
$region0: #{tile.246}
  #allocation0 [shape = 's32[1]{0}', space=sflag, size = 0x4, scoped, tag = 'scoped memory for tile.246']
  %s0 = inlined_call_operand.vmem [shape: s32[64], index: 0, kind: input, shape index: {}]
  %s1 = inlined_call_operand.vmem [shape: s32[2,64], index: 1, kind: output, shape index: {}]
  // Predicated region
  $region2: #{tile.246} parent=0 // pred_check
    _
  $region3: #{tile.246} parent=0 // pred_check_branch
    %3 = sbr.rel (0) target = $region5
  $region4: #{tile.246} parent=0 // pred_region
    _
  $region5: #{tile.246} parent=0 // pred_fallthru
    _
  %v4 = vld [vmem:[%s0] ss:$0 sm:$0xff]
  %5 = vst [vmem:[%s1] sm:$0x3] %v4

// kernel: tile.247
$region0: #{tile.247}
  %s0 = inlined_call_operand.vmem [shape: s32[2,64], index: 0, kind: input, shape index: {}]
  %s1 = inlined_call_operand.vmem [shape: s32[1,128], index: 1, kind: output, shape index: {}]
  $region1: #{tile.247} parent=0
    #allocation0 [shape = 'u8[4096]{0}', space=vmem, size = 0x1000, scoped, tag = 'scoped mem for output reshape']
    #allocation1 [shape = 'u8[4096]{0}', space=vmem, size = 0x1000, scoped, tag = 'scoped mem for input reshape']
    %s3 = sshll.u32 1, 2
    %s4 = ssub.s32 %s3, 1
    %v5 = vld [vmem:[%s0] sm:%s4]
    %6 = vst [vmem:[#allocation1] sm:%s4] %v5
    %v7 = vld [vmem:[#allocation1] sm:$0x1]
    %vm8 = vcmask 523264
    %9 = vst.msk [vmem:[#allocation0] sm:$0x1] %vm8, %v7
    %s10 = scalar_lea.vmem [#allocation1], 1
    %v11 = vld [vmem:[%s10] sm:$0x1]
    %12 = vrot.lane.b32.xlu0 %v11, 64
    %v13 = vpop.permute.xlu0 %12
    %vm14 = vcmask 1048064
    %15 = vst.msk [vmem:[#allocation0] sm:$0x1] %vm14, %v13
    %s17 = sshll.u32 1, 1
    %s18 = ssub.s32 %s17, 1
    %v20 = vld [vmem:[#allocation0] sm:%s18]
    %s21 = sshll.u32 1, 1
    %s22 = ssub.s32 %s21, 1
    %23 = vst [vmem:[%s1] sm:%s22] %v20

// kernel: mixed_op_forward.1
$region0: #{mixed_op_forward.1}
  #allocation0 [shape = 'u32[]', space=smem, size = 0x4, offset = 0x4, fixed_abs, tag = 'smem constant byte address 0x4 - core index']
  #allocation1 [shape = 'u32[144,128]{1,0:T(1,128)}', space=vmem, size = 0x12000, scoped, tag = 'internal scratch']
  %s0 = inlined_call_operand.vmem [shape: f32[8], index: 0, kind: input, shape index: {}]
  %s1 = inlined_call_operand.vmem [shape: f32[16,128], index: 1, kind: input, shape index: {}]
  %s2 = inlined_call_operand.vmem [shape: s32[16,1], index: 2, kind: input, shape index: {}]
  %s3 = inlined_call_operand.vmem [shape: s32[1,128], index: 3, kind: input, shape index: {}]
  %s4 = inlined_call_operand.vmem [shape: f32[9,128], index: 4, kind: input, shape index: {}]
  %s5 = inlined_call_operand.vmem [shape: f32[7,128], index: 5, kind: input, shape index: {}]
  %s6 = inlined_call_operand.vmem [shape: f32[9,128], index: 6, kind: input, shape index: {}]
  %s7 = inlined_call_operand.vmem [shape: f32[7,128], index: 7, kind: input, shape index: {}]
  %s8 = inlined_call_operand.vmem [shape: f32[25,128], index: 8, kind: input, shape index: {}]
  %s9 = inlined_call_operand.vmem [shape: f32[7,128], index: 9, kind: input, shape index: {}]
  %s10 = inlined_call_operand.vmem [shape: f32[25,128], index: 10, kind: input, shape index: {}]
  %s11 = inlined_call_operand.vmem [shape: f32[7,128], index: 11, kind: input, shape index: {}]
  %s12 = inlined_call_operand.vmem [shape: f32[9,128], index: 12, kind: input, shape index: {}]
  %s13 = inlined_call_operand.vmem [shape: f32[7,128], index: 13, kind: input, shape index: {}]
  %s14 = inlined_call_operand.vmem [shape: f32[25,128], index: 14, kind: input, shape index: {}]
  %s15 = inlined_call_operand.vmem [shape: f32[7,128], index: 15, kind: input, shape index: {}]
  %s16 = inlined_call_operand.vmem [shape: f32[2,16,128], index: 16, kind: output, shape index: {}]
  %s17 = sld [smem:[#allocation0]]
  $region129: #{mixed_op_forward.1} parent=0
    _
  %s19 = ssub.s32 1, %s17
  %s20 = scalar_select 0, %s19, %s17
  $region1: #{mixed_op_forward.1} parent=0
    #allocation2 [shape = 'u8[512]{0}', space=smem, size = 0x200, scoped, tag = 'input window, operand 0, single buffered']
    #allocation3 [shape = 's32[2]{0}', space=sflag, size = 0x8, scoped, tag = 'scoped memory for mixed_op_forward.1']
    %21 = vsyncpa [#allocation3], 0
    loop: start=0, step=1, limit=4
    $region2: #{mixed_op_forward.1} parent=1 // loop_pre_header
      _
    $region3: #{mixed_op_forward.1} parent=1 // loop_header
      %s23 = sphi 0, %s27
      %p24 = scmp.ge.s32.totalorder %s23, 4
      %s31 = sphi 0, %s31
      %s33 = sphi 0, %s31
      %s34 = sphi 0, %s33
      %s48 = sphi 0, %s34
      %s52 = sphi 0, %s52
      %s54 = sphi 0, %s52
      %s55 = sphi 0, %s54
      %s69 = sphi 0, %s55
      %s73 = sphi 0, %s73
      %s75 = sphi 0, %s73
      %s76 = sphi 0, %s75
      %s90 = sphi 0, %s76
      %s94 = sphi 0, %s94
      %s96 = sphi 0, %s94
      %s97 = sphi 0, %s96
      %s111 = sphi 0, %s97
      %s115 = sphi 0, %s115
      %s117 = sphi 0, %s115
      %s118 = sphi 0, %s117
      %s132 = sphi 0, %s118
      %s136 = sphi 0, %s136
      %s138 = sphi 0, %s136
      %s139 = sphi 0, %s138
      %s153 = sphi 0, %s139
      %s157 = sphi 0, %s157
      %s159 = sphi 0, %s157
      %s160 = sphi 0, %s159
      %s174 = sphi 0, %s160
      %s178 = sphi 0, %s178
      %s180 = sphi 0, %s178
      %s181 = sphi 0, %s180
      %s195 = sphi 0, %s181
      %s199 = sphi 0, %s199
      %s201 = sphi 0, %s199
      %s202 = sphi 0, %s201
      %s216 = sphi 0, %s202
      %s220 = sphi 0, %s220
      %s222 = sphi 0, %s220
      %s223 = sphi 0, %s222
      %s237 = sphi 0, %s223
      %s241 = sphi 0, %s241
      %s243 = sphi 0, %s241
      %s244 = sphi 0, %s243
      %s258 = sphi 0, %s244
      %s262 = sphi 0, %s262
      %s264 = sphi 0, %s262
      %s265 = sphi 0, %s264
      %s279 = sphi 0, %s265
      %s283 = sphi 0, %s283
      %s285 = sphi 0, %s283
      %s286 = sphi 0, %s285
      %s300 = sphi 0, %s286
      %s304 = sphi 0, %s304
      %s306 = sphi 0, %s304
      %s307 = sphi 0, %s306
      %s321 = sphi 0, %s307
      %s325 = sphi 0, %s325
      %s327 = sphi 0, %s325
      %s328 = sphi 0, %s327
      %s342 = sphi 0, %s328
      %s346 = sphi 0, %s346
      %s348 = sphi 0, %s346
      %s349 = sphi 0, %s348
      %s363 = sphi 0, %s349
      %s369 = sphi 0, %s371
      %s372 = sphi 0, %s369
      %s373 = sphi 0, %s372
      %s389 = sphi 0, %s373
    $region4: #{mixed_op_forward.1} parent=1 // loop_header_branch
      %26 = sbr.rel (%p24) target = $region8
    $region5: #{mixed_op_forward.1} parent=1 // loop_body
      %s28 = ssub.s32 %s23, 1
      %s29 = ssub.s32 %s23, 2
      %s30 = sadd.s32 %s23, 1
      %s32 = sadd.s32 %s31, 1
      %p35 = scmp.eq.s32.totalorder %s23, 1
      %p36 = scmp.ne.s32.totalorder %s31, %s33
      %p37 = scmp.eq.s32.totalorder %s23, 0
      %p38 = por %p36, %p37
      %p39 = scmp.ne.s32.totalorder %s31, %s33
      %p40 = scmp.eq.s32.totalorder %s28, 1
      %p41 = por %p39, %p40
      %p42 = scmp.ne.s32.totalorder %s33, %s34
      %p43 = scmp.eq.s32.totalorder %s28, 0
      %p44 = por %p42, %p43
      %p45 = scmp.ne.s32.totalorder %s33, %s34
      %p46 = scmp.eq.s32.totalorder %s29, 1
      %p47 = por %p45, %p46
      %p49 = scmp.ne.s32.totalorder %s34, %s48
      %p50 = scmp.eq.s32.totalorder %s29, 0
      %p51 = por %p49, %p50
      %s53 = sadd.s32 %s52, 1
      %p56 = scmp.eq.s32.totalorder %s23, 1
      %p57 = scmp.ne.s32.totalorder %s52, %s54
      %p58 = scmp.eq.s32.totalorder %s23, 0
      %p59 = por %p57, %p58
      %p60 = scmp.ne.s32.totalorder %s52, %s54
      %p61 = scmp.eq.s32.totalorder %s28, 1
      %p62 = por %p60, %p61
      %p63 = scmp.ne.s32.totalorder %s54, %s55
      %p64 = scmp.eq.s32.totalorder %s28, 0
      %p65 = por %p63, %p64
      %p66 = scmp.ne.s32.totalorder %s54, %s55
      %p67 = scmp.eq.s32.totalorder %s29, 1
      %p68 = por %p66, %p67
      %p70 = scmp.ne.s32.totalorder %s55, %s69
      %p71 = scmp.eq.s32.totalorder %s29, 0
      %p72 = por %p70, %p71
      %s74 = sadd.s32 %s73, 1
      %p77 = scmp.eq.s32.totalorder %s23, 1
      %p78 = scmp.ne.s32.totalorder %s73, %s75
      %p79 = scmp.eq.s32.totalorder %s23, 0
      %p80 = por %p78, %p79
      %p81 = scmp.ne.s32.totalorder %s73, %s75
      %p82 = scmp.eq.s32.totalorder %s28, 1
      %p83 = por %p81, %p82
      %p84 = scmp.ne.s32.totalorder %s75, %s76
      %p85 = scmp.eq.s32.totalorder %s28, 0
      %p86 = por %p84, %p85
      %p87 = scmp.ne.s32.totalorder %s75, %s76
      %p88 = scmp.eq.s32.totalorder %s29, 1
      %p89 = por %p87, %p88
      %p91 = scmp.ne.s32.totalorder %s76, %s90
      %p92 = scmp.eq.s32.totalorder %s29, 0
      %p93 = por %p91, %p92
      %s95 = sadd.s32 %s94, 1
      %p98 = scmp.eq.s32.totalorder %s23, 1
      %p99 = scmp.ne.s32.totalorder %s94, %s96
      %p100 = scmp.eq.s32.totalorder %s23, 0
      %p101 = por %p99, %p100
      %p102 = scmp.ne.s32.totalorder %s94, %s96
      %p103 = scmp.eq.s32.totalorder %s28, 1
      %p104 = por %p102, %p103
      %p105 = scmp.ne.s32.totalorder %s96, %s97
      %p106 = scmp.eq.s32.totalorder %s28, 0
      %p107 = por %p105, %p106
      %p108 = scmp.ne.s32.totalorder %s96, %s97
      %p109 = scmp.eq.s32.totalorder %s29, 1
      %p110 = por %p108, %p109
      %p112 = scmp.ne.s32.totalorder %s97, %s111
      %p113 = scmp.eq.s32.totalorder %s29, 0
      %p114 = por %p112, %p113
      %s116 = sadd.s32 %s115, 1
      %p119 = scmp.eq.s32.totalorder %s23, 1
      %p120 = scmp.ne.s32.totalorder %s115, %s117
      %p121 = scmp.eq.s32.totalorder %s23, 0
      %p122 = por %p120, %p121
      %p123 = scmp.ne.s32.totalorder %s115, %s117
      %p124 = scmp.eq.s32.totalorder %s28, 1
      %p125 = por %p123, %p124
      %p126 = scmp.ne.s32.totalorder %s117, %s118
      %p127 = scmp.eq.s32.totalorder %s28, 0
      %p128 = por %p126, %p127
      %p129 = scmp.ne.s32.totalorder %s117, %s118
      %p130 = scmp.eq.s32.totalorder %s29, 1
      %p131 = por %p129, %p130
      %p133 = scmp.ne.s32.totalorder %s118, %s132
      %p134 = scmp.eq.s32.totalorder %s29, 0
      %p135 = por %p133, %p134
      %s137 = sadd.s32 %s136, 1
      %p140 = scmp.eq.s32.totalorder %s23, 1
      %p141 = scmp.ne.s32.totalorder %s136, %s138
      %p142 = scmp.eq.s32.totalorder %s23, 0
      %p143 = por %p141, %p142
      %p144 = scmp.ne.s32.totalorder %s136, %s138
      %p145 = scmp.eq.s32.totalorder %s28, 1
      %p146 = por %p144, %p145
      %p147 = scmp.ne.s32.totalorder %s138, %s139
      %p148 = scmp.eq.s32.totalorder %s28, 0
      %p149 = por %p147, %p148
      %p150 = scmp.ne.s32.totalorder %s138, %s139
      %p151 = scmp.eq.s32.totalorder %s29, 1
      %p152 = por %p150, %p151
      %p154 = scmp.ne.s32.totalorder %s139, %s153
      %p155 = scmp.eq.s32.totalorder %s29, 0
      %p156 = por %p154, %p155
      %s158 = sadd.s32 %s157, 1
      %p161 = scmp.eq.s32.totalorder %s23, 1
      %p162 = scmp.ne.s32.totalorder %s157, %s159
      %p163 = scmp.eq.s32.totalorder %s23, 0
      %p164 = por %p162, %p163
      %p165 = scmp.ne.s32.totalorder %s157, %s159
      %p166 = scmp.eq.s32.totalorder %s28, 1
      %p167 = por %p165, %p166
      %p168 = scmp.ne.s32.totalorder %s159, %s160
      %p169 = scmp.eq.s32.totalorder %s28, 0
      %p170 = por %p168, %p169
      %p171 = scmp.ne.s32.totalorder %s159, %s160
      %p172 = scmp.eq.s32.totalorder %s29, 1
      %p173 = por %p171, %p172
      %p175 = scmp.ne.s32.totalorder %s160, %s174
      %p176 = scmp.eq.s32.totalorder %s29, 0
      %p177 = por %p175, %p176
      %s179 = sadd.s32 %s178, 1
      %p182 = scmp.eq.s32.totalorder %s23, 1
      %p183 = scmp.ne.s32.totalorder %s178, %s180
      %p184 = scmp.eq.s32.totalorder %s23, 0
      %p185 = por %p183, %p184
      %p186 = scmp.ne.s32.totalorder %s178, %s180
      %p187 = scmp.eq.s32.totalorder %s28, 1
      %p188 = por %p186, %p187
      %p189 = scmp.ne.s32.totalorder %s180, %s181
      %p190 = scmp.eq.s32.totalorder %s28, 0
      %p191 = por %p189, %p190
      %p192 = scmp.ne.s32.totalorder %s180, %s181
      %p193 = scmp.eq.s32.totalorder %s29, 1
      %p194 = por %p192, %p193
      %p196 = scmp.ne.s32.totalorder %s181, %s195
      %p197 = scmp.eq.s32.totalorder %s29, 0
      %p198 = por %p196, %p197
      %s200 = sadd.s32 %s199, 1
      %p203 = scmp.eq.s32.totalorder %s23, 1
      %p204 = scmp.ne.s32.totalorder %s199, %s201
      %p205 = scmp.eq.s32.totalorder %s23, 0
      %p206 = por %p204, %p205
      %p207 = scmp.ne.s32.totalorder %s199, %s201
      %p208 = scmp.eq.s32.totalorder %s28, 1
      %p209 = por %p207, %p208
      %p210 = scmp.ne.s32.totalorder %s201, %s202
      %p211 = scmp.eq.s32.totalorder %s28, 0
      %p212 = por %p210, %p211
      %p213 = scmp.ne.s32.totalorder %s201, %s202
      %p214 = scmp.eq.s32.totalorder %s29, 1
      %p215 = por %p213, %p214
      %p217 = scmp.ne.s32.totalorder %s202, %s216
      %p218 = scmp.eq.s32.totalorder %s29, 0
      %p219 = por %p217, %p218
      %s221 = sadd.s32 %s220, 1
      %p224 = scmp.eq.s32.totalorder %s23, 1
      %p225 = scmp.ne.s32.totalorder %s220, %s222
      %p226 = scmp.eq.s32.totalorder %s23, 0
      %p227 = por %p225, %p226
      %p228 = scmp.ne.s32.totalorder %s220, %s222
      %p229 = scmp.eq.s32.totalorder %s28, 1
      %p230 = por %p228, %p229
      %p231 = scmp.ne.s32.totalorder %s222, %s223
      %p232 = scmp.eq.s32.totalorder %s28, 0
      %p233 = por %p231, %p232
      %p234 = scmp.ne.s32.totalorder %s222, %s223
      %p235 = scmp.eq.s32.totalorder %s29, 1
      %p236 = por %p234, %p235
      %p238 = scmp.ne.s32.totalorder %s223, %s237
      %p239 = scmp.eq.s32.totalorder %s29, 0
      %p240 = por %p238, %p239
      %s242 = sadd.s32 %s241, 1
      %p245 = scmp.eq.s32.totalorder %s23, 1
      %p246 = scmp.ne.s32.totalorder %s241, %s243
      %p247 = scmp.eq.s32.totalorder %s23, 0
      %p248 = por %p246, %p247
      %p249 = scmp.ne.s32.totalorder %s241, %s243
      %p250 = scmp.eq.s32.totalorder %s28, 1
      %p251 = por %p249, %p250
      %p252 = scmp.ne.s32.totalorder %s243, %s244
      %p253 = scmp.eq.s32.totalorder %s28, 0
      %p254 = por %p252, %p253
      %p255 = scmp.ne.s32.totalorder %s243, %s244
      %p256 = scmp.eq.s32.totalorder %s29, 1
      %p257 = por %p255, %p256
      %p259 = scmp.ne.s32.totalorder %s244, %s258
      %p260 = scmp.eq.s32.totalorder %s29, 0
      %p261 = por %p259, %p260
      %s263 = sadd.s32 %s262, 1
      %p266 = scmp.eq.s32.totalorder %s23, 1
      %p267 = scmp.ne.s32.totalorder %s262, %s264
      %p268 = scmp.eq.s32.totalorder %s23, 0
      %p269 = por %p267, %p268
      %p270 = scmp.ne.s32.totalorder %s262, %s264
      %p271 = scmp.eq.s32.totalorder %s28, 1
      %p272 = por %p270, %p271
      %p273 = scmp.ne.s32.totalorder %s264, %s265
      %p274 = scmp.eq.s32.totalorder %s28, 0
      %p275 = por %p273, %p274
      %p276 = scmp.ne.s32.totalorder %s264, %s265
      %p277 = scmp.eq.s32.totalorder %s29, 1
      %p278 = por %p276, %p277
      %p280 = scmp.ne.s32.totalorder %s265, %s279
      %p281 = scmp.eq.s32.totalorder %s29, 0
      %p282 = por %p280, %p281
      %s284 = sadd.s32 %s283, 1
      %p287 = scmp.eq.s32.totalorder %s23, 1
      %p288 = scmp.ne.s32.totalorder %s283, %s285
      %p289 = scmp.eq.s32.totalorder %s23, 0
      %p290 = por %p288, %p289
      %p291 = scmp.ne.s32.totalorder %s283, %s285
      %p292 = scmp.eq.s32.totalorder %s28, 1
      %p293 = por %p291, %p292
      %p294 = scmp.ne.s32.totalorder %s285, %s286
      %p295 = scmp.eq.s32.totalorder %s28, 0
      %p296 = por %p294, %p295
      %p297 = scmp.ne.s32.totalorder %s285, %s286
      %p298 = scmp.eq.s32.totalorder %s29, 1
      %p299 = por %p297, %p298
      %p301 = scmp.ne.s32.totalorder %s286, %s300
      %p302 = scmp.eq.s32.totalorder %s29, 0
      %p303 = por %p301, %p302
      %s305 = sadd.s32 %s304, 1
      %p308 = scmp.eq.s32.totalorder %s23, 1
      %p309 = scmp.ne.s32.totalorder %s304, %s306
      %p310 = scmp.eq.s32.totalorder %s23, 0
      %p311 = por %p309, %p310
      %p312 = scmp.ne.s32.totalorder %s304, %s306
      %p313 = scmp.eq.s32.totalorder %s28, 1
      %p314 = por %p312, %p313
      %p315 = scmp.ne.s32.totalorder %s306, %s307
      %p316 = scmp.eq.s32.totalorder %s28, 0
      %p317 = por %p315, %p316
      %p318 = scmp.ne.s32.totalorder %s306, %s307
      %p319 = scmp.eq.s32.totalorder %s29, 1
      %p320 = por %p318, %p319
      %p322 = scmp.ne.s32.totalorder %s307, %s321
      %p323 = scmp.eq.s32.totalorder %s29, 0
      %p324 = por %p322, %p323
      %s326 = sadd.s32 %s325, 1
      %p329 = scmp.eq.s32.totalorder %s23, 1
      %p330 = scmp.ne.s32.totalorder %s325, %s327
      %p331 = scmp.eq.s32.totalorder %s23, 0
      %p332 = por %p330, %p331
      %p333 = scmp.ne.s32.totalorder %s325, %s327
      %p334 = scmp.eq.s32.totalorder %s28, 1
      %p335 = por %p333, %p334
      %p336 = scmp.ne.s32.totalorder %s327, %s328
      %p337 = scmp.eq.s32.totalorder %s28, 0
      %p338 = por %p336, %p337
      %p339 = scmp.ne.s32.totalorder %s327, %s328
      %p340 = scmp.eq.s32.totalorder %s29, 1
      %p341 = por %p339, %p340
      %p343 = scmp.ne.s32.totalorder %s328, %s342
      %p344 = scmp.eq.s32.totalorder %s29, 0
      %p345 = por %p343, %p344
      %s347 = sadd.s32 %s346, 1
      %p350 = scmp.eq.s32.totalorder %s23, 1
      %p351 = scmp.ne.s32.totalorder %s346, %s348
      %p352 = scmp.eq.s32.totalorder %s23, 0
      %p353 = por %p351, %p352
      %p354 = scmp.ne.s32.totalorder %s346, %s348
      %p355 = scmp.eq.s32.totalorder %s28, 1
      %p356 = por %p354, %p355
      %p357 = scmp.ne.s32.totalorder %s348, %s349
      %p358 = scmp.eq.s32.totalorder %s28, 0
      %p359 = por %p357, %p358
      %p360 = scmp.ne.s32.totalorder %s348, %s349
      %p361 = scmp.eq.s32.totalorder %s29, 1
      %p362 = por %p360, %p361
      %p364 = scmp.ne.s32.totalorder %s349, %s363
      %p365 = scmp.eq.s32.totalorder %s29, 0
      %p366 = por %p364, %p365
      %s367 = ssub.s32 %s23, %s30
      %p368 = scmp.eq.s32.totalorder %s367, 0
      %s370 = sadd.s32 %s369, 1
      %s371 = scalar_select %p368, %s369, %s370
      %p374 = pneg %p368
      %p375 = scmp.eq.s32.totalorder %s23, 1
      %p376 = por %p374, %p375
      %p377 = scmp.ne.s32.totalorder %s369, %s372
      %p378 = scmp.eq.s32.totalorder %s23, 0
      %p379 = por %p377, %p378
      %p380 = scmp.ne.s32.totalorder %s369, %s372
      %p381 = scmp.eq.s32.totalorder %s28, 1
      %p382 = por %p380, %p381
      %p383 = scmp.ne.s32.totalorder %s372, %s373
      %p384 = scmp.eq.s32.totalorder %s28, 0
      %p385 = por %p383, %p384
      %p386 = scmp.ne.s32.totalorder %s372, %s373
      %p387 = scmp.eq.s32.totalorder %s29, 1
      %p388 = por %p386, %p387
      %p390 = scmp.ne.s32.totalorder %s373, %s389
      %p391 = scmp.eq.s32.totalorder %s29, 0
      %p392 = por %p390, %p391
      %p393 = scmp.le.s32.totalorder 1, %s23
      %p394 = scmp.lt.s32.totalorder %s23, 3
      %p395 = pnand %p393, %p394
      %p396 = pneg %p395
      // Predicated region
      $region9: #{mixed_op_forward.1} parent=5 // pred_check
        _
      $region10: #{mixed_op_forward.1} parent=5 // pred_check_branch
        %398 = sbr.rel (%p395) target = $region12
      $region11: #{mixed_op_forward.1} parent=5 // pred_region
        %s399 = ssub.s32 %s23, 1
        // Predicated region
        $region13: #{mixed_op_forward.1} parent=11 // pred_check
          %p400 = pneg %p44
        $region14: #{mixed_op_forward.1} parent=11 // pred_check_branch
          %402 = sbr.rel (%p400) target = $region16
        $region15: #{mixed_op_forward.1} parent=11 // pred_region
          %s404 = ssub.s32 16, 16
          %405 = vsyncadd [#allocation3], %s404
          %s407 = sshll.u32 %s0, 4
          %s408 = int_to_ptr.vmem [resolvable:$true] %s407
          %410 = dma.vmem_to_smem %s408, 16, [#allocation2], [#allocation3]
        $region16: #{mixed_op_forward.1} parent=11 // pred_fallthru
          _
        // Predicated region
        $region17: #{mixed_op_forward.1} parent=11 // pred_check
          %p411 = pneg %p65
        $region18: #{mixed_op_forward.1} parent=11 // pred_check_branch
          %413 = sbr.rel (%p411) target = $region20
        $region19: #{mixed_op_forward.1} parent=11 // pred_region
          _
        $region20: #{mixed_op_forward.1} parent=11 // pred_fallthru
          _
        // Predicated region
        $region21: #{mixed_op_forward.1} parent=11 // pred_check
          %p414 = pneg %p86
        $region22: #{mixed_op_forward.1} parent=11 // pred_check_branch
          %416 = sbr.rel (%p414) target = $region24
        $region23: #{mixed_op_forward.1} parent=11 // pred_region
          _
        $region24: #{mixed_op_forward.1} parent=11 // pred_fallthru
          _
        // Predicated region
        $region25: #{mixed_op_forward.1} parent=11 // pred_check
          %p417 = pneg %p107
        $region26: #{mixed_op_forward.1} parent=11 // pred_check_branch
          %419 = sbr.rel (%p417) target = $region28
        $region27: #{mixed_op_forward.1} parent=11 // pred_region
          _
        $region28: #{mixed_op_forward.1} parent=11 // pred_fallthru
          _
        // Predicated region
        $region29: #{mixed_op_forward.1} parent=11 // pred_check
          %p420 = pneg %p128
        $region30: #{mixed_op_forward.1} parent=11 // pred_check_branch
          %422 = sbr.rel (%p420) target = $region32
        $region31: #{mixed_op_forward.1} parent=11 // pred_region
          _
        $region32: #{mixed_op_forward.1} parent=11 // pred_fallthru
          _
        // Predicated region
        $region33: #{mixed_op_forward.1} parent=11 // pred_check
          %p423 = pneg %p149
        $region34: #{mixed_op_forward.1} parent=11 // pred_check_branch
          %425 = sbr.rel (%p423) target = $region36
        $region35: #{mixed_op_forward.1} parent=11 // pred_region
          _
        $region36: #{mixed_op_forward.1} parent=11 // pred_fallthru
          _
        // Predicated region
        $region37: #{mixed_op_forward.1} parent=11 // pred_check
          %p426 = pneg %p170
        $region38: #{mixed_op_forward.1} parent=11 // pred_check_branch
          %428 = sbr.rel (%p426) target = $region40
        $region39: #{mixed_op_forward.1} parent=11 // pred_region
          _
        $region40: #{mixed_op_forward.1} parent=11 // pred_fallthru
          _
        // Predicated region
        $region41: #{mixed_op_forward.1} parent=11 // pred_check
          %p429 = pneg %p191
        $region42: #{mixed_op_forward.1} parent=11 // pred_check_branch
          %431 = sbr.rel (%p429) target = $region44
        $region43: #{mixed_op_forward.1} parent=11 // pred_region
          _
        $region44: #{mixed_op_forward.1} parent=11 // pred_fallthru
          _
        // Predicated region
        $region45: #{mixed_op_forward.1} parent=11 // pred_check
          %p432 = pneg %p212
        $region46: #{mixed_op_forward.1} parent=11 // pred_check_branch
          %434 = sbr.rel (%p432) target = $region48
        $region47: #{mixed_op_forward.1} parent=11 // pred_region
          _
        $region48: #{mixed_op_forward.1} parent=11 // pred_fallthru
          _
        // Predicated region
        $region49: #{mixed_op_forward.1} parent=11 // pred_check
          %p435 = pneg %p233
        $region50: #{mixed_op_forward.1} parent=11 // pred_check_branch
          %437 = sbr.rel (%p435) target = $region52
        $region51: #{mixed_op_forward.1} parent=11 // pred_region
          _
        $region52: #{mixed_op_forward.1} parent=11 // pred_fallthru
          _
        // Predicated region
        $region53: #{mixed_op_forward.1} parent=11 // pred_check
          %p438 = pneg %p254
        $region54: #{mixed_op_forward.1} parent=11 // pred_check_branch
          %440 = sbr.rel (%p438) target = $region56
        $region55: #{mixed_op_forward.1} parent=11 // pred_region
          _
        $region56: #{mixed_op_forward.1} parent=11 // pred_fallthru
          _
        // Predicated region
        $region57: #{mixed_op_forward.1} parent=11 // pred_check
          %p441 = pneg %p275
        $region58: #{mixed_op_forward.1} parent=11 // pred_check_branch
          %443 = sbr.rel (%p441) target = $region60
        $region59: #{mixed_op_forward.1} parent=11 // pred_region
          _
        $region60: #{mixed_op_forward.1} parent=11 // pred_fallthru
          _
        // Predicated region
        $region61: #{mixed_op_forward.1} parent=11 // pred_check
          %p444 = pneg %p296
        $region62: #{mixed_op_forward.1} parent=11 // pred_check_branch
          %446 = sbr.rel (%p444) target = $region64
        $region63: #{mixed_op_forward.1} parent=11 // pred_region
          _
        $region64: #{mixed_op_forward.1} parent=11 // pred_fallthru
          _
        // Predicated region
        $region65: #{mixed_op_forward.1} parent=11 // pred_check
          %p447 = pneg %p317
        $region66: #{mixed_op_forward.1} parent=11 // pred_check_branch
          %449 = sbr.rel (%p447) target = $region68
        $region67: #{mixed_op_forward.1} parent=11 // pred_region
          _
        $region68: #{mixed_op_forward.1} parent=11 // pred_fallthru
          _
        // Predicated region
        $region69: #{mixed_op_forward.1} parent=11 // pred_check
          %p450 = pneg %p338
        $region70: #{mixed_op_forward.1} parent=11 // pred_check_branch
          %452 = sbr.rel (%p450) target = $region72
        $region71: #{mixed_op_forward.1} parent=11 // pred_region
          _
        $region72: #{mixed_op_forward.1} parent=11 // pred_fallthru
          _
        // Predicated region
        $region73: #{mixed_op_forward.1} parent=11 // pred_check
          %p453 = pneg %p359
        $region74: #{mixed_op_forward.1} parent=11 // pred_check_branch
          %455 = sbr.rel (%p453) target = $region76
        $region75: #{mixed_op_forward.1} parent=11 // pred_region
          _
        $region76: #{mixed_op_forward.1} parent=11 // pred_fallthru
          _
      $region12: #{mixed_op_forward.1} parent=5 // pred_fallthru
        _
      %p456 = scmp.lt.s32.totalorder %s23, 2
      // Predicated region
      $region77: #{mixed_op_forward.1} parent=5 // pred_check
        %p457 = pneg %p456
      $region78: #{mixed_op_forward.1} parent=5 // pred_check_branch
        %459 = sbr.rel (%p457) target = $region80
      $region79: #{mixed_op_forward.1} parent=5 // pred_region
        _
      $region80: #{mixed_op_forward.1} parent=5 // pred_fallthru
        _
      %p460 = scmp.le.s32.totalorder 1, %s23
      %p461 = scmp.lt.s32.totalorder %s23, 3
      %p462 = pnand %p460, %p461
      %p463 = pneg %p462
      // Predicated region
      $region81: #{mixed_op_forward.1} parent=5 // pred_check
        _
      $region82: #{mixed_op_forward.1} parent=5 // pred_check_branch
        %465 = sbr.rel (%p462) target = $region84
      $region83: #{mixed_op_forward.1} parent=5 // pred_region
        %s466 = ssub.s32 %s23, 1
        // Predicated region
        $region85: #{mixed_op_forward.1} parent=83 // pred_check
          %p467 = pneg %p44
        $region86: #{mixed_op_forward.1} parent=83 // pred_check_branch
          %469 = sbr.rel (%p467) target = $region88
        $region87: #{mixed_op_forward.1} parent=83 // pred_region
          %470 = dma.done [#allocation3], 16
        $region88: #{mixed_op_forward.1} parent=83 // pred_fallthru
          _
        %471 = sfence
        %p472 = pneg %p44
        %p473 = pneg %p41
        %p474 = pneg %p65
        %p475 = pneg %p62
        %p476 = pneg %p86
        %p477 = pneg %p83
        %p478 = pneg %p107
        %p479 = pneg %p104
        %p480 = pneg %p128
        %p481 = pneg %p125
        %p482 = pneg %p149
        %p483 = pneg %p146
        %p484 = pneg %p170
        %p485 = pneg %p167
        %p486 = pneg %p191
        %p487 = pneg %p188
        %p488 = pneg %p212
        %p489 = pneg %p209
        %p490 = pneg %p233
        %p491 = pneg %p230
        %p492 = pneg %p254
        %p493 = pneg %p251
        %p494 = pneg %p275
        %p495 = pneg %p272
        %p496 = pneg %p296
        %p497 = pneg %p293
        %p498 = pneg %p317
        %p499 = pneg %p314
        %p500 = pneg %p338
        %p501 = pneg %p335
        %p502 = pneg %p359
        %p503 = pneg %p356
        %p504 = pneg %p385
        %p505 = pneg %p382
        %p506 = scmp.lt.s32.totalorder %s28, 1
        %s507 = scalar_select %p506, %s28, 1
        %s508 = smul.addr %s507, 2
        %s509 = smul.addr %s508, 8
        %s510 = scalar_lea.vmem %s16, %s509
        %p511 = scmp.lt.s32.totalorder %s28, 1
        %s512 = scalar_select %p511, %s28, 1
        %s513 = smul.addr %s512, 2
        %s514 = smul.addr %s513, 8
        %s515 = scalar_lea.vmem %s16, %s514
        %v516 = vld [vmem:[%s1] sm:$0xff]
        %v517 = vld [vmem:[%s1 + $0x8] sm:$0xff]
        %v518 = vmax.f32 %v516, 0.0
        %v519 = vmax.f32 %v517, 0.0
        %v520 = vld [vmem:[%s2] sm:$0xff]
        %v521 = vld [vmem:[%s2 + $0x8] sm:$0xff]
        %v522 = vld [vmem:[%s3] sm:$0x1]
        %523 = vst [vmem:[%s515] sm:$0xff] 0.0
        %524 = vst [vmem:[%s515 + $0x8] sm:$0xff] 0.0
        %p525 = scmp.eq.s32.totalorder %s28, 0
        %s526 = sld [smem:[#allocation2 + $0x1]]
        %p527 = scmp.ne.f32.partialorder %s526, 0.0
        %p528 = pnand %p525, %p527
        %p529 = pneg %p528
        // Predicated region
        $region89: #{mixed_op_forward.1} parent=83 // pred_check
          _
        $region90: #{mixed_op_forward.1} parent=83 // pred_check_branch
          %531 = sbr.rel (%p528) target = $region92
        $region91: #{mixed_op_forward.1} parent=83 // pred_region
          %v532 = vld [vmem:[%s515] sm:$0xff]
          %v533 = vld [vmem:[%s515 + $0x8] sm:$0xff]
          %s534 = sld [smem:[#allocation2 + $0x1]]
          %v535 = vrot.slane %v516, 7
          %v536 = vrot.slane %v517, 7
          %v537 = vlaneseq
          %v538 = vshrl.u32 %v537, 7
          %vm539 = vcmp.lt.s32.totalorder %v538, 1
          %v540 = vsel %vm539, %v535, %v536
          %v541 = vsel %vm539, %v536, %v535
          %v542 = vadd.s32 %v520, 4294967295
          %v543 = vadd.s32 %v521, 4294967295
          %vm544 = vcmp.ge.s32.totalorder %v542, 0
          %vm545 = vcmp.ge.s32.totalorder %v543, 0
          %vm546 = vcmp.lt.s32.totalorder %v542, 16
          %vm547 = vcmp.lt.s32.totalorder %v543, 16
          %vm548 = vmand %vm544, %vm546
          %vm549 = vmand %vm545, %vm547
          %v550 = vsel %vm548, 1, 0
          %v551 = vsel %vm549, 1, 0
          %552 = vset.pattern.permute.xlu0 0
          %553 = vperm.xlu0 %552, %v550
          %v554 = vpop.permute.xlu0 %553
          %555 = vset.pattern.permute.xlu0 0
          %556 = vperm.xlu0 %555, %v551
          %v557 = vpop.permute.xlu0 %556
          %vm558 = vcmp.eq.s32.totalorder %v554, 1
          %vm559 = vcmp.eq.s32.totalorder %v557, 1
          %v560 = vsel %vm558, %v541, -inf
          %v561 = vsel %vm559, %v540, -inf
          %562 = vrot.lane.b32.xlu0 %v560, 4
          %v563 = vpop.permute.xlu0 %562
          %564 = vrot.lane.b32.xlu0 %v561, 4
          %v565 = vpop.permute.xlu0 %564
          %v566 = vadd.s32 %v522, 4294967295
          %vm567 = vcmp.ge.s32.totalorder %v566, 0
          %vm568 = vcmp.lt.s32.totalorder %v566, 16
          %vm569 = vmand %vm567, %vm568
          %v570 = vsel %vm569, 1, 0
          %v571 = vlaneseq
          %v572 = vshrl.u32 %v571, 7
          %v573 = vsub.s32 0, %v572
          %v574 = vrot.slane %v570, %v573
          %vm575 = vcmp.eq.s32.totalorder %v574, 1
          %v576 = vsel %vm575, %v563, -inf
          %v577 = vsel %vm575, %v565, -inf
          %v578 = vmax.f32 %v576, %v560
          %v579 = vmax.f32 %v577, %v561
          %580 = vrot.lane.b32.xlu0 %v560, 124
          %v581 = vpop.permute.xlu0 %580
          %582 = vrot.lane.b32.xlu0 %v561, 124
          %v583 = vpop.permute.xlu0 %582
          %v584 = vadd.s32 %v522, 1
          %vm585 = vcmp.ge.s32.totalorder %v584, 0
          %vm586 = vcmp.lt.s32.totalorder %v584, 16
          %vm587 = vmand %vm585, %vm586
          %v588 = vsel %vm587, 1, 0
          %v589 = vlaneseq
          %v590 = vshrl.u32 %v589, 7
          %v591 = vsub.s32 0, %v590
          %v592 = vrot.slane %v588, %v591
          %vm593 = vcmp.eq.s32.totalorder %v592, 1
          %v594 = vsel %vm593, %v581, -inf
          %v595 = vsel %vm593, %v583, -inf
          %v596 = vmax.f32 %v578, %v594
          %v597 = vmax.f32 %v579, %v595
          %598 = vrot.lane.b32.xlu0 %v516, 4
          %v599 = vpop.permute.xlu0 %598
          %600 = vrot.lane.b32.xlu0 %v517, 4
          %v601 = vpop.permute.xlu0 %600
          %v602 = vsel %vm575, %v599, -inf
          %v603 = vsel %vm575, %v601, -inf
          %v604 = vmax.f32 %v596, %v602
          %v605 = vmax.f32 %v597, %v603
          %v606 = vmax.f32 %v604, %v516
          %v607 = vmax.f32 %v605, %v517
          %608 = vrot.lane.b32.xlu0 %v516, 124
          %v609 = vpop.permute.xlu0 %608
          %610 = vrot.lane.b32.xlu0 %v517, 124
          %v611 = vpop.permute.xlu0 %610
          %v612 = vsel %vm593, %v609, -inf
          %v613 = vsel %vm593, %v611, -inf
          %v614 = vmax.f32 %v606, %v612
          %v615 = vmax.f32 %v607, %v613
          %v616 = vrot.slane %v516, 1
          %v617 = vrot.slane %v517, 1
          %vm618 = vcmp.lt.s32.totalorder %v538, 7
          %v619 = vsel %vm618, %v616, %v617
          %v620 = vsel %vm618, %v617, %v616
          %v621 = vadd.s32 %v520, 1
          %v622 = vadd.s32 %v521, 1
          %vm623 = vcmp.ge.s32.totalorder %v621, 0
          %vm624 = vcmp.ge.s32.totalorder %v622, 0
          %vm625 = vcmp.lt.s32.totalorder %v621, 16
          %vm626 = vcmp.lt.s32.totalorder %v622, 16
          %vm627 = vmand %vm623, %vm625
          %vm628 = vmand %vm624, %vm626
          %v629 = vsel %vm627, 1, 0
          %v630 = vsel %vm628, 1, 0
          %631 = vset.pattern.permute.xlu0 0
          %632 = vperm.xlu0 %631, %v629
          %v633 = vpop.permute.xlu0 %632
          %634 = vset.pattern.permute.xlu0 0
          %635 = vperm.xlu0 %634, %v630
          %v636 = vpop.permute.xlu0 %635
          %vm637 = vcmp.eq.s32.totalorder %v633, 1
          %vm638 = vcmp.eq.s32.totalorder %v636, 1
          %v639 = vsel %vm637, %v619, -inf
          %v640 = vsel %vm638, %v620, -inf
          %641 = vrot.lane.b32.xlu0 %v639, 4
          %v642 = vpop.permute.xlu0 %641
          %643 = vrot.lane.b32.xlu0 %v640, 4
          %v644 = vpop.permute.xlu0 %643
          %v645 = vsel %vm575, %v642, -inf
          %v646 = vsel %vm575, %v644, -inf
          %v647 = vmax.f32 %v614, %v645
          %v648 = vmax.f32 %v615, %v646
          %v649 = vmax.f32 %v647, %v639
          %v650 = vmax.f32 %v648, %v640
          %651 = vrot.lane.b32.xlu0 %v639, 124
          %v652 = vpop.permute.xlu0 %651
          %653 = vrot.lane.b32.xlu0 %v640, 124
          %v654 = vpop.permute.xlu0 %653
          %v655 = vsel %vm593, %v652, -inf
          %v656 = vsel %vm593, %v654, -inf
          %v657 = vmax.f32 %v649, %v655
          %v658 = vmax.f32 %v650, %v656
          %659 = vrot.lane.b32.xlu0 %v657, 4
          %v660 = vpop.permute.xlu0 %659
          %661 = vrot.lane.b32.xlu0 %v658, 4
          %v662 = vpop.permute.xlu0 %661
          %v663 = vadd.f32 %v657, %v660
          %v664 = vadd.f32 %v658, %v662
          %665 = vrot.lane.b32.xlu0 %v663, 8
          %v666 = vpop.permute.xlu0 %665
          %667 = vrot.lane.b32.xlu0 %v664, 8
          %v668 = vpop.permute.xlu0 %667
          %v669 = vadd.f32 %v663, %v666
          %v670 = vadd.f32 %v664, %v668
          %671 = vrot.lane.b32.xlu0 %v669, 16
          %v672 = vpop.permute.xlu0 %671
          %673 = vrot.lane.b32.xlu0 %v670, 16
          %v674 = vpop.permute.xlu0 %673
          %v675 = vadd.f32 %v669, %v672
          %v676 = vadd.f32 %v670, %v674
          %677 = vrot.lane.b32.xlu0 %v675, 32
          %v678 = vpop.permute.xlu0 %677
          %679 = vrot.lane.b32.xlu0 %v676, 32
          %v680 = vpop.permute.xlu0 %679
          %v681 = vadd.f32 %v675, %v678
          %v682 = vadd.f32 %v676, %v680
          %683 = vrot.lane.b32.xlu0 %v681, 64
          %v684 = vpop.permute.xlu0 %683
          %685 = vrot.lane.b32.xlu0 %v682, 64
          %v686 = vpop.permute.xlu0 %685
          %v687 = vadd.f32 %v681, %v684
          %v688 = vadd.f32 %v682, %v686
          %v689 = vadd.f32 %v687, %v688
          %v690 = vrot.slane %v689, 4
          %v691 = vadd.f32 %v689, %v690
          %v692 = vrot.slane %v691, 2
          %v693 = vadd.f32 %v691, %v692
          %v694 = vrot.slane %v693, 1
          %v695 = vadd.f32 %v693, %v694
          %v696 = vmul.f32 %v695, 0.001953125
          %v697 = vsub.f32 %v657, %v696
          %v698 = vsub.f32 %v658, %v696
          %v699 = vmul.f32 %v697, %v697
          %v700 = vmul.f32 %v698, %v698
          %701 = vrot.lane.b32.xlu0 %v699, 4
          %v702 = vpop.permute.xlu0 %701
          %703 = vrot.lane.b32.xlu0 %v700, 4
          %v704 = vpop.permute.xlu0 %703
          %v705 = vadd.f32 %v699, %v702
          %v706 = vadd.f32 %v700, %v704
          %707 = vrot.lane.b32.xlu0 %v705, 8
          %v708 = vpop.permute.xlu0 %707
          %709 = vrot.lane.b32.xlu0 %v706, 8
          %v710 = vpop.permute.xlu0 %709
          %v711 = vadd.f32 %v705, %v708
          %v712 = vadd.f32 %v706, %v710
          %713 = vrot.lane.b32.xlu0 %v711, 16
          %v714 = vpop.permute.xlu0 %713
          %715 = vrot.lane.b32.xlu0 %v712, 16
          %v716 = vpop.permute.xlu0 %715
          %v717 = vadd.f32 %v711, %v714
          %v718 = vadd.f32 %v712, %v716
          %719 = vrot.lane.b32.xlu0 %v717, 32
          %v720 = vpop.permute.xlu0 %719
          %721 = vrot.lane.b32.xlu0 %v718, 32
          %v722 = vpop.permute.xlu0 %721
          %v723 = vadd.f32 %v717, %v720
          %v724 = vadd.f32 %v718, %v722
          %725 = vrot.lane.b32.xlu0 %v723, 64
          %v726 = vpop.permute.xlu0 %725
          %727 = vrot.lane.b32.xlu0 %v724, 64
          %v728 = vpop.permute.xlu0 %727
          %v729 = vadd.f32 %v723, %v726
          %v730 = vadd.f32 %v724, %v728
          %v731 = vadd.f32 %v729, %v730
          %v732 = vrot.slane %v731, 4
          %v733 = vadd.f32 %v731, %v732
          %v734 = vrot.slane %v733, 2
          %v735 = vadd.f32 %v733, %v734
          %v736 = vrot.slane %v735, 1
          %v737 = vadd.f32 %v735, %v736
          %v738 = vmul.f32 %v737, 0.001953125
          %v739 = vadd.f32 %v738, 1e-05
          %v740 = vrsqrt.pop %v739
          %v741 = vmul.f32 %v697, %v740
          %v742 = vmul.f32 %v698, %v740
          %v743 = vstv %s534
          %v744 = vmul.f32 %v743, %v741
          %v745 = vmul.f32 %v743, %v742
          %v746 = vadd.f32 %v532, %v744
          %v747 = vadd.f32 %v533, %v745
          %748 = vst [vmem:[%s515] sm:$0xff] %v746
          %749 = vst [vmem:[%s515 + $0x8] sm:$0xff] %v747
        $region92: #{mixed_op_forward.1} parent=83 // pred_fallthru
          _
        %p750 = scmp.eq.s32.totalorder %s28, 1
        %s751 = sld [smem:[#allocation2 + $0x2]]
        %p752 = scmp.ne.f32.partialorder %s751, 0.0
        %p753 = pnand %p750, %p752
        %p754 = pneg %p753
        // Predicated region
        $region93: #{mixed_op_forward.1} parent=83 // pred_check
          _
        $region94: #{mixed_op_forward.1} parent=83 // pred_check_branch
          %756 = sbr.rel (%p753) target = $region96
        $region95: #{mixed_op_forward.1} parent=83 // pred_region
          %v757 = vld [vmem:[%s515] sm:$0xff]
          %v758 = vld [vmem:[%s515 + $0x8] sm:$0xff]
          %s759 = sld [smem:[#allocation2 + $0x2]]
          %v760 = vrot.slane %v516, 7
          %v761 = vrot.slane %v517, 7
          %v762 = vlaneseq
          %v763 = vshrl.u32 %v762, 7
          %vm764 = vcmp.lt.s32.totalorder %v763, 1
          %v765 = vsel %vm764, %v760, %v761
          %v766 = vsel %vm764, %v761, %v760
          %v767 = vadd.s32 %v520, 4294967295
          %v768 = vadd.s32 %v521, 4294967295
          %vm769 = vcmp.ge.s32.totalorder %v767, 0
          %vm770 = vcmp.ge.s32.totalorder %v768, 0
          %vm771 = vcmp.lt.s32.totalorder %v767, 16
          %vm772 = vcmp.lt.s32.totalorder %v768, 16
          %vm773 = vmand %vm769, %vm771
          %vm774 = vmand %vm770, %vm772
          %v775 = vsel %vm773, 1, 0
          %v776 = vsel %vm774, 1, 0
          %777 = vset.pattern.permute.xlu0 0
          %778 = vperm.xlu0 %777, %v775
          %v779 = vpop.permute.xlu0 %778
          %780 = vset.pattern.permute.xlu0 0
          %781 = vperm.xlu0 %780, %v776
          %v782 = vpop.permute.xlu0 %781
          %vm783 = vcmp.eq.s32.totalorder %v779, 1
          %vm784 = vcmp.eq.s32.totalorder %v782, 1
          %v785 = vsel %vm783, %v766, 0.0
          %v786 = vsel %vm784, %v765, 0.0
          %787 = vrot.lane.b32.xlu0 %v785, 4
          %v788 = vpop.permute.xlu0 %787
          %789 = vrot.lane.b32.xlu0 %v786, 4
          %v790 = vpop.permute.xlu0 %789
          %v791 = vadd.s32 %v522, 4294967295
          %vm792 = vcmp.ge.s32.totalorder %v791, 0
          %vm793 = vcmp.lt.s32.totalorder %v791, 16
          %vm794 = vmand %vm792, %vm793
          %v795 = vsel %vm794, 1, 0
          %v796 = vlaneseq
          %v797 = vshrl.u32 %v796, 7
          %v798 = vsub.s32 0, %v797
          %v799 = vrot.slane %v795, %v798
          %vm800 = vcmp.eq.s32.totalorder %v799, 1
          %v801 = vsel %vm800, %v788, 0.0
          %v802 = vsel %vm800, %v790, 0.0
          %v803 = vadd.f32 %v801, 0.0
          %v804 = vadd.f32 %v802, 0.0
          %v805 = vadd.f32 %v803, %v785
          %v806 = vadd.f32 %v804, %v786
          %807 = vrot.lane.b32.xlu0 %v785, 124
          %v808 = vpop.permute.xlu0 %807
          %809 = vrot.lane.b32.xlu0 %v786, 124
          %v810 = vpop.permute.xlu0 %809
          %v811 = vadd.s32 %v522, 1
          %vm812 = vcmp.ge.s32.totalorder %v811, 0
          %vm813 = vcmp.lt.s32.totalorder %v811, 16
          %vm814 = vmand %vm812, %vm813
          %v815 = vsel %vm814, 1, 0
          %v816 = vlaneseq
          %v817 = vshrl.u32 %v816, 7
          %v818 = vsub.s32 0, %v817
          %v819 = vrot.slane %v815, %v818
          %vm820 = vcmp.eq.s32.totalorder %v819, 1
          %v821 = vsel %vm820, %v808, 0.0
          %v822 = vsel %vm820, %v810, 0.0
          %v823 = vadd.f32 %v805, %v821
          %v824 = vadd.f32 %v806, %v822
          %825 = vrot.lane.b32.xlu0 %v516, 4
          %v826 = vpop.permute.xlu0 %825
          %827 = vrot.lane.b32.xlu0 %v517, 4
          %v828 = vpop.permute.xlu0 %827
          %v829 = vsel %vm800, %v826, 0.0
          %v830 = vsel %vm800, %v828, 0.0
          %v831 = vadd.f32 %v823, %v829
          %v832 = vadd.f32 %v824, %v830
          %v833 = vadd.f32 %v831, %v516
          %v834 = vadd.f32 %v832, %v517
          %835 = vrot.lane.b32.xlu0 %v516, 124
          %v836 = vpop.permute.xlu0 %835
          %837 = vrot.lane.b32.xlu0 %v517, 124
          %v838 = vpop.permute.xlu0 %837
          %v839 = vsel %vm820, %v836, 0.0
          %v840 = vsel %vm820, %v838, 0.0
          %v841 = vadd.f32 %v833, %v839
          %v842 = vadd.f32 %v834, %v840
          %v843 = vrot.slane %v516, 1
          %v844 = vrot.slane %v517, 1
          %vm845 = vcmp.lt.s32.totalorder %v763, 7
          %v846 = vsel %vm845, %v843, %v844
          %v847 = vsel %vm845, %v844, %v843
          %v848 = vadd.s32 %v520, 1
          %v849 = vadd.s32 %v521, 1
          %vm850 = vcmp.ge.s32.totalorder %v848, 0
          %vm851 = vcmp.ge.s32.totalorder %v849, 0
          %vm852 = vcmp.lt.s32.totalorder %v848, 16
          %vm853 = vcmp.lt.s32.totalorder %v849, 16
          %vm854 = vmand %vm850, %vm852
          %vm855 = vmand %vm851, %vm853
          %v856 = vsel %vm854, 1, 0
          %v857 = vsel %vm855, 1, 0
          %858 = vset.pattern.permute.xlu0 0
          %859 = vperm.xlu0 %858, %v856
          %v860 = vpop.permute.xlu0 %859
          %861 = vset.pattern.permute.xlu0 0
          %862 = vperm.xlu0 %861, %v857
          %v863 = vpop.permute.xlu0 %862
          %vm864 = vcmp.eq.s32.totalorder %v860, 1
          %vm865 = vcmp.eq.s32.totalorder %v863, 1
          %v866 = vsel %vm864, %v846, 0.0
          %v867 = vsel %vm865, %v847, 0.0
          %868 = vrot.lane.b32.xlu0 %v866, 4
          %v869 = vpop.permute.xlu0 %868
          %870 = vrot.lane.b32.xlu0 %v867, 4
          %v871 = vpop.permute.xlu0 %870
          %v872 = vsel %vm800, %v869, 0.0
          %v873 = vsel %vm800, %v871, 0.0
          %v874 = vadd.f32 %v841, %v872
          %v875 = vadd.f32 %v842, %v873
          %v876 = vadd.f32 %v874, %v866
          %v877 = vadd.f32 %v875, %v867
          %878 = vrot.lane.b32.xlu0 %v866, 124
          %v879 = vpop.permute.xlu0 %878
          %880 = vrot.lane.b32.xlu0 %v867, 124
          %v881 = vpop.permute.xlu0 %880
          %v882 = vsel %vm820, %v879, 0.0
          %v883 = vsel %vm820, %v881, 0.0
          %v884 = vadd.f32 %v876, %v882
          %v885 = vadd.f32 %v877, %v883
          %vm886 = vcmp.eq.s32.totalorder %v520, 0
          %vm887 = vcmp.eq.s32.totalorder %v521, 0
          %v888 = vsel %vm886, 1.0, 0.0
          %v889 = vsel %vm887, 1.0, 0.0
          %v890 = vsub.f32 3.0, %v888
          %v891 = vsub.f32 3.0, %v889
          %vm892 = vcmp.eq.s32.totalorder %v520, 15
          %vm893 = vcmp.eq.s32.totalorder %v521, 15
          %v894 = vsel %vm892, 1.0, 0.0
          %v895 = vsel %vm893, 1.0, 0.0
          %v896 = vsub.f32 %v890, %v894
          %v897 = vsub.f32 %v891, %v895
          %vm898 = vcmp.eq.s32.totalorder %v522, 0
          %v899 = vsel %vm898, 1.0, 0.0
          %v900 = vsub.f32 3.0, %v899
          %vm901 = vcmp.eq.s32.totalorder %v522, 15
          %v902 = vsel %vm901, 1.0, 0.0
          %v903 = vsub.f32 %v900, %v902
          %905 = vset.pattern.permute.xlu0 0
          %906 = vperm.xlu0 %905, %v896
          %v907 = vpop.permute.xlu0 %906
          %910 = vset.pattern.permute.xlu0 0
          %911 = vperm.xlu0 %910, %v897
          %v912 = vpop.permute.xlu0 %911
          %v915 = vlaneseq
          %v916 = vshrl.u32 %v915, 7
          %v917 = vsub.s32 0, %v916
          %v918 = vrot.slane %v903, %v917
          %v920 = vmul.f32 %v907, %v918
          %v921 = vmul.f32 %v912, %v918
          %v922 = vrcp.pop %v920
          %v923 = vmul.f32 %v884, %v922
          %v924 = vrcp.pop %v921
          %v925 = vmul.f32 %v885, %v924
          %926 = vrot.lane.b32.xlu0 %v923, 4
          %v927 = vpop.permute.xlu0 %926
          %928 = vrot.lane.b32.xlu0 %v925, 4
          %v929 = vpop.permute.xlu0 %928
          %v930 = vadd.f32 %v923, %v927
          %v931 = vadd.f32 %v925, %v929
          %932 = vrot.lane.b32.xlu0 %v930, 8
          %v933 = vpop.permute.xlu0 %932
          %934 = vrot.lane.b32.xlu0 %v931, 8
          %v935 = vpop.permute.xlu0 %934
          %v936 = vadd.f32 %v930, %v933
          %v937 = vadd.f32 %v931, %v935
          %938 = vrot.lane.b32.xlu0 %v936, 16
          %v939 = vpop.permute.xlu0 %938
          %940 = vrot.lane.b32.xlu0 %v937, 16
          %v941 = vpop.permute.xlu0 %940
          %v942 = vadd.f32 %v936, %v939
          %v943 = vadd.f32 %v937, %v941
          %944 = vrot.lane.b32.xlu0 %v942, 32
          %v945 = vpop.permute.xlu0 %944
          %946 = vrot.lane.b32.xlu0 %v943, 32
          %v947 = vpop.permute.xlu0 %946
          %v948 = vadd.f32 %v942, %v945
          %v949 = vadd.f32 %v943, %v947
          %950 = vrot.lane.b32.xlu0 %v948, 64
          %v951 = vpop.permute.xlu0 %950
          %952 = vrot.lane.b32.xlu0 %v949, 64
          %v953 = vpop.permute.xlu0 %952
          %v954 = vadd.f32 %v948, %v951
          %v955 = vadd.f32 %v949, %v953
          %v956 = vadd.f32 %v954, %v955
          %v957 = vrot.slane %v956, 4
          %v958 = vadd.f32 %v956, %v957
          %v959 = vrot.slane %v958, 2
          %v960 = vadd.f32 %v958, %v959
          %v961 = vrot.slane %v960, 1
          %v962 = vadd.f32 %v960, %v961
          %v963 = vmul.f32 %v962, 0.001953125
          %v964 = vsub.f32 %v923, %v963
          %v965 = vsub.f32 %v925, %v963
          %v966 = vmul.f32 %v964, %v964
          %v967 = vmul.f32 %v965, %v965
          %968 = vrot.lane.b32.xlu0 %v966, 4
          %v969 = vpop.permute.xlu0 %968
          %970 = vrot.lane.b32.xlu0 %v967, 4
          %v971 = vpop.permute.xlu0 %970
          %v972 = vadd.f32 %v966, %v969
          %v973 = vadd.f32 %v967, %v971
          %974 = vrot.lane.b32.xlu0 %v972, 8
          %v975 = vpop.permute.xlu0 %974
          %976 = vrot.lane.b32.xlu0 %v973, 8
          %v977 = vpop.permute.xlu0 %976
          %v978 = vadd.f32 %v972, %v975
          %v979 = vadd.f32 %v973, %v977
          %980 = vrot.lane.b32.xlu0 %v978, 16
          %v981 = vpop.permute.xlu0 %980
          %982 = vrot.lane.b32.xlu0 %v979, 16
          %v983 = vpop.permute.xlu0 %982
          %v984 = vadd.f32 %v978, %v981
          %v985 = vadd.f32 %v979, %v983
          %986 = vrot.lane.b32.xlu0 %v984, 32
          %v987 = vpop.permute.xlu0 %986
          %988 = vrot.lane.b32.xlu0 %v985, 32
          %v989 = vpop.permute.xlu0 %988
          %v990 = vadd.f32 %v984, %v987
          %v991 = vadd.f32 %v985, %v989
          %992 = vrot.lane.b32.xlu0 %v990, 64
          %v993 = vpop.permute.xlu0 %992
          %994 = vrot.lane.b32.xlu0 %v991, 64
          %v995 = vpop.permute.xlu0 %994
          %v996 = vadd.f32 %v990, %v993
          %v997 = vadd.f32 %v991, %v995
          %v998 = vadd.f32 %v996, %v997
          %v999 = vrot.slane %v998, 4
          %v1000 = vadd.f32 %v998, %v999
          %v1001 = vrot.slane %v1000, 2
          %v1002 = vadd.f32 %v1000, %v1001
          %v1003 = vrot.slane %v1002, 1
          %v1004 = vadd.f32 %v1002, %v1003
          %v1005 = vmul.f32 %v1004, 0.001953125
          %v1006 = vadd.f32 %v1005, 1e-05
          %v1007 = vrsqrt.pop %v1006
          %v1008 = vmul.f32 %v964, %v1007
          %v1009 = vmul.f32 %v965, %v1007
          %v1010 = vstv %s759
          %v1011 = vmul.f32 %v1010, %v1008
          %v1012 = vmul.f32 %v1010, %v1009
          %v1013 = vadd.f32 %v757, %v1011
          %v1014 = vadd.f32 %v758, %v1012
          %1015 = vst [vmem:[%s515] sm:$0xff] %v1013
          %1016 = vst [vmem:[%s515 + $0x8] sm:$0xff] %v1014
        $region96: #{mixed_op_forward.1} parent=83 // pred_fallthru
          _
        %s1017 = sld [smem:[#allocation2 + $0x3]]
        %p1018 = scmp.ne.f32.partialorder %s1017, 0.0
        %p1019 = pnand %p525, %p1018
        %p1020 = pneg %p1019
        // Predicated region
        $region97: #{mixed_op_forward.1} parent=83 // pred_check
          _
        $region98: #{mixed_op_forward.1} parent=83 // pred_check_branch
          %1022 = sbr.rel (%p1019) target = $region100
        $region99: #{mixed_op_forward.1} parent=83 // pred_region
          %v1023 = vld [vmem:[%s515] sm:$0xff]
          %v1024 = vld [vmem:[%s515 + $0x8] sm:$0xff]
          %s1025 = sld [smem:[#allocation2 + $0x3]]
          %v1026 = vstv %s1025
          %v1027 = vmul.f32 %v1026, %v516
          %v1028 = vmul.f32 %v1026, %v517
          %v1029 = vadd.f32 %v1023, %v1027
          %v1030 = vadd.f32 %v1024, %v1028
          %1031 = vst [vmem:[%s515] sm:$0xff] %v1029
          %1032 = vst [vmem:[%s515 + $0x8] sm:$0xff] %v1030
        $region100: #{mixed_op_forward.1} parent=83 // pred_fallthru
          _
        %s1033 = sld [smem:[#allocation2 + $0x4]]
        %p1034 = scmp.ne.f32.partialorder %s1033, 0.0
        %p1035 = pnand %p525, %p1034
        %p1036 = pneg %p1035
        // Predicated region
        $region101: #{mixed_op_forward.1} parent=83 // pred_check
          _
        $region102: #{mixed_op_forward.1} parent=83 // pred_check_branch
          %1038 = sbr.rel (%p1035) target = $region104
        $region103: #{mixed_op_forward.1} parent=83 // pred_region
          %v1039 = vld [vmem:[%s515] sm:$0xff]
          %v1040 = vld [vmem:[%s515 + $0x8] sm:$0xff]
          %s1041 = sld [smem:[#allocation2 + $0x4]]
          %v1042 = vrot.slane %v518, 7
          %v1043 = vrot.slane %v519, 7
          %v1044 = vlaneseq
          %v1045 = vshrl.u32 %v1044, 7
          %vm1046 = vcmp.lt.s32.totalorder %v1045, 1
          %v1047 = vsel %vm1046, %v1042, %v1043
          %v1048 = vsel %vm1046, %v1043, %v1042
          %v1049 = vadd.s32 %v520, 4294967295
          %v1050 = vadd.s32 %v521, 4294967295
          %vm1051 = vcmp.ge.s32.totalorder %v1049, 0
          %vm1052 = vcmp.ge.s32.totalorder %v1050, 0
          %vm1053 = vcmp.lt.s32.totalorder %v1049, 16
          %vm1054 = vcmp.lt.s32.totalorder %v1050, 16
          %vm1055 = vmand %vm1051, %vm1053
          %vm1056 = vmand %vm1052, %vm1054
          %v1057 = vsel %vm1055, 1, 0
          %v1058 = vsel %vm1056, 1, 0
          %1059 = vset.pattern.permute.xlu0 0
          %1060 = vperm.xlu0 %1059, %v1057
          %v1061 = vpop.permute.xlu0 %1060
          %1062 = vset.pattern.permute.xlu0 0
          %1063 = vperm.xlu0 %1062, %v1058
          %v1064 = vpop.permute.xlu0 %1063
          %vm1065 = vcmp.eq.s32.totalorder %v1061, 1
          %vm1066 = vcmp.eq.s32.totalorder %v1064, 1
          %v1067 = vsel %vm1065, %v1048, 0.0
          %v1068 = vsel %vm1066, %v1047, 0.0
          %1069 = vrot.lane.b32.xlu0 %v1067, 4
          %v1070 = vpop.permute.xlu0 %1069
          %1071 = vrot.lane.b32.xlu0 %v1068, 4
          %v1072 = vpop.permute.xlu0 %1071
          %v1073 = vadd.s32 %v522, 4294967295
          %vm1074 = vcmp.ge.s32.totalorder %v1073, 0
          %vm1075 = vcmp.lt.s32.totalorder %v1073, 16
          %vm1076 = vmand %vm1074, %vm1075
          %v1077 = vsel %vm1076, 1, 0
          %v1078 = vlaneseq
          %v1079 = vshrl.u32 %v1078, 7
          %v1080 = vsub.s32 0, %v1079
          %v1081 = vrot.slane %v1077, %v1080
          %vm1082 = vcmp.eq.s32.totalorder %v1081, 1
          %v1083 = vsel %vm1082, %v1070, 0.0
          %v1084 = vsel %vm1082, %v1072, 0.0
          %v1085 = vld [vmem:[%s4] sm:$0x1]
          %v1086 = vlaneseq
          %v1087 = vshrl.u32 %v1086, 7
          %v1088 = vsub.s32 0, %v1087
          %v1089 = vrot.slane %v1085, %v1088
          %v1090 = vmul.f32 %v1083, %v1089
          %v1091 = vmul.f32 %v1084, %v1089
          %v1092 = vadd.f32 %v1090, 0.0
          %v1093 = vadd.f32 %v1091, 0.0
          %v1094 = vld [vmem:[%s4 + $0x1] sm:$0x1]
          %v1095 = vlaneseq
          %v1096 = vshrl.u32 %v1095, 7
          %v1097 = vsub.s32 0, %v1096
          %v1098 = vrot.slane %v1094, %v1097
          %v1099 = vmul.f32 %v1067, %v1098
          %v1100 = vmul.f32 %v1068, %v1098
          %v1101 = vadd.f32 %v1092, %v1099
          %v1102 = vadd.f32 %v1093, %v1100
          %1103 = vrot.lane.b32.xlu0 %v1067, 124
          %v1104 = vpop.permute.xlu0 %1103
          %1105 = vrot.lane.b32.xlu0 %v1068, 124
          %v1106 = vpop.permute.xlu0 %1105
          %v1107 = vadd.s32 %v522, 1
          %vm1108 = vcmp.ge.s32.totalorder %v1107, 0
          %vm1109 = vcmp.lt.s32.totalorder %v1107, 16
          %vm1110 = vmand %vm1108, %vm1109
          %v1111 = vsel %vm1110, 1, 0
          %v1112 = vlaneseq
          %v1113 = vshrl.u32 %v1112, 7
          %v1114 = vsub.s32 0, %v1113
          %v1115 = vrot.slane %v1111, %v1114
          %vm1116 = vcmp.eq.s32.totalorder %v1115, 1
          %v1117 = vsel %vm1116, %v1104, 0.0
          %v1118 = vsel %vm1116, %v1106, 0.0
          %v1119 = vld [vmem:[%s4 + $0x2] sm:$0x1]
          %v1120 = vlaneseq
          %v1121 = vshrl.u32 %v1120, 7
          %v1122 = vsub.s32 0, %v1121
          %v1123 = vrot.slane %v1119, %v1122
          %v1124 = vmul.f32 %v1117, %v1123
          %v1125 = vmul.f32 %v1118, %v1123
          %v1126 = vadd.f32 %v1101, %v1124
          %v1127 = vadd.f32 %v1102, %v1125
          %1128 = vrot.lane.b32.xlu0 %v518, 4
          %v1129 = vpop.permute.xlu0 %1128
          %1130 = vrot.lane.b32.xlu0 %v519, 4
          %v1131 = vpop.permute.xlu0 %1130
          %v1132 = vsel %vm1082, %v1129, 0.0
          %v1133 = vsel %vm1082, %v1131, 0.0
          %v1134 = vld [vmem:[%s4 + $0x3] sm:$0x1]
          %v1135 = vlaneseq
          %v1136 = vshrl.u32 %v1135, 7
          %v1137 = vsub.s32 0, %v1136
          %v1138 = vrot.slane %v1134, %v1137
          %v1139 = vmul.f32 %v1132, %v1138
          %v1140 = vmul.f32 %v1133, %v1138
          %v1141 = vadd.f32 %v1126, %v1139
          %v1142 = vadd.f32 %v1127, %v1140
          %v1143 = vld [vmem:[%s4 + $0x4] sm:$0x1]
          %v1144 = vlaneseq
          %v1145 = vshrl.u32 %v1144, 7
          %v1146 = vsub.s32 0, %v1145
          %v1147 = vrot.slane %v1143, %v1146
          %v1148 = vmul.f32 %v518, %v1147
          %v1149 = vmul.f32 %v519, %v1147
          %v1150 = vadd.f32 %v1141, %v1148
          %v1151 = vadd.f32 %v1142, %v1149
          %1152 = vrot.lane.b32.xlu0 %v518, 124
          %v1153 = vpop.permute.xlu0 %1152
          %1154 = vrot.lane.b32.xlu0 %v519, 124
          %v1155 = vpop.permute.xlu0 %1154
          %v1156 = vsel %vm1116, %v1153, 0.0
          %v1157 = vsel %vm1116, %v1155, 0.0
          %v1158 = vld [vmem:[%s4 + $0x5] sm:$0x1]
          %v1159 = vlaneseq
          %v1160 = vshrl.u32 %v1159, 7
          %v1161 = vsub.s32 0, %v1160
          %v1162 = vrot.slane %v1158, %v1161
          %v1163 = vmul.f32 %v1156, %v1162
          %v1164 = vmul.f32 %v1157, %v1162
          %v1165 = vadd.f32 %v1150, %v1163
          %v1166 = vadd.f32 %v1151, %v1164
          %v1167 = vrot.slane %v518, 1
          %v1168 = vrot.slane %v519, 1
          %vm1169 = vcmp.lt.s32.totalorder %v1045, 7
          %v1170 = vsel %vm1169, %v1167, %v1168
          %v1171 = vsel %vm1169, %v1168, %v1167
          %v1172 = vadd.s32 %v520, 1
          %v1173 = vadd.s32 %v521, 1
          %vm1174 = vcmp.ge.s32.totalorder %v1172, 0
          %vm1175 = vcmp.ge.s32.totalorder %v1173, 0
          %vm1176 = vcmp.lt.s32.totalorder %v1172, 16
          %vm1177 = vcmp.lt.s32.totalorder %v1173, 16
          %vm1178 = vmand %vm1174, %vm1176
          %vm1179 = vmand %vm1175, %vm1177
          %v1180 = vsel %vm1178, 1, 0
          %v1181 = vsel %vm1179, 1, 0
          %1182 = vset.pattern.permute.xlu0 0
          %1183 = vperm.xlu0 %1182, %v1180
          %v1184 = vpop.permute.xlu0 %1183
          %1185 = vset.pattern.permute.xlu0 0
          %1186 = vperm.xlu0 %1185, %v1181
          %v1187 = vpop.permute.xlu0 %1186
          %vm1188 = vcmp.eq.s32.totalorder %v1184, 1
          %vm1189 = vcmp.eq.s32.totalorder %v1187, 1
          %v1190 = vsel %vm1188, %v1170, 0.0
          %v1191 = vsel %vm1189, %v1171, 0.0
          %1192 = vrot.lane.b32.xlu0 %v1190, 4
          %v1193 = vpop.permute.xlu0 %1192
          %1194 = vrot.lane.b32.xlu0 %v1191, 4
          %v1195 = vpop.permute.xlu0 %1194
          %v1196 = vsel %vm1082, %v1193, 0.0
          %v1197 = vsel %vm1082, %v1195, 0.0
          %v1198 = vld [vmem:[%s4 + $0x6] sm:$0x1]
          %v1199 = vlaneseq
          %v1200 = vshrl.u32 %v1199, 7
          %v1201 = vsub.s32 0, %v1200
          %v1202 = vrot.slane %v1198, %v1201
          %v1203 = vmul.f32 %v1196, %v1202
          %v1204 = vmul.f32 %v1197, %v1202
          %v1205 = vadd.f32 %v1165, %v1203
          %v1206 = vadd.f32 %v1166, %v1204
          %v1207 = vld [vmem:[%s4 + $0x7] sm:$0x1]
          %v1208 = vlaneseq
          %v1209 = vshrl.u32 %v1208, 7
          %v1210 = vsub.s32 0, %v1209
          %v1211 = vrot.slane %v1207, %v1210
          %v1212 = vmul.f32 %v1190, %v1211
          %v1213 = vmul.f32 %v1191, %v1211
          %v1214 = vadd.f32 %v1205, %v1212
          %v1215 = vadd.f32 %v1206, %v1213
          %1216 = vrot.lane.b32.xlu0 %v1190, 124
          %v1217 = vpop.permute.xlu0 %1216
          %1218 = vrot.lane.b32.xlu0 %v1191, 124
          %v1219 = vpop.permute.xlu0 %1218
          %v1220 = vsel %vm1116, %v1217, 0.0
          %v1221 = vsel %vm1116, %v1219, 0.0
          %v1222 = vld [vmem:[%s4 + $0x8] sm:$0x1]
          %v1223 = vlaneseq
          %v1224 = vshrl.u32 %v1223, 7
          %v1225 = vsub.s32 0, %v1224
          %v1226 = vrot.slane %v1222, %v1225
          %v1227 = vmul.f32 %v1220, %v1226
          %v1228 = vmul.f32 %v1221, %v1226
          %v1229 = vadd.f32 %v1214, %v1227
          %v1230 = vadd.f32 %v1215, %v1228
          %v1231 = vld [vmem:[%s5 + $0x3] sm:$0x1]
          %v1232 = vlaneseq
          %v1233 = vshrl.u32 %v1232, 7
          %v1234 = vsub.s32 0, %v1233
          %v1235 = vrot.slane %v1231, %v1234
          %v1236 = vmul.f32 %v1229, %v1235
          %v1237 = vmul.f32 %v1230, %v1235
          %1238 = vrot.lane.b32.xlu0 %v1229, 1
          %v1239 = vpop.permute.xlu0 %1238
          %1240 = vrot.lane.b32.xlu0 %v1230, 1
          %v1241 = vpop.permute.xlu0 %1240
          %v1242 = vld [vmem:[%s5 + $0x4] sm:$0x1]
          %v1243 = vlaneseq
          %v1244 = vshrl.u32 %v1243, 7
          %v1245 = vsub.s32 0, %v1244
          %v1246 = vrot.slane %v1242, %v1245
          %v1247 = vmul.f32 %v1239, %v1246
          %v1248 = vmul.f32 %v1241, %v1246
          %v1249 = vadd.f32 %v1236, %v1247
          %v1250 = vadd.f32 %v1237, %v1248
          %1251 = vrot.lane.b32.xlu0 %v1229, 127
          %v1252 = vpop.permute.xlu0 %1251
          %1253 = vrot.lane.b32.xlu0 %v1230, 127
          %v1254 = vpop.permute.xlu0 %1253
          %v1255 = vld [vmem:[%s5 + $0x2] sm:$0x1]
          %v1256 = vlaneseq
          %v1257 = vshrl.u32 %v1256, 7
          %v1258 = vsub.s32 0, %v1257
          %v1259 = vrot.slane %v1255, %v1258
          %v1260 = vmul.f32 %v1252, %v1259
          %v1261 = vmul.f32 %v1254, %v1259
          %v1262 = vadd.f32 %v1249, %v1260
          %v1263 = vadd.f32 %v1250, %v1261
          %1264 = vrot.lane.b32.xlu0 %v1229, 2
          %v1265 = vpop.permute.xlu0 %1264
          %1266 = vrot.lane.b32.xlu0 %v1230, 2
          %v1267 = vpop.permute.xlu0 %1266
          %v1268 = vld [vmem:[%s5 + $0x5] sm:$0x1]
          %v1269 = vlaneseq
          %v1270 = vshrl.u32 %v1269, 7
          %v1271 = vsub.s32 0, %v1270
          %v1272 = vrot.slane %v1268, %v1271
          %v1273 = vmul.f32 %v1265, %v1272
          %v1274 = vmul.f32 %v1267, %v1272
          %v1275 = vadd.f32 %v1262, %v1273
          %v1276 = vadd.f32 %v1263, %v1274
          %1277 = vrot.lane.b32.xlu0 %v1229, 126
          %v1278 = vpop.permute.xlu0 %1277
          %1279 = vrot.lane.b32.xlu0 %v1230, 126
          %v1280 = vpop.permute.xlu0 %1279
          %v1281 = vld [vmem:[%s5 + $0x1] sm:$0x1]
          %v1282 = vlaneseq
          %v1283 = vshrl.u32 %v1282, 7
          %v1284 = vsub.s32 0, %v1283
          %v1285 = vrot.slane %v1281, %v1284
          %v1286 = vmul.f32 %v1278, %v1285
          %v1287 = vmul.f32 %v1280, %v1285
          %v1288 = vadd.f32 %v1275, %v1286
          %v1289 = vadd.f32 %v1276, %v1287
          %1290 = vrot.lane.b32.xlu0 %v1229, 3
          %v1291 = vpop.permute.xlu0 %1290
          %1292 = vrot.lane.b32.xlu0 %v1230, 3
          %v1293 = vpop.permute.xlu0 %1292
          %v1294 = vld [vmem:[%s5 + $0x6] sm:$0x1]
          %v1295 = vlaneseq
          %v1296 = vshrl.u32 %v1295, 7
          %v1297 = vsub.s32 0, %v1296
          %v1298 = vrot.slane %v1294, %v1297
          %v1299 = vmul.f32 %v1291, %v1298
          %v1300 = vmul.f32 %v1293, %v1298
          %v1301 = vadd.f32 %v1288, %v1299
          %v1302 = vadd.f32 %v1289, %v1300
          %1303 = vrot.lane.b32.xlu0 %v1229, 125
          %v1304 = vpop.permute.xlu0 %1303
          %1305 = vrot.lane.b32.xlu0 %v1230, 125
          %v1306 = vpop.permute.xlu0 %1305
          %v1307 = vld [vmem:[%s5] sm:$0x1]
          %v1308 = vlaneseq
          %v1309 = vshrl.u32 %v1308, 7
          %v1310 = vsub.s32 0, %v1309
          %v1311 = vrot.slane %v1307, %v1310
          %v1312 = vmul.f32 %v1304, %v1311
          %v1313 = vmul.f32 %v1306, %v1311
          %v1314 = vadd.f32 %v1301, %v1312
          %v1315 = vadd.f32 %v1302, %v1313
          %1316 = vrot.lane.b32.xlu0 %v1314, 4
          %v1317 = vpop.permute.xlu0 %1316
          %1318 = vrot.lane.b32.xlu0 %v1315, 4
          %v1319 = vpop.permute.xlu0 %1318
          %v1320 = vadd.f32 %v1314, %v1317
          %v1321 = vadd.f32 %v1315, %v1319
          %1322 = vrot.lane.b32.xlu0 %v1320, 8
          %v1323 = vpop.permute.xlu0 %1322
          %1324 = vrot.lane.b32.xlu0 %v1321, 8
          %v1325 = vpop.permute.xlu0 %1324
          %v1326 = vadd.f32 %v1320, %v1323
          %v1327 = vadd.f32 %v1321, %v1325
          %1328 = vrot.lane.b32.xlu0 %v1326, 16
          %v1329 = vpop.permute.xlu0 %1328
          %1330 = vrot.lane.b32.xlu0 %v1327, 16
          %v1331 = vpop.permute.xlu0 %1330
          %v1332 = vadd.f32 %v1326, %v1329
          %v1333 = vadd.f32 %v1327, %v1331
          %1334 = vrot.lane.b32.xlu0 %v1332, 32
          %v1335 = vpop.permute.xlu0 %1334
          %1336 = vrot.lane.b32.xlu0 %v1333, 32
          %v1337 = vpop.permute.xlu0 %1336
          %v1338 = vadd.f32 %v1332, %v1335
          %v1339 = vadd.f32 %v1333, %v1337
          %1340 = vrot.lane.b32.xlu0 %v1338, 64
          %v1341 = vpop.permute.xlu0 %1340
          %1342 = vrot.lane.b32.xlu0 %v1339, 64
          %v1343 = vpop.permute.xlu0 %1342
          %v1344 = vadd.f32 %v1338, %v1341
          %v1345 = vadd.f32 %v1339, %v1343
          %v1346 = vadd.f32 %v1344, %v1345
          %v1347 = vrot.slane %v1346, 4
          %v1348 = vadd.f32 %v1346, %v1347
          %v1349 = vrot.slane %v1348, 2
          %v1350 = vadd.f32 %v1348, %v1349
          %v1351 = vrot.slane %v1350, 1
          %v1352 = vadd.f32 %v1350, %v1351
          %v1353 = vmul.f32 %v1352, 0.001953125
          %v1354 = vsub.f32 %v1314, %v1353
          %v1355 = vsub.f32 %v1315, %v1353
          %v1356 = vmul.f32 %v1354, %v1354
          %v1357 = vmul.f32 %v1355, %v1355
          %1358 = vrot.lane.b32.xlu0 %v1356, 4
          %v1359 = vpop.permute.xlu0 %1358
          %1360 = vrot.lane.b32.xlu0 %v1357, 4
          %v1361 = vpop.permute.xlu0 %1360
          %v1362 = vadd.f32 %v1356, %v1359
          %v1363 = vadd.f32 %v1357, %v1361
          %1364 = vrot.lane.b32.xlu0 %v1362, 8
          %v1365 = vpop.permute.xlu0 %1364
          %1366 = vrot.lane.b32.xlu0 %v1363, 8
          %v1367 = vpop.permute.xlu0 %1366
          %v1368 = vadd.f32 %v1362, %v1365
          %v1369 = vadd.f32 %v1363, %v1367
          %1370 = vrot.lane.b32.xlu0 %v1368, 16
          %v1371 = vpop.permute.xlu0 %1370
          %1372 = vrot.lane.b32.xlu0 %v1369, 16
          %v1373 = vpop.permute.xlu0 %1372
          %v1374 = vadd.f32 %v1368, %v1371
          %v1375 = vadd.f32 %v1369, %v1373
          %1376 = vrot.lane.b32.xlu0 %v1374, 32
          %v1377 = vpop.permute.xlu0 %1376
          %1378 = vrot.lane.b32.xlu0 %v1375, 32
          %v1379 = vpop.permute.xlu0 %1378
          %v1380 = vadd.f32 %v1374, %v1377
          %v1381 = vadd.f32 %v1375, %v1379
          %1382 = vrot.lane.b32.xlu0 %v1380, 64
          %v1383 = vpop.permute.xlu0 %1382
          %1384 = vrot.lane.b32.xlu0 %v1381, 64
          %v1385 = vpop.permute.xlu0 %1384
          %v1386 = vadd.f32 %v1380, %v1383
          %v1387 = vadd.f32 %v1381, %v1385
          %v1388 = vadd.f32 %v1386, %v1387
          %v1389 = vrot.slane %v1388, 4
          %v1390 = vadd.f32 %v1388, %v1389
          %v1391 = vrot.slane %v1390, 2
          %v1392 = vadd.f32 %v1390, %v1391
          %v1393 = vrot.slane %v1392, 1
          %v1394 = vadd.f32 %v1392, %v1393
          %v1395 = vmul.f32 %v1394, 0.001953125
          %v1396 = vadd.f32 %v1395, 1e-05
          %v1397 = vrsqrt.pop %v1396
          %v1398 = vmul.f32 %v1354, %v1397
          %v1399 = vmul.f32 %v1355, %v1397
          %v1400 = vmax.f32 %v1398, 0.0
          %v1401 = vmax.f32 %v1399, 0.0
          %v1402 = vrot.slane %v1400, 7
          %v1403 = vrot.slane %v1401, 7
          %v1404 = vsel %vm1046, %v1402, %v1403
          %v1405 = vsel %vm1046, %v1403, %v1402
          %v1406 = vsel %vm1065, %v1405, 0.0
          %v1407 = vsel %vm1066, %v1404, 0.0
          %1408 = vrot.lane.b32.xlu0 %v1406, 4
          %v1409 = vpop.permute.xlu0 %1408
          %1410 = vrot.lane.b32.xlu0 %v1407, 4
          %v1411 = vpop.permute.xlu0 %1410
          %v1412 = vsel %vm1082, %v1409, 0.0
          %v1413 = vsel %vm1082, %v1411, 0.0
          %v1414 = vld [vmem:[%s6] sm:$0x1]
          %v1415 = vlaneseq
          %v1416 = vshrl.u32 %v1415, 7
          %v1417 = vsub.s32 0, %v1416
          %v1418 = vrot.slane %v1414, %v1417
          %v1419 = vmul.f32 %v1412, %v1418
          %v1420 = vmul.f32 %v1413, %v1418
          %v1421 = vadd.f32 %v1419, 0.0
          %v1422 = vadd.f32 %v1420, 0.0
          %v1423 = vld [vmem:[%s6 + $0x1] sm:$0x1]
          %v1424 = vlaneseq
          %v1425 = vshrl.u32 %v1424, 7
          %v1426 = vsub.s32 0, %v1425
          %v1427 = vrot.slane %v1423, %v1426
          %v1428 = vmul.f32 %v1406, %v1427
          %v1429 = vmul.f32 %v1407, %v1427
          %v1430 = vadd.f32 %v1421, %v1428
          %v1431 = vadd.f32 %v1422, %v1429
          %1432 = vrot.lane.b32.xlu0 %v1406, 124
          %v1433 = vpop.permute.xlu0 %1432
          %1434 = vrot.lane.b32.xlu0 %v1407, 124
          %v1435 = vpop.permute.xlu0 %1434
          %v1436 = vsel %vm1116, %v1433, 0.0
          %v1437 = vsel %vm1116, %v1435, 0.0
          %v1438 = vld [vmem:[%s6 + $0x2] sm:$0x1]
          %v1439 = vlaneseq
          %v1440 = vshrl.u32 %v1439, 7
          %v1441 = vsub.s32 0, %v1440
          %v1442 = vrot.slane %v1438, %v1441
          %v1443 = vmul.f32 %v1436, %v1442
          %v1444 = vmul.f32 %v1437, %v1442
          %v1445 = vadd.f32 %v1430, %v1443
          %v1446 = vadd.f32 %v1431, %v1444
          %1447 = vrot.lane.b32.xlu0 %v1400, 4
          %v1448 = vpop.permute.xlu0 %1447
          %1449 = vrot.lane.b32.xlu0 %v1401, 4
          %v1450 = vpop.permute.xlu0 %1449
          %v1451 = vsel %vm1082, %v1448, 0.0
          %v1452 = vsel %vm1082, %v1450, 0.0
          %v1453 = vld [vmem:[%s6 + $0x3] sm:$0x1]
          %v1454 = vlaneseq
          %v1455 = vshrl.u32 %v1454, 7
          %v1456 = vsub.s32 0, %v1455
          %v1457 = vrot.slane %v1453, %v1456
          %v1458 = vmul.f32 %v1451, %v1457
          %v1459 = vmul.f32 %v1452, %v1457
          %v1460 = vadd.f32 %v1445, %v1458
          %v1461 = vadd.f32 %v1446, %v1459
          %v1462 = vld [vmem:[%s6 + $0x4] sm:$0x1]
          %v1463 = vlaneseq
          %v1464 = vshrl.u32 %v1463, 7
          %v1465 = vsub.s32 0, %v1464
          %v1466 = vrot.slane %v1462, %v1465
          %v1467 = vmul.f32 %v1400, %v1466
          %v1468 = vmul.f32 %v1401, %v1466
          %v1469 = vadd.f32 %v1460, %v1467
          %v1470 = vadd.f32 %v1461, %v1468
          %1471 = vrot.lane.b32.xlu0 %v1400, 124
          %v1472 = vpop.permute.xlu0 %1471
          %1473 = vrot.lane.b32.xlu0 %v1401, 124
          %v1474 = vpop.permute.xlu0 %1473
          %v1475 = vsel %vm1116, %v1472, 0.0
          %v1476 = vsel %vm1116, %v1474, 0.0
          %v1477 = vld [vmem:[%s6 + $0x5] sm:$0x1]
          %v1478 = vlaneseq
          %v1479 = vshrl.u32 %v1478, 7
          %v1480 = vsub.s32 0, %v1479
          %v1481 = vrot.slane %v1477, %v1480
          %v1482 = vmul.f32 %v1475, %v1481
          %v1483 = vmul.f32 %v1476, %v1481
          %v1484 = vadd.f32 %v1469, %v1482
          %v1485 = vadd.f32 %v1470, %v1483
          %v1486 = vrot.slane %v1400, 1
          %v1487 = vrot.slane %v1401, 1
          %v1488 = vsel %vm1169, %v1486, %v1487
          %v1489 = vsel %vm1169, %v1487, %v1486
          %v1490 = vsel %vm1188, %v1488, 0.0
          %v1491 = vsel %vm1189, %v1489, 0.0
          %1492 = vrot.lane.b32.xlu0 %v1490, 4
          %v1493 = vpop.permute.xlu0 %1492
          %1494 = vrot.lane.b32.xlu0 %v1491, 4
          %v1495 = vpop.permute.xlu0 %1494
          %v1496 = vsel %vm1082, %v1493, 0.0
          %v1497 = vsel %vm1082, %v1495, 0.0
          %v1498 = vld [vmem:[%s6 + $0x6] sm:$0x1]
          %v1499 = vlaneseq
          %v1500 = vshrl.u32 %v1499, 7
          %v1501 = vsub.s32 0, %v1500
          %v1502 = vrot.slane %v1498, %v1501
          %v1503 = vmul.f32 %v1496, %v1502
          %v1504 = vmul.f32 %v1497, %v1502
          %v1505 = vadd.f32 %v1484, %v1503
          %v1506 = vadd.f32 %v1485, %v1504
          %v1507 = vld [vmem:[%s6 + $0x7] sm:$0x1]
          %v1508 = vlaneseq
          %v1509 = vshrl.u32 %v1508, 7
          %v1510 = vsub.s32 0, %v1509
          %v1511 = vrot.slane %v1507, %v1510
          %v1512 = vmul.f32 %v1490, %v1511
          %v1513 = vmul.f32 %v1491, %v1511
          %v1514 = vadd.f32 %v1505, %v1512
          %v1515 = vadd.f32 %v1506, %v1513
          %1516 = vrot.lane.b32.xlu0 %v1490, 124
          %v1517 = vpop.permute.xlu0 %1516
          %1518 = vrot.lane.b32.xlu0 %v1491, 124
          %v1519 = vpop.permute.xlu0 %1518
          %v1520 = vsel %vm1116, %v1517, 0.0
          %v1521 = vsel %vm1116, %v1519, 0.0
          %v1522 = vld [vmem:[%s6 + $0x8] sm:$0x1]
          %v1523 = vlaneseq
          %v1524 = vshrl.u32 %v1523, 7
          %v1525 = vsub.s32 0, %v1524
          %v1526 = vrot.slane %v1522, %v1525
          %v1527 = vmul.f32 %v1520, %v1526
          %v1528 = vmul.f32 %v1521, %v1526
          %v1529 = vadd.f32 %v1514, %v1527
          %v1530 = vadd.f32 %v1515, %v1528
          %v1531 = vld [vmem:[%s7 + $0x3] sm:$0x1]
          %v1532 = vlaneseq
          %v1533 = vshrl.u32 %v1532, 7
          %v1534 = vsub.s32 0, %v1533
          %v1535 = vrot.slane %v1531, %v1534
          %v1536 = vmul.f32 %v1529, %v1535
          %v1537 = vmul.f32 %v1530, %v1535
          %1538 = vrot.lane.b32.xlu0 %v1529, 1
          %v1539 = vpop.permute.xlu0 %1538
          %1540 = vrot.lane.b32.xlu0 %v1530, 1
          %v1541 = vpop.permute.xlu0 %1540
          %v1542 = vld [vmem:[%s7 + $0x4] sm:$0x1]
          %v1543 = vlaneseq
          %v1544 = vshrl.u32 %v1543, 7
          %v1545 = vsub.s32 0, %v1544
          %v1546 = vrot.slane %v1542, %v1545
          %v1547 = vmul.f32 %v1539, %v1546
          %v1548 = vmul.f32 %v1541, %v1546
          %v1549 = vadd.f32 %v1536, %v1547
          %v1550 = vadd.f32 %v1537, %v1548
          %1551 = vrot.lane.b32.xlu0 %v1529, 127
          %v1552 = vpop.permute.xlu0 %1551
          %1553 = vrot.lane.b32.xlu0 %v1530, 127
          %v1554 = vpop.permute.xlu0 %1553
          %v1555 = vld [vmem:[%s7 + $0x2] sm:$0x1]
          %v1556 = vlaneseq
          %v1557 = vshrl.u32 %v1556, 7
          %v1558 = vsub.s32 0, %v1557
          %v1559 = vrot.slane %v1555, %v1558
          %v1560 = vmul.f32 %v1552, %v1559
          %v1561 = vmul.f32 %v1554, %v1559
          %v1562 = vadd.f32 %v1549, %v1560
          %v1563 = vadd.f32 %v1550, %v1561
          %1564 = vrot.lane.b32.xlu0 %v1529, 2
          %v1565 = vpop.permute.xlu0 %1564
          %1566 = vrot.lane.b32.xlu0 %v1530, 2
          %v1567 = vpop.permute.xlu0 %1566
          %v1568 = vld [vmem:[%s7 + $0x5] sm:$0x1]
          %v1569 = vlaneseq
          %v1570 = vshrl.u32 %v1569, 7
          %v1571 = vsub.s32 0, %v1570
          %v1572 = vrot.slane %v1568, %v1571
          %v1573 = vmul.f32 %v1565, %v1572
          %v1574 = vmul.f32 %v1567, %v1572
          %v1575 = vadd.f32 %v1562, %v1573
          %v1576 = vadd.f32 %v1563, %v1574
          %1577 = vrot.lane.b32.xlu0 %v1529, 126
          %v1578 = vpop.permute.xlu0 %1577
          %1579 = vrot.lane.b32.xlu0 %v1530, 126
          %v1580 = vpop.permute.xlu0 %1579
          %v1581 = vld [vmem:[%s7 + $0x1] sm:$0x1]
          %v1582 = vlaneseq
          %v1583 = vshrl.u32 %v1582, 7
          %v1584 = vsub.s32 0, %v1583
          %v1585 = vrot.slane %v1581, %v1584
          %v1586 = vmul.f32 %v1578, %v1585
          %v1587 = vmul.f32 %v1580, %v1585
          %v1588 = vadd.f32 %v1575, %v1586
          %v1589 = vadd.f32 %v1576, %v1587
          %1590 = vrot.lane.b32.xlu0 %v1529, 3
          %v1591 = vpop.permute.xlu0 %1590
          %1592 = vrot.lane.b32.xlu0 %v1530, 3
          %v1593 = vpop.permute.xlu0 %1592
          %v1594 = vld [vmem:[%s7 + $0x6] sm:$0x1]
          %v1595 = vlaneseq
          %v1596 = vshrl.u32 %v1595, 7
          %v1597 = vsub.s32 0, %v1596
          %v1598 = vrot.slane %v1594, %v1597
          %v1599 = vmul.f32 %v1591, %v1598
          %v1600 = vmul.f32 %v1593, %v1598
          %v1601 = vadd.f32 %v1588, %v1599
          %v1602 = vadd.f32 %v1589, %v1600
          %1603 = vrot.lane.b32.xlu0 %v1529, 125
          %v1604 = vpop.permute.xlu0 %1603
          %1605 = vrot.lane.b32.xlu0 %v1530, 125
          %v1606 = vpop.permute.xlu0 %1605
          %v1607 = vld [vmem:[%s7] sm:$0x1]
          %v1608 = vlaneseq
          %v1609 = vshrl.u32 %v1608, 7
          %v1610 = vsub.s32 0, %v1609
          %v1611 = vrot.slane %v1607, %v1610
          %v1612 = vmul.f32 %v1604, %v1611
          %v1613 = vmul.f32 %v1606, %v1611
          %v1614 = vadd.f32 %v1601, %v1612
          %v1615 = vadd.f32 %v1602, %v1613
          %1616 = vrot.lane.b32.xlu0 %v1614, 4
          %v1617 = vpop.permute.xlu0 %1616
          %1618 = vrot.lane.b32.xlu0 %v1615, 4
          %v1619 = vpop.permute.xlu0 %1618
          %v1620 = vadd.f32 %v1614, %v1617
          %v1621 = vadd.f32 %v1615, %v1619
          %1622 = vrot.lane.b32.xlu0 %v1620, 8
          %v1623 = vpop.permute.xlu0 %1622
          %1624 = vrot.lane.b32.xlu0 %v1621, 8
          %v1625 = vpop.permute.xlu0 %1624
          %v1626 = vadd.f32 %v1620, %v1623
          %v1627 = vadd.f32 %v1621, %v1625
          %1628 = vrot.lane.b32.xlu0 %v1626, 16
          %v1629 = vpop.permute.xlu0 %1628
          %1630 = vrot.lane.b32.xlu0 %v1627, 16
          %v1631 = vpop.permute.xlu0 %1630
          %v1632 = vadd.f32 %v1626, %v1629
          %v1633 = vadd.f32 %v1627, %v1631
          %1634 = vrot.lane.b32.xlu0 %v1632, 32
          %v1635 = vpop.permute.xlu0 %1634
          %1636 = vrot.lane.b32.xlu0 %v1633, 32
          %v1637 = vpop.permute.xlu0 %1636
          %v1638 = vadd.f32 %v1632, %v1635
          %v1639 = vadd.f32 %v1633, %v1637
          %1640 = vrot.lane.b32.xlu0 %v1638, 64
          %v1641 = vpop.permute.xlu0 %1640
          %1642 = vrot.lane.b32.xlu0 %v1639, 64
          %v1643 = vpop.permute.xlu0 %1642
          %v1644 = vadd.f32 %v1638, %v1641
          %v1645 = vadd.f32 %v1639, %v1643
          %v1646 = vadd.f32 %v1644, %v1645
          %v1647 = vrot.slane %v1646, 4
          %v1648 = vadd.f32 %v1646, %v1647
          %v1649 = vrot.slane %v1648, 2
          %v1650 = vadd.f32 %v1648, %v1649
          %v1651 = vrot.slane %v1650, 1
          %v1652 = vadd.f32 %v1650, %v1651
          %v1653 = vmul.f32 %v1652, 0.001953125
          %v1654 = vsub.f32 %v1614, %v1653
          %v1655 = vsub.f32 %v1615, %v1653
          %v1656 = vmul.f32 %v1654, %v1654
          %v1657 = vmul.f32 %v1655, %v1655
          %1658 = vrot.lane.b32.xlu0 %v1656, 4
          %v1659 = vpop.permute.xlu0 %1658
          %1660 = vrot.lane.b32.xlu0 %v1657, 4
          %v1661 = vpop.permute.xlu0 %1660
          %v1662 = vadd.f32 %v1656, %v1659
          %v1663 = vadd.f32 %v1657, %v1661
          %1664 = vrot.lane.b32.xlu0 %v1662, 8
          %v1665 = vpop.permute.xlu0 %1664
          %1666 = vrot.lane.b32.xlu0 %v1663, 8
          %v1667 = vpop.permute.xlu0 %1666
          %v1668 = vadd.f32 %v1662, %v1665
          %v1669 = vadd.f32 %v1663, %v1667
          %1670 = vrot.lane.b32.xlu0 %v1668, 16
          %v1671 = vpop.permute.xlu0 %1670
          %1672 = vrot.lane.b32.xlu0 %v1669, 16
          %v1673 = vpop.permute.xlu0 %1672
          %v1674 = vadd.f32 %v1668, %v1671
          %v1675 = vadd.f32 %v1669, %v1673
          %1676 = vrot.lane.b32.xlu0 %v1674, 32
          %v1677 = vpop.permute.xlu0 %1676
          %1678 = vrot.lane.b32.xlu0 %v1675, 32
          %v1679 = vpop.permute.xlu0 %1678
          %v1680 = vadd.f32 %v1674, %v1677
          %v1681 = vadd.f32 %v1675, %v1679
          %1682 = vrot.lane.b32.xlu0 %v1680, 64
          %v1683 = vpop.permute.xlu0 %1682
          %1684 = vrot.lane.b32.xlu0 %v1681, 64
          %v1685 = vpop.permute.xlu0 %1684
          %v1686 = vadd.f32 %v1680, %v1683
          %v1687 = vadd.f32 %v1681, %v1685
          %v1688 = vadd.f32 %v1686, %v1687
          %v1689 = vrot.slane %v1688, 4
          %v1690 = vadd.f32 %v1688, %v1689
          %v1691 = vrot.slane %v1690, 2
          %v1692 = vadd.f32 %v1690, %v1691
          %v1693 = vrot.slane %v1692, 1
          %v1694 = vadd.f32 %v1692, %v1693
          %v1695 = vmul.f32 %v1694, 0.001953125
          %v1696 = vadd.f32 %v1695, 1e-05
          %v1697 = vrsqrt.pop %v1696
          %v1698 = vmul.f32 %v1654, %v1697
          %v1699 = vmul.f32 %v1655, %v1697
          %v1700 = vstv %s1041
          %v1701 = vmul.f32 %v1700, %v1698
          %v1702 = vmul.f32 %v1700, %v1699
          %v1703 = vadd.f32 %v1039, %v1701
          %v1704 = vadd.f32 %v1040, %v1702
          %1705 = vst [vmem:[%s515] sm:$0xff] %v1703
          %1706 = vst [vmem:[%s515 + $0x8] sm:$0xff] %v1704
        $region104: #{mixed_op_forward.1} parent=83 // pred_fallthru
          _
        %s1707 = sld [smem:[#allocation2 + $0x5]]
        %p1708 = scmp.ne.f32.partialorder %s1707, 0.0
        %p1709 = pnand %p750, %p1708
        %p1710 = pneg %p1709
        // Predicated region
        $region105: #{mixed_op_forward.1} parent=83 // pred_check
          _
        $region106: #{mixed_op_forward.1} parent=83 // pred_check_branch
          %1712 = sbr.rel (%p1709) target = $region108
        $region107: #{mixed_op_forward.1} parent=83 // pred_region
          %v1713 = vld [vmem:[%s515] sm:$0xff]
          %v1714 = vld [vmem:[%s515 + $0x8] sm:$0xff]
          %s1715 = sld [smem:[#allocation2 + $0x5]]
          %v1716 = vrot.slane %v518, 6
          %v1717 = vrot.slane %v519, 6
          %v1718 = vlaneseq
          %v1719 = vshrl.u32 %v1718, 7
          %vm1720 = vcmp.lt.s32.totalorder %v1719, 2
          %v1721 = vsel %vm1720, %v1716, %v1717
          %v1722 = vsel %vm1720, %v1717, %v1716
          %v1723 = vadd.s32 %v520, 4294967294
          %v1724 = vadd.s32 %v521, 4294967294
          %vm1725 = vcmp.ge.s32.totalorder %v1723, 0
          %vm1726 = vcmp.ge.s32.totalorder %v1724, 0
          %vm1727 = vcmp.lt.s32.totalorder %v1723, 16
          %vm1728 = vcmp.lt.s32.totalorder %v1724, 16
          %vm1729 = vmand %vm1725, %vm1727
          %vm1730 = vmand %vm1726, %vm1728
          %v1731 = vsel %vm1729, 1, 0
          %v1732 = vsel %vm1730, 1, 0
          %1733 = vset.pattern.permute.xlu0 0
          %1734 = vperm.xlu0 %1733, %v1731
          %v1735 = vpop.permute.xlu0 %1734
          %1736 = vset.pattern.permute.xlu0 0
          %1737 = vperm.xlu0 %1736, %v1732
          %v1738 = vpop.permute.xlu0 %1737
          %vm1739 = vcmp.eq.s32.totalorder %v1735, 1
          %vm1740 = vcmp.eq.s32.totalorder %v1738, 1
          %v1741 = vsel %vm1739, %v1722, 0.0
          %v1742 = vsel %vm1740, %v1721, 0.0
          %1743 = vrot.lane.b32.xlu0 %v1741, 8
          %v1744 = vpop.permute.xlu0 %1743
          %1745 = vrot.lane.b32.xlu0 %v1742, 8
          %v1746 = vpop.permute.xlu0 %1745
          %v1747 = vadd.s32 %v522, 4294967294
          %vm1748 = vcmp.ge.s32.totalorder %v1747, 0
          %vm1749 = vcmp.lt.s32.totalorder %v1747, 16
          %vm1750 = vmand %vm1748, %vm1749
          %v1751 = vsel %vm1750, 1, 0
          %v1752 = vlaneseq
          %v1753 = vshrl.u32 %v1752, 7
          %v1754 = vsub.s32 0, %v1753
          %v1755 = vrot.slane %v1751, %v1754
          %vm1756 = vcmp.eq.s32.totalorder %v1755, 1
          %v1757 = vsel %vm1756, %v1744, 0.0
          %v1758 = vsel %vm1756, %v1746, 0.0
          %v1759 = vld [vmem:[%s8] sm:$0x1]
          %v1760 = vlaneseq
          %v1761 = vshrl.u32 %v1760, 7
          %v1762 = vsub.s32 0, %v1761
          %v1763 = vrot.slane %v1759, %v1762
          %v1764 = vmul.f32 %v1757, %v1763
          %v1765 = vmul.f32 %v1758, %v1763
          %v1766 = vadd.f32 %v1764, 0.0
          %v1767 = vadd.f32 %v1765, 0.0
          %1768 = vrot.lane.b32.xlu0 %v1741, 4
          %v1769 = vpop.permute.xlu0 %1768
          %1770 = vrot.lane.b32.xlu0 %v1742, 4
          %v1771 = vpop.permute.xlu0 %1770
          %v1772 = vadd.s32 %v522, 4294967295
          %vm1773 = vcmp.ge.s32.totalorder %v1772, 0
          %vm1774 = vcmp.lt.s32.totalorder %v1772, 16
          %vm1775 = vmand %vm1773, %vm1774
          %v1776 = vsel %vm1775, 1, 0
          %v1777 = vlaneseq
          %v1778 = vshrl.u32 %v1777, 7
          %v1779 = vsub.s32 0, %v1778
          %v1780 = vrot.slane %v1776, %v1779
          %vm1781 = vcmp.eq.s32.totalorder %v1780, 1
          %v1782 = vsel %vm1781, %v1769, 0.0
          %v1783 = vsel %vm1781, %v1771, 0.0
          %v1784 = vld [vmem:[%s8 + $0x1] sm:$0x1]
          %v1785 = vlaneseq
          %v1786 = vshrl.u32 %v1785, 7
          %v1787 = vsub.s32 0, %v1786
          %v1788 = vrot.slane %v1784, %v1787
          %v1789 = vmul.f32 %v1782, %v1788
          %v1790 = vmul.f32 %v1783, %v1788
          %v1791 = vadd.f32 %v1766, %v1789
          %v1792 = vadd.f32 %v1767, %v1790
          %v1793 = vld [vmem:[%s8 + $0x2] sm:$0x1]
          %v1794 = vlaneseq
          %v1795 = vshrl.u32 %v1794, 7
          %v1796 = vsub.s32 0, %v1795
          %v1797 = vrot.slane %v1793, %v1796
          %v1798 = vmul.f32 %v1741, %v1797
          %v1799 = vmul.f32 %v1742, %v1797
          %v1800 = vadd.f32 %v1791, %v1798
          %v1801 = vadd.f32 %v1792, %v1799
          %1802 = vrot.lane.b32.xlu0 %v1741, 124
          %v1803 = vpop.permute.xlu0 %1802
          %1804 = vrot.lane.b32.xlu0 %v1742, 124
          %v1805 = vpop.permute.xlu0 %1804
          %v1806 = vadd.s32 %v522, 1
          %vm1807 = vcmp.ge.s32.totalorder %v1806, 0
          %vm1808 = vcmp.lt.s32.totalorder %v1806, 16
          %vm1809 = vmand %vm1807, %vm1808
          %v1810 = vsel %vm1809, 1, 0
          %v1811 = vlaneseq
          %v1812 = vshrl.u32 %v1811, 7
          %v1813 = vsub.s32 0, %v1812
          %v1814 = vrot.slane %v1810, %v1813
          %vm1815 = vcmp.eq.s32.totalorder %v1814, 1
          %v1816 = vsel %vm1815, %v1803, 0.0
          %v1817 = vsel %vm1815, %v1805, 0.0
          %v1818 = vld [vmem:[%s8 + $0x3] sm:$0x1]
          %v1819 = vlaneseq
          %v1820 = vshrl.u32 %v1819, 7
          %v1821 = vsub.s32 0, %v1820
          %v1822 = vrot.slane %v1818, %v1821
          %v1823 = vmul.f32 %v1816, %v1822
          %v1824 = vmul.f32 %v1817, %v1822
          %v1825 = vadd.f32 %v1800, %v1823
          %v1826 = vadd.f32 %v1801, %v1824
          %1827 = vrot.lane.b32.xlu0 %v1741, 120
          %v1828 = vpop.permute.xlu0 %1827
          %1829 = vrot.lane.b32.xlu0 %v1742, 120
          %v1830 = vpop.permute.xlu0 %1829
          %v1831 = vadd.s32 %v522, 2
          %vm1832 = vcmp.ge.s32.totalorder %v1831, 0
          %vm1833 = vcmp.lt.s32.totalorder %v1831, 16
          %vm1834 = vmand %vm1832, %vm1833
          %v1835 = vsel %vm1834, 1, 0
          %v1836 = vlaneseq
          %v1837 = vshrl.u32 %v1836, 7
          %v1838 = vsub.s32 0, %v1837
          %v1839 = vrot.slane %v1835, %v1838
          %vm1840 = vcmp.eq.s32.totalorder %v1839, 1
          %v1841 = vsel %vm1840, %v1828, 0.0
          %v1842 = vsel %vm1840, %v1830, 0.0
          %v1843 = vld [vmem:[%s8 + $0x4] sm:$0x1]
          %v1844 = vlaneseq
          %v1845 = vshrl.u32 %v1844, 7
          %v1846 = vsub.s32 0, %v1845
          %v1847 = vrot.slane %v1843, %v1846
          %v1848 = vmul.f32 %v1841, %v1847
          %v1849 = vmul.f32 %v1842, %v1847
          %v1850 = vadd.f32 %v1825, %v1848
          %v1851 = vadd.f32 %v1826, %v1849
          %v1852 = vrot.slane %v518, 7
          %v1853 = vrot.slane %v519, 7
          %vm1854 = vcmp.lt.s32.totalorder %v1719, 1
          %v1855 = vsel %vm1854, %v1852, %v1853
          %v1856 = vsel %vm1854, %v1853, %v1852
          %v1857 = vadd.s32 %v520, 4294967295
          %v1858 = vadd.s32 %v521, 4294967295
          %vm1859 = vcmp.ge.s32.totalorder %v1857, 0
          %vm1860 = vcmp.ge.s32.totalorder %v1858, 0
          %vm1861 = vcmp.lt.s32.totalorder %v1857, 16
          %vm1862 = vcmp.lt.s32.totalorder %v1858, 16
          %vm1863 = vmand %vm1859, %vm1861
          %vm1864 = vmand %vm1860, %vm1862
          %v1865 = vsel %vm1863, 1, 0
          %v1866 = vsel %vm1864, 1, 0
          %1867 = vset.pattern.permute.xlu0 0
          %1868 = vperm.xlu0 %1867, %v1865
          %v1869 = vpop.permute.xlu0 %1868
          %1870 = vset.pattern.permute.xlu0 0
          %1871 = vperm.xlu0 %1870, %v1866
          %v1872 = vpop.permute.xlu0 %1871
          %vm1873 = vcmp.eq.s32.totalorder %v1869, 1
          %vm1874 = vcmp.eq.s32.totalorder %v1872, 1
          %v1875 = vsel %vm1873, %v1856, 0.0
          %v1876 = vsel %vm1874, %v1855, 0.0
          %1877 = vrot.lane.b32.xlu0 %v1875, 8
          %v1878 = vpop.permute.xlu0 %1877
          %1879 = vrot.lane.b32.xlu0 %v1876, 8
          %v1880 = vpop.permute.xlu0 %1879
          %v1881 = vsel %vm1756, %v1878, 0.0
          %v1882 = vsel %vm1756, %v1880, 0.0
          %v1883 = vld [vmem:[%s8 + $0x5] sm:$0x1]
          %v1884 = vlaneseq
          %v1885 = vshrl.u32 %v1884, 7
          %v1886 = vsub.s32 0, %v1885
          %v1887 = vrot.slane %v1883, %v1886
          %v1888 = vmul.f32 %v1881, %v1887
          %v1889 = vmul.f32 %v1882, %v1887
          %v1890 = vadd.f32 %v1850, %v1888
          %v1891 = vadd.f32 %v1851, %v1889
          %1892 = vrot.lane.b32.xlu0 %v1875, 4
          %v1893 = vpop.permute.xlu0 %1892
          %1894 = vrot.lane.b32.xlu0 %v1876, 4
          %v1895 = vpop.permute.xlu0 %1894
          %v1896 = vsel %vm1781, %v1893, 0.0
          %v1897 = vsel %vm1781, %v1895, 0.0
          %v1898 = vld [vmem:[%s8 + $0x6] sm:$0x1]
          %v1899 = vlaneseq
          %v1900 = vshrl.u32 %v1899, 7
          %v1901 = vsub.s32 0, %v1900
          %v1902 = vrot.slane %v1898, %v1901
          %v1903 = vmul.f32 %v1896, %v1902
          %v1904 = vmul.f32 %v1897, %v1902
          %v1905 = vadd.f32 %v1890, %v1903
          %v1906 = vadd.f32 %v1891, %v1904
          %v1907 = vld [vmem:[%s8 + $0x7] sm:$0x1]
          %v1908 = vlaneseq
          %v1909 = vshrl.u32 %v1908, 7
          %v1910 = vsub.s32 0, %v1909
          %v1911 = vrot.slane %v1907, %v1910
          %v1912 = vmul.f32 %v1875, %v1911
          %v1913 = vmul.f32 %v1876, %v1911
          %v1914 = vadd.f32 %v1905, %v1912
          %v1915 = vadd.f32 %v1906, %v1913
          %1916 = vrot.lane.b32.xlu0 %v1875, 124
          %v1917 = vpop.permute.xlu0 %1916
          %1918 = vrot.lane.b32.xlu0 %v1876, 124
          %v1919 = vpop.permute.xlu0 %1918
          %v1920 = vsel %vm1815, %v1917, 0.0
          %v1921 = vsel %vm1815, %v1919, 0.0
          %v1922 = vld [vmem:[%s8 + $0x8] sm:$0x1]
          %v1923 = vlaneseq
          %v1924 = vshrl.u32 %v1923, 7
          %v1925 = vsub.s32 0, %v1924
          %v1926 = vrot.slane %v1922, %v1925
          %v1927 = vmul.f32 %v1920, %v1926
          %v1928 = vmul.f32 %v1921, %v1926
          %v1929 = vadd.f32 %v1914, %v1927
          %v1930 = vadd.f32 %v1915, %v1928
          %1931 = vrot.lane.b32.xlu0 %v1875, 120
          %v1932 = vpop.permute.xlu0 %1931
          %1933 = vrot.lane.b32.xlu0 %v1876, 120
          %v1934 = vpop.permute.xlu0 %1933
          %v1935 = vsel %vm1840, %v1932, 0.0
          %v1936 = vsel %vm1840, %v1934, 0.0
          %v1937 = vld [vmem:[%s8 + $0x9] sm:$0x1]
          %v1938 = vlaneseq
          %v1939 = vshrl.u32 %v1938, 7
          %v1940 = vsub.s32 0, %v1939
          %v1941 = vrot.slane %v1937, %v1940
          %v1942 = vmul.f32 %v1935, %v1941
          %v1943 = vmul.f32 %v1936, %v1941
          %v1944 = vadd.f32 %v1929, %v1942
          %v1945 = vadd.f32 %v1930, %v1943
          %1946 = vrot.lane.b32.xlu0 %v518, 8
          %v1947 = vpop.permute.xlu0 %1946
          %1948 = vrot.lane.b32.xlu0 %v519, 8
          %v1949 = vpop.permute.xlu0 %1948
          %v1950 = vsel %vm1756, %v1947, 0.0
          %v1951 = vsel %vm1756, %v1949, 0.0
          %v1952 = vld [vmem:[%s8 + $0xa] sm:$0x1]
          %v1953 = vlaneseq
          %v1954 = vshrl.u32 %v1953, 7
          %v1955 = vsub.s32 0, %v1954
          %v1956 = vrot.slane %v1952, %v1955
          %v1957 = vmul.f32 %v1950, %v1956
          %v1958 = vmul.f32 %v1951, %v1956
          %v1959 = vadd.f32 %v1944, %v1957
          %v1960 = vadd.f32 %v1945, %v1958
          %1961 = vrot.lane.b32.xlu0 %v518, 4
          %v1962 = vpop.permute.xlu0 %1961
          %1963 = vrot.lane.b32.xlu0 %v519, 4
          %v1964 = vpop.permute.xlu0 %1963
          %v1965 = vsel %vm1781, %v1962, 0.0
          %v1966 = vsel %vm1781, %v1964, 0.0
          %v1967 = vld [vmem:[%s8 + $0xb] sm:$0x1]
          %v1968 = vlaneseq
          %v1969 = vshrl.u32 %v1968, 7
          %v1970 = vsub.s32 0, %v1969
          %v1971 = vrot.slane %v1967, %v1970
          %v1972 = vmul.f32 %v1965, %v1971
          %v1973 = vmul.f32 %v1966, %v1971
          %v1974 = vadd.f32 %v1959, %v1972
          %v1975 = vadd.f32 %v1960, %v1973
          %v1976 = vld [vmem:[%s8 + $0xc] sm:$0x1]
          %v1977 = vlaneseq
          %v1978 = vshrl.u32 %v1977, 7
          %v1979 = vsub.s32 0, %v1978
          %v1980 = vrot.slane %v1976, %v1979
          %v1981 = vmul.f32 %v518, %v1980
          %v1982 = vmul.f32 %v519, %v1980
          %v1983 = vadd.f32 %v1974, %v1981
          %v1984 = vadd.f32 %v1975, %v1982
          %1985 = vrot.lane.b32.xlu0 %v518, 124
          %v1986 = vpop.permute.xlu0 %1985
          %1987 = vrot.lane.b32.xlu0 %v519, 124
          %v1988 = vpop.permute.xlu0 %1987
          %v1989 = vsel %vm1815, %v1986, 0.0
          %v1990 = vsel %vm1815, %v1988, 0.0
          %v1991 = vld [vmem:[%s8 + $0xd] sm:$0x1]
          %v1992 = vlaneseq
          %v1993 = vshrl.u32 %v1992, 7
          %v1994 = vsub.s32 0, %v1993
          %v1995 = vrot.slane %v1991, %v1994
          %v1996 = vmul.f32 %v1989, %v1995
          %v1997 = vmul.f32 %v1990, %v1995
          %v1998 = vadd.f32 %v1983, %v1996
          %v1999 = vadd.f32 %v1984, %v1997
          %2000 = vrot.lane.b32.xlu0 %v518, 120
          %v2001 = vpop.permute.xlu0 %2000
          %2002 = vrot.lane.b32.xlu0 %v519, 120
          %v2003 = vpop.permute.xlu0 %2002
          %v2004 = vsel %vm1840, %v2001, 0.0
          %v2005 = vsel %vm1840, %v2003, 0.0
          %v2006 = vld [vmem:[%s8 + $0xe] sm:$0x1]
          %v2007 = vlaneseq
          %v2008 = vshrl.u32 %v2007, 7
          %v2009 = vsub.s32 0, %v2008
          %v2010 = vrot.slane %v2006, %v2009
          %v2011 = vmul.f32 %v2004, %v2010
          %v2012 = vmul.f32 %v2005, %v2010
          %v2013 = vadd.f32 %v1998, %v2011
          %v2014 = vadd.f32 %v1999, %v2012
          %v2015 = vrot.slane %v518, 1
          %v2016 = vrot.slane %v519, 1
          %vm2017 = vcmp.lt.s32.totalorder %v1719, 7
          %v2018 = vsel %vm2017, %v2015, %v2016
          %v2019 = vsel %vm2017, %v2016, %v2015
          %v2020 = vadd.s32 %v520, 1
          %v2021 = vadd.s32 %v521, 1
          %vm2022 = vcmp.ge.s32.totalorder %v2020, 0
          %vm2023 = vcmp.ge.s32.totalorder %v2021, 0
          %vm2024 = vcmp.lt.s32.totalorder %v2020, 16
          %vm2025 = vcmp.lt.s32.totalorder %v2021, 16
          %vm2026 = vmand %vm2022, %vm2024
          %vm2027 = vmand %vm2023, %vm2025
          %v2028 = vsel %vm2026, 1, 0
          %v2029 = vsel %vm2027, 1, 0
          %2030 = vset.pattern.permute.xlu0 0
          %2031 = vperm.xlu0 %2030, %v2028
          %v2032 = vpop.permute.xlu0 %2031
          %2033 = vset.pattern.permute.xlu0 0
          %2034 = vperm.xlu0 %2033, %v2029
          %v2035 = vpop.permute.xlu0 %2034
          %vm2036 = vcmp.eq.s32.totalorder %v2032, 1
          %vm2037 = vcmp.eq.s32.totalorder %v2035, 1
          %v2038 = vsel %vm2036, %v2018, 0.0
          %v2039 = vsel %vm2037, %v2019, 0.0
          %2040 = vrot.lane.b32.xlu0 %v2038, 8
          %v2041 = vpop.permute.xlu0 %2040
          %2042 = vrot.lane.b32.xlu0 %v2039, 8
          %v2043 = vpop.permute.xlu0 %2042
          %v2044 = vsel %vm1756, %v2041, 0.0
          %v2045 = vsel %vm1756, %v2043, 0.0
          %v2046 = vld [vmem:[%s8 + $0xf] sm:$0x1]
          %v2047 = vlaneseq
          %v2048 = vshrl.u32 %v2047, 7
          %v2049 = vsub.s32 0, %v2048
          %v2050 = vrot.slane %v2046, %v2049
          %v2051 = vmul.f32 %v2044, %v2050
          %v2052 = vmul.f32 %v2045, %v2050
          %v2053 = vadd.f32 %v2013, %v2051
          %v2054 = vadd.f32 %v2014, %v2052
          %2055 = vrot.lane.b32.xlu0 %v2038, 4
          %v2056 = vpop.permute.xlu0 %2055
          %2057 = vrot.lane.b32.xlu0 %v2039, 4
          %v2058 = vpop.permute.xlu0 %2057
          %v2059 = vsel %vm1781, %v2056, 0.0
          %v2060 = vsel %vm1781, %v2058, 0.0
          %v2061 = vld [vmem:[%s8 + $0x10] sm:$0x1]
          %v2062 = vlaneseq
          %v2063 = vshrl.u32 %v2062, 7
          %v2064 = vsub.s32 0, %v2063
          %v2065 = vrot.slane %v2061, %v2064
          %v2066 = vmul.f32 %v2059, %v2065
          %v2067 = vmul.f32 %v2060, %v2065
          %v2068 = vadd.f32 %v2053, %v2066
          %v2069 = vadd.f32 %v2054, %v2067
          %v2070 = vld [vmem:[%s8 + $0x11] sm:$0x1]
          %v2071 = vlaneseq
          %v2072 = vshrl.u32 %v2071, 7
          %v2073 = vsub.s32 0, %v2072
          %v2074 = vrot.slane %v2070, %v2073
          %v2075 = vmul.f32 %v2038, %v2074
          %v2076 = vmul.f32 %v2039, %v2074
          %v2077 = vadd.f32 %v2068, %v2075
          %v2078 = vadd.f32 %v2069, %v2076
          %2079 = vrot.lane.b32.xlu0 %v2038, 124
          %v2080 = vpop.permute.xlu0 %2079
          %2081 = vrot.lane.b32.xlu0 %v2039, 124
          %v2082 = vpop.permute.xlu0 %2081
          %v2083 = vsel %vm1815, %v2080, 0.0
          %v2084 = vsel %vm1815, %v2082, 0.0
          %v2085 = vld [vmem:[%s8 + $0x12] sm:$0x1]
          %v2086 = vlaneseq
          %v2087 = vshrl.u32 %v2086, 7
          %v2088 = vsub.s32 0, %v2087
          %v2089 = vrot.slane %v2085, %v2088
          %v2090 = vmul.f32 %v2083, %v2089
          %v2091 = vmul.f32 %v2084, %v2089
          %v2092 = vadd.f32 %v2077, %v2090
          %v2093 = vadd.f32 %v2078, %v2091
          %2094 = vrot.lane.b32.xlu0 %v2038, 120
          %v2095 = vpop.permute.xlu0 %2094
          %2096 = vrot.lane.b32.xlu0 %v2039, 120
          %v2097 = vpop.permute.xlu0 %2096
          %v2098 = vsel %vm1840, %v2095, 0.0
          %v2099 = vsel %vm1840, %v2097, 0.0
          %v2100 = vld [vmem:[%s8 + $0x13] sm:$0x1]
          %v2101 = vlaneseq
          %v2102 = vshrl.u32 %v2101, 7
          %v2103 = vsub.s32 0, %v2102
          %v2104 = vrot.slane %v2100, %v2103
          %v2105 = vmul.f32 %v2098, %v2104
          %v2106 = vmul.f32 %v2099, %v2104
          %v2107 = vadd.f32 %v2092, %v2105
          %v2108 = vadd.f32 %v2093, %v2106
          %v2109 = vrot.slane %v518, 2
          %v2110 = vrot.slane %v519, 2
          %vm2111 = vcmp.lt.s32.totalorder %v1719, 6
          %v2112 = vsel %vm2111, %v2109, %v2110
          %v2113 = vsel %vm2111, %v2110, %v2109
          %v2114 = vadd.s32 %v520, 2
          %v2115 = vadd.s32 %v521, 2
          %vm2116 = vcmp.ge.s32.totalorder %v2114, 0
          %vm2117 = vcmp.ge.s32.totalorder %v2115, 0
          %vm2118 = vcmp.lt.s32.totalorder %v2114, 16
          %vm2119 = vcmp.lt.s32.totalorder %v2115, 16
          %vm2120 = vmand %vm2116, %vm2118
          %vm2121 = vmand %vm2117, %vm2119
          %v2122 = vsel %vm2120, 1, 0
          %v2123 = vsel %vm2121, 1, 0
          %2124 = vset.pattern.permute.xlu0 0
          %2125 = vperm.xlu0 %2124, %v2122
          %v2126 = vpop.permute.xlu0 %2125
          %2127 = vset.pattern.permute.xlu0 0
          %2128 = vperm.xlu0 %2127, %v2123
          %v2129 = vpop.permute.xlu0 %2128
          %vm2130 = vcmp.eq.s32.totalorder %v2126, 1
          %vm2131 = vcmp.eq.s32.totalorder %v2129, 1
          %v2132 = vsel %vm2130, %v2112, 0.0
          %v2133 = vsel %vm2131, %v2113, 0.0
          %2134 = vrot.lane.b32.xlu0 %v2132, 8
          %v2135 = vpop.permute.xlu0 %2134
          %2136 = vrot.lane.b32.xlu0 %v2133, 8
          %v2137 = vpop.permute.xlu0 %2136
          %v2138 = vsel %vm1756, %v2135, 0.0
          %v2139 = vsel %vm1756, %v2137, 0.0
          %v2140 = vld [vmem:[%s8 + $0x14] sm:$0x1]
          %v2141 = vlaneseq
          %v2142 = vshrl.u32 %v2141, 7
          %v2143 = vsub.s32 0, %v2142
          %v2144 = vrot.slane %v2140, %v2143
          %v2145 = vmul.f32 %v2138, %v2144
          %v2146 = vmul.f32 %v2139, %v2144
          %v2147 = vadd.f32 %v2107, %v2145
          %v2148 = vadd.f32 %v2108, %v2146
          %2149 = vrot.lane.b32.xlu0 %v2132, 4
          %v2150 = vpop.permute.xlu0 %2149
          %2151 = vrot.lane.b32.xlu0 %v2133, 4
          %v2152 = vpop.permute.xlu0 %2151
          %v2153 = vsel %vm1781, %v2150, 0.0
          %v2154 = vsel %vm1781, %v2152, 0.0
          %v2155 = vld [vmem:[%s8 + $0x15] sm:$0x1]
          %v2156 = vlaneseq
          %v2157 = vshrl.u32 %v2156, 7
          %v2158 = vsub.s32 0, %v2157
          %v2159 = vrot.slane %v2155, %v2158
          %v2160 = vmul.f32 %v2153, %v2159
          %v2161 = vmul.f32 %v2154, %v2159
          %v2162 = vadd.f32 %v2147, %v2160
          %v2163 = vadd.f32 %v2148, %v2161
          %v2164 = vld [vmem:[%s8 + $0x16] sm:$0x1]
          %v2165 = vlaneseq
          %v2166 = vshrl.u32 %v2165, 7
          %v2167 = vsub.s32 0, %v2166
          %v2168 = vrot.slane %v2164, %v2167
          %v2169 = vmul.f32 %v2132, %v2168
          %v2170 = vmul.f32 %v2133, %v2168
          %v2171 = vadd.f32 %v2162, %v2169
          %v2172 = vadd.f32 %v2163, %v2170
          %2173 = vrot.lane.b32.xlu0 %v2132, 124
          %v2174 = vpop.permute.xlu0 %2173
          %2175 = vrot.lane.b32.xlu0 %v2133, 124
          %v2176 = vpop.permute.xlu0 %2175
          %v2177 = vsel %vm1815, %v2174, 0.0
          %v2178 = vsel %vm1815, %v2176, 0.0
          %v2179 = vld [vmem:[%s8 + $0x17] sm:$0x1]
          %v2180 = vlaneseq
          %v2181 = vshrl.u32 %v2180, 7
          %v2182 = vsub.s32 0, %v2181
          %v2183 = vrot.slane %v2179, %v2182
          %v2184 = vmul.f32 %v2177, %v2183
          %v2185 = vmul.f32 %v2178, %v2183
          %v2186 = vadd.f32 %v2171, %v2184
          %v2187 = vadd.f32 %v2172, %v2185
          %2188 = vrot.lane.b32.xlu0 %v2132, 120
          %v2189 = vpop.permute.xlu0 %2188
          %2190 = vrot.lane.b32.xlu0 %v2133, 120
          %v2191 = vpop.permute.xlu0 %2190
          %v2192 = vsel %vm1840, %v2189, 0.0
          %v2193 = vsel %vm1840, %v2191, 0.0
          %v2194 = vld [vmem:[%s8 + $0x18] sm:$0x1]
          %v2195 = vlaneseq
          %v2196 = vshrl.u32 %v2195, 7
          %v2197 = vsub.s32 0, %v2196
          %v2198 = vrot.slane %v2194, %v2197
          %v2199 = vmul.f32 %v2192, %v2198
          %v2200 = vmul.f32 %v2193, %v2198
          %v2201 = vadd.f32 %v2186, %v2199
          %v2202 = vadd.f32 %v2187, %v2200
          %v2203 = vld [vmem:[%s9 + $0x3] sm:$0x1]
          %v2204 = vlaneseq
          %v2205 = vshrl.u32 %v2204, 7
          %v2206 = vsub.s32 0, %v2205
          %v2207 = vrot.slane %v2203, %v2206
          %v2208 = vmul.f32 %v2201, %v2207
          %v2209 = vmul.f32 %v2202, %v2207
          %2210 = vrot.lane.b32.xlu0 %v2201, 1
          %v2211 = vpop.permute.xlu0 %2210
          %2212 = vrot.lane.b32.xlu0 %v2202, 1
          %v2213 = vpop.permute.xlu0 %2212
          %v2214 = vld [vmem:[%s9 + $0x4] sm:$0x1]
          %v2215 = vlaneseq
          %v2216 = vshrl.u32 %v2215, 7
          %v2217 = vsub.s32 0, %v2216
          %v2218 = vrot.slane %v2214, %v2217
          %v2219 = vmul.f32 %v2211, %v2218
          %v2220 = vmul.f32 %v2213, %v2218
          %v2221 = vadd.f32 %v2208, %v2219
          %v2222 = vadd.f32 %v2209, %v2220
          %2223 = vrot.lane.b32.xlu0 %v2201, 127
          %v2224 = vpop.permute.xlu0 %2223
          %2225 = vrot.lane.b32.xlu0 %v2202, 127
          %v2226 = vpop.permute.xlu0 %2225
          %v2227 = vld [vmem:[%s9 + $0x2] sm:$0x1]
          %v2228 = vlaneseq
          %v2229 = vshrl.u32 %v2228, 7
          %v2230 = vsub.s32 0, %v2229
          %v2231 = vrot.slane %v2227, %v2230
          %v2232 = vmul.f32 %v2224, %v2231
          %v2233 = vmul.f32 %v2226, %v2231
          %v2234 = vadd.f32 %v2221, %v2232
          %v2235 = vadd.f32 %v2222, %v2233
          %2236 = vrot.lane.b32.xlu0 %v2201, 2
          %v2237 = vpop.permute.xlu0 %2236
          %2238 = vrot.lane.b32.xlu0 %v2202, 2
          %v2239 = vpop.permute.xlu0 %2238
          %v2240 = vld [vmem:[%s9 + $0x5] sm:$0x1]
          %v2241 = vlaneseq
          %v2242 = vshrl.u32 %v2241, 7
          %v2243 = vsub.s32 0, %v2242
          %v2244 = vrot.slane %v2240, %v2243
          %v2245 = vmul.f32 %v2237, %v2244
          %v2246 = vmul.f32 %v2239, %v2244
          %v2247 = vadd.f32 %v2234, %v2245
          %v2248 = vadd.f32 %v2235, %v2246
          %2249 = vrot.lane.b32.xlu0 %v2201, 126
          %v2250 = vpop.permute.xlu0 %2249
          %2251 = vrot.lane.b32.xlu0 %v2202, 126
          %v2252 = vpop.permute.xlu0 %2251
          %v2253 = vld [vmem:[%s9 + $0x1] sm:$0x1]
          %v2254 = vlaneseq
          %v2255 = vshrl.u32 %v2254, 7
          %v2256 = vsub.s32 0, %v2255
          %v2257 = vrot.slane %v2253, %v2256
          %v2258 = vmul.f32 %v2250, %v2257
          %v2259 = vmul.f32 %v2252, %v2257
          %v2260 = vadd.f32 %v2247, %v2258
          %v2261 = vadd.f32 %v2248, %v2259
          %2262 = vrot.lane.b32.xlu0 %v2201, 3
          %v2263 = vpop.permute.xlu0 %2262
          %2264 = vrot.lane.b32.xlu0 %v2202, 3
          %v2265 = vpop.permute.xlu0 %2264
          %v2266 = vld [vmem:[%s9 + $0x6] sm:$0x1]
          %v2267 = vlaneseq
          %v2268 = vshrl.u32 %v2267, 7
          %v2269 = vsub.s32 0, %v2268
          %v2270 = vrot.slane %v2266, %v2269
          %v2271 = vmul.f32 %v2263, %v2270
          %v2272 = vmul.f32 %v2265, %v2270
          %v2273 = vadd.f32 %v2260, %v2271
          %v2274 = vadd.f32 %v2261, %v2272
          %2275 = vrot.lane.b32.xlu0 %v2201, 125
          %v2276 = vpop.permute.xlu0 %2275
          %2277 = vrot.lane.b32.xlu0 %v2202, 125
          %v2278 = vpop.permute.xlu0 %2277
          %v2279 = vld [vmem:[%s9] sm:$0x1]
          %v2280 = vlaneseq
          %v2281 = vshrl.u32 %v2280, 7
          %v2282 = vsub.s32 0, %v2281
          %v2283 = vrot.slane %v2279, %v2282
          %v2284 = vmul.f32 %v2276, %v2283
          %v2285 = vmul.f32 %v2278, %v2283
          %v2286 = vadd.f32 %v2273, %v2284
          %v2287 = vadd.f32 %v2274, %v2285
          %2288 = vrot.lane.b32.xlu0 %v2286, 4
          %v2289 = vpop.permute.xlu0 %2288
          %2290 = vrot.lane.b32.xlu0 %v2287, 4
          %v2291 = vpop.permute.xlu0 %2290
          %v2292 = vadd.f32 %v2286, %v2289
          %v2293 = vadd.f32 %v2287, %v2291
          %2294 = vrot.lane.b32.xlu0 %v2292, 8
          %v2295 = vpop.permute.xlu0 %2294
          %2296 = vrot.lane.b32.xlu0 %v2293, 8
          %v2297 = vpop.permute.xlu0 %2296
          %v2298 = vadd.f32 %v2292, %v2295
          %v2299 = vadd.f32 %v2293, %v2297
          %2300 = vrot.lane.b32.xlu0 %v2298, 16
          %v2301 = vpop.permute.xlu0 %2300
          %2302 = vrot.lane.b32.xlu0 %v2299, 16
          %v2303 = vpop.permute.xlu0 %2302
          %v2304 = vadd.f32 %v2298, %v2301
          %v2305 = vadd.f32 %v2299, %v2303
          %2306 = vrot.lane.b32.xlu0 %v2304, 32
          %v2307 = vpop.permute.xlu0 %2306
          %2308 = vrot.lane.b32.xlu0 %v2305, 32
          %v2309 = vpop.permute.xlu0 %2308
          %v2310 = vadd.f32 %v2304, %v2307
          %v2311 = vadd.f32 %v2305, %v2309
          %2312 = vrot.lane.b32.xlu0 %v2310, 64
          %v2313 = vpop.permute.xlu0 %2312
          %2314 = vrot.lane.b32.xlu0 %v2311, 64
          %v2315 = vpop.permute.xlu0 %2314
          %v2316 = vadd.f32 %v2310, %v2313
          %v2317 = vadd.f32 %v2311, %v2315
          %v2318 = vadd.f32 %v2316, %v2317
          %v2319 = vrot.slane %v2318, 4
          %v2320 = vadd.f32 %v2318, %v2319
          %v2321 = vrot.slane %v2320, 2
          %v2322 = vadd.f32 %v2320, %v2321
          %v2323 = vrot.slane %v2322, 1
          %v2324 = vadd.f32 %v2322, %v2323
          %v2325 = vmul.f32 %v2324, 0.001953125
          %v2326 = vsub.f32 %v2286, %v2325
          %v2327 = vsub.f32 %v2287, %v2325
          %v2328 = vmul.f32 %v2326, %v2326
          %v2329 = vmul.f32 %v2327, %v2327
          %2330 = vrot.lane.b32.xlu0 %v2328, 4
          %v2331 = vpop.permute.xlu0 %2330
          %2332 = vrot.lane.b32.xlu0 %v2329, 4
          %v2333 = vpop.permute.xlu0 %2332
          %v2334 = vadd.f32 %v2328, %v2331
          %v2335 = vadd.f32 %v2329, %v2333
          %2336 = vrot.lane.b32.xlu0 %v2334, 8
          %v2337 = vpop.permute.xlu0 %2336
          %2338 = vrot.lane.b32.xlu0 %v2335, 8
          %v2339 = vpop.permute.xlu0 %2338
          %v2340 = vadd.f32 %v2334, %v2337
          %v2341 = vadd.f32 %v2335, %v2339
          %2342 = vrot.lane.b32.xlu0 %v2340, 16
          %v2343 = vpop.permute.xlu0 %2342
          %2344 = vrot.lane.b32.xlu0 %v2341, 16
          %v2345 = vpop.permute.xlu0 %2344
          %v2346 = vadd.f32 %v2340, %v2343
          %v2347 = vadd.f32 %v2341, %v2345
          %2348 = vrot.lane.b32.xlu0 %v2346, 32
          %v2349 = vpop.permute.xlu0 %2348
          %2350 = vrot.lane.b32.xlu0 %v2347, 32
          %v2351 = vpop.permute.xlu0 %2350
          %v2352 = vadd.f32 %v2346, %v2349
          %v2353 = vadd.f32 %v2347, %v2351
          %2354 = vrot.lane.b32.xlu0 %v2352, 64
          %v2355 = vpop.permute.xlu0 %2354
          %2356 = vrot.lane.b32.xlu0 %v2353, 64
          %v2357 = vpop.permute.xlu0 %2356
          %v2358 = vadd.f32 %v2352, %v2355
          %v2359 = vadd.f32 %v2353, %v2357
          %v2360 = vadd.f32 %v2358, %v2359
          %v2361 = vrot.slane %v2360, 4
          %v2362 = vadd.f32 %v2360, %v2361
          %v2363 = vrot.slane %v2362, 2
          %v2364 = vadd.f32 %v2362, %v2363
          %v2365 = vrot.slane %v2364, 1
          %v2366 = vadd.f32 %v2364, %v2365
          %v2367 = vmul.f32 %v2366, 0.001953125
          %v2368 = vadd.f32 %v2367, 1e-05
          %v2369 = vrsqrt.pop %v2368
          %v2370 = vmul.f32 %v2326, %v2369
          %v2371 = vmul.f32 %v2327, %v2369
          %v2372 = vmax.f32 %v2370, 0.0
          %v2373 = vmax.f32 %v2371, 0.0
          %v2374 = vrot.slane %v2372, 6
          %v2375 = vrot.slane %v2373, 6
          %v2376 = vsel %vm1720, %v2374, %v2375
          %v2377 = vsel %vm1720, %v2375, %v2374
          %v2378 = vsel %vm1739, %v2377, 0.0
          %v2379 = vsel %vm1740, %v2376, 0.0
          %2380 = vrot.lane.b32.xlu0 %v2378, 8
          %v2381 = vpop.permute.xlu0 %2380
          %2382 = vrot.lane.b32.xlu0 %v2379, 8
          %v2383 = vpop.permute.xlu0 %2382
          %v2384 = vsel %vm1756, %v2381, 0.0
          %v2385 = vsel %vm1756, %v2383, 0.0
          %v2386 = vld [vmem:[%s10] sm:$0x1]
          %v2387 = vlaneseq
          %v2388 = vshrl.u32 %v2387, 7
          %v2389 = vsub.s32 0, %v2388
          %v2390 = vrot.slane %v2386, %v2389
          %v2391 = vmul.f32 %v2384, %v2390
          %v2392 = vmul.f32 %v2385, %v2390
          %v2393 = vadd.f32 %v2391, 0.0
          %v2394 = vadd.f32 %v2392, 0.0
          %2395 = vrot.lane.b32.xlu0 %v2378, 4
          %v2396 = vpop.permute.xlu0 %2395
          %2397 = vrot.lane.b32.xlu0 %v2379, 4
          %v2398 = vpop.permute.xlu0 %2397
          %v2399 = vsel %vm1781, %v2396, 0.0
          %v2400 = vsel %vm1781, %v2398, 0.0
          %v2401 = vld [vmem:[%s10 + $0x1] sm:$0x1]
          %v2402 = vlaneseq
          %v2403 = vshrl.u32 %v2402, 7
          %v2404 = vsub.s32 0, %v2403
          %v2405 = vrot.slane %v2401, %v2404
          %v2406 = vmul.f32 %v2399, %v2405
          %v2407 = vmul.f32 %v2400, %v2405
          %v2408 = vadd.f32 %v2393, %v2406
          %v2409 = vadd.f32 %v2394, %v2407
          %v2410 = vld [vmem:[%s10 + $0x2] sm:$0x1]
          %v2411 = vlaneseq
          %v2412 = vshrl.u32 %v2411, 7
          %v2413 = vsub.s32 0, %v2412
          %v2414 = vrot.slane %v2410, %v2413
          %v2415 = vmul.f32 %v2378, %v2414
          %v2416 = vmul.f32 %v2379, %v2414
          %v2417 = vadd.f32 %v2408, %v2415
          %v2418 = vadd.f32 %v2409, %v2416
          %2419 = vrot.lane.b32.xlu0 %v2378, 124
          %v2420 = vpop.permute.xlu0 %2419
          %2421 = vrot.lane.b32.xlu0 %v2379, 124
          %v2422 = vpop.permute.xlu0 %2421
          %v2423 = vsel %vm1815, %v2420, 0.0
          %v2424 = vsel %vm1815, %v2422, 0.0
          %v2425 = vld [vmem:[%s10 + $0x3] sm:$0x1]
          %v2426 = vlaneseq
          %v2427 = vshrl.u32 %v2426, 7
          %v2428 = vsub.s32 0, %v2427
          %v2429 = vrot.slane %v2425, %v2428
          %v2430 = vmul.f32 %v2423, %v2429
          %v2431 = vmul.f32 %v2424, %v2429
          %v2432 = vadd.f32 %v2417, %v2430
          %v2433 = vadd.f32 %v2418, %v2431
          %2434 = vrot.lane.b32.xlu0 %v2378, 120
          %v2435 = vpop.permute.xlu0 %2434
          %2436 = vrot.lane.b32.xlu0 %v2379, 120
          %v2437 = vpop.permute.xlu0 %2436
          %v2438 = vsel %vm1840, %v2435, 0.0
          %v2439 = vsel %vm1840, %v2437, 0.0
          %v2440 = vld [vmem:[%s10 + $0x4] sm:$0x1]
          %v2441 = vlaneseq
          %v2442 = vshrl.u32 %v2441, 7
          %v2443 = vsub.s32 0, %v2442
          %v2444 = vrot.slane %v2440, %v2443
          %v2445 = vmul.f32 %v2438, %v2444
          %v2446 = vmul.f32 %v2439, %v2444
          %v2447 = vadd.f32 %v2432, %v2445
          %v2448 = vadd.f32 %v2433, %v2446
          %v2449 = vrot.slane %v2372, 7
          %v2450 = vrot.slane %v2373, 7
          %v2451 = vsel %vm1854, %v2449, %v2450
          %v2452 = vsel %vm1854, %v2450, %v2449
          %v2453 = vsel %vm1873, %v2452, 0.0
          %v2454 = vsel %vm1874, %v2451, 0.0
          %2455 = vrot.lane.b32.xlu0 %v2453, 8
          %v2456 = vpop.permute.xlu0 %2455
          %2457 = vrot.lane.b32.xlu0 %v2454, 8
          %v2458 = vpop.permute.xlu0 %2457
          %v2459 = vsel %vm1756, %v2456, 0.0
          %v2460 = vsel %vm1756, %v2458, 0.0
          %v2461 = vld [vmem:[%s10 + $0x5] sm:$0x1]
          %v2462 = vlaneseq
          %v2463 = vshrl.u32 %v2462, 7
          %v2464 = vsub.s32 0, %v2463
          %v2465 = vrot.slane %v2461, %v2464
          %v2466 = vmul.f32 %v2459, %v2465
          %v2467 = vmul.f32 %v2460, %v2465
          %v2468 = vadd.f32 %v2447, %v2466
          %v2469 = vadd.f32 %v2448, %v2467
          %2470 = vrot.lane.b32.xlu0 %v2453, 4
          %v2471 = vpop.permute.xlu0 %2470
          %2472 = vrot.lane.b32.xlu0 %v2454, 4
          %v2473 = vpop.permute.xlu0 %2472
          %v2474 = vsel %vm1781, %v2471, 0.0
          %v2475 = vsel %vm1781, %v2473, 0.0
          %v2476 = vld [vmem:[%s10 + $0x6] sm:$0x1]
          %v2477 = vlaneseq
          %v2478 = vshrl.u32 %v2477, 7
          %v2479 = vsub.s32 0, %v2478
          %v2480 = vrot.slane %v2476, %v2479
          %v2481 = vmul.f32 %v2474, %v2480
          %v2482 = vmul.f32 %v2475, %v2480
          %v2483 = vadd.f32 %v2468, %v2481
          %v2484 = vadd.f32 %v2469, %v2482
          %v2485 = vld [vmem:[%s10 + $0x7] sm:$0x1]
          %v2486 = vlaneseq
          %v2487 = vshrl.u32 %v2486, 7
          %v2488 = vsub.s32 0, %v2487
          %v2489 = vrot.slane %v2485, %v2488
          %v2490 = vmul.f32 %v2453, %v2489
          %v2491 = vmul.f32 %v2454, %v2489
          %v2492 = vadd.f32 %v2483, %v2490
          %v2493 = vadd.f32 %v2484, %v2491
          %2494 = vrot.lane.b32.xlu0 %v2453, 124
          %v2495 = vpop.permute.xlu0 %2494
          %2496 = vrot.lane.b32.xlu0 %v2454, 124
          %v2497 = vpop.permute.xlu0 %2496
          %v2498 = vsel %vm1815, %v2495, 0.0
          %v2499 = vsel %vm1815, %v2497, 0.0
          %v2500 = vld [vmem:[%s10 + $0x8] sm:$0x1]
          %v2501 = vlaneseq
          %v2502 = vshrl.u32 %v2501, 7
          %v2503 = vsub.s32 0, %v2502
          %v2504 = vrot.slane %v2500, %v2503
          %v2505 = vmul.f32 %v2498, %v2504
          %v2506 = vmul.f32 %v2499, %v2504
          %v2507 = vadd.f32 %v2492, %v2505
          %v2508 = vadd.f32 %v2493, %v2506
          %2509 = vrot.lane.b32.xlu0 %v2453, 120
          %v2510 = vpop.permute.xlu0 %2509
          %2511 = vrot.lane.b32.xlu0 %v2454, 120
          %v2512 = vpop.permute.xlu0 %2511
          %v2513 = vsel %vm1840, %v2510, 0.0
          %v2514 = vsel %vm1840, %v2512, 0.0
          %v2515 = vld [vmem:[%s10 + $0x9] sm:$0x1]
          %v2516 = vlaneseq
          %v2517 = vshrl.u32 %v2516, 7
          %v2518 = vsub.s32 0, %v2517
          %v2519 = vrot.slane %v2515, %v2518
          %v2520 = vmul.f32 %v2513, %v2519
          %v2521 = vmul.f32 %v2514, %v2519
          %v2522 = vadd.f32 %v2507, %v2520
          %v2523 = vadd.f32 %v2508, %v2521
          %2524 = vrot.lane.b32.xlu0 %v2372, 8
          %v2525 = vpop.permute.xlu0 %2524
          %2526 = vrot.lane.b32.xlu0 %v2373, 8
          %v2527 = vpop.permute.xlu0 %2526
          %v2528 = vsel %vm1756, %v2525, 0.0
          %v2529 = vsel %vm1756, %v2527, 0.0
          %v2530 = vld [vmem:[%s10 + $0xa] sm:$0x1]
          %v2531 = vlaneseq
          %v2532 = vshrl.u32 %v2531, 7
          %v2533 = vsub.s32 0, %v2532
          %v2534 = vrot.slane %v2530, %v2533
          %v2535 = vmul.f32 %v2528, %v2534
          %v2536 = vmul.f32 %v2529, %v2534
          %v2537 = vadd.f32 %v2522, %v2535
          %v2538 = vadd.f32 %v2523, %v2536
          %2539 = vrot.lane.b32.xlu0 %v2372, 4
          %v2540 = vpop.permute.xlu0 %2539
          %2541 = vrot.lane.b32.xlu0 %v2373, 4
          %v2542 = vpop.permute.xlu0 %2541
          %v2543 = vsel %vm1781, %v2540, 0.0
          %v2544 = vsel %vm1781, %v2542, 0.0
          %v2545 = vld [vmem:[%s10 + $0xb] sm:$0x1]
          %v2546 = vlaneseq
          %v2547 = vshrl.u32 %v2546, 7
          %v2548 = vsub.s32 0, %v2547
          %v2549 = vrot.slane %v2545, %v2548
          %v2550 = vmul.f32 %v2543, %v2549
          %v2551 = vmul.f32 %v2544, %v2549
          %v2552 = vadd.f32 %v2537, %v2550
          %v2553 = vadd.f32 %v2538, %v2551
          %v2554 = vld [vmem:[%s10 + $0xc] sm:$0x1]
          %v2555 = vlaneseq
          %v2556 = vshrl.u32 %v2555, 7
          %v2557 = vsub.s32 0, %v2556
          %v2558 = vrot.slane %v2554, %v2557
          %v2559 = vmul.f32 %v2372, %v2558
          %v2560 = vmul.f32 %v2373, %v2558
          %v2561 = vadd.f32 %v2552, %v2559
          %v2562 = vadd.f32 %v2553, %v2560
          %2563 = vrot.lane.b32.xlu0 %v2372, 124
          %v2564 = vpop.permute.xlu0 %2563
          %2565 = vrot.lane.b32.xlu0 %v2373, 124
          %v2566 = vpop.permute.xlu0 %2565
          %v2567 = vsel %vm1815, %v2564, 0.0
          %v2568 = vsel %vm1815, %v2566, 0.0
          %v2569 = vld [vmem:[%s10 + $0xd] sm:$0x1]
          %v2570 = vlaneseq
          %v2571 = vshrl.u32 %v2570, 7
          %v2572 = vsub.s32 0, %v2571
          %v2573 = vrot.slane %v2569, %v2572
          %v2574 = vmul.f32 %v2567, %v2573
          %v2575 = vmul.f32 %v2568, %v2573
          %v2576 = vadd.f32 %v2561, %v2574
          %v2577 = vadd.f32 %v2562, %v2575
          %2578 = vrot.lane.b32.xlu0 %v2372, 120
          %v2579 = vpop.permute.xlu0 %2578
          %2580 = vrot.lane.b32.xlu0 %v2373, 120
          %v2581 = vpop.permute.xlu0 %2580
          %v2582 = vsel %vm1840, %v2579, 0.0
          %v2583 = vsel %vm1840, %v2581, 0.0
          %v2584 = vld [vmem:[%s10 + $0xe] sm:$0x1]
          %v2585 = vlaneseq
          %v2586 = vshrl.u32 %v2585, 7
          %v2587 = vsub.s32 0, %v2586
          %v2588 = vrot.slane %v2584, %v2587
          %v2589 = vmul.f32 %v2582, %v2588
          %v2590 = vmul.f32 %v2583, %v2588
          %v2591 = vadd.f32 %v2576, %v2589
          %v2592 = vadd.f32 %v2577, %v2590
          %v2593 = vrot.slane %v2372, 1
          %v2594 = vrot.slane %v2373, 1
          %v2595 = vsel %vm2017, %v2593, %v2594
          %v2596 = vsel %vm2017, %v2594, %v2593
          %v2597 = vsel %vm2036, %v2595, 0.0
          %v2598 = vsel %vm2037, %v2596, 0.0
          %2599 = vrot.lane.b32.xlu0 %v2597, 8
          %v2600 = vpop.permute.xlu0 %2599
          %2601 = vrot.lane.b32.xlu0 %v2598, 8
          %v2602 = vpop.permute.xlu0 %2601
          %v2603 = vsel %vm1756, %v2600, 0.0
          %v2604 = vsel %vm1756, %v2602, 0.0
          %v2605 = vld [vmem:[%s10 + $0xf] sm:$0x1]
          %v2606 = vlaneseq
          %v2607 = vshrl.u32 %v2606, 7
          %v2608 = vsub.s32 0, %v2607
          %v2609 = vrot.slane %v2605, %v2608
          %v2610 = vmul.f32 %v2603, %v2609
          %v2611 = vmul.f32 %v2604, %v2609
          %v2612 = vadd.f32 %v2591, %v2610
          %v2613 = vadd.f32 %v2592, %v2611
          %2614 = vrot.lane.b32.xlu0 %v2597, 4
          %v2615 = vpop.permute.xlu0 %2614
          %2616 = vrot.lane.b32.xlu0 %v2598, 4
          %v2617 = vpop.permute.xlu0 %2616
          %v2618 = vsel %vm1781, %v2615, 0.0
          %v2619 = vsel %vm1781, %v2617, 0.0
          %v2620 = vld [vmem:[%s10 + $0x10] sm:$0x1]
          %v2621 = vlaneseq
          %v2622 = vshrl.u32 %v2621, 7
          %v2623 = vsub.s32 0, %v2622
          %v2624 = vrot.slane %v2620, %v2623
          %v2625 = vmul.f32 %v2618, %v2624
          %v2626 = vmul.f32 %v2619, %v2624
          %v2627 = vadd.f32 %v2612, %v2625
          %v2628 = vadd.f32 %v2613, %v2626
          %v2629 = vld [vmem:[%s10 + $0x11] sm:$0x1]
          %v2630 = vlaneseq
          %v2631 = vshrl.u32 %v2630, 7
          %v2632 = vsub.s32 0, %v2631
          %v2633 = vrot.slane %v2629, %v2632
          %v2634 = vmul.f32 %v2597, %v2633
          %v2635 = vmul.f32 %v2598, %v2633
          %v2636 = vadd.f32 %v2627, %v2634
          %v2637 = vadd.f32 %v2628, %v2635
          %2638 = vrot.lane.b32.xlu0 %v2597, 124
          %v2639 = vpop.permute.xlu0 %2638
          %2640 = vrot.lane.b32.xlu0 %v2598, 124
          %v2641 = vpop.permute.xlu0 %2640
          %v2642 = vsel %vm1815, %v2639, 0.0
          %v2643 = vsel %vm1815, %v2641, 0.0
          %v2644 = vld [vmem:[%s10 + $0x12] sm:$0x1]
          %v2645 = vlaneseq
          %v2646 = vshrl.u32 %v2645, 7
          %v2647 = vsub.s32 0, %v2646
          %v2648 = vrot.slane %v2644, %v2647
          %v2649 = vmul.f32 %v2642, %v2648
          %v2650 = vmul.f32 %v2643, %v2648
          %v2651 = vadd.f32 %v2636, %v2649
          %v2652 = vadd.f32 %v2637, %v2650
          %2653 = vrot.lane.b32.xlu0 %v2597, 120
          %v2654 = vpop.permute.xlu0 %2653
          %2655 = vrot.lane.b32.xlu0 %v2598, 120
          %v2656 = vpop.permute.xlu0 %2655
          %v2657 = vsel %vm1840, %v2654, 0.0
          %v2658 = vsel %vm1840, %v2656, 0.0
          %v2659 = vld [vmem:[%s10 + $0x13] sm:$0x1]
          %v2660 = vlaneseq
          %v2661 = vshrl.u32 %v2660, 7
          %v2662 = vsub.s32 0, %v2661
          %v2663 = vrot.slane %v2659, %v2662
          %v2664 = vmul.f32 %v2657, %v2663
          %v2665 = vmul.f32 %v2658, %v2663
          %v2666 = vadd.f32 %v2651, %v2664
          %v2667 = vadd.f32 %v2652, %v2665
          %v2668 = vrot.slane %v2372, 2
          %v2669 = vrot.slane %v2373, 2
          %v2670 = vsel %vm2111, %v2668, %v2669
          %v2671 = vsel %vm2111, %v2669, %v2668
          %v2672 = vsel %vm2130, %v2670, 0.0
          %v2673 = vsel %vm2131, %v2671, 0.0
          %2674 = vrot.lane.b32.xlu0 %v2672, 8
          %v2675 = vpop.permute.xlu0 %2674
          %2676 = vrot.lane.b32.xlu0 %v2673, 8
          %v2677 = vpop.permute.xlu0 %2676
          %v2678 = vsel %vm1756, %v2675, 0.0
          %v2679 = vsel %vm1756, %v2677, 0.0
          %v2680 = vld [vmem:[%s10 + $0x14] sm:$0x1]
          %v2681 = vlaneseq
          %v2682 = vshrl.u32 %v2681, 7
          %v2683 = vsub.s32 0, %v2682
          %v2684 = vrot.slane %v2680, %v2683
          %v2685 = vmul.f32 %v2678, %v2684
          %v2686 = vmul.f32 %v2679, %v2684
          %v2687 = vadd.f32 %v2666, %v2685
          %v2688 = vadd.f32 %v2667, %v2686
          %2689 = vrot.lane.b32.xlu0 %v2672, 4
          %v2690 = vpop.permute.xlu0 %2689
          %2691 = vrot.lane.b32.xlu0 %v2673, 4
          %v2692 = vpop.permute.xlu0 %2691
          %v2693 = vsel %vm1781, %v2690, 0.0
          %v2694 = vsel %vm1781, %v2692, 0.0
          %v2695 = vld [vmem:[%s10 + $0x15] sm:$0x1]
          %v2696 = vlaneseq
          %v2697 = vshrl.u32 %v2696, 7
          %v2698 = vsub.s32 0, %v2697
          %v2699 = vrot.slane %v2695, %v2698
          %v2700 = vmul.f32 %v2693, %v2699
          %v2701 = vmul.f32 %v2694, %v2699
          %v2702 = vadd.f32 %v2687, %v2700
          %v2703 = vadd.f32 %v2688, %v2701
          %v2704 = vld [vmem:[%s10 + $0x16] sm:$0x1]
          %v2705 = vlaneseq
          %v2706 = vshrl.u32 %v2705, 7
          %v2707 = vsub.s32 0, %v2706
          %v2708 = vrot.slane %v2704, %v2707
          %v2709 = vmul.f32 %v2672, %v2708
          %v2710 = vmul.f32 %v2673, %v2708
          %v2711 = vadd.f32 %v2702, %v2709
          %v2712 = vadd.f32 %v2703, %v2710
          %2713 = vrot.lane.b32.xlu0 %v2672, 124
          %v2714 = vpop.permute.xlu0 %2713
          %2715 = vrot.lane.b32.xlu0 %v2673, 124
          %v2716 = vpop.permute.xlu0 %2715
          %v2717 = vsel %vm1815, %v2714, 0.0
          %v2718 = vsel %vm1815, %v2716, 0.0
          %v2719 = vld [vmem:[%s10 + $0x17] sm:$0x1]
          %v2720 = vlaneseq
          %v2721 = vshrl.u32 %v2720, 7
          %v2722 = vsub.s32 0, %v2721
          %v2723 = vrot.slane %v2719, %v2722
          %v2724 = vmul.f32 %v2717, %v2723
          %v2725 = vmul.f32 %v2718, %v2723
          %v2726 = vadd.f32 %v2711, %v2724
          %v2727 = vadd.f32 %v2712, %v2725
          %2728 = vrot.lane.b32.xlu0 %v2672, 120
          %v2729 = vpop.permute.xlu0 %2728
          %2730 = vrot.lane.b32.xlu0 %v2673, 120
          %v2731 = vpop.permute.xlu0 %2730
          %v2732 = vsel %vm1840, %v2729, 0.0
          %v2733 = vsel %vm1840, %v2731, 0.0
          %v2734 = vld [vmem:[%s10 + $0x18] sm:$0x1]
          %v2735 = vlaneseq
          %v2736 = vshrl.u32 %v2735, 7
          %v2737 = vsub.s32 0, %v2736
          %v2738 = vrot.slane %v2734, %v2737
          %v2739 = vmul.f32 %v2732, %v2738
          %v2740 = vmul.f32 %v2733, %v2738
          %v2741 = vadd.f32 %v2726, %v2739
          %v2742 = vadd.f32 %v2727, %v2740
          %v2743 = vld [vmem:[%s11 + $0x3] sm:$0x1]
          %v2744 = vlaneseq
          %v2745 = vshrl.u32 %v2744, 7
          %v2746 = vsub.s32 0, %v2745
          %v2747 = vrot.slane %v2743, %v2746
          %v2748 = vmul.f32 %v2741, %v2747
          %v2749 = vmul.f32 %v2742, %v2747
          %2750 = vrot.lane.b32.xlu0 %v2741, 1
          %v2751 = vpop.permute.xlu0 %2750
          %2752 = vrot.lane.b32.xlu0 %v2742, 1
          %v2753 = vpop.permute.xlu0 %2752
          %v2754 = vld [vmem:[%s11 + $0x4] sm:$0x1]
          %v2755 = vlaneseq
          %v2756 = vshrl.u32 %v2755, 7
          %v2757 = vsub.s32 0, %v2756
          %v2758 = vrot.slane %v2754, %v2757
          %v2759 = vmul.f32 %v2751, %v2758
          %v2760 = vmul.f32 %v2753, %v2758
          %v2761 = vadd.f32 %v2748, %v2759
          %v2762 = vadd.f32 %v2749, %v2760
          %2763 = vrot.lane.b32.xlu0 %v2741, 127
          %v2764 = vpop.permute.xlu0 %2763
          %2765 = vrot.lane.b32.xlu0 %v2742, 127
          %v2766 = vpop.permute.xlu0 %2765
          %v2767 = vld [vmem:[%s11 + $0x2] sm:$0x1]
          %v2768 = vlaneseq
          %v2769 = vshrl.u32 %v2768, 7
          %v2770 = vsub.s32 0, %v2769
          %v2771 = vrot.slane %v2767, %v2770
          %v2772 = vmul.f32 %v2764, %v2771
          %v2773 = vmul.f32 %v2766, %v2771
          %v2774 = vadd.f32 %v2761, %v2772
          %v2775 = vadd.f32 %v2762, %v2773
          %2776 = vrot.lane.b32.xlu0 %v2741, 2
          %v2777 = vpop.permute.xlu0 %2776
          %2778 = vrot.lane.b32.xlu0 %v2742, 2
          %v2779 = vpop.permute.xlu0 %2778
          %v2780 = vld [vmem:[%s11 + $0x5] sm:$0x1]
          %v2781 = vlaneseq
          %v2782 = vshrl.u32 %v2781, 7
          %v2783 = vsub.s32 0, %v2782
          %v2784 = vrot.slane %v2780, %v2783
          %v2785 = vmul.f32 %v2777, %v2784
          %v2786 = vmul.f32 %v2779, %v2784
          %v2787 = vadd.f32 %v2774, %v2785
          %v2788 = vadd.f32 %v2775, %v2786
          %2789 = vrot.lane.b32.xlu0 %v2741, 126
          %v2790 = vpop.permute.xlu0 %2789
          %2791 = vrot.lane.b32.xlu0 %v2742, 126
          %v2792 = vpop.permute.xlu0 %2791
          %v2793 = vld [vmem:[%s11 + $0x1] sm:$0x1]
          %v2794 = vlaneseq
          %v2795 = vshrl.u32 %v2794, 7
          %v2796 = vsub.s32 0, %v2795
          %v2797 = vrot.slane %v2793, %v2796
          %v2798 = vmul.f32 %v2790, %v2797
          %v2799 = vmul.f32 %v2792, %v2797
          %v2800 = vadd.f32 %v2787, %v2798
          %v2801 = vadd.f32 %v2788, %v2799
          %2802 = vrot.lane.b32.xlu0 %v2741, 3
          %v2803 = vpop.permute.xlu0 %2802
          %2804 = vrot.lane.b32.xlu0 %v2742, 3
          %v2805 = vpop.permute.xlu0 %2804
          %v2806 = vld [vmem:[%s11 + $0x6] sm:$0x1]
          %v2807 = vlaneseq
          %v2808 = vshrl.u32 %v2807, 7
          %v2809 = vsub.s32 0, %v2808
          %v2810 = vrot.slane %v2806, %v2809
          %v2811 = vmul.f32 %v2803, %v2810
          %v2812 = vmul.f32 %v2805, %v2810
          %v2813 = vadd.f32 %v2800, %v2811
          %v2814 = vadd.f32 %v2801, %v2812
          %2815 = vrot.lane.b32.xlu0 %v2741, 125
          %v2816 = vpop.permute.xlu0 %2815
          %2817 = vrot.lane.b32.xlu0 %v2742, 125
          %v2818 = vpop.permute.xlu0 %2817
          %v2819 = vld [vmem:[%s11] sm:$0x1]
          %v2820 = vlaneseq
          %v2821 = vshrl.u32 %v2820, 7
          %v2822 = vsub.s32 0, %v2821
          %v2823 = vrot.slane %v2819, %v2822
          %v2824 = vmul.f32 %v2816, %v2823
          %v2825 = vmul.f32 %v2818, %v2823
          %v2826 = vadd.f32 %v2813, %v2824
          %v2827 = vadd.f32 %v2814, %v2825
          %2828 = vrot.lane.b32.xlu0 %v2826, 4
          %v2829 = vpop.permute.xlu0 %2828
          %2830 = vrot.lane.b32.xlu0 %v2827, 4
          %v2831 = vpop.permute.xlu0 %2830
          %v2832 = vadd.f32 %v2826, %v2829
          %v2833 = vadd.f32 %v2827, %v2831
          %2834 = vrot.lane.b32.xlu0 %v2832, 8
          %v2835 = vpop.permute.xlu0 %2834
          %2836 = vrot.lane.b32.xlu0 %v2833, 8
          %v2837 = vpop.permute.xlu0 %2836
          %v2838 = vadd.f32 %v2832, %v2835
          %v2839 = vadd.f32 %v2833, %v2837
          %2840 = vrot.lane.b32.xlu0 %v2838, 16
          %v2841 = vpop.permute.xlu0 %2840
          %2842 = vrot.lane.b32.xlu0 %v2839, 16
          %v2843 = vpop.permute.xlu0 %2842
          %v2844 = vadd.f32 %v2838, %v2841
          %v2845 = vadd.f32 %v2839, %v2843
          %2846 = vrot.lane.b32.xlu0 %v2844, 32
          %v2847 = vpop.permute.xlu0 %2846
          %2848 = vrot.lane.b32.xlu0 %v2845, 32
          %v2849 = vpop.permute.xlu0 %2848
          %v2850 = vadd.f32 %v2844, %v2847
          %v2851 = vadd.f32 %v2845, %v2849
          %2852 = vrot.lane.b32.xlu0 %v2850, 64
          %v2853 = vpop.permute.xlu0 %2852
          %2854 = vrot.lane.b32.xlu0 %v2851, 64
          %v2855 = vpop.permute.xlu0 %2854
          %v2856 = vadd.f32 %v2850, %v2853
          %v2857 = vadd.f32 %v2851, %v2855
          %v2858 = vadd.f32 %v2856, %v2857
          %v2859 = vrot.slane %v2858, 4
          %v2860 = vadd.f32 %v2858, %v2859
          %v2861 = vrot.slane %v2860, 2
          %v2862 = vadd.f32 %v2860, %v2861
          %v2863 = vrot.slane %v2862, 1
          %v2864 = vadd.f32 %v2862, %v2863
          %v2865 = vmul.f32 %v2864, 0.001953125
          %v2866 = vsub.f32 %v2826, %v2865
          %v2867 = vsub.f32 %v2827, %v2865
          %v2868 = vmul.f32 %v2866, %v2866
          %v2869 = vmul.f32 %v2867, %v2867
          %2870 = vrot.lane.b32.xlu0 %v2868, 4
          %v2871 = vpop.permute.xlu0 %2870
          %2872 = vrot.lane.b32.xlu0 %v2869, 4
          %v2873 = vpop.permute.xlu0 %2872
          %v2874 = vadd.f32 %v2868, %v2871
          %v2875 = vadd.f32 %v2869, %v2873
          %2876 = vrot.lane.b32.xlu0 %v2874, 8
          %v2877 = vpop.permute.xlu0 %2876
          %2878 = vrot.lane.b32.xlu0 %v2875, 8
          %v2879 = vpop.permute.xlu0 %2878
          %v2880 = vadd.f32 %v2874, %v2877
          %v2881 = vadd.f32 %v2875, %v2879
          %2882 = vrot.lane.b32.xlu0 %v2880, 16
          %v2883 = vpop.permute.xlu0 %2882
          %2884 = vrot.lane.b32.xlu0 %v2881, 16
          %v2885 = vpop.permute.xlu0 %2884
          %v2886 = vadd.f32 %v2880, %v2883
          %v2887 = vadd.f32 %v2881, %v2885
          %2888 = vrot.lane.b32.xlu0 %v2886, 32
          %v2889 = vpop.permute.xlu0 %2888
          %2890 = vrot.lane.b32.xlu0 %v2887, 32
          %v2891 = vpop.permute.xlu0 %2890
          %v2892 = vadd.f32 %v2886, %v2889
          %v2893 = vadd.f32 %v2887, %v2891
          %2894 = vrot.lane.b32.xlu0 %v2892, 64
          %v2895 = vpop.permute.xlu0 %2894
          %2896 = vrot.lane.b32.xlu0 %v2893, 64
          %v2897 = vpop.permute.xlu0 %2896
          %v2898 = vadd.f32 %v2892, %v2895
          %v2899 = vadd.f32 %v2893, %v2897
          %v2900 = vadd.f32 %v2898, %v2899
          %v2901 = vrot.slane %v2900, 4
          %v2902 = vadd.f32 %v2900, %v2901
          %v2903 = vrot.slane %v2902, 2
          %v2904 = vadd.f32 %v2902, %v2903
          %v2905 = vrot.slane %v2904, 1
          %v2906 = vadd.f32 %v2904, %v2905
          %v2907 = vmul.f32 %v2906, 0.001953125
          %v2908 = vadd.f32 %v2907, 1e-05
          %v2909 = vrsqrt.pop %v2908
          %v2910 = vmul.f32 %v2866, %v2909
          %v2911 = vmul.f32 %v2867, %v2909
          %v2912 = vstv %s1715
          %v2913 = vmul.f32 %v2912, %v2910
          %v2914 = vmul.f32 %v2912, %v2911
          %v2915 = vadd.f32 %v1713, %v2913
          %v2916 = vadd.f32 %v1714, %v2914
          %2917 = vst [vmem:[%s515] sm:$0xff] %v2915
          %2918 = vst [vmem:[%s515 + $0x8] sm:$0xff] %v2916
        $region108: #{mixed_op_forward.1} parent=83 // pred_fallthru
          _
        %s2919 = sld [smem:[#allocation2 + $0x6]]
        %p2920 = scmp.ne.f32.partialorder %s2919, 0.0
        %p2921 = pnand %p525, %p2920
        %p2922 = pneg %p2921
        // Predicated region
        $region109: #{mixed_op_forward.1} parent=83 // pred_check
          _
        $region110: #{mixed_op_forward.1} parent=83 // pred_check_branch
          %2924 = sbr.rel (%p2921) target = $region112
        $region111: #{mixed_op_forward.1} parent=83 // pred_region
          %v2925 = vld [vmem:[%s515] sm:$0xff]
          %v2926 = vld [vmem:[%s515 + $0x8] sm:$0xff]
          %s2927 = sld [smem:[#allocation2 + $0x6]]
          %v2928 = vrot.slane %v518, 6
          %v2929 = vrot.slane %v519, 6
          %v2930 = vlaneseq
          %v2931 = vshrl.u32 %v2930, 7
          %vm2932 = vcmp.lt.s32.totalorder %v2931, 2
          %v2933 = vsel %vm2932, %v2928, %v2929
          %v2934 = vsel %vm2932, %v2929, %v2928
          %v2935 = vadd.s32 %v520, 4294967294
          %v2936 = vadd.s32 %v521, 4294967294
          %vm2937 = vcmp.ge.s32.totalorder %v2935, 0
          %vm2938 = vcmp.ge.s32.totalorder %v2936, 0
          %vm2939 = vcmp.lt.s32.totalorder %v2935, 16
          %vm2940 = vcmp.lt.s32.totalorder %v2936, 16
          %vm2941 = vmand %vm2937, %vm2939
          %vm2942 = vmand %vm2938, %vm2940
          %v2943 = vsel %vm2941, 1, 0
          %v2944 = vsel %vm2942, 1, 0
          %2945 = vset.pattern.permute.xlu0 0
          %2946 = vperm.xlu0 %2945, %v2943
          %v2947 = vpop.permute.xlu0 %2946
          %2948 = vset.pattern.permute.xlu0 0
          %2949 = vperm.xlu0 %2948, %v2944
          %v2950 = vpop.permute.xlu0 %2949
          %vm2951 = vcmp.eq.s32.totalorder %v2947, 1
          %vm2952 = vcmp.eq.s32.totalorder %v2950, 1
          %v2953 = vsel %vm2951, %v2934, 0.0
          %v2954 = vsel %vm2952, %v2933, 0.0
          %2955 = vrot.lane.b32.xlu0 %v2953, 8
          %v2956 = vpop.permute.xlu0 %2955
          %2957 = vrot.lane.b32.xlu0 %v2954, 8
          %v2958 = vpop.permute.xlu0 %2957
          %v2959 = vadd.s32 %v522, 4294967294
          %vm2960 = vcmp.ge.s32.totalorder %v2959, 0
          %vm2961 = vcmp.lt.s32.totalorder %v2959, 16
          %vm2962 = vmand %vm2960, %vm2961
          %v2963 = vsel %vm2962, 1, 0
          %v2964 = vlaneseq
          %v2965 = vshrl.u32 %v2964, 7
          %v2966 = vsub.s32 0, %v2965
          %v2967 = vrot.slane %v2963, %v2966
          %vm2968 = vcmp.eq.s32.totalorder %v2967, 1
          %v2969 = vsel %vm2968, %v2956, 0.0
          %v2970 = vsel %vm2968, %v2958, 0.0
          %v2971 = vld [vmem:[%s12] sm:$0x1]
          %v2972 = vlaneseq
          %v2973 = vshrl.u32 %v2972, 7
          %v2974 = vsub.s32 0, %v2973
          %v2975 = vrot.slane %v2971, %v2974
          %v2976 = vmul.f32 %v2969, %v2975
          %v2977 = vmul.f32 %v2970, %v2975
          %v2978 = vadd.f32 %v2976, 0.0
          %v2979 = vadd.f32 %v2977, 0.0
          %v2980 = vld [vmem:[%s12 + $0x1] sm:$0x1]
          %v2981 = vlaneseq
          %v2982 = vshrl.u32 %v2981, 7
          %v2983 = vsub.s32 0, %v2982
          %v2984 = vrot.slane %v2980, %v2983
          %v2985 = vmul.f32 %v2953, %v2984
          %v2986 = vmul.f32 %v2954, %v2984
          %v2987 = vadd.f32 %v2978, %v2985
          %v2988 = vadd.f32 %v2979, %v2986
          %2989 = vrot.lane.b32.xlu0 %v2953, 120
          %v2990 = vpop.permute.xlu0 %2989
          %2991 = vrot.lane.b32.xlu0 %v2954, 120
          %v2992 = vpop.permute.xlu0 %2991
          %v2993 = vadd.s32 %v522, 2
          %vm2994 = vcmp.ge.s32.totalorder %v2993, 0
          %vm2995 = vcmp.lt.s32.totalorder %v2993, 16
          %vm2996 = vmand %vm2994, %vm2995
          %v2997 = vsel %vm2996, 1, 0
          %v2998 = vlaneseq
          %v2999 = vshrl.u32 %v2998, 7
          %v3000 = vsub.s32 0, %v2999
          %v3001 = vrot.slane %v2997, %v3000
          %vm3002 = vcmp.eq.s32.totalorder %v3001, 1
          %v3003 = vsel %vm3002, %v2990, 0.0
          %v3004 = vsel %vm3002, %v2992, 0.0
          %v3005 = vld [vmem:[%s12 + $0x2] sm:$0x1]
          %v3006 = vlaneseq
          %v3007 = vshrl.u32 %v3006, 7
          %v3008 = vsub.s32 0, %v3007
          %v3009 = vrot.slane %v3005, %v3008
          %v3010 = vmul.f32 %v3003, %v3009
          %v3011 = vmul.f32 %v3004, %v3009
          %v3012 = vadd.f32 %v2987, %v3010
          %v3013 = vadd.f32 %v2988, %v3011
          %3014 = vrot.lane.b32.xlu0 %v518, 8
          %v3015 = vpop.permute.xlu0 %3014
          %3016 = vrot.lane.b32.xlu0 %v519, 8
          %v3017 = vpop.permute.xlu0 %3016
          %v3018 = vsel %vm2968, %v3015, 0.0
          %v3019 = vsel %vm2968, %v3017, 0.0
          %v3020 = vld [vmem:[%s12 + $0x3] sm:$0x1]
          %v3021 = vlaneseq
          %v3022 = vshrl.u32 %v3021, 7
          %v3023 = vsub.s32 0, %v3022
          %v3024 = vrot.slane %v3020, %v3023
          %v3025 = vmul.f32 %v3018, %v3024
          %v3026 = vmul.f32 %v3019, %v3024
          %v3027 = vadd.f32 %v3012, %v3025
          %v3028 = vadd.f32 %v3013, %v3026
          %v3029 = vld [vmem:[%s12 + $0x4] sm:$0x1]
          %v3030 = vlaneseq
          %v3031 = vshrl.u32 %v3030, 7
          %v3032 = vsub.s32 0, %v3031
          %v3033 = vrot.slane %v3029, %v3032
          %v3034 = vmul.f32 %v518, %v3033
          %v3035 = vmul.f32 %v519, %v3033
          %v3036 = vadd.f32 %v3027, %v3034
          %v3037 = vadd.f32 %v3028, %v3035
          %3038 = vrot.lane.b32.xlu0 %v518, 120
          %v3039 = vpop.permute.xlu0 %3038
          %3040 = vrot.lane.b32.xlu0 %v519, 120
          %v3041 = vpop.permute.xlu0 %3040
          %v3042 = vsel %vm3002, %v3039, 0.0
          %v3043 = vsel %vm3002, %v3041, 0.0
          %v3044 = vld [vmem:[%s12 + $0x5] sm:$0x1]
          %v3045 = vlaneseq
          %v3046 = vshrl.u32 %v3045, 7
          %v3047 = vsub.s32 0, %v3046
          %v3048 = vrot.slane %v3044, %v3047
          %v3049 = vmul.f32 %v3042, %v3048
          %v3050 = vmul.f32 %v3043, %v3048
          %v3051 = vadd.f32 %v3036, %v3049
          %v3052 = vadd.f32 %v3037, %v3050
          %v3053 = vrot.slane %v518, 2
          %v3054 = vrot.slane %v519, 2
          %vm3055 = vcmp.lt.s32.totalorder %v2931, 6
          %v3056 = vsel %vm3055, %v3053, %v3054
          %v3057 = vsel %vm3055, %v3054, %v3053
          %v3058 = vadd.s32 %v520, 2
          %v3059 = vadd.s32 %v521, 2
          %vm3060 = vcmp.ge.s32.totalorder %v3058, 0
          %vm3061 = vcmp.ge.s32.totalorder %v3059, 0
          %vm3062 = vcmp.lt.s32.totalorder %v3058, 16
          %vm3063 = vcmp.lt.s32.totalorder %v3059, 16
          %vm3064 = vmand %vm3060, %vm3062
          %vm3065 = vmand %vm3061, %vm3063
          %v3066 = vsel %vm3064, 1, 0
          %v3067 = vsel %vm3065, 1, 0
          %3068 = vset.pattern.permute.xlu0 0
          %3069 = vperm.xlu0 %3068, %v3066
          %v3070 = vpop.permute.xlu0 %3069
          %3071 = vset.pattern.permute.xlu0 0
          %3072 = vperm.xlu0 %3071, %v3067
          %v3073 = vpop.permute.xlu0 %3072
          %vm3074 = vcmp.eq.s32.totalorder %v3070, 1
          %vm3075 = vcmp.eq.s32.totalorder %v3073, 1
          %v3076 = vsel %vm3074, %v3056, 0.0
          %v3077 = vsel %vm3075, %v3057, 0.0
          %3078 = vrot.lane.b32.xlu0 %v3076, 8
          %v3079 = vpop.permute.xlu0 %3078
          %3080 = vrot.lane.b32.xlu0 %v3077, 8
          %v3081 = vpop.permute.xlu0 %3080
          %v3082 = vsel %vm2968, %v3079, 0.0
          %v3083 = vsel %vm2968, %v3081, 0.0
          %v3084 = vld [vmem:[%s12 + $0x6] sm:$0x1]
          %v3085 = vlaneseq
          %v3086 = vshrl.u32 %v3085, 7
          %v3087 = vsub.s32 0, %v3086
          %v3088 = vrot.slane %v3084, %v3087
          %v3089 = vmul.f32 %v3082, %v3088
          %v3090 = vmul.f32 %v3083, %v3088
          %v3091 = vadd.f32 %v3051, %v3089
          %v3092 = vadd.f32 %v3052, %v3090
          %v3093 = vld [vmem:[%s12 + $0x7] sm:$0x1]
          %v3094 = vlaneseq
          %v3095 = vshrl.u32 %v3094, 7
          %v3096 = vsub.s32 0, %v3095
          %v3097 = vrot.slane %v3093, %v3096
          %v3098 = vmul.f32 %v3076, %v3097
          %v3099 = vmul.f32 %v3077, %v3097
          %v3100 = vadd.f32 %v3091, %v3098
          %v3101 = vadd.f32 %v3092, %v3099
          %3102 = vrot.lane.b32.xlu0 %v3076, 120
          %v3103 = vpop.permute.xlu0 %3102
          %3104 = vrot.lane.b32.xlu0 %v3077, 120
          %v3105 = vpop.permute.xlu0 %3104
          %v3106 = vsel %vm3002, %v3103, 0.0
          %v3107 = vsel %vm3002, %v3105, 0.0
          %v3108 = vld [vmem:[%s12 + $0x8] sm:$0x1]
          %v3109 = vlaneseq
          %v3110 = vshrl.u32 %v3109, 7
          %v3111 = vsub.s32 0, %v3110
          %v3112 = vrot.slane %v3108, %v3111
          %v3113 = vmul.f32 %v3106, %v3112
          %v3114 = vmul.f32 %v3107, %v3112
          %v3115 = vadd.f32 %v3100, %v3113
          %v3116 = vadd.f32 %v3101, %v3114
          %v3117 = vld [vmem:[%s13 + $0x3] sm:$0x1]
          %v3118 = vlaneseq
          %v3119 = vshrl.u32 %v3118, 7
          %v3120 = vsub.s32 0, %v3119
          %v3121 = vrot.slane %v3117, %v3120
          %v3122 = vmul.f32 %v3115, %v3121
          %v3123 = vmul.f32 %v3116, %v3121
          %3124 = vrot.lane.b32.xlu0 %v3115, 1
          %v3125 = vpop.permute.xlu0 %3124
          %3126 = vrot.lane.b32.xlu0 %v3116, 1
          %v3127 = vpop.permute.xlu0 %3126
          %v3128 = vld [vmem:[%s13 + $0x4] sm:$0x1]
          %v3129 = vlaneseq
          %v3130 = vshrl.u32 %v3129, 7
          %v3131 = vsub.s32 0, %v3130
          %v3132 = vrot.slane %v3128, %v3131
          %v3133 = vmul.f32 %v3125, %v3132
          %v3134 = vmul.f32 %v3127, %v3132
          %v3135 = vadd.f32 %v3122, %v3133
          %v3136 = vadd.f32 %v3123, %v3134
          %3137 = vrot.lane.b32.xlu0 %v3115, 127
          %v3138 = vpop.permute.xlu0 %3137
          %3139 = vrot.lane.b32.xlu0 %v3116, 127
          %v3140 = vpop.permute.xlu0 %3139
          %v3141 = vld [vmem:[%s13 + $0x2] sm:$0x1]
          %v3142 = vlaneseq
          %v3143 = vshrl.u32 %v3142, 7
          %v3144 = vsub.s32 0, %v3143
          %v3145 = vrot.slane %v3141, %v3144
          %v3146 = vmul.f32 %v3138, %v3145
          %v3147 = vmul.f32 %v3140, %v3145
          %v3148 = vadd.f32 %v3135, %v3146
          %v3149 = vadd.f32 %v3136, %v3147
          %3150 = vrot.lane.b32.xlu0 %v3115, 2
          %v3151 = vpop.permute.xlu0 %3150
          %3152 = vrot.lane.b32.xlu0 %v3116, 2
          %v3153 = vpop.permute.xlu0 %3152
          %v3154 = vld [vmem:[%s13 + $0x5] sm:$0x1]
          %v3155 = vlaneseq
          %v3156 = vshrl.u32 %v3155, 7
          %v3157 = vsub.s32 0, %v3156
          %v3158 = vrot.slane %v3154, %v3157
          %v3159 = vmul.f32 %v3151, %v3158
          %v3160 = vmul.f32 %v3153, %v3158
          %v3161 = vadd.f32 %v3148, %v3159
          %v3162 = vadd.f32 %v3149, %v3160
          %3163 = vrot.lane.b32.xlu0 %v3115, 126
          %v3164 = vpop.permute.xlu0 %3163
          %3165 = vrot.lane.b32.xlu0 %v3116, 126
          %v3166 = vpop.permute.xlu0 %3165
          %v3167 = vld [vmem:[%s13 + $0x1] sm:$0x1]
          %v3168 = vlaneseq
          %v3169 = vshrl.u32 %v3168, 7
          %v3170 = vsub.s32 0, %v3169
          %v3171 = vrot.slane %v3167, %v3170
          %v3172 = vmul.f32 %v3164, %v3171
          %v3173 = vmul.f32 %v3166, %v3171
          %v3174 = vadd.f32 %v3161, %v3172
          %v3175 = vadd.f32 %v3162, %v3173
          %3176 = vrot.lane.b32.xlu0 %v3115, 3
          %v3177 = vpop.permute.xlu0 %3176
          %3178 = vrot.lane.b32.xlu0 %v3116, 3
          %v3179 = vpop.permute.xlu0 %3178
          %v3180 = vld [vmem:[%s13 + $0x6] sm:$0x1]
          %v3181 = vlaneseq
          %v3182 = vshrl.u32 %v3181, 7
          %v3183 = vsub.s32 0, %v3182
          %v3184 = vrot.slane %v3180, %v3183
          %v3185 = vmul.f32 %v3177, %v3184
          %v3186 = vmul.f32 %v3179, %v3184
          %v3187 = vadd.f32 %v3174, %v3185
          %v3188 = vadd.f32 %v3175, %v3186
          %3189 = vrot.lane.b32.xlu0 %v3115, 125
          %v3190 = vpop.permute.xlu0 %3189
          %3191 = vrot.lane.b32.xlu0 %v3116, 125
          %v3192 = vpop.permute.xlu0 %3191
          %v3193 = vld [vmem:[%s13] sm:$0x1]
          %v3194 = vlaneseq
          %v3195 = vshrl.u32 %v3194, 7
          %v3196 = vsub.s32 0, %v3195
          %v3197 = vrot.slane %v3193, %v3196
          %v3198 = vmul.f32 %v3190, %v3197
          %v3199 = vmul.f32 %v3192, %v3197
          %v3200 = vadd.f32 %v3187, %v3198
          %v3201 = vadd.f32 %v3188, %v3199
          %3202 = vrot.lane.b32.xlu0 %v3200, 4
          %v3203 = vpop.permute.xlu0 %3202
          %3204 = vrot.lane.b32.xlu0 %v3201, 4
          %v3205 = vpop.permute.xlu0 %3204
          %v3206 = vadd.f32 %v3200, %v3203
          %v3207 = vadd.f32 %v3201, %v3205
          %3208 = vrot.lane.b32.xlu0 %v3206, 8
          %v3209 = vpop.permute.xlu0 %3208
          %3210 = vrot.lane.b32.xlu0 %v3207, 8
          %v3211 = vpop.permute.xlu0 %3210
          %v3212 = vadd.f32 %v3206, %v3209
          %v3213 = vadd.f32 %v3207, %v3211
          %3214 = vrot.lane.b32.xlu0 %v3212, 16
          %v3215 = vpop.permute.xlu0 %3214
          %3216 = vrot.lane.b32.xlu0 %v3213, 16
          %v3217 = vpop.permute.xlu0 %3216
          %v3218 = vadd.f32 %v3212, %v3215
          %v3219 = vadd.f32 %v3213, %v3217
          %3220 = vrot.lane.b32.xlu0 %v3218, 32
          %v3221 = vpop.permute.xlu0 %3220
          %3222 = vrot.lane.b32.xlu0 %v3219, 32
          %v3223 = vpop.permute.xlu0 %3222
          %v3224 = vadd.f32 %v3218, %v3221
          %v3225 = vadd.f32 %v3219, %v3223
          %3226 = vrot.lane.b32.xlu0 %v3224, 64
          %v3227 = vpop.permute.xlu0 %3226
          %3228 = vrot.lane.b32.xlu0 %v3225, 64
          %v3229 = vpop.permute.xlu0 %3228
          %v3230 = vadd.f32 %v3224, %v3227
          %v3231 = vadd.f32 %v3225, %v3229
          %v3232 = vadd.f32 %v3230, %v3231
          %v3233 = vrot.slane %v3232, 4
          %v3234 = vadd.f32 %v3232, %v3233
          %v3235 = vrot.slane %v3234, 2
          %v3236 = vadd.f32 %v3234, %v3235
          %v3237 = vrot.slane %v3236, 1
          %v3238 = vadd.f32 %v3236, %v3237
          %v3239 = vmul.f32 %v3238, 0.001953125
          %v3240 = vsub.f32 %v3200, %v3239
          %v3241 = vsub.f32 %v3201, %v3239
          %v3242 = vmul.f32 %v3240, %v3240
          %v3243 = vmul.f32 %v3241, %v3241
          %3244 = vrot.lane.b32.xlu0 %v3242, 4
          %v3245 = vpop.permute.xlu0 %3244
          %3246 = vrot.lane.b32.xlu0 %v3243, 4
          %v3247 = vpop.permute.xlu0 %3246
          %v3248 = vadd.f32 %v3242, %v3245
          %v3249 = vadd.f32 %v3243, %v3247
          %3250 = vrot.lane.b32.xlu0 %v3248, 8
          %v3251 = vpop.permute.xlu0 %3250
          %3252 = vrot.lane.b32.xlu0 %v3249, 8
          %v3253 = vpop.permute.xlu0 %3252
          %v3254 = vadd.f32 %v3248, %v3251
          %v3255 = vadd.f32 %v3249, %v3253
          %3256 = vrot.lane.b32.xlu0 %v3254, 16
          %v3257 = vpop.permute.xlu0 %3256
          %3258 = vrot.lane.b32.xlu0 %v3255, 16
          %v3259 = vpop.permute.xlu0 %3258
          %v3260 = vadd.f32 %v3254, %v3257
          %v3261 = vadd.f32 %v3255, %v3259
          %3262 = vrot.lane.b32.xlu0 %v3260, 32
          %v3263 = vpop.permute.xlu0 %3262
          %3264 = vrot.lane.b32.xlu0 %v3261, 32
          %v3265 = vpop.permute.xlu0 %3264
          %v3266 = vadd.f32 %v3260, %v3263
          %v3267 = vadd.f32 %v3261, %v3265
          %3268 = vrot.lane.b32.xlu0 %v3266, 64
          %v3269 = vpop.permute.xlu0 %3268
          %3270 = vrot.lane.b32.xlu0 %v3267, 64
          %v3271 = vpop.permute.xlu0 %3270
          %v3272 = vadd.f32 %v3266, %v3269
          %v3273 = vadd.f32 %v3267, %v3271
          %v3274 = vadd.f32 %v3272, %v3273
          %v3275 = vrot.slane %v3274, 4
          %v3276 = vadd.f32 %v3274, %v3275
          %v3277 = vrot.slane %v3276, 2
          %v3278 = vadd.f32 %v3276, %v3277
          %v3279 = vrot.slane %v3278, 1
          %v3280 = vadd.f32 %v3278, %v3279
          %v3281 = vmul.f32 %v3280, 0.001953125
          %v3282 = vadd.f32 %v3281, 1e-05
          %v3283 = vrsqrt.pop %v3282
          %v3284 = vmul.f32 %v3240, %v3283
          %v3285 = vmul.f32 %v3241, %v3283
          %v3286 = vstv %s2927
          %v3287 = vmul.f32 %v3286, %v3284
          %v3288 = vmul.f32 %v3286, %v3285
          %v3289 = vadd.f32 %v2925, %v3287
          %v3290 = vadd.f32 %v2926, %v3288
          %3291 = vst [vmem:[%s515] sm:$0xff] %v3289
          %3292 = vst [vmem:[%s515 + $0x8] sm:$0xff] %v3290
        $region112: #{mixed_op_forward.1} parent=83 // pred_fallthru
          _
        %s3293 = sld [smem:[#allocation2 + $0x7]]
        %p3294 = scmp.ne.f32.partialorder %s3293, 0.0
        %p3295 = pnand %p525, %p3294
        %p3296 = pneg %p3295
        // Predicated region
        $region113: #{mixed_op_forward.1} parent=83 // pred_check
          _
        $region114: #{mixed_op_forward.1} parent=83 // pred_check_branch
          %3298 = sbr.rel (%p3295) target = $region116
        $region115: #{mixed_op_forward.1} parent=83 // pred_region
          %v3299 = vld [vmem:[%s515] sm:$0xff]
          %v3300 = vld [vmem:[%s515 + $0x8] sm:$0xff]
          %s3301 = sld [smem:[#allocation2 + $0x7]]
          %v3302 = vrot.slane %v518, 4
          %v3303 = vrot.slane %v519, 4
          %v3304 = vlaneseq
          %v3305 = vshrl.u32 %v3304, 7
          %vm3306 = vcmp.lt.s32.totalorder %v3305, 4
          %v3307 = vsel %vm3306, %v3302, %v3303
          %v3308 = vsel %vm3306, %v3303, %v3302
          %v3309 = vadd.s32 %v520, 4294967292
          %v3310 = vadd.s32 %v521, 4294967292
          %vm3311 = vcmp.ge.s32.totalorder %v3309, 0
          %vm3312 = vcmp.ge.s32.totalorder %v3310, 0
          %vm3313 = vcmp.lt.s32.totalorder %v3309, 16
          %vm3314 = vcmp.lt.s32.totalorder %v3310, 16
          %vm3315 = vmand %vm3311, %vm3313
          %vm3316 = vmand %vm3312, %vm3314
          %v3317 = vsel %vm3315, 1, 0
          %v3318 = vsel %vm3316, 1, 0
          %3319 = vset.pattern.permute.xlu0 0
          %3320 = vperm.xlu0 %3319, %v3317
          %v3321 = vpop.permute.xlu0 %3320
          %3322 = vset.pattern.permute.xlu0 0
          %3323 = vperm.xlu0 %3322, %v3318
          %v3324 = vpop.permute.xlu0 %3323
          %vm3325 = vcmp.eq.s32.totalorder %v3321, 1
          %vm3326 = vcmp.eq.s32.totalorder %v3324, 1
          %v3327 = vsel %vm3325, %v3308, 0.0
          %v3328 = vsel %vm3326, %v3307, 0.0
          %3329 = vrot.lane.b32.xlu0 %v3327, 16
          %v3330 = vpop.permute.xlu0 %3329
          %3331 = vrot.lane.b32.xlu0 %v3328, 16
          %v3332 = vpop.permute.xlu0 %3331
          %v3333 = vadd.s32 %v522, 4294967292
          %vm3334 = vcmp.ge.s32.totalorder %v3333, 0
          %vm3335 = vcmp.lt.s32.totalorder %v3333, 16
          %vm3336 = vmand %vm3334, %vm3335
          %v3337 = vsel %vm3336, 1, 0
          %v3338 = vlaneseq
          %v3339 = vshrl.u32 %v3338, 7
          %v3340 = vsub.s32 0, %v3339
          %v3341 = vrot.slane %v3337, %v3340
          %vm3342 = vcmp.eq.s32.totalorder %v3341, 1
          %v3343 = vsel %vm3342, %v3330, 0.0
          %v3344 = vsel %vm3342, %v3332, 0.0
          %v3345 = vld [vmem:[%s14] sm:$0x1]
          %v3346 = vlaneseq
          %v3347 = vshrl.u32 %v3346, 7
          %v3348 = vsub.s32 0, %v3347
          %v3349 = vrot.slane %v3345, %v3348
          %v3350 = vmul.f32 %v3343, %v3349
          %v3351 = vmul.f32 %v3344, %v3349
          %v3352 = vadd.f32 %v3350, 0.0
          %v3353 = vadd.f32 %v3351, 0.0
          %3354 = vrot.lane.b32.xlu0 %v3327, 8
          %v3355 = vpop.permute.xlu0 %3354
          %3356 = vrot.lane.b32.xlu0 %v3328, 8
          %v3357 = vpop.permute.xlu0 %3356
          %v3358 = vadd.s32 %v522, 4294967294
          %vm3359 = vcmp.ge.s32.totalorder %v3358, 0
          %vm3360 = vcmp.lt.s32.totalorder %v3358, 16
          %vm3361 = vmand %vm3359, %vm3360
          %v3362 = vsel %vm3361, 1, 0
          %v3363 = vlaneseq
          %v3364 = vshrl.u32 %v3363, 7
          %v3365 = vsub.s32 0, %v3364
          %v3366 = vrot.slane %v3362, %v3365
          %vm3367 = vcmp.eq.s32.totalorder %v3366, 1
          %v3368 = vsel %vm3367, %v3355, 0.0
          %v3369 = vsel %vm3367, %v3357, 0.0
          %v3370 = vld [vmem:[%s14 + $0x1] sm:$0x1]
          %v3371 = vlaneseq
          %v3372 = vshrl.u32 %v3371, 7
          %v3373 = vsub.s32 0, %v3372
          %v3374 = vrot.slane %v3370, %v3373
          %v3375 = vmul.f32 %v3368, %v3374
          %v3376 = vmul.f32 %v3369, %v3374
          %v3377 = vadd.f32 %v3352, %v3375
          %v3378 = vadd.f32 %v3353, %v3376
          %v3379 = vld [vmem:[%s14 + $0x2] sm:$0x1]
          %v3380 = vlaneseq
          %v3381 = vshrl.u32 %v3380, 7
          %v3382 = vsub.s32 0, %v3381
          %v3383 = vrot.slane %v3379, %v3382
          %v3384 = vmul.f32 %v3327, %v3383
          %v3385 = vmul.f32 %v3328, %v3383
          %v3386 = vadd.f32 %v3377, %v3384
          %v3387 = vadd.f32 %v3378, %v3385
          %3388 = vrot.lane.b32.xlu0 %v3327, 120
          %v3389 = vpop.permute.xlu0 %3388
          %3390 = vrot.lane.b32.xlu0 %v3328, 120
          %v3391 = vpop.permute.xlu0 %3390
          %v3392 = vadd.s32 %v522, 2
          %vm3393 = vcmp.ge.s32.totalorder %v3392, 0
          %vm3394 = vcmp.lt.s32.totalorder %v3392, 16
          %vm3395 = vmand %vm3393, %vm3394
          %v3396 = vsel %vm3395, 1, 0
          %v3397 = vlaneseq
          %v3398 = vshrl.u32 %v3397, 7
          %v3399 = vsub.s32 0, %v3398
          %v3400 = vrot.slane %v3396, %v3399
          %vm3401 = vcmp.eq.s32.totalorder %v3400, 1
          %v3402 = vsel %vm3401, %v3389, 0.0
          %v3403 = vsel %vm3401, %v3391, 0.0
          %v3404 = vld [vmem:[%s14 + $0x3] sm:$0x1]
          %v3405 = vlaneseq
          %v3406 = vshrl.u32 %v3405, 7
          %v3407 = vsub.s32 0, %v3406
          %v3408 = vrot.slane %v3404, %v3407
          %v3409 = vmul.f32 %v3402, %v3408
          %v3410 = vmul.f32 %v3403, %v3408
          %v3411 = vadd.f32 %v3386, %v3409
          %v3412 = vadd.f32 %v3387, %v3410
          %3413 = vrot.lane.b32.xlu0 %v3327, 112
          %v3414 = vpop.permute.xlu0 %3413
          %3415 = vrot.lane.b32.xlu0 %v3328, 112
          %v3416 = vpop.permute.xlu0 %3415
          %v3417 = vadd.s32 %v522, 4
          %vm3418 = vcmp.ge.s32.totalorder %v3417, 0
          %vm3419 = vcmp.lt.s32.totalorder %v3417, 16
          %vm3420 = vmand %vm3418, %vm3419
          %v3421 = vsel %vm3420, 1, 0
          %v3422 = vlaneseq
          %v3423 = vshrl.u32 %v3422, 7
          %v3424 = vsub.s32 0, %v3423
          %v3425 = vrot.slane %v3421, %v3424
          %vm3426 = vcmp.eq.s32.totalorder %v3425, 1
          %v3427 = vsel %vm3426, %v3414, 0.0
          %v3428 = vsel %vm3426, %v3416, 0.0
          %v3429 = vld [vmem:[%s14 + $0x4] sm:$0x1]
          %v3430 = vlaneseq
          %v3431 = vshrl.u32 %v3430, 7
          %v3432 = vsub.s32 0, %v3431
          %v3433 = vrot.slane %v3429, %v3432
          %v3434 = vmul.f32 %v3427, %v3433
          %v3435 = vmul.f32 %v3428, %v3433
          %v3436 = vadd.f32 %v3411, %v3434
          %v3437 = vadd.f32 %v3412, %v3435
          %v3438 = vrot.slane %v518, 6
          %v3439 = vrot.slane %v519, 6
          %vm3440 = vcmp.lt.s32.totalorder %v3305, 2
          %v3441 = vsel %vm3440, %v3438, %v3439
          %v3442 = vsel %vm3440, %v3439, %v3438
          %v3443 = vadd.s32 %v520, 4294967294
          %v3444 = vadd.s32 %v521, 4294967294
          %vm3445 = vcmp.ge.s32.totalorder %v3443, 0
          %vm3446 = vcmp.ge.s32.totalorder %v3444, 0
          %vm3447 = vcmp.lt.s32.totalorder %v3443, 16
          %vm3448 = vcmp.lt.s32.totalorder %v3444, 16
          %vm3449 = vmand %vm3445, %vm3447
          %vm3450 = vmand %vm3446, %vm3448
          %v3451 = vsel %vm3449, 1, 0
          %v3452 = vsel %vm3450, 1, 0
          %3453 = vset.pattern.permute.xlu0 0
          %3454 = vperm.xlu0 %3453, %v3451
          %v3455 = vpop.permute.xlu0 %3454
          %3456 = vset.pattern.permute.xlu0 0
          %3457 = vperm.xlu0 %3456, %v3452
          %v3458 = vpop.permute.xlu0 %3457
          %vm3459 = vcmp.eq.s32.totalorder %v3455, 1
          %vm3460 = vcmp.eq.s32.totalorder %v3458, 1
          %v3461 = vsel %vm3459, %v3442, 0.0
          %v3462 = vsel %vm3460, %v3441, 0.0
          %3463 = vrot.lane.b32.xlu0 %v3461, 16
          %v3464 = vpop.permute.xlu0 %3463
          %3465 = vrot.lane.b32.xlu0 %v3462, 16
          %v3466 = vpop.permute.xlu0 %3465
          %v3467 = vsel %vm3342, %v3464, 0.0
          %v3468 = vsel %vm3342, %v3466, 0.0
          %v3469 = vld [vmem:[%s14 + $0x5] sm:$0x1]
          %v3470 = vlaneseq
          %v3471 = vshrl.u32 %v3470, 7
          %v3472 = vsub.s32 0, %v3471
          %v3473 = vrot.slane %v3469, %v3472
          %v3474 = vmul.f32 %v3467, %v3473
          %v3475 = vmul.f32 %v3468, %v3473
          %v3476 = vadd.f32 %v3436, %v3474
          %v3477 = vadd.f32 %v3437, %v3475
          %3478 = vrot.lane.b32.xlu0 %v3461, 8
          %v3479 = vpop.permute.xlu0 %3478
          %3480 = vrot.lane.b32.xlu0 %v3462, 8
          %v3481 = vpop.permute.xlu0 %3480
          %v3482 = vsel %vm3367, %v3479, 0.0
          %v3483 = vsel %vm3367, %v3481, 0.0
          %v3484 = vld [vmem:[%s14 + $0x6] sm:$0x1]
          %v3485 = vlaneseq
          %v3486 = vshrl.u32 %v3485, 7
          %v3487 = vsub.s32 0, %v3486
          %v3488 = vrot.slane %v3484, %v3487
          %v3489 = vmul.f32 %v3482, %v3488
          %v3490 = vmul.f32 %v3483, %v3488
          %v3491 = vadd.f32 %v3476, %v3489
          %v3492 = vadd.f32 %v3477, %v3490
          %v3493 = vld [vmem:[%s14 + $0x7] sm:$0x1]
          %v3494 = vlaneseq
          %v3495 = vshrl.u32 %v3494, 7
          %v3496 = vsub.s32 0, %v3495
          %v3497 = vrot.slane %v3493, %v3496
          %v3498 = vmul.f32 %v3461, %v3497
          %v3499 = vmul.f32 %v3462, %v3497
          %v3500 = vadd.f32 %v3491, %v3498
          %v3501 = vadd.f32 %v3492, %v3499
          %3502 = vrot.lane.b32.xlu0 %v3461, 120
          %v3503 = vpop.permute.xlu0 %3502
          %3504 = vrot.lane.b32.xlu0 %v3462, 120
          %v3505 = vpop.permute.xlu0 %3504
          %v3506 = vsel %vm3401, %v3503, 0.0
          %v3507 = vsel %vm3401, %v3505, 0.0
          %v3508 = vld [vmem:[%s14 + $0x8] sm:$0x1]
          %v3509 = vlaneseq
          %v3510 = vshrl.u32 %v3509, 7
          %v3511 = vsub.s32 0, %v3510
          %v3512 = vrot.slane %v3508, %v3511
          %v3513 = vmul.f32 %v3506, %v3512
          %v3514 = vmul.f32 %v3507, %v3512
          %v3515 = vadd.f32 %v3500, %v3513
          %v3516 = vadd.f32 %v3501, %v3514
          %3517 = vrot.lane.b32.xlu0 %v3461, 112
          %v3518 = vpop.permute.xlu0 %3517
          %3519 = vrot.lane.b32.xlu0 %v3462, 112
          %v3520 = vpop.permute.xlu0 %3519
          %v3521 = vsel %vm3426, %v3518, 0.0
          %v3522 = vsel %vm3426, %v3520, 0.0
          %v3523 = vld [vmem:[%s14 + $0x9] sm:$0x1]
          %v3524 = vlaneseq
          %v3525 = vshrl.u32 %v3524, 7
          %v3526 = vsub.s32 0, %v3525
          %v3527 = vrot.slane %v3523, %v3526
          %v3528 = vmul.f32 %v3521, %v3527
          %v3529 = vmul.f32 %v3522, %v3527
          %v3530 = vadd.f32 %v3515, %v3528
          %v3531 = vadd.f32 %v3516, %v3529
          %3532 = vrot.lane.b32.xlu0 %v518, 16
          %v3533 = vpop.permute.xlu0 %3532
          %3534 = vrot.lane.b32.xlu0 %v519, 16
          %v3535 = vpop.permute.xlu0 %3534
          %v3536 = vsel %vm3342, %v3533, 0.0
          %v3537 = vsel %vm3342, %v3535, 0.0
          %v3538 = vld [vmem:[%s14 + $0xa] sm:$0x1]
          %v3539 = vlaneseq
          %v3540 = vshrl.u32 %v3539, 7
          %v3541 = vsub.s32 0, %v3540
          %v3542 = vrot.slane %v3538, %v3541
          %v3543 = vmul.f32 %v3536, %v3542
          %v3544 = vmul.f32 %v3537, %v3542
          %v3545 = vadd.f32 %v3530, %v3543
          %v3546 = vadd.f32 %v3531, %v3544
          %3547 = vrot.lane.b32.xlu0 %v518, 8
          %v3548 = vpop.permute.xlu0 %3547
          %3549 = vrot.lane.b32.xlu0 %v519, 8
          %v3550 = vpop.permute.xlu0 %3549
          %v3551 = vsel %vm3367, %v3548, 0.0
          %v3552 = vsel %vm3367, %v3550, 0.0
          %v3553 = vld [vmem:[%s14 + $0xb] sm:$0x1]
          %v3554 = vlaneseq
          %v3555 = vshrl.u32 %v3554, 7
          %v3556 = vsub.s32 0, %v3555
          %v3557 = vrot.slane %v3553, %v3556
          %v3558 = vmul.f32 %v3551, %v3557
          %v3559 = vmul.f32 %v3552, %v3557
          %v3560 = vadd.f32 %v3545, %v3558
          %v3561 = vadd.f32 %v3546, %v3559
          %v3562 = vld [vmem:[%s14 + $0xc] sm:$0x1]
          %v3563 = vlaneseq
          %v3564 = vshrl.u32 %v3563, 7
          %v3565 = vsub.s32 0, %v3564
          %v3566 = vrot.slane %v3562, %v3565
          %v3567 = vmul.f32 %v518, %v3566
          %v3568 = vmul.f32 %v519, %v3566
          %v3569 = vadd.f32 %v3560, %v3567
          %v3570 = vadd.f32 %v3561, %v3568
          %3571 = vrot.lane.b32.xlu0 %v518, 120
          %v3572 = vpop.permute.xlu0 %3571
          %3573 = vrot.lane.b32.xlu0 %v519, 120
          %v3574 = vpop.permute.xlu0 %3573
          %v3575 = vsel %vm3401, %v3572, 0.0
          %v3576 = vsel %vm3401, %v3574, 0.0
          %v3577 = vld [vmem:[%s14 + $0xd] sm:$0x1]
          %v3578 = vlaneseq
          %v3579 = vshrl.u32 %v3578, 7
          %v3580 = vsub.s32 0, %v3579
          %v3581 = vrot.slane %v3577, %v3580
          %v3582 = vmul.f32 %v3575, %v3581
          %v3583 = vmul.f32 %v3576, %v3581
          %v3584 = vadd.f32 %v3569, %v3582
          %v3585 = vadd.f32 %v3570, %v3583
          %3586 = vrot.lane.b32.xlu0 %v518, 112
          %v3587 = vpop.permute.xlu0 %3586
          %3588 = vrot.lane.b32.xlu0 %v519, 112
          %v3589 = vpop.permute.xlu0 %3588
          %v3590 = vsel %vm3426, %v3587, 0.0
          %v3591 = vsel %vm3426, %v3589, 0.0
          %v3592 = vld [vmem:[%s14 + $0xe] sm:$0x1]
          %v3593 = vlaneseq
          %v3594 = vshrl.u32 %v3593, 7
          %v3595 = vsub.s32 0, %v3594
          %v3596 = vrot.slane %v3592, %v3595
          %v3597 = vmul.f32 %v3590, %v3596
          %v3598 = vmul.f32 %v3591, %v3596
          %v3599 = vadd.f32 %v3584, %v3597
          %v3600 = vadd.f32 %v3585, %v3598
          %v3601 = vrot.slane %v518, 2
          %v3602 = vrot.slane %v519, 2
          %vm3603 = vcmp.lt.s32.totalorder %v3305, 6
          %v3604 = vsel %vm3603, %v3601, %v3602
          %v3605 = vsel %vm3603, %v3602, %v3601
          %v3606 = vadd.s32 %v520, 2
          %v3607 = vadd.s32 %v521, 2
          %vm3608 = vcmp.ge.s32.totalorder %v3606, 0
          %vm3609 = vcmp.ge.s32.totalorder %v3607, 0
          %vm3610 = vcmp.lt.s32.totalorder %v3606, 16
          %vm3611 = vcmp.lt.s32.totalorder %v3607, 16
          %vm3612 = vmand %vm3608, %vm3610
          %vm3613 = vmand %vm3609, %vm3611
          %v3614 = vsel %vm3612, 1, 0
          %v3615 = vsel %vm3613, 1, 0
          %3616 = vset.pattern.permute.xlu0 0
          %3617 = vperm.xlu0 %3616, %v3614
          %v3618 = vpop.permute.xlu0 %3617
          %3619 = vset.pattern.permute.xlu0 0
          %3620 = vperm.xlu0 %3619, %v3615
          %v3621 = vpop.permute.xlu0 %3620
          %vm3622 = vcmp.eq.s32.totalorder %v3618, 1
          %vm3623 = vcmp.eq.s32.totalorder %v3621, 1
          %v3624 = vsel %vm3622, %v3604, 0.0
          %v3625 = vsel %vm3623, %v3605, 0.0
          %3626 = vrot.lane.b32.xlu0 %v3624, 16
          %v3627 = vpop.permute.xlu0 %3626
          %3628 = vrot.lane.b32.xlu0 %v3625, 16
          %v3629 = vpop.permute.xlu0 %3628
          %v3630 = vsel %vm3342, %v3627, 0.0
          %v3631 = vsel %vm3342, %v3629, 0.0
          %v3632 = vld [vmem:[%s14 + $0xf] sm:$0x1]
          %v3633 = vlaneseq
          %v3634 = vshrl.u32 %v3633, 7
          %v3635 = vsub.s32 0, %v3634
          %v3636 = vrot.slane %v3632, %v3635
          %v3637 = vmul.f32 %v3630, %v3636
          %v3638 = vmul.f32 %v3631, %v3636
          %v3639 = vadd.f32 %v3599, %v3637
          %v3640 = vadd.f32 %v3600, %v3638
          %3641 = vrot.lane.b32.xlu0 %v3624, 8
          %v3642 = vpop.permute.xlu0 %3641
          %3643 = vrot.lane.b32.xlu0 %v3625, 8
          %v3644 = vpop.permute.xlu0 %3643
          %v3645 = vsel %vm3367, %v3642, 0.0
          %v3646 = vsel %vm3367, %v3644, 0.0
          %v3647 = vld [vmem:[%s14 + $0x10] sm:$0x1]
          %v3648 = vlaneseq
          %v3649 = vshrl.u32 %v3648, 7
          %v3650 = vsub.s32 0, %v3649
          %v3651 = vrot.slane %v3647, %v3650
          %v3652 = vmul.f32 %v3645, %v3651
          %v3653 = vmul.f32 %v3646, %v3651
          %v3654 = vadd.f32 %v3639, %v3652
          %v3655 = vadd.f32 %v3640, %v3653
          %v3656 = vld [vmem:[%s14 + $0x11] sm:$0x1]
          %v3657 = vlaneseq
          %v3658 = vshrl.u32 %v3657, 7
          %v3659 = vsub.s32 0, %v3658
          %v3660 = vrot.slane %v3656, %v3659
          %v3661 = vmul.f32 %v3624, %v3660
          %v3662 = vmul.f32 %v3625, %v3660
          %v3663 = vadd.f32 %v3654, %v3661
          %v3664 = vadd.f32 %v3655, %v3662
          %3665 = vrot.lane.b32.xlu0 %v3624, 120
          %v3666 = vpop.permute.xlu0 %3665
          %3667 = vrot.lane.b32.xlu0 %v3625, 120
          %v3668 = vpop.permute.xlu0 %3667
          %v3669 = vsel %vm3401, %v3666, 0.0
          %v3670 = vsel %vm3401, %v3668, 0.0
          %v3671 = vld [vmem:[%s14 + $0x12] sm:$0x1]
          %v3672 = vlaneseq
          %v3673 = vshrl.u32 %v3672, 7
          %v3674 = vsub.s32 0, %v3673
          %v3675 = vrot.slane %v3671, %v3674
          %v3676 = vmul.f32 %v3669, %v3675
          %v3677 = vmul.f32 %v3670, %v3675
          %v3678 = vadd.f32 %v3663, %v3676
          %v3679 = vadd.f32 %v3664, %v3677
          %3680 = vrot.lane.b32.xlu0 %v3624, 112
          %v3681 = vpop.permute.xlu0 %3680
          %3682 = vrot.lane.b32.xlu0 %v3625, 112
          %v3683 = vpop.permute.xlu0 %3682
          %v3684 = vsel %vm3426, %v3681, 0.0
          %v3685 = vsel %vm3426, %v3683, 0.0
          %v3686 = vld [vmem:[%s14 + $0x13] sm:$0x1]
          %v3687 = vlaneseq
          %v3688 = vshrl.u32 %v3687, 7
          %v3689 = vsub.s32 0, %v3688
          %v3690 = vrot.slane %v3686, %v3689
          %v3691 = vmul.f32 %v3684, %v3690
          %v3692 = vmul.f32 %v3685, %v3690
          %v3693 = vadd.f32 %v3678, %v3691
          %v3694 = vadd.f32 %v3679, %v3692
          %v3695 = vadd.s32 %v520, 4
          %v3696 = vadd.s32 %v521, 4
          %vm3697 = vcmp.ge.s32.totalorder %v3695, 0
          %vm3698 = vcmp.ge.s32.totalorder %v3696, 0
          %vm3699 = vcmp.lt.s32.totalorder %v3695, 16
          %vm3700 = vcmp.lt.s32.totalorder %v3696, 16
          %vm3701 = vmand %vm3697, %vm3699
          %vm3702 = vmand %vm3698, %vm3700
          %v3703 = vsel %vm3701, 1, 0
          %v3704 = vsel %vm3702, 1, 0
          %3705 = vset.pattern.permute.xlu0 0
          %3706 = vperm.xlu0 %3705, %v3703
          %v3707 = vpop.permute.xlu0 %3706
          %3708 = vset.pattern.permute.xlu0 0
          %3709 = vperm.xlu0 %3708, %v3704
          %v3710 = vpop.permute.xlu0 %3709
          %vm3711 = vcmp.eq.s32.totalorder %v3707, 1
          %vm3712 = vcmp.eq.s32.totalorder %v3710, 1
          %v3713 = vsel %vm3711, %v3307, 0.0
          %v3714 = vsel %vm3712, %v3308, 0.0
          %3715 = vrot.lane.b32.xlu0 %v3713, 16
          %v3716 = vpop.permute.xlu0 %3715
          %3717 = vrot.lane.b32.xlu0 %v3714, 16
          %v3718 = vpop.permute.xlu0 %3717
          %v3719 = vsel %vm3342, %v3716, 0.0
          %v3720 = vsel %vm3342, %v3718, 0.0
          %v3721 = vld [vmem:[%s14 + $0x14] sm:$0x1]
          %v3722 = vlaneseq
          %v3723 = vshrl.u32 %v3722, 7
          %v3724 = vsub.s32 0, %v3723
          %v3725 = vrot.slane %v3721, %v3724
          %v3726 = vmul.f32 %v3719, %v3725
          %v3727 = vmul.f32 %v3720, %v3725
          %v3728 = vadd.f32 %v3693, %v3726
          %v3729 = vadd.f32 %v3694, %v3727
          %3730 = vrot.lane.b32.xlu0 %v3713, 8
          %v3731 = vpop.permute.xlu0 %3730
          %3732 = vrot.lane.b32.xlu0 %v3714, 8
          %v3733 = vpop.permute.xlu0 %3732
          %v3734 = vsel %vm3367, %v3731, 0.0
          %v3735 = vsel %vm3367, %v3733, 0.0
          %v3736 = vld [vmem:[%s14 + $0x15] sm:$0x1]
          %v3737 = vlaneseq
          %v3738 = vshrl.u32 %v3737, 7
          %v3739 = vsub.s32 0, %v3738
          %v3740 = vrot.slane %v3736, %v3739
          %v3741 = vmul.f32 %v3734, %v3740
          %v3742 = vmul.f32 %v3735, %v3740
          %v3743 = vadd.f32 %v3728, %v3741
          %v3744 = vadd.f32 %v3729, %v3742
          %v3745 = vld [vmem:[%s14 + $0x16] sm:$0x1]
          %v3746 = vlaneseq
          %v3747 = vshrl.u32 %v3746, 7
          %v3748 = vsub.s32 0, %v3747
          %v3749 = vrot.slane %v3745, %v3748
          %v3750 = vmul.f32 %v3713, %v3749
          %v3751 = vmul.f32 %v3714, %v3749
          %v3752 = vadd.f32 %v3743, %v3750
          %v3753 = vadd.f32 %v3744, %v3751
          %3754 = vrot.lane.b32.xlu0 %v3713, 120
          %v3755 = vpop.permute.xlu0 %3754
          %3756 = vrot.lane.b32.xlu0 %v3714, 120
          %v3757 = vpop.permute.xlu0 %3756
          %v3758 = vsel %vm3401, %v3755, 0.0
          %v3759 = vsel %vm3401, %v3757, 0.0
          %v3760 = vld [vmem:[%s14 + $0x17] sm:$0x1]
          %v3761 = vlaneseq
          %v3762 = vshrl.u32 %v3761, 7
          %v3763 = vsub.s32 0, %v3762
          %v3764 = vrot.slane %v3760, %v3763
          %v3765 = vmul.f32 %v3758, %v3764
          %v3766 = vmul.f32 %v3759, %v3764
          %v3767 = vadd.f32 %v3752, %v3765
          %v3768 = vadd.f32 %v3753, %v3766
          %3769 = vrot.lane.b32.xlu0 %v3713, 112
          %v3770 = vpop.permute.xlu0 %3769
          %3771 = vrot.lane.b32.xlu0 %v3714, 112
          %v3772 = vpop.permute.xlu0 %3771
          %v3773 = vsel %vm3426, %v3770, 0.0
          %v3774 = vsel %vm3426, %v3772, 0.0
          %v3775 = vld [vmem:[%s14 + $0x18] sm:$0x1]
          %v3776 = vlaneseq
          %v3777 = vshrl.u32 %v3776, 7
          %v3778 = vsub.s32 0, %v3777
          %v3779 = vrot.slane %v3775, %v3778
          %v3780 = vmul.f32 %v3773, %v3779
          %v3781 = vmul.f32 %v3774, %v3779
          %v3782 = vadd.f32 %v3767, %v3780
          %v3783 = vadd.f32 %v3768, %v3781
          %v3784 = vld [vmem:[%s15 + $0x3] sm:$0x1]
          %v3785 = vlaneseq
          %v3786 = vshrl.u32 %v3785, 7
          %v3787 = vsub.s32 0, %v3786
          %v3788 = vrot.slane %v3784, %v3787
          %v3789 = vmul.f32 %v3782, %v3788
          %v3790 = vmul.f32 %v3783, %v3788
          %3791 = vrot.lane.b32.xlu0 %v3782, 1
          %v3792 = vpop.permute.xlu0 %3791
          %3793 = vrot.lane.b32.xlu0 %v3783, 1
          %v3794 = vpop.permute.xlu0 %3793
          %v3795 = vld [vmem:[%s15 + $0x4] sm:$0x1]
          %v3796 = vlaneseq
          %v3797 = vshrl.u32 %v3796, 7
          %v3798 = vsub.s32 0, %v3797
          %v3799 = vrot.slane %v3795, %v3798
          %v3800 = vmul.f32 %v3792, %v3799
          %v3801 = vmul.f32 %v3794, %v3799
          %v3802 = vadd.f32 %v3789, %v3800
          %v3803 = vadd.f32 %v3790, %v3801
          %3804 = vrot.lane.b32.xlu0 %v3782, 127
          %v3805 = vpop.permute.xlu0 %3804
          %3806 = vrot.lane.b32.xlu0 %v3783, 127
          %v3807 = vpop.permute.xlu0 %3806
          %v3808 = vld [vmem:[%s15 + $0x2] sm:$0x1]
          %v3809 = vlaneseq
          %v3810 = vshrl.u32 %v3809, 7
          %v3811 = vsub.s32 0, %v3810
          %v3812 = vrot.slane %v3808, %v3811
          %v3813 = vmul.f32 %v3805, %v3812
          %v3814 = vmul.f32 %v3807, %v3812
          %v3815 = vadd.f32 %v3802, %v3813
          %v3816 = vadd.f32 %v3803, %v3814
          %3817 = vrot.lane.b32.xlu0 %v3782, 2
          %v3818 = vpop.permute.xlu0 %3817
          %3819 = vrot.lane.b32.xlu0 %v3783, 2
          %v3820 = vpop.permute.xlu0 %3819
          %v3821 = vld [vmem:[%s15 + $0x5] sm:$0x1]
          %v3822 = vlaneseq
          %v3823 = vshrl.u32 %v3822, 7
          %v3824 = vsub.s32 0, %v3823
          %v3825 = vrot.slane %v3821, %v3824
          %v3826 = vmul.f32 %v3818, %v3825
          %v3827 = vmul.f32 %v3820, %v3825
          %v3828 = vadd.f32 %v3815, %v3826
          %v3829 = vadd.f32 %v3816, %v3827
          %3830 = vrot.lane.b32.xlu0 %v3782, 126
          %v3831 = vpop.permute.xlu0 %3830
          %3832 = vrot.lane.b32.xlu0 %v3783, 126
          %v3833 = vpop.permute.xlu0 %3832
          %v3834 = vld [vmem:[%s15 + $0x1] sm:$0x1]
          %v3835 = vlaneseq
          %v3836 = vshrl.u32 %v3835, 7
          %v3837 = vsub.s32 0, %v3836
          %v3838 = vrot.slane %v3834, %v3837
          %v3839 = vmul.f32 %v3831, %v3838
          %v3840 = vmul.f32 %v3833, %v3838
          %v3841 = vadd.f32 %v3828, %v3839
          %v3842 = vadd.f32 %v3829, %v3840
          %3843 = vrot.lane.b32.xlu0 %v3782, 3
          %v3844 = vpop.permute.xlu0 %3843
          %3845 = vrot.lane.b32.xlu0 %v3783, 3
          %v3846 = vpop.permute.xlu0 %3845
          %v3847 = vld [vmem:[%s15 + $0x6] sm:$0x1]
          %v3848 = vlaneseq
          %v3849 = vshrl.u32 %v3848, 7
          %v3850 = vsub.s32 0, %v3849
          %v3851 = vrot.slane %v3847, %v3850
          %v3852 = vmul.f32 %v3844, %v3851
          %v3853 = vmul.f32 %v3846, %v3851
          %v3854 = vadd.f32 %v3841, %v3852
          %v3855 = vadd.f32 %v3842, %v3853
          %3856 = vrot.lane.b32.xlu0 %v3782, 125
          %v3857 = vpop.permute.xlu0 %3856
          %3858 = vrot.lane.b32.xlu0 %v3783, 125
          %v3859 = vpop.permute.xlu0 %3858
          %v3860 = vld [vmem:[%s15] sm:$0x1]
          %v3861 = vlaneseq
          %v3862 = vshrl.u32 %v3861, 7
          %v3863 = vsub.s32 0, %v3862
          %v3864 = vrot.slane %v3860, %v3863
          %v3865 = vmul.f32 %v3857, %v3864
          %v3866 = vmul.f32 %v3859, %v3864
          %v3867 = vadd.f32 %v3854, %v3865
          %v3868 = vadd.f32 %v3855, %v3866
          %3869 = vrot.lane.b32.xlu0 %v3867, 4
          %v3870 = vpop.permute.xlu0 %3869
          %3871 = vrot.lane.b32.xlu0 %v3868, 4
          %v3872 = vpop.permute.xlu0 %3871
          %v3873 = vadd.f32 %v3867, %v3870
          %v3874 = vadd.f32 %v3868, %v3872
          %3875 = vrot.lane.b32.xlu0 %v3873, 8
          %v3876 = vpop.permute.xlu0 %3875
          %3877 = vrot.lane.b32.xlu0 %v3874, 8
          %v3878 = vpop.permute.xlu0 %3877
          %v3879 = vadd.f32 %v3873, %v3876
          %v3880 = vadd.f32 %v3874, %v3878
          %3881 = vrot.lane.b32.xlu0 %v3879, 16
          %v3882 = vpop.permute.xlu0 %3881
          %3883 = vrot.lane.b32.xlu0 %v3880, 16
          %v3884 = vpop.permute.xlu0 %3883
          %v3885 = vadd.f32 %v3879, %v3882
          %v3886 = vadd.f32 %v3880, %v3884
          %3887 = vrot.lane.b32.xlu0 %v3885, 32
          %v3888 = vpop.permute.xlu0 %3887
          %3889 = vrot.lane.b32.xlu0 %v3886, 32
          %v3890 = vpop.permute.xlu0 %3889
          %v3891 = vadd.f32 %v3885, %v3888
          %v3892 = vadd.f32 %v3886, %v3890
          %3893 = vrot.lane.b32.xlu0 %v3891, 64
          %v3894 = vpop.permute.xlu0 %3893
          %3895 = vrot.lane.b32.xlu0 %v3892, 64
          %v3896 = vpop.permute.xlu0 %3895
          %v3897 = vadd.f32 %v3891, %v3894
          %v3898 = vadd.f32 %v3892, %v3896
          %v3899 = vadd.f32 %v3897, %v3898
          %v3900 = vrot.slane %v3899, 4
          %v3901 = vadd.f32 %v3899, %v3900
          %v3902 = vrot.slane %v3901, 2
          %v3903 = vadd.f32 %v3901, %v3902
          %v3904 = vrot.slane %v3903, 1
          %v3905 = vadd.f32 %v3903, %v3904
          %v3906 = vmul.f32 %v3905, 0.001953125
          %v3907 = vsub.f32 %v3867, %v3906
          %v3908 = vsub.f32 %v3868, %v3906
          %v3909 = vmul.f32 %v3907, %v3907
          %v3910 = vmul.f32 %v3908, %v3908
          %3911 = vrot.lane.b32.xlu0 %v3909, 4
          %v3912 = vpop.permute.xlu0 %3911
          %3913 = vrot.lane.b32.xlu0 %v3910, 4
          %v3914 = vpop.permute.xlu0 %3913
          %v3915 = vadd.f32 %v3909, %v3912
          %v3916 = vadd.f32 %v3910, %v3914
          %3917 = vrot.lane.b32.xlu0 %v3915, 8
          %v3918 = vpop.permute.xlu0 %3917
          %3919 = vrot.lane.b32.xlu0 %v3916, 8
          %v3920 = vpop.permute.xlu0 %3919
          %v3921 = vadd.f32 %v3915, %v3918
          %v3922 = vadd.f32 %v3916, %v3920
          %3923 = vrot.lane.b32.xlu0 %v3921, 16
          %v3924 = vpop.permute.xlu0 %3923
          %3925 = vrot.lane.b32.xlu0 %v3922, 16
          %v3926 = vpop.permute.xlu0 %3925
          %v3927 = vadd.f32 %v3921, %v3924
          %v3928 = vadd.f32 %v3922, %v3926
          %3929 = vrot.lane.b32.xlu0 %v3927, 32
          %v3930 = vpop.permute.xlu0 %3929
          %3931 = vrot.lane.b32.xlu0 %v3928, 32
          %v3932 = vpop.permute.xlu0 %3931
          %v3933 = vadd.f32 %v3927, %v3930
          %v3934 = vadd.f32 %v3928, %v3932
          %3935 = vrot.lane.b32.xlu0 %v3933, 64
          %v3936 = vpop.permute.xlu0 %3935
          %3937 = vrot.lane.b32.xlu0 %v3934, 64
          %v3938 = vpop.permute.xlu0 %3937
          %v3939 = vadd.f32 %v3933, %v3936
          %v3940 = vadd.f32 %v3934, %v3938
          %v3941 = vadd.f32 %v3939, %v3940
          %v3942 = vrot.slane %v3941, 4
          %v3943 = vadd.f32 %v3941, %v3942
          %v3944 = vrot.slane %v3943, 2
          %v3945 = vadd.f32 %v3943, %v3944
          %v3946 = vrot.slane %v3945, 1
          %v3947 = vadd.f32 %v3945, %v3946
          %v3948 = vmul.f32 %v3947, 0.001953125
          %v3949 = vadd.f32 %v3948, 1e-05
          %v3950 = vrsqrt.pop %v3949
          %v3951 = vmul.f32 %v3907, %v3950
          %v3952 = vmul.f32 %v3908, %v3950
          %v3953 = vstv %s3301
          %v3954 = vmul.f32 %v3953, %v3951
          %v3955 = vmul.f32 %v3953, %v3952
          %v3956 = vadd.f32 %v3299, %v3954
          %v3957 = vadd.f32 %v3300, %v3955
          %3958 = vst [vmem:[%s515] sm:$0xff] %v3956
          %3959 = vst [vmem:[%s515 + $0x8] sm:$0xff] %v3957
        $region116: #{mixed_op_forward.1} parent=83 // pred_fallthru
          _
        %p3960 = scmp.lt.s32.totalorder %s28, 1
        %s3961 = scalar_select %p3960, %s28, 1
        %s3962 = smul.addr %s3961, 2
        %s3963 = smul.addr %s3962, 8
        %s3964 = scalar_lea.vmem %s16, %s3963
        // Predicated region
        $region117: #{mixed_op_forward.1} parent=83 // pred_check
          %p3965 = pneg %p382
        $region118: #{mixed_op_forward.1} parent=83 // pred_check_branch
          %3967 = sbr.rel (%p3965) target = $region120
        $region119: #{mixed_op_forward.1} parent=83 // pred_region
          _
        $region120: #{mixed_op_forward.1} parent=83 // pred_fallthru
          _
      $region84: #{mixed_op_forward.1} parent=5 // pred_fallthru
        _
      %p3968 = scmp.le.s32.totalorder 2, %s23
      // Predicated region
      $region121: #{mixed_op_forward.1} parent=5 // pred_check
        %p3969 = pneg %p3968
      $region122: #{mixed_op_forward.1} parent=5 // pred_check_branch
        %3971 = sbr.rel (%p3969) target = $region124
      $region123: #{mixed_op_forward.1} parent=5 // pred_region
        %s3972 = ssub.s32 %s23, 2
        // Predicated region
        $region125: #{mixed_op_forward.1} parent=123 // pred_check
          %p3973 = pneg %p388
        $region126: #{mixed_op_forward.1} parent=123 // pred_check_branch
          %3975 = sbr.rel (%p3973) target = $region128
        $region127: #{mixed_op_forward.1} parent=123 // pred_region
          %p3976 = scmp.lt.s32.totalorder %s29, 1
          %s3977 = scalar_select %p3976, %s29, 1
          %s3978 = smul.addr %s3977, 2
          %s3979 = smul.addr %s3978, 8
          %s3980 = scalar_lea.vmem %s16, %s3979
        $region128: #{mixed_op_forward.1} parent=123 // pred_fallthru
          _
      $region124: #{mixed_op_forward.1} parent=5 // pred_fallthru
        _
    $region6: #{mixed_op_forward.1} parent=1 // loop_footer
      %s27 = sadd.s32 1, %s23
    $region7: #{mixed_op_forward.1} parent=1 // loop_footer_branch
      %22 = sbr.rel target = $region3
    $region8: #{mixed_op_forward.1} parent=1 // loop_exit
      _
    %3981 = vsyncpa [#allocation3], 1
    %s3982 = scalar_lea.sflag [#allocation3], 1
    %3983 = vsyncpa %s3982, 1

</llo_original>
